<compile_context>
chip_gen: v6e
topology: v6e:2x2x1
jax: 0.10.0
libtpu: 0.0.40
codegen_flags: <defaults>
</compile_context>

<pallas_src>
import functools
import math

import numpy as np

import jax
import jax.numpy as jnp
from jax.experimental import pallas as pl
from jax.experimental.pallas import tpu as pltpu

NUM_CLASSES = 4
REG_MAX = 7                                   # DFL bins - 1
NUM_BINS = REG_MAX + 1
NUM_OUT = NUM_CLASSES + 4 * NUM_BINS          # 36 head output channels
SB_W = NUM_CLASSES + 4                        # fused scores+boxes output width
FPN_C = 32


# ----------------------------------------------------------------------------
# Tiling helper (no padding / slicing copies)
# ----------------------------------------------------------------------------
def _row_tile(m):
    """Largest row tile that divides m, is a multiple of 8 and leaves >= 2 grid
    steps (so the 'parallel' grid axis can shard across dual TensorCores)."""
    for t in (512, 336, 256, 128, 64, 32, 16, 8):
        if m % t == 0 and m // t >= 2:
            return t
    return m   # single full-extent block (always layout-legal)


# ----------------------------------------------------------------------------
# Pallas kernels
# ----------------------------------------------------------------------------
def _matmul_bias_act_kernel(x_ref, w_ref, b_ref, *rest, act, has_skip):
    """o = act(x @ w + b) [+ skip].  bf16 inputs, f32 MXU accumulation."""
    if has_skip:
        skip_ref, o_ref = rest
    else:
        (o_ref,) = rest
    acc = jnp.dot(x_ref[...], w_ref[...], preferred_element_type=jnp.float32)
    acc = acc + b_ref[...]
    if act == "relu":
        acc = jnp.maximum(acc, 0.0)
    if has_skip:
        acc = acc + skip_ref[...].astype(jnp.float32)   # fused FPN upsample-add
    o_ref[...] = acc.astype(o_ref.dtype)


def _head_postprocess_kernel(x_ref, w1_ref, b1_ref, w2_ref, b2_ref, dfl_ref,
                             ctr_ref, pred_ref, sb_ref):
    """Fused head + post-process for all FPN levels (shared weights).

    x_ref:   (T, 9*FPN_C) bf16 im2col columns of the FPN features
    w1/b1:   shared 3x3 head conv (relu)      w2/b2: 1x1 projection to NUM_OUT
    dfl_ref: (4*NUM_BINS, 8) block-diag [ones | proj] matrix for the DFL integral
    ctr_ref: (T, 8) = [cx, cy, cx, cy, s, s, s, s] per anchor point
    Outputs: pred_ref (T, NUM_OUT) raw head preds; sb_ref (T, 8) = [scores|boxes]
    """
    # shared 3x3 conv (im2col'd) + relu -- bf16 operands, f32 accumulation
    h = jnp.dot(x_ref[...], w1_ref[...], preferred_element_type=jnp.float32)
    h = jnp.maximum(h + b1_ref[...], 0.0)
    # fused 1x1 output conv: the 32-channel intermediate never leaves VMEM
    p = jnp.dot(h, w2_ref[...], preferred_element_type=jnp.float32) + b2_ref[...]
    pred_ref[...] = p

    # post_process core: per-class sigmoid scores
    scores = jax.nn.sigmoid(p[:, :NUM_CLASSES])

    # DFL softmax-integral as ONE small matmul:  [den | num] = exp(reg) @ dfl.
    # Row-global max subtraction is mathematically exact for each group's
    # softmax ratio and numerically safe for head-logit ranges.
    reg = p[:, NUM_CLASSES:]
    reg = reg - jnp.max(reg, axis=-1, keepdims=True)
    e = jnp.exp(reg)
    nd = jnp.dot(e, dfl_ref[...], preferred_element_type=jnp.float32)   # (T, 8)
    dist = nd[:, 4:8] / nd[:, 0:4]                                      # (T, 4)

    # distance -> xyxy box decode (scaled by the level stride)
    ctr = ctr_ref[...]
    d = dist * ctr[:, 4:8]
    boxes = jnp.concatenate(
        [ctr[:, 0:2] - d[:, 0:2], ctr[:, 2:4] + d[:, 2:4]], axis=-1)
    sb_ref[...] = jnp.concatenate([scores, boxes], axis=-1)


# ----------------------------------------------------------------------------
# pallas_call wrappers
# ----------------------------------------------------------------------------
def pallas_matmul_bias(x, w, b, act="none", skip=None, out_dtype=jnp.float32):
    """x: (M, K), w: (K, N), b: (N,) [, skip: (M, N)] -> (M, N)."""
    m, k = x.shape
    n = w.shape[1]
    tm = _row_tile(m)
    in_specs = [
        pl.BlockSpec((tm, k), lambda i: (i, 0)),
        pl.BlockSpec((k, n), lambda i: (0, 0)),
        pl.BlockSpec((1, n), lambda i: (0, 0)),
    ]
    args = [x, w, b.reshape(1, n).astype(jnp.float32)]
    if skip is not None:
        in_specs.append(pl.BlockSpec((tm, n), lambda i: (i, 0)))
        args.append(skip)
    # TODO(synk): at real NanoDet channel counts, tile K with a reduction grid
    # axis + accumulator scratch instead of a full (K, N) weight block per step
    # (matters for v7x's smaller VMEM), and set vmem_limit_bytes explicitly.
    return pl.pallas_call(
        functools.partial(_matmul_bias_act_kernel, act=act,
                          has_skip=skip is not None),
        out_shape=jax.ShapeDtypeStruct((m, n), out_dtype),
        grid=(m // tm,),
        in_specs=in_specs,
        out_specs=pl.BlockSpec((tm, n), lambda i: (i, 0)),
        compiler_params=pltpu.CompilerParams(dimension_semantics=("parallel",)),
    )(*args)


def pallas_head_postprocess(cols, ctrs, w1, b1, w2, b2, dfl):
    """All FPN levels batched: cols (M, 9*FPN_C) -> preds (M, 36), sb (M, 8)."""
    m, k1 = cols.shape
    cmid = w1.shape[1]
    tm = _row_tile(m)
    preds, sb = pl.pallas_call(
        _head_postprocess_kernel,
        out_shape=(
            jax.ShapeDtypeStruct((m, NUM_OUT), jnp.float32),
            jax.ShapeDtypeStruct((m, SB_W), jnp.float32),
        ),
        grid=(m // tm,),
        in_specs=[
            pl.BlockSpec((tm, k1), lambda i: (i, 0)),
            pl.BlockSpec((k1, cmid), lambda i: (0, 0)),
            pl.BlockSpec((1, cmid), lambda i: (0, 0)),
            pl.BlockSpec((cmid, NUM_OUT), lambda i: (0, 0)),
            pl.BlockSpec((1, NUM_OUT), lambda i: (0, 0)),
            pl.BlockSpec((4 * NUM_BINS, 8), lambda i: (0, 0)),
            pl.BlockSpec((tm, 8), lambda i: (i, 0)),
        ],
        out_specs=(
            pl.BlockSpec((tm, NUM_OUT), lambda i: (i, 0)),
            pl.BlockSpec((tm, SB_W), lambda i: (i, 0)),
        ),
        compiler_params=pltpu.CompilerParams(dimension_semantics=("parallel",)),
    )(cols, w1, b1.reshape(1, -1).astype(jnp.float32),
      w2, b2.reshape(1, -1).astype(jnp.float32), dfl, ctrs)
    return preds, sb


# ----------------------------------------------------------------------------
# Conv via im2col + Pallas matmul
# ----------------------------------------------------------------------------
def im2col(x, kh, kw, stride):
    """x: NHWC. Returns (N*Ho*Wo, kh*kw*C) with patch ordering (kh, kw, C)."""
    # TODO(synk): at real resolutions build the 3x3 window inside the kernel
    # (shifted VMEM reads accumulated over a reduction grid axis) to avoid the
    # 9x im2col materialization in HBM.
    n, h, w, c = x.shape
    ph, pw = kh // 2, kw // 2
    xp = jnp.pad(x, ((0, 0), (ph, ph), (pw, pw), (0, 0)))
    ho = (h + 2 * ph - kh) // stride + 1
    wo = (w + 2 * pw - kw) // stride + 1
    patches = []
    for i in range(kh):
        for j in range(kw):
            patches.append(
                xp[:, i:i + stride * ho:stride, j:j + stride * wo:stride, :])
    pat = jnp.concatenate(patches, axis=-1)
    return pat.reshape(n * ho * wo, kh * kw * c), (n, ho, wo)


def conv2d(x_nhwc, w_torch, b, stride=1, act="none", skip=None,
           out_dtype=jnp.bfloat16):
    """w_torch: PyTorch layout (Cout, Cin, kh, kw). SAME-style padding = k//2.
    Optional `skip` (NHWC, Cout channels) is added in the matmul epilogue."""
    cout, cin, kh, kw = w_torch.shape
    if kh == 1 and kw == 1 and stride == 1:
        n, h, w_, _ = x_nhwc.shape
        cols, ho, wo = x_nhwc.reshape(-1, cin), h, w_
    else:
        cols, (n, ho, wo) = im2col(x_nhwc, kh, kw, stride)
    wm = jnp.transpose(w_torch, (2, 3, 1, 0)).reshape(kh * kw * cin, cout)
    skip_m = None if skip is None else skip.reshape(-1, cout)
    y = pallas_matmul_bias(cols.astype(jnp.bfloat16), wm.astype(jnp.bfloat16),
                           b, act=act, skip=skip_m, out_dtype=out_dtype)
    return y.reshape(n, ho, wo, cout)


def upsample2x(x_nhwc):
    # TODO(synk): NanoDet-Plus FPN uses bilinear; nearest kept for this
    # synthetic stand-in (matches the previous version's semantics).
    return jnp.repeat(jnp.repeat(x_nhwc, 2, axis=1), 2, axis=2)


# ----------------------------------------------------------------------------
# Parameters (deterministic synthetic init)
# ----------------------------------------------------------------------------
def init_params(key):
    ks = iter(jax.random.split(key, 32))

    def conv_w(cout, cin, kh, kw):
        scale = 1.0 / math.sqrt(cin * kh * kw)
        return jax.random.normal(next(ks), (cout, cin, kh, kw), jnp.float32) * scale

    def bias(cout):
        return jax.random.normal(next(ks), (cout,), jnp.float32) * 0.01

    p = {}
    # NanoDet pixel_mean / pixel_std buffers (BGR)
    p["pixel_mean"] = jnp.array([103.53, 116.28, 123.675], jnp.float32)
    p["pixel_std"] = jnp.array([57.375, 57.12, 58.395], jnp.float32)
    # backbone: three strided 3x3 conv stages (multi-scale features)
    p["bb1_w"], p["bb1_b"] = conv_w(16, 3, 3, 3), bias(16)
    p["bb2_w"], p["bb2_b"] = conv_w(32, 16, 3, 3), bias(32)
    p["bb3_w"], p["bb3_b"] = conv_w(64, 32, 3, 3), bias(64)
    # fpn: 1x1 lateral convs to FPN_C channels
    p["lat1_w"], p["lat1_b"] = conv_w(FPN_C, 16, 1, 1), bias(FPN_C)
    p["lat2_w"], p["lat2_b"] = conv_w(FPN_C, 32, 1, 1), bias(FPN_C)
    p["lat3_w"], p["lat3_b"] = conv_w(FPN_C, 64, 1, 1), bias(FPN_C)
    # head: shared 3x3 conv + 1x1 projection to cls+DFL outputs
    p["head_conv_w"], p["head_conv_b"] = conv_w(FPN_C, FPN_C, 3, 3), bias(FPN_C)
    p["head_out_w"], p["head_out_b"] = conv_w(NUM_OUT, FPN_C, 1, 1), bias(NUM_OUT)
    return p


def _dfl_matrix():
    """(4*NUM_BINS, 8) = [block-diag ones | block-diag proj] for the DFL integral."""
    rows = np.arange(4 * NUM_BINS)
    onehot = (rows[:, None] // NUM_BINS == np.arange(4)[None, :]).astype(np.float32)
    proj = (rows % NUM_BINS).astype(np.float32)[:, None] * onehot
    return jnp.asarray(np.concatenate([onehot, proj], axis=1))


# ----------------------------------------------------------------------------
# NanoDet-Plus forward (inference branch)
# ----------------------------------------------------------------------------
def nanodet_plus_forward(x_nchw, params):
    x = jnp.transpose(x_nchw, (0, 2, 3, 1)).astype(jnp.float32)   # NCHW -> NHWC
    n = x.shape[0]

    # preprocess_image fused into the first conv:
    #   pixel_std is folded into the bb1 weights; the mean subtraction is a
    #   tiny XLA elementwise op fused into the im2col build, which keeps the
    #   reference "zero-pad the normalized image" semantics exact.
    x0 = x - params["pixel_mean"]
    bb1_w = params["bb1_w"] / params["pixel_std"][None, :, None, None]

    # backbone -> multi-scale features (strides 2, 4, 8 w.r.t. input), bf16
    c1 = conv2d(x0, bb1_w, params["bb1_b"], stride=2, act="relu")
    c2 = conv2d(c1, params["bb2_w"], params["bb2_b"], stride=2, act="relu")
    c3 = conv2d(c2, params["bb3_w"], params["bb3_b"], stride=2, act="relu")

    # fpn: lateral 1x1 convs; the top-down upsample+add is fused into the
    # lateral conv's matmul epilogue (skip input) -- no separate add kernel.
    p3 = conv2d(c3, params["lat3_w"], params["lat3_b"])
    p2 = conv2d(c2, params["lat2_w"], params["lat2_b"], skip=upsample2x(p3))
    p1 = conv2d(c1, params["lat1_w"], params["lat1_b"], skip=upsample2x(p2))
    fpn_feats = [p1, p2, p3]
    strides = [2, 4, 8]

    # head + post_process core: all levels batched through ONE fused kernel
    # (shared weights).  Anchor centers/strides are compile-time constants.
    cols_list, ctr_list, level_rows = [], [], []
    for f, s in zip(fpn_feats, strides):
        cols_l, (n_, hs, ws) = im2col(f, 3, 3, 1)
        cols_list.append(cols_l)
        yy, xx = np.meshgrid(np.arange(hs), np.arange(ws), indexing="ij")
        cx = (xx.reshape(-1) * s).astype(np.float32)
        cy = (yy.reshape(-1) * s).astype(np.float32)
        sv = np.full_like(cx, float(s))
        ctr = np.stack([cx, cy, cx, cy, sv, sv, sv, sv], axis=-1)   # (hs*ws, 8)
        ctr_list.append(np.tile(ctr, (n_, 1)))
        level_rows.append((n_, hs * ws))
    cols = jnp.concatenate(cols_list, axis=0).astype(jnp.bfloat16)
    ctrs = jnp.asarray(np.concatenate(ctr_list, axis=0))

    w1 = jnp.transpose(params["head_conv_w"], (2, 3, 1, 0)).reshape(
        9 * FPN_C, FPN_C).astype(jnp.bfloat16)
    w2 = jnp.transpose(params["head_out_w"], (2, 3, 1, 0)).reshape(
        FPN_C, NUM_OUT).astype(jnp.float32)

    preds_flat, sb_flat = pallas_head_postprocess(
        cols, ctrs, w1, params["head_conv_b"], w2, params["head_out_b"],
        _dfl_matrix())

    # split back into (N, P, ...) with per-image level-major anchor ordering
    preds_list, scores_list, boxes_list = [], [], []
    off = 0
    for n_, hw in level_rows:
        rows_l = n_ * hw
        preds_list.append(preds_flat[off:off + rows_l].reshape(n_, hw, NUM_OUT))
        sb_l = sb_flat[off:off + rows_l].reshape(n_, hw, SB_W)
        scores_list.append(sb_l[..., :NUM_CLASSES])
        boxes_list.append(sb_l[..., NUM_CLASSES:])
        off += rows_l
    preds = jnp.concatenate(preds_list, axis=1)      # (N, P, 36)
    scores = jnp.concatenate(scores_list, axis=1)    # (N, P, 4) sigmoid scores
    boxes = jnp.concatenate(boxes_list, axis=1)      # (N, P, 4) xyxy

    # TODO(synk): per-image NMS, warp_boxes (np.linalg.inv of warp matrices) and
    # Instances construction are host-side numpy/list ops with no Pallas equivalent.
    return preds, scores, boxes


# ----------------------------------------------------------------------------
if __name__ == "__main__":
    key = jax.random.PRNGKey(0)
    k_img, k_par = jax.random.split(key)
    # batched_inputs analogue: batch of 2 BGR images, NCHW, 3x32x32
    images = jax.random.uniform(k_img, (2, 3, 32, 32), jnp.float32) * 255.0
    params = init_params(k_par)

    preds, scores, boxes = jax.jit(nanodet_plus_forward)(images, params)
    jax.block_until_ready((preds, scores, boxes))

    assert preds.shape == (2, 16 * 16 + 8 * 8 + 4 * 4, NUM_OUT)
    assert scores.shape == (2, 336, NUM_CLASSES)
    assert boxes.shape == (2, 336, 4)
    assert bool(jnp.all(jnp.isfinite(preds)))
    assert bool(jnp.all(jnp.isfinite(boxes)))
    print("KERNEL_OK")
</pallas_src>

<mosaic_0001>
module attributes {stable_mosaic.version = 11 : i64} {
  func.func @_matmul_bias_act_kernel(%arg0: i32, %arg1: memref<256x27xbf16, #tpu.memory_space<vmem>>, %arg2: memref<27x16xbf16, #tpu.memory_space<vmem>>, %arg3: memref<1x16xf32, #tpu.memory_space<vmem>>, %arg4: memref<256x16xbf16, #tpu.memory_space<vmem>>) attributes {dimension_semantics = [#tpu.dimension_semantics<parallel>], iteration_bounds = array<i64: 2>, scalar_prefetch = 0 : i64, scratch_operands = 0 : i64, tpu.core_type = #tpu.core_type<tc>, window_params = [{transform_indices = @transform_0, window_bounds = array<i64: 256, 27>}, {pipeline_mode = #tpu.pipeline_mode<synchronous>, transform_indices = @transform_1, window_bounds = array<i64: 27, 16>}, {pipeline_mode = #tpu.pipeline_mode<synchronous>, transform_indices = @transform_2, window_bounds = array<i64: 1, 16>}, {transform_indices = @transform_3, window_bounds = array<i64: 256, 16>}]} {
    %c0 = arith.constant 0 : index
    %c0_0 = arith.constant 0 : index
    %0 = vector.load %arg1[%c0, %c0_0] : memref<256x27xbf16, #tpu.memory_space<vmem>>, vector<256x27xbf16>
    %c0_1 = arith.constant 0 : index
    %c0_2 = arith.constant 0 : index
    %1 = vector.load %arg2[%c0_1, %c0_2] : memref<27x16xbf16, #tpu.memory_space<vmem>>, vector<27x16xbf16>
    %cst = arith.constant dense<0.000000e+00> : vector<256x16xf32>
    %2 = tpu.matmul %0, %1, %cst {dimension_numbers = #tpu.dot_dimension_numbers<[1], [0], [0], [1], [0, 0, 1, 1], [], []>} : vector<256x27xbf16>, vector<27x16xbf16>, vector<256x16xf32> -> vector<256x16xf32>
    %c0_3 = arith.constant 0 : index
    %c0_4 = arith.constant 0 : index
    %3 = vector.load %arg3[%c0_3, %c0_4] : memref<1x16xf32, #tpu.memory_space<vmem>>, vector<1x16xf32>
    %4 = vector.broadcast %3 : vector<1x16xf32> to vector<256x16xf32>
    %5 = arith.addf %2, %4 : vector<256x16xf32>
    %cst_5 = arith.constant 0.000000e+00 : f32
    %6 = vector.broadcast %cst_5 : f32 to vector<256x16xf32>
    %7 = arith.maximumf %5, %6 : vector<256x16xf32>
    %8 = arith.truncf %7 : vector<256x16xf32> to vector<256x16xbf16>
    %c0_6 = arith.constant 0 : index
    %c0_7 = arith.constant 0 : index
    %9 = vector.load %arg4[%c0_6, %c0_7] : memref<256x16xbf16, #tpu.memory_space<vmem>>, vector<256x16xbf16>
    tpu.vector_store %arg4[%c0_6, %c0_7], %8 {strides = array<i32>} : memref<256x16xbf16, #tpu.memory_space<vmem>>, vector<256x16xbf16>,
    return
  }
  func.func @transform_0(%arg0: i32) -> (i32, i32) {
    %c0_i32 = arith.constant 0 : i32
    %c0_i32_0 = arith.constant 0 : i32
    return %arg0, %c0_i32 : i32, i32
  }
  func.func @transform_1(%arg0: i32) -> (i32, i32) {
    %c0_i32 = arith.constant 0 : i32
    %c0_i32_0 = arith.constant 0 : i32
    %c0_i32_1 = arith.constant 0 : i32
    return %c0_i32, %c0_i32_0 : i32, i32
  }
  func.func @transform_2(%arg0: i32) -> (i32, i32) {
    %c0_i32 = arith.constant 0 : i32
    %c0_i32_0 = arith.constant 0 : i32
    %c0_i32_1 = arith.constant 0 : i32
    return %c0_i32, %c0_i32_0 : i32, i32
  }
  func.func @transform_3(%arg0: i32) -> (i32, i32) {
    %c0_i32 = arith.constant 0 : i32
    %c0_i32_0 = arith.constant 0 : i32
    return %arg0, %c0_i32 : i32, i32
  }
}

module attributes {stable_mosaic.version = 11 : i64} {
  func.func @_matmul_bias_act_kernel(%arg0: i32, %arg1: memref<64x144xbf16, #tpu.memory_space<vmem>>, %arg2: memref<144x32xbf16, #tpu.memory_space<vmem>>, %arg3: memref<1x32xf32, #tpu.memory_space<vmem>>, %arg4: memref<64x32xbf16, #tpu.memory_space<vmem>>) attributes {dimension_semantics = [#tpu.dimension_semantics<parallel>], iteration_bounds = array<i64: 2>, scalar_prefetch = 0 : i64, scratch_operands = 0 : i64, tpu.core_type = #tpu.core_type<tc>, window_params = [{transform_indices = @transform_0, window_bounds = array<i64: 64, 144>}, {pipeline_mode = #tpu.pipeline_mode<synchronous>, transform_indices = @transform_1, window_bounds = array<i64: 144, 32>}, {pipeline_mode = #tpu.pipeline_mode<synchronous>, transform_indices = @transform_2, window_bounds = array<i64: 1, 32>}, {transform_indices = @transform_3, window_bounds = array<i64: 64, 32>}]} {
    %c0 = arith.constant 0 : index
    %c0_0 = arith.constant 0 : index
    %0 = vector.load %arg1[%c0, %c0_0] : memref<64x144xbf16, #tpu.memory_space<vmem>>, vector<64x144xbf16>
    %c0_1 = arith.constant 0 : index
    %c0_2 = arith.constant 0 : index
    %1 = vector.load %arg2[%c0_1, %c0_2] : memref<144x32xbf16, #tpu.memory_space<vmem>>, vector<144x32xbf16>
    %cst = arith.constant dense<0.000000e+00> : vector<64x32xf32>
    %2 = tpu.matmul %0, %1, %cst {dimension_numbers = #tpu.dot_dimension_numbers<[1], [0], [0], [1], [0, 0, 1, 1], [], []>} : vector<64x144xbf16>, vector<144x32xbf16>, vector<64x32xf32> -> vector<64x32xf32>
    %c0_3 = arith.constant 0 : index
    %c0_4 = arith.constant 0 : index
    %3 = vector.load %arg3[%c0_3, %c0_4] : memref<1x32xf32, #tpu.memory_space<vmem>>, vector<1x32xf32>
    %4 = vector.broadcast %3 : vector<1x32xf32> to vector<64x32xf32>
    %5 = arith.addf %2, %4 : vector<64x32xf32>
    %cst_5 = arith.constant 0.000000e+00 : f32
    %6 = vector.broadcast %cst_5 : f32 to vector<64x32xf32>
    %7 = arith.maximumf %5, %6 : vector<64x32xf32>
    %8 = arith.truncf %7 : vector<64x32xf32> to vector<64x32xbf16>
    %c0_6 = arith.constant 0 : index
    %c0_7 = arith.constant 0 : index
    %9 = vector.load %arg4[%c0_6, %c0_7] : memref<64x32xbf16, #tpu.memory_space<vmem>>, vector<64x32xbf16>
    tpu.vector_store %arg4[%c0_6, %c0_7], %8 {strides = array<i32>} : memref<64x32xbf16, #tpu.memory_space<vmem>>, vector<64x32xbf16>,
    return
  }
  func.func @transform_0(%arg0: i32) -> (i32, i32) {
    %c0_i32 = arith.constant 0 : i32
    %c0_i32_0 = arith.constant 0 : i32
    return %arg0, %c0_i32 : i32, i32
  }
  func.func @transform_1(%arg0: i32) -> (i32, i32) {
    %c0_i32 = arith.constant 0 : i32
    %c0_i32_0 = arith.constant 0 : i32
    %c0_i32_1 = arith.constant 0 : i32
    return %c0_i32, %c0_i32_0 : i32, i32
  }
  func.func @transform_2(%arg0: i32) -> (i32, i32) {
    %c0_i32 = arith.constant 0 : i32
    %c0_i32_0 = arith.constant 0 : i32
    %c0_i32_1 = arith.constant 0 : i32
    return %c0_i32, %c0_i32_0 : i32, i32
  }
  func.func @transform_3(%arg0: i32) -> (i32, i32) {
    %c0_i32 = arith.constant 0 : i32
    %c0_i32_0 = arith.constant 0 : i32
    return %arg0, %c0_i32 : i32, i32
  }
}

module attributes {stable_mosaic.version = 11 : i64} {
  func.func @_matmul_bias_act_kernel(%arg0: i32, %arg1: memref<16x288xbf16, #tpu.memory_space<vmem>>, %arg2: memref<288x64xbf16, #tpu.memory_space<vmem>>, %arg3: memref<1x64xf32, #tpu.memory_space<vmem>>, %arg4: memref<16x64xbf16, #tpu.memory_space<vmem>>) attributes {dimension_semantics = [#tpu.dimension_semantics<parallel>], iteration_bounds = array<i64: 2>, scalar_prefetch = 0 : i64, scratch_operands = 0 : i64, tpu.core_type = #tpu.core_type<tc>, window_params = [{transform_indices = @transform_0, window_bounds = array<i64: 16, 288>}, {pipeline_mode = #tpu.pipeline_mode<synchronous>, transform_indices = @transform_1, window_bounds = array<i64: 288, 64>}, {pipeline_mode = #tpu.pipeline_mode<synchronous>, transform_indices = @transform_2, window_bounds = array<i64: 1, 64>}, {transform_indices = @transform_3, window_bounds = array<i64: 16, 64>}]} {
    %c0 = arith.constant 0 : index
    %c0_0 = arith.constant 0 : index
    %0 = vector.load %arg1[%c0, %c0_0] : memref<16x288xbf16, #tpu.memory_space<vmem>>, vector<16x288xbf16>
    %c0_1 = arith.constant 0 : index
    %c0_2 = arith.constant 0 : index
    %1 = vector.load %arg2[%c0_1, %c0_2] : memref<288x64xbf16, #tpu.memory_space<vmem>>, vector<288x64xbf16>
    %cst = arith.constant dense<0.000000e+00> : vector<16x64xf32>
    %2 = tpu.matmul %0, %1, %cst {dimension_numbers = #tpu.dot_dimension_numbers<[1], [0], [0], [1], [0, 0, 1, 1], [], []>} : vector<16x288xbf16>, vector<288x64xbf16>, vector<16x64xf32> -> vector<16x64xf32>
    %c0_3 = arith.constant 0 : index
    %c0_4 = arith.constant 0 : index
    %3 = vector.load %arg3[%c0_3, %c0_4] : memref<1x64xf32, #tpu.memory_space<vmem>>, vector<1x64xf32>
    %4 = vector.broadcast %3 : vector<1x64xf32> to vector<16x64xf32>
    %5 = arith.addf %2, %4 : vector<16x64xf32>
    %cst_5 = arith.constant 0.000000e+00 : f32
    %6 = vector.broadcast %cst_5 : f32 to vector<16x64xf32>
    %7 = arith.maximumf %5, %6 : vector<16x64xf32>
    %8 = arith.truncf %7 : vector<16x64xf32> to vector<16x64xbf16>
    %c0_6 = arith.constant 0 : index
    %c0_7 = arith.constant 0 : index
    %9 = vector.load %arg4[%c0_6, %c0_7] : memref<16x64xbf16, #tpu.memory_space<vmem>>, vector<16x64xbf16>
    tpu.vector_store %arg4[%c0_6, %c0_7], %8 {strides = array<i32>} : memref<16x64xbf16, #tpu.memory_space<vmem>>, vector<16x64xbf16>,
    return
  }
  func.func @transform_0(%arg0: i32) -> (i32, i32) {
    %c0_i32 = arith.constant 0 : i32
    %c0_i32_0 = arith.constant 0 : i32
    return %arg0, %c0_i32 : i32, i32
  }
  func.func @transform_1(%arg0: i32) -> (i32, i32) {
    %c0_i32 = arith.constant 0 : i32
    %c0_i32_0 = arith.constant 0 : i32
    %c0_i32_1 = arith.constant 0 : i32
    return %c0_i32, %c0_i32_0 : i32, i32
  }
  func.func @transform_2(%arg0: i32) -> (i32, i32) {
    %c0_i32 = arith.constant 0 : i32
    %c0_i32_0 = arith.constant 0 : i32
    %c0_i32_1 = arith.constant 0 : i32
    return %c0_i32, %c0_i32_0 : i32, i32
  }
  func.func @transform_3(%arg0: i32) -> (i32, i32) {
    %c0_i32 = arith.constant 0 : i32
    %c0_i32_0 = arith.constant 0 : i32
    return %arg0, %c0_i32 : i32, i32
  }
}

module attributes {stable_mosaic.version = 11 : i64} {
  func.func @_matmul_bias_act_kernel(%arg0: i32, %arg1: memref<16x64xbf16, #tpu.memory_space<vmem>>, %arg2: memref<64x32xbf16, #tpu.memory_space<vmem>>, %arg3: memref<1x32xf32, #tpu.memory_space<vmem>>, %arg4: memref<16x32xbf16, #tpu.memory_space<vmem>>) attributes {dimension_semantics = [#tpu.dimension_semantics<parallel>], iteration_bounds = array<i64: 2>, scalar_prefetch = 0 : i64, scratch_operands = 0 : i64, tpu.core_type = #tpu.core_type<tc>, window_params = [{transform_indices = @transform_0, window_bounds = array<i64: 16, 64>}, {pipeline_mode = #tpu.pipeline_mode<synchronous>, transform_indices = @transform_1, window_bounds = array<i64: 64, 32>}, {pipeline_mode = #tpu.pipeline_mode<synchronous>, transform_indices = @transform_2, window_bounds = array<i64: 1, 32>}, {transform_indices = @transform_3, window_bounds = array<i64: 16, 32>}]} {
    %c0 = arith.constant 0 : index
    %c0_0 = arith.constant 0 : index
    %0 = vector.load %arg1[%c0, %c0_0] : memref<16x64xbf16, #tpu.memory_space<vmem>>, vector<16x64xbf16>
    %c0_1 = arith.constant 0 : index
    %c0_2 = arith.constant 0 : index
    %1 = vector.load %arg2[%c0_1, %c0_2] : memref<64x32xbf16, #tpu.memory_space<vmem>>, vector<64x32xbf16>
    %cst = arith.constant dense<0.000000e+00> : vector<16x32xf32>
    %2 = tpu.matmul %0, %1, %cst {dimension_numbers = #tpu.dot_dimension_numbers<[1], [0], [0], [1], [0, 0, 1, 1], [], []>} : vector<16x64xbf16>, vector<64x32xbf16>, vector<16x32xf32> -> vector<16x32xf32>
    %c0_3 = arith.constant 0 : index
    %c0_4 = arith.constant 0 : index
    %3 = vector.load %arg3[%c0_3, %c0_4] : memref<1x32xf32, #tpu.memory_space<vmem>>, vector<1x32xf32>
    %4 = vector.broadcast %3 : vector<1x32xf32> to vector<16x32xf32>
    %5 = arith.addf %2, %4 : vector<16x32xf32>
    %6 = arith.truncf %5 : vector<16x32xf32> to vector<16x32xbf16>
    %c0_5 = arith.constant 0 : index
    %c0_6 = arith.constant 0 : index
    %7 = vector.load %arg4[%c0_5, %c0_6] : memref<16x32xbf16, #tpu.memory_space<vmem>>, vector<16x32xbf16>
    tpu.vector_store %arg4[%c0_5, %c0_6], %6 {strides = array<i32>} : memref<16x32xbf16, #tpu.memory_space<vmem>>, vector<16x32xbf16>,
    return
  }
  func.func @transform_0(%arg0: i32) -> (i32, i32) {
    %c0_i32 = arith.constant 0 : i32
    %c0_i32_0 = arith.constant 0 : i32
    return %arg0, %c0_i32 : i32, i32
  }
  func.func @transform_1(%arg0: i32) -> (i32, i32) {
    %c0_i32 = arith.constant 0 : i32
    %c0_i32_0 = arith.constant 0 : i32
    %c0_i32_1 = arith.constant 0 : i32
    return %c0_i32, %c0_i32_0 : i32, i32
  }
  func.func @transform_2(%arg0: i32) -> (i32, i32) {
    %c0_i32 = arith.constant 0 : i32
    %c0_i32_0 = arith.constant 0 : i32
    %c0_i32_1 = arith.constant 0 : i32
    return %c0_i32, %c0_i32_0 : i32, i32
  }
  func.func @transform_3(%arg0: i32) -> (i32, i32) {
    %c0_i32 = arith.constant 0 : i32
    %c0_i32_0 = arith.constant 0 : i32
    return %arg0, %c0_i32 : i32, i32
  }
}

module attributes {stable_mosaic.version = 11 : i64} {
  func.func @_matmul_bias_act_kernel(%arg0: i32, %arg1: memref<64x32xbf16, #tpu.memory_space<vmem>>, %arg2: memref<32x32xbf16, #tpu.memory_space<vmem>>, %arg3: memref<1x32xf32, #tpu.memory_space<vmem>>, %arg4: memref<64x32xbf16, #tpu.memory_space<vmem>>, %arg5: memref<64x32xbf16, #tpu.memory_space<vmem>>) attributes {dimension_semantics = [#tpu.dimension_semantics<parallel>], iteration_bounds = array<i64: 2>, scalar_prefetch = 0 : i64, scratch_operands = 0 : i64, tpu.core_type = #tpu.core_type<tc>, window_params = [{transform_indices = @transform_0, window_bounds = array<i64: 64, 32>}, {pipeline_mode = #tpu.pipeline_mode<synchronous>, transform_indices = @transform_1, window_bounds = array<i64: 32, 32>}, {pipeline_mode = #tpu.pipeline_mode<synchronous>, transform_indices = @transform_2, window_bounds = array<i64: 1, 32>}, {transform_indices = @transform_3, window_bounds = array<i64: 64, 32>}, {transform_indices = @transform_4, window_bounds = array<i64: 64, 32>}]} {
    %c0 = arith.constant 0 : index
    %c0_0 = arith.constant 0 : index
    %0 = vector.load %arg1[%c0, %c0_0] : memref<64x32xbf16, #tpu.memory_space<vmem>>, vector<64x32xbf16>
    %c0_1 = arith.constant 0 : index
    %c0_2 = arith.constant 0 : index
    %1 = vector.load %arg2[%c0_1, %c0_2] : memref<32x32xbf16, #tpu.memory_space<vmem>>, vector<32x32xbf16>
    %cst = arith.constant dense<0.000000e+00> : vector<64x32xf32>
    %2 = tpu.matmul %0, %1, %cst {dimension_numbers = #tpu.dot_dimension_numbers<[1], [0], [0], [1], [0, 0, 1, 1], [], []>} : vector<64x32xbf16>, vector<32x32xbf16>, vector<64x32xf32> -> vector<64x32xf32>
    %c0_3 = arith.constant 0 : index
    %c0_4 = arith.constant 0 : index
    %3 = vector.load %arg3[%c0_3, %c0_4] : memref<1x32xf32, #tpu.memory_space<vmem>>, vector<1x32xf32>
    %4 = vector.broadcast %3 : vector<1x32xf32> to vector<64x32xf32>
    %5 = arith.addf %2, %4 : vector<64x32xf32>
    %c0_5 = arith.constant 0 : index
    %c0_6 = arith.constant 0 : index
    %6 = vector.load %arg4[%c0_5, %c0_6] : memref<64x32xbf16, #tpu.memory_space<vmem>>, vector<64x32xbf16>
    %7 = arith.extf %6 : vector<64x32xbf16> to vector<64x32xf32>
    %8 = arith.addf %5, %7 : vector<64x32xf32>
    %9 = arith.truncf %8 : vector<64x32xf32> to vector<64x32xbf16>
    %c0_7 = arith.constant 0 : index
    %c0_8 = arith.constant 0 : index
    %10 = vector.load %arg5[%c0_7, %c0_8] : memref<64x32xbf16, #tpu.memory_space<vmem>>, vector<64x32xbf16>
    tpu.vector_store %arg5[%c0_7, %c0_8], %9 {strides = array<i32>} : memref<64x32xbf16, #tpu.memory_space<vmem>>, vector<64x32xbf16>,
    return
  }
  func.func @transform_0(%arg0: i32) -> (i32, i32) {
    %c0_i32 = arith.constant 0 : i32
    %c0_i32_0 = arith.constant 0 : i32
    return %arg0, %c0_i32 : i32, i32
  }
  func.func @transform_1(%arg0: i32) -> (i32, i32) {
    %c0_i32 = arith.constant 0 : i32
    %c0_i32_0 = arith.constant 0 : i32
    %c0_i32_1 = arith.constant 0 : i32
    return %c0_i32, %c0_i32_0 : i32, i32
  }
  func.func @transform_2(%arg0: i32) -> (i32, i32) {
    %c0_i32 = arith.constant 0 : i32
    %c0_i32_0 = arith.constant 0 : i32
    %c0_i32_1 = arith.constant 0 : i32
    return %c0_i32, %c0_i32_0 : i32, i32
  }
  func.func @transform_3(%arg0: i32) -> (i32, i32) {
    %c0_i32 = arith.constant 0 : i32
    %c0_i32_0 = arith.constant 0 : i32
    return %arg0, %c0_i32 : i32, i32
  }
  func.func @transform_4(%arg0: i32) -> (i32, i32) {
    %c0_i32 = arith.constant 0 : i32
    %c0_i32_0 = arith.constant 0 : i32
    return %arg0, %c0_i32 : i32, i32
  }
}

module attributes {stable_mosaic.version = 11 : i64} {
  func.func @_matmul_bias_act_kernel(%arg0: i32, %arg1: memref<256x16xbf16, #tpu.memory_space<vmem>>, %arg2: memref<16x32xbf16, #tpu.memory_space<vmem>>, %arg3: memref<1x32xf32, #tpu.memory_space<vmem>>, %arg4: memref<256x32xbf16, #tpu.memory_space<vmem>>, %arg5: memref<256x32xbf16, #tpu.memory_space<vmem>>) attributes {dimension_semantics = [#tpu.dimension_semantics<parallel>], iteration_bounds = array<i64: 2>, scalar_prefetch = 0 : i64, scratch_operands = 0 : i64, tpu.core_type = #tpu.core_type<tc>, window_params = [{transform_indices = @transform_0, window_bounds = array<i64: 256, 16>}, {pipeline_mode = #tpu.pipeline_mode<synchronous>, transform_indices = @transform_1, window_bounds = array<i64: 16, 32>}, {pipeline_mode = #tpu.pipeline_mode<synchronous>, transform_indices = @transform_2, window_bounds = array<i64: 1, 32>}, {transform_indices = @transform_3, window_bounds = array<i64: 256, 32>}, {transform_indices = @transform_4, window_bounds = array<i64: 256, 32>}]} {
    %c0 = arith.constant 0 : index
    %c0_0 = arith.constant 0 : index
    %0 = vector.load %arg1[%c0, %c0_0] : memref<256x16xbf16, #tpu.memory_space<vmem>>, vector<256x16xbf16>
    %c0_1 = arith.constant 0 : index
    %c0_2 = arith.constant 0 : index
    %1 = vector.load %arg2[%c0_1, %c0_2] : memref<16x32xbf16, #tpu.memory_space<vmem>>, vector<16x32xbf16>
    %cst = arith.constant dense<0.000000e+00> : vector<256x32xf32>
    %2 = tpu.matmul %0, %1, %cst {dimension_numbers = #tpu.dot_dimension_numbers<[1], [0], [0], [1], [0, 0, 1, 1], [], []>} : vector<256x16xbf16>, vector<16x32xbf16>, vector<256x32xf32> -> vector<256x32xf32>
    %c0_3 = arith.constant 0 : index
    %c0_4 = arith.constant 0 : index
    %3 = vector.load %arg3[%c0_3, %c0_4] : memref<1x32xf32, #tpu.memory_space<vmem>>, vector<1x32xf32>
    %4 = vector.broadcast %3 : vector<1x32xf32> to vector<256x32xf32>
    %5 = arith.addf %2, %4 : vector<256x32xf32>
    %c0_5 = arith.constant 0 : index
    %c0_6 = arith.constant 0 : index
    %6 = vector.load %arg4[%c0_5, %c0_6] : memref<256x32xbf16, #tpu.memory_space<vmem>>, vector<256x32xbf16>
    %7 = arith.extf %6 : vector<256x32xbf16> to vector<256x32xf32>
    %8 = arith.addf %5, %7 : vector<256x32xf32>
    %9 = arith.truncf %8 : vector<256x32xf32> to vector<256x32xbf16>
    %c0_7 = arith.constant 0 : index
    %c0_8 = arith.constant 0 : index
    %10 = vector.load %arg5[%c0_7, %c0_8] : memref<256x32xbf16, #tpu.memory_space<vmem>>, vector<256x32xbf16>
    tpu.vector_store %arg5[%c0_7, %c0_8], %9 {strides = array<i32>} : memref<256x32xbf16, #tpu.memory_space<vmem>>, vector<256x32xbf16>,
    return
  }
  func.func @transform_0(%arg0: i32) -> (i32, i32) {
    %c0_i32 = arith.constant 0 : i32
    %c0_i32_0 = arith.constant 0 : i32
    return %arg0, %c0_i32 : i32, i32
  }
  func.func @transform_1(%arg0: i32) -> (i32, i32) {
    %c0_i32 = arith.constant 0 : i32
    %c0_i32_0 = arith.constant 0 : i32
    %c0_i32_1 = arith.constant 0 : i32
    return %c0_i32, %c0_i32_0 : i32, i32
  }
  func.func @transform_2(%arg0: i32) -> (i32, i32) {
    %c0_i32 = arith.constant 0 : i32
    %c0_i32_0 = arith.constant 0 : i32
    %c0_i32_1 = arith.constant 0 : i32
    return %c0_i32, %c0_i32_0 : i32, i32
  }
  func.func @transform_3(%arg0: i32) -> (i32, i32) {
    %c0_i32 = arith.constant 0 : i32
    %c0_i32_0 = arith.constant 0 : i32
    return %arg0, %c0_i32 : i32, i32
  }
  func.func @transform_4(%arg0: i32) -> (i32, i32) {
    %c0_i32 = arith.constant 0 : i32
    %c0_i32_0 = arith.constant 0 : i32
    return %arg0, %c0_i32 : i32, i32
  }
}

module attributes {stable_mosaic.version = 11 : i64} {
  func.func @_head_postprocess_kernel(%arg0: i32, %arg1: memref<336x288xbf16, #tpu.memory_space<vmem>>, %arg2: memref<288x32xbf16, #tpu.memory_space<vmem>>, %arg3: memref<1x32xf32, #tpu.memory_space<vmem>>, %arg4: memref<32x36xf32, #tpu.memory_space<vmem>>, %arg5: memref<1x36xf32, #tpu.memory_space<vmem>>, %arg6: memref<32x8xf32, #tpu.memory_space<vmem>>, %arg7: memref<336x8xf32, #tpu.memory_space<vmem>>, %arg8: memref<336x36xf32, #tpu.memory_space<vmem>>, %arg9: memref<336x8xf32, #tpu.memory_space<vmem>>) attributes {dimension_semantics = [#tpu.dimension_semantics<parallel>], iteration_bounds = array<i64: 2>, scalar_prefetch = 0 : i64, scratch_operands = 0 : i64, tpu.core_type = #tpu.core_type<tc>, window_params = [{transform_indices = @transform_0, window_bounds = array<i64: 336, 288>}, {pipeline_mode = #tpu.pipeline_mode<synchronous>, transform_indices = @transform_1, window_bounds = array<i64: 288, 32>}, {pipeline_mode = #tpu.pipeline_mode<synchronous>, transform_indices = @transform_2, window_bounds = array<i64: 1, 32>}, {pipeline_mode = #tpu.pipeline_mode<synchronous>, transform_indices = @transform_3, window_bounds = array<i64: 32, 36>}, {pipeline_mode = #tpu.pipeline_mode<synchronous>, transform_indices = @transform_4, window_bounds = array<i64: 1, 36>}, {pipeline_mode = #tpu.pipeline_mode<synchronous>, transform_indices = @transform_5, window_bounds = array<i64: 32, 8>}, {transform_indices = @transform_6, window_bounds = array<i64: 336, 8>}, {transform_indices = @transform_7, window_bounds = array<i64: 336, 36>}, {transform_indices = @transform_8, window_bounds = array<i64: 336, 8>}]} {
    %c0 = arith.constant 0 : index
    %c0_0 = arith.constant 0 : index
    %0 = vector.load %arg1[%c0, %c0_0] : memref<336x288xbf16, #tpu.memory_space<vmem>>, vector<336x288xbf16>
    %c0_1 = arith.constant 0 : index
    %c0_2 = arith.constant 0 : index
    %1 = vector.load %arg2[%c0_1, %c0_2] : memref<288x32xbf16, #tpu.memory_space<vmem>>, vector<288x32xbf16>
    %cst = arith.constant dense<0.000000e+00> : vector<336x32xf32>
    %2 = tpu.matmul %0, %1, %cst {dimension_numbers = #tpu.dot_dimension_numbers<[1], [0], [0], [1], [0, 0, 1, 1], [], []>} : vector<336x288xbf16>, vector<288x32xbf16>, vector<336x32xf32> -> vector<336x32xf32>
    %c0_3 = arith.constant 0 : index
    %c0_4 = arith.constant 0 : index
    %3 = vector.load %arg3[%c0_3, %c0_4] : memref<1x32xf32, #tpu.memory_space<vmem>>, vector<1x32xf32>
    %4 = vector.broadcast %3 : vector<1x32xf32> to vector<336x32xf32>
    %5 = arith.addf %2, %4 : vector<336x32xf32>
    %cst_5 = arith.constant 0.000000e+00 : f32
    %6 = vector.broadcast %cst_5 : f32 to vector<336x32xf32>
    %7 = arith.maximumf %5, %6 : vector<336x32xf32>
    %c0_6 = arith.constant 0 : index
    %c0_7 = arith.constant 0 : index
    %8 = vector.load %arg4[%c0_6, %c0_7] : memref<32x36xf32, #tpu.memory_space<vmem>>, vector<32x36xf32>
    %cst_8 = arith.constant dense<0.000000e+00> : vector<336x36xf32>
    %9 = tpu.matmul %7, %8, %cst_8 {dimension_numbers = #tpu.dot_dimension_numbers<[1], [0], [0], [1], [0, 0, 1, 1], [], []>} : vector<336x32xf32>, vector<32x36xf32>, vector<336x36xf32> -> vector<336x36xf32>
    %c0_9 = arith.constant 0 : index
    %c0_10 = arith.constant 0 : index
    %10 = vector.load %arg5[%c0_9, %c0_10] : memref<1x36xf32, #tpu.memory_space<vmem>>, vector<1x36xf32>
    %11 = vector.broadcast %10 : vector<1x36xf32> to vector<336x36xf32>
    %12 = arith.addf %9, %11 : vector<336x36xf32>
    %c0_11 = arith.constant 0 : index
    %c0_12 = arith.constant 0 : index
    %13 = vector.load %arg8[%c0_11, %c0_12] : memref<336x36xf32, #tpu.memory_space<vmem>>, vector<336x36xf32>
    tpu.vector_store %arg8[%c0_11, %c0_12], %12 {strides = array<i32>} : memref<336x36xf32, #tpu.memory_space<vmem>>, vector<336x36xf32>,
    %14 = vector.extract_strided_slice %12 {offsets = [0, 0], sizes = [336, 4], strides = [1, 1]} : vector<336x36xf32> to vector<336x4xf32>
    %15 = arith.negf %14 : vector<336x4xf32>
    %16 = math.exp %15 : vector<336x4xf32>
    %cst_13 = arith.constant 1.000000e+00 : f32
    %17 = vector.broadcast %cst_13 : f32 to vector<336x4xf32>
    %18 = arith.addf %17, %16 : vector<336x4xf32>
    %19 = arith.divf %17, %18 : vector<336x4xf32>
    %20 = vector.extract_strided_slice %12 {offsets = [0, 4], sizes = [336, 32], strides = [1, 1]} : vector<336x36xf32> to vector<336x32xf32>
    %cst_14 = arith.constant dense<0xFF800000> : vector<336xf32>
    %21 = vector.multi_reduction <maximumf>, %20, %cst_14 [1] : vector<336x32xf32> to vector<336xf32>
    %22 = vector.shape_cast %21 : vector<336xf32> to vector<336x1xf32>
    %23 = vector.broadcast %22 : vector<336x1xf32> to vector<336x32xf32>
    %24 = arith.subf %20, %23 : vector<336x32xf32>
    %25 = math.exp %24 : vector<336x32xf32>
    %c0_15 = arith.constant 0 : index
    %c0_16 = arith.constant 0 : index
    %26 = vector.load %arg6[%c0_15, %c0_16] : memref<32x8xf32, #tpu.memory_space<vmem>>, vector<32x8xf32>
    %cst_17 = arith.constant dense<0.000000e+00> : vector<336x8xf32>
    %27 = tpu.matmul %25, %26, %cst_17 {dimension_numbers = #tpu.dot_dimension_numbers<[1], [0], [0], [1], [0, 0, 1, 1], [], []>} : vector<336x32xf32>, vector<32x8xf32>, vector<336x8xf32> -> vector<336x8xf32>
    %28 = vector.extract_strided_slice %27 {offsets = [0, 4], sizes = [336, 4], strides = [1, 1]} : vector<336x8xf32> to vector<336x4xf32>
    %29 = vector.extract_strided_slice %27 {offsets = [0, 0], sizes = [336, 4], strides = [1, 1]} : vector<336x8xf32> to vector<336x4xf32>
    %30 = arith.divf %28, %29 : vector<336x4xf32>
    %c0_18 = arith.constant 0 : index
    %c0_19 = arith.constant 0 : index
    %31 = vector.load %arg7[%c0_18, %c0_19] : memref<336x8xf32, #tpu.memory_space<vmem>>, vector<336x8xf32>
    %32 = vector.extract_strided_slice %31 {offsets = [0, 4], sizes = [336, 4], strides = [1, 1]} : vector<336x8xf32> to vector<336x4xf32>
    %33 = arith.mulf %30, %32 : vector<336x4xf32>
    %34 = vector.extract_strided_slice %31 {offsets = [0, 0], sizes = [336, 2], strides = [1, 1]} : vector<336x8xf32> to vector<336x2xf32>
    %35 = vector.extract_strided_slice %33 {offsets = [0, 0], sizes = [336, 2], strides = [1, 1]} : vector<336x4xf32> to vector<336x2xf32>
    %36 = arith.subf %34, %35 : vector<336x2xf32>
    %37 = vector.extract_strided_slice %31 {offsets = [0, 2], sizes = [336, 2], strides = [1, 1]} : vector<336x8xf32> to vector<336x2xf32>
    %38 = vector.extract_strided_slice %33 {offsets = [0, 2], sizes = [336, 2], strides = [1, 1]} : vector<336x4xf32> to vector<336x2xf32>
    %39 = arith.addf %37, %38 : vector<336x2xf32>
    %40 = tpu.concatenate %36, %39 in 1 : vector<336x2xf32>, vector<336x2xf32> -> vector<336x4xf32>
    %41 = tpu.concatenate %19, %40 in 1 : vector<336x4xf32>, vector<336x4xf32> -> vector<336x8xf32>
    %c0_20 = arith.constant 0 : index
    %c0_21 = arith.constant 0 : index
    %42 = vector.load %arg9[%c0_20, %c0_21] : memref<336x8xf32, #tpu.memory_space<vmem>>, vector<336x8xf32>
    tpu.vector_store %arg9[%c0_20, %c0_21], %41 {strides = array<i32>} : memref<336x8xf32, #tpu.memory_space<vmem>>, vector<336x8xf32>,
    return
  }
  func.func @transform_0(%arg0: i32) -> (i32, i32) {
    %c0_i32 = arith.constant 0 : i32
    %c0_i32_0 = arith.constant 0 : i32
    return %arg0, %c0_i32 : i32, i32
  }
  func.func @transform_1(%arg0: i32) -> (i32, i32) {
    %c0_i32 = arith.constant 0 : i32
    %c0_i32_0 = arith.constant 0 : i32
    %c0_i32_1 = arith.constant 0 : i32
    return %c0_i32, %c0_i32_0 : i32, i32
  }
  func.func @transform_2(%arg0: i32) -> (i32, i32) {
    %c0_i32 = arith.constant 0 : i32
    %c0_i32_0 = arith.constant 0 : i32
    %c0_i32_1 = arith.constant 0 : i32
    return %c0_i32, %c0_i32_0 : i32, i32
  }
  func.func @transform_3(%arg0: i32) -> (i32, i32) {
    %c0_i32 = arith.constant 0 : i32
    %c0_i32_0 = arith.constant 0 : i32
    %c0_i32_1 = arith.constant 0 : i32
    return %c0_i32, %c0_i32_0 : i32, i32
  }
  func.func @transform_4(%arg0: i32) -> (i32, i32) {
    %c0_i32 = arith.constant 0 : i32
    %c0_i32_0 = arith.constant 0 : i32
    %c0_i32_1 = arith.constant 0 : i32
    return %c0_i32, %c0_i32_0 : i32, i32
  }
  func.func @transform_5(%arg0: i32) -> (i32, i32) {
    %c0_i32 = arith.constant 0 : i32
    %c0_i32_0 = arith.constant 0 : i32
    %c0_i32_1 = arith.constant 0 : i32
    return %c0_i32, %c0_i32_0 : i32, i32
  }
  func.func @transform_6(%arg0: i32) -> (i32, i32) {
    %c0_i32 = arith.constant 0 : i32
    %c0_i32_0 = arith.constant 0 : i32
    return %arg0, %c0_i32 : i32, i32
  }
  func.func @transform_7(%arg0: i32) -> (i32, i32) {
    %c0_i32 = arith.constant 0 : i32
    %c0_i32_0 = arith.constant 0 : i32
    return %arg0, %c0_i32 : i32, i32
  }
  func.func @transform_8(%arg0: i32) -> (i32, i32) {
    %c0_i32 = arith.constant 0 : i32
    %c0_i32_0 = arith.constant 0 : i32
    return %arg0, %c0_i32 : i32, i32
  }
}

</mosaic_0001>

<llo_original>
// kernel: nanodet_plus_forward.7
$region0: #{nanodet_plus_forward.7}
  #allocation0 [shape = 'u32[]', space=smem, size = 0x4, offset = 0x4, fixed_abs, tag = 'smem constant byte address 0x4 - core index']
  #allocation1 [shape = 'u32[144,128]{1,0:T(1,128)}', space=vmem, size = 0x12000, scoped, tag = 'internal scratch']
  %s0 = inlined_call_operand.vmem [shape: bf16[512,27], index: 0, kind: input, shape index: {}]
  %s1 = inlined_call_operand.vmem [shape: bf16[27,16], index: 1, kind: input, shape index: {}]
  %s2 = inlined_call_operand.vmem [shape: f32[1,16], index: 2, kind: input, shape index: {}]
  %s3 = inlined_call_operand.vmem [shape: bf16[512,16], index: 3, kind: output, shape index: {}]
  %s4 = sld [smem:[#allocation0]]
  $region45: #{nanodet_plus_forward.7} parent=0
    _
  %s6 = ssub.s32 1, %s4
  %s7 = scalar_select 0, %s6, %s4
  loop: start=0, step=1, limit=4
  $region2: #{nanodet_plus_forward.7} parent=0 // loop_pre_header
    _
  $region3: #{nanodet_plus_forward.7} parent=0 // loop_header
    %s9 = sphi 0, %s13
    %p10 = scmp.ge.s32.totalorder %s9, 4
    %s19 = sphi 0, %s21
    %s22 = sphi 0, %s19
    %s23 = sphi 0, %s22
    %s39 = sphi 0, %s23
    %s43 = sphi 0, %s43
    %s45 = sphi 0, %s43
    %s46 = sphi 0, %s45
    %s60 = sphi 0, %s46
    %s64 = sphi 0, %s64
    %s66 = sphi 0, %s64
    %s67 = sphi 0, %s66
    %s81 = sphi 0, %s67
    %s87 = sphi 0, %s89
    %s90 = sphi 0, %s87
    %s91 = sphi 0, %s90
    %s107 = sphi 0, %s91
  $region4: #{nanodet_plus_forward.7} parent=0 // loop_header_branch
    %12 = sbr.rel (%p10) target = $region8
  $region5: #{nanodet_plus_forward.7} parent=0 // loop_body
    %s14 = ssub.s32 %s9, 1
    %s15 = ssub.s32 %s9, 2
    %s16 = sadd.s32 %s9, 1
    %s17 = ssub.s32 %s9, %s16
    %p18 = scmp.eq.s32.totalorder %s17, 0
    %s20 = sadd.s32 %s19, 1
    %s21 = scalar_select %p18, %s19, %s20
    %p24 = pneg %p18
    %p25 = scmp.eq.s32.totalorder %s9, 1
    %p26 = por %p24, %p25
    %p27 = scmp.ne.s32.totalorder %s19, %s22
    %p28 = scmp.eq.s32.totalorder %s9, 0
    %p29 = por %p27, %p28
    %p30 = scmp.ne.s32.totalorder %s19, %s22
    %p31 = scmp.eq.s32.totalorder %s14, 1
    %p32 = por %p30, %p31
    %p33 = scmp.ne.s32.totalorder %s22, %s23
    %p34 = scmp.eq.s32.totalorder %s14, 0
    %p35 = por %p33, %p34
    %p36 = scmp.ne.s32.totalorder %s22, %s23
    %p37 = scmp.eq.s32.totalorder %s15, 1
    %p38 = por %p36, %p37
    %p40 = scmp.ne.s32.totalorder %s23, %s39
    %p41 = scmp.eq.s32.totalorder %s15, 0
    %p42 = por %p40, %p41
    %s44 = sadd.s32 %s43, 1
    %p47 = scmp.eq.s32.totalorder %s9, 1
    %p48 = scmp.ne.s32.totalorder %s43, %s45
    %p49 = scmp.eq.s32.totalorder %s9, 0
    %p50 = por %p48, %p49
    %p51 = scmp.ne.s32.totalorder %s43, %s45
    %p52 = scmp.eq.s32.totalorder %s14, 1
    %p53 = por %p51, %p52
    %p54 = scmp.ne.s32.totalorder %s45, %s46
    %p55 = scmp.eq.s32.totalorder %s14, 0
    %p56 = por %p54, %p55
    %p57 = scmp.ne.s32.totalorder %s45, %s46
    %p58 = scmp.eq.s32.totalorder %s15, 1
    %p59 = por %p57, %p58
    %p61 = scmp.ne.s32.totalorder %s46, %s60
    %p62 = scmp.eq.s32.totalorder %s15, 0
    %p63 = por %p61, %p62
    %s65 = sadd.s32 %s64, 1
    %p68 = scmp.eq.s32.totalorder %s9, 1
    %p69 = scmp.ne.s32.totalorder %s64, %s66
    %p70 = scmp.eq.s32.totalorder %s9, 0
    %p71 = por %p69, %p70
    %p72 = scmp.ne.s32.totalorder %s64, %s66
    %p73 = scmp.eq.s32.totalorder %s14, 1
    %p74 = por %p72, %p73
    %p75 = scmp.ne.s32.totalorder %s66, %s67
    %p76 = scmp.eq.s32.totalorder %s14, 0
    %p77 = por %p75, %p76
    %p78 = scmp.ne.s32.totalorder %s66, %s67
    %p79 = scmp.eq.s32.totalorder %s15, 1
    %p80 = por %p78, %p79
    %p82 = scmp.ne.s32.totalorder %s67, %s81
    %p83 = scmp.eq.s32.totalorder %s15, 0
    %p84 = por %p82, %p83
    %s85 = ssub.s32 %s9, %s16
    %p86 = scmp.eq.s32.totalorder %s85, 0
    %s88 = sadd.s32 %s87, 1
    %s89 = scalar_select %p86, %s87, %s88
    %p92 = pneg %p86
    %p93 = scmp.eq.s32.totalorder %s9, 1
    %p94 = por %p92, %p93
    %p95 = scmp.ne.s32.totalorder %s87, %s90
    %p96 = scmp.eq.s32.totalorder %s9, 0
    %p97 = por %p95, %p96
    %p98 = scmp.ne.s32.totalorder %s87, %s90
    %p99 = scmp.eq.s32.totalorder %s14, 1
    %p100 = por %p98, %p99
    %p101 = scmp.ne.s32.totalorder %s90, %s91
    %p102 = scmp.eq.s32.totalorder %s14, 0
    %p103 = por %p101, %p102
    %p104 = scmp.ne.s32.totalorder %s90, %s91
    %p105 = scmp.eq.s32.totalorder %s15, 1
    %p106 = por %p104, %p105
    %p108 = scmp.ne.s32.totalorder %s91, %s107
    %p109 = scmp.eq.s32.totalorder %s15, 0
    %p110 = por %p108, %p109
    %p111 = scmp.le.s32.totalorder 1, %s9
    %p112 = scmp.lt.s32.totalorder %s9, 3
    %p113 = pnand %p111, %p112
    %p114 = pneg %p113
    // Predicated region
    $region9: #{nanodet_plus_forward.7} parent=5 // pred_check
      _
    $region10: #{nanodet_plus_forward.7} parent=5 // pred_check_branch
      %116 = sbr.rel (%p113) target = $region12
    $region11: #{nanodet_plus_forward.7} parent=5 // pred_region
      %s117 = ssub.s32 %s9, 1
      // Predicated region
      $region13: #{nanodet_plus_forward.7} parent=11 // pred_check
        %p118 = pneg %p56
      $region14: #{nanodet_plus_forward.7} parent=11 // pred_check_branch
        %120 = sbr.rel (%p118) target = $region16
      $region15: #{nanodet_plus_forward.7} parent=11 // pred_region
        _
      $region16: #{nanodet_plus_forward.7} parent=11 // pred_fallthru
        _
      // Predicated region
      $region17: #{nanodet_plus_forward.7} parent=11 // pred_check
        %p121 = pneg %p77
      $region18: #{nanodet_plus_forward.7} parent=11 // pred_check_branch
        %123 = sbr.rel (%p121) target = $region20
      $region19: #{nanodet_plus_forward.7} parent=11 // pred_region
        _
      $region20: #{nanodet_plus_forward.7} parent=11 // pred_fallthru
        _
    $region12: #{nanodet_plus_forward.7} parent=5 // pred_fallthru
      _
    %p124 = scmp.lt.s32.totalorder %s9, 2
    // Predicated region
    $region21: #{nanodet_plus_forward.7} parent=5 // pred_check
      %p125 = pneg %p124
    $region22: #{nanodet_plus_forward.7} parent=5 // pred_check_branch
      %127 = sbr.rel (%p125) target = $region24
    $region23: #{nanodet_plus_forward.7} parent=5 // pred_region
      // Predicated region
      $region25: #{nanodet_plus_forward.7} parent=23 // pred_check
        %p128 = pneg %p29
      $region26: #{nanodet_plus_forward.7} parent=23 // pred_check_branch
        %130 = sbr.rel (%p128) target = $region28
      $region27: #{nanodet_plus_forward.7} parent=23 // pred_region
        %s131 = smul.u32 32, %s9
        %p132 = scmp.lt.s32.totalorder %s131, 63
        %s133 = scalar_select %p132, %s131, 63
        %s134 = smul.addr %s133, 4
        %s135 = scalar_lea.vmem %s0, %s134
        %s136 = smul.u32 32, %s9
      $region28: #{nanodet_plus_forward.7} parent=23 // pred_fallthru
        _
    $region24: #{nanodet_plus_forward.7} parent=5 // pred_fallthru
      _
    %p137 = scmp.le.s32.totalorder 1, %s9
    %p138 = scmp.lt.s32.totalorder %s9, 3
    %p139 = pnand %p137, %p138
    %p140 = pneg %p139
    // Predicated region
    $region29: #{nanodet_plus_forward.7} parent=5 // pred_check
      _
    $region30: #{nanodet_plus_forward.7} parent=5 // pred_check_branch
      %142 = sbr.rel (%p139) target = $region32
    $region31: #{nanodet_plus_forward.7} parent=5 // pred_region
      %s143 = ssub.s32 %s9, 1
      %s144 = smul.u32 32, %s14
      %p145 = scmp.lt.s32.totalorder %s144, 63
      %s146 = scalar_select %p145, %s144, 63
      %s147 = smul.addr %s146, 4
      %s148 = scalar_lea.vmem %s0, %s147
      %p149 = pneg %p35
      %p150 = pneg %p32
      %p151 = pneg %p56
      %p152 = pneg %p53
      %p153 = pneg %p77
      %p154 = pneg %p74
      %p155 = pneg %p103
      %p156 = pneg %p100
      %s157 = smul.u32 32, %s14
      %p158 = scmp.lt.s32.totalorder %s157, 63
      %s159 = scalar_select %p158, %s157, 63
      %s160 = smul.addr %s159, 4
      %s161 = scalar_lea.vmem %s3, %s160
      %s162 = smul.u32 32, %s14
      %p163 = scmp.lt.s32.totalorder %s162, 63
      %s164 = scalar_select %p163, %s162, 63
      %s165 = smul.addr %s164, 4
      %s166 = scalar_lea.vmem %s0, %s165
      %s167 = smul.u32 32, %s14
      %s168 = smul.u32 32, %s14
      %p169 = scmp.lt.s32.totalorder %s168, 63
      %s170 = scalar_select %p169, %s168, 63
      %s171 = smul.addr %s170, 4
      %s172 = scalar_lea.vmem %s3, %s171
      %s173 = smul.u32 32, %s14
      %v175 = vld [vmem:[%s166] sm:$0xf]
      %v176 = vld [vmem:[%s166 + $0x4] sm:$0xf]
      %v177 = vld [vmem:[%s166 + $0x8] sm:$0xf]
      %v178 = vld [vmem:[%s166 + $0xc] sm:$0xf]
      %v179 = vld [vmem:[%s166 + $0x10] sm:$0xf]
      %v180 = vld [vmem:[%s166 + $0x14] sm:$0xf]
      %v181 = vld [vmem:[%s166 + $0x18] sm:$0xf]
      %v182 = vld [vmem:[%s166 + $0x1c] sm:$0xf]
      %v183 = vld [vmem:[%s166 + $0x20] sm:$0xf]
      %v184 = vld [vmem:[%s166 + $0x24] sm:$0xf]
      %v185 = vld [vmem:[%s166 + $0x28] sm:$0xf]
      %v186 = vld [vmem:[%s166 + $0x2c] sm:$0xf]
      %v187 = vld [vmem:[%s166 + $0x30] sm:$0xf]
      %v188 = vld [vmem:[%s166 + $0x34] sm:$0xf]
      %v189 = vld [vmem:[%s166 + $0x38] sm:$0xf]
      %v190 = vld [vmem:[%s166 + $0x3c] sm:$0xf]
      %v191 = vld [vmem:[%s166 + $0x40] sm:$0xf]
      %v192 = vld [vmem:[%s166 + $0x44] sm:$0xf]
      %v193 = vld [vmem:[%s166 + $0x48] sm:$0xf]
      %v194 = vld [vmem:[%s166 + $0x4c] sm:$0xf]
      %v195 = vld [vmem:[%s166 + $0x50] sm:$0xf]
      %v196 = vld [vmem:[%s166 + $0x54] sm:$0xf]
      %v197 = vld [vmem:[%s166 + $0x58] sm:$0xf]
      %v198 = vld [vmem:[%s166 + $0x5c] sm:$0xf]
      %v199 = vld [vmem:[%s166 + $0x60] sm:$0xf]
      %v200 = vld [vmem:[%s166 + $0x64] sm:$0xf]
      %v201 = vld [vmem:[%s166 + $0x68] sm:$0xf]
      %v202 = vld [vmem:[%s166 + $0x6c] sm:$0xf]
      %v203 = vld [vmem:[%s166 + $0x70] sm:$0xf]
      %v204 = vld [vmem:[%s166 + $0x74] sm:$0xf]
      %v205 = vld [vmem:[%s166 + $0x78] sm:$0xf]
      %v206 = vld [vmem:[%s166 + $0x7c] sm:$0xf]
      %v207 = vld [vmem:[%s1] sm:$0xf]
      %v208 = vld [vmem:[%s1 + $0x4] sm:$0xf]
      %v209 = vld [vmem:[%s1 + $0x8] sm:$0xf]
      %v210 = vld [vmem:[%s1 + $0xc] sm:$0x3]
      %v211 = vld [vmem:[%s2] sm:$0x1]
      %v213 = vlaneseq
      %v214 = vshrl.u32 %v213, 7
      %v215 = vsub.s32 0, %v214
      %v216 = vrot.slane %v211, %v215
      %v250 = vunpack.c.l.b16 %v175
      %v251 = vunpack.c.l.b16 %v176
      %v252 = vunpack.c.l.b16 %v177
      %v253 = vunpack.c.l.b16 %v178
      %v254 = vunpack.c.l.b16 %v179
      %v255 = vunpack.c.l.b16 %v180
      %v256 = vunpack.c.l.b16 %v181
      %v257 = vunpack.c.l.b16 %v182
      %v258 = vunpack.c.l.b16 %v183
      %v259 = vunpack.c.l.b16 %v184
      %v260 = vunpack.c.l.b16 %v185
      %v261 = vunpack.c.l.b16 %v186
      %v262 = vunpack.c.l.b16 %v187
      %v263 = vunpack.c.l.b16 %v188
      %v264 = vunpack.c.l.b16 %v189
      %v265 = vunpack.c.l.b16 %v190
      %v266 = vunpack.c.l.b16 %v191
      %v267 = vunpack.c.l.b16 %v192
      %v268 = vunpack.c.l.b16 %v193
      %v269 = vunpack.c.l.b16 %v194
      %v270 = vunpack.c.l.b16 %v195
      %v271 = vunpack.c.l.b16 %v196
      %v272 = vunpack.c.l.b16 %v197
      %v273 = vunpack.c.l.b16 %v198
      %v274 = vunpack.c.l.b16 %v199
      %v275 = vunpack.c.l.b16 %v200
      %v276 = vunpack.c.l.b16 %v201
      %v277 = vunpack.c.l.b16 %v202
      %v278 = vunpack.c.l.b16 %v203
      %v279 = vunpack.c.l.b16 %v204
      %v280 = vunpack.c.l.b16 %v205
      %v281 = vunpack.c.l.b16 %v206
      %v282 = vpack.c.b16 %v251, %v250
      %v283 = vpack.c.b16 %v253, %v252
      %v284 = vpack.c.b16 %v255, %v254
      %v285 = vpack.c.b16 %v257, %v256
      %v286 = vpack.c.b16 %v259, %v258
      %v287 = vpack.c.b16 %v261, %v260
      %v288 = vpack.c.b16 %v263, %v262
      %v289 = vpack.c.b16 %v265, %v264
      %v290 = vpack.c.b16 %v267, %v266
      %v291 = vpack.c.b16 %v269, %v268
      %v292 = vpack.c.b16 %v271, %v270
      %v293 = vpack.c.b16 %v273, %v272
      %v294 = vpack.c.b16 %v275, %v274
      %v295 = vpack.c.b16 %v277, %v276
      %v296 = vpack.c.b16 %v279, %v278
      %v297 = vpack.c.b16 %v281, %v280
      %v302 = vunpack.c.l.b16 %v207
      %v303 = vunpack.c.l.b16 %v208
      %v304 = vunpack.c.l.b16 %v209
      %v305 = vunpack.c.l.b16 %v210
      %v306 = vpack.c.b16 %v303, %v302
      %v307 = vpack.c.b16 %v305, %v304
      %vm309 = vcmask 220160
      %v311 = vsel %vm309, %v282, 0
      %v314 = vsel %vm309, %v283, 0
      %v317 = vsel %vm309, %v284, 0
      %v320 = vsel %vm309, %v285, 0
      %v323 = vsel %vm309, %v286, 0
      %v326 = vsel %vm309, %v287, 0
      %v329 = vsel %vm309, %v288, 0
      %v332 = vsel %vm309, %v289, 0
      %v335 = vsel %vm309, %v290, 0
      %v338 = vsel %vm309, %v291, 0
      %v341 = vsel %vm309, %v292, 0
      %v344 = vsel %vm309, %v293, 0
      %v347 = vsel %vm309, %v294, 0
      %v350 = vsel %vm309, %v295, 0
      %v353 = vsel %vm309, %v296, 0
      %v356 = vsel %vm309, %v297, 0
      %vm358 = vcmask 1044480
      %vm359 = vcmask 1045504
      %v360 = vsel %vm358, 4294967295, 65535
      %v361 = vsel %vm359, %v360, 0
      %v363 = vand.u32 %v307, %v361
      %365 = vmatprep.subr.bf16.mxu0 0
      %366 = vmatpush1.bf16.msra.mxu0 0
      %367 = vmatprep.subr.bf16.mxu0 0
      %368 = vmatpush1.bf16.msra.mxu0 0
      %369 = vmatprep.subr.bf16.mxu0 0
      %370 = vmatpush1.bf16.msra.mxu0 0
      %371 = vmatprep.subr.bf16.mxu0 0
      %372 = vmatpush1.bf16.msra.mxu0 0
      %373 = vmatprep.subr.bf16.mxu0 0
      %374 = vmatpush1.bf16.msra.mxu0 0
      %375 = vmatprep.subr.bf16.mxu0 0
      %376 = vmatpush1.bf16.msra.mxu0 0
      %377 = vmatprep.subr.bf16.mxu0 0
      %378 = vmatpush1.bf16.msra.mxu0 %v363
      %379 = vmatprep.subr.bf16.mxu0 0
      %380 = vmatpush1.bf16.msra.mxu0 %v306
      %381 = vmatprep.subr.bf16.mxu0 0
      %382 = vmatpush2.bf16.msra.mxu0 0
      %383 = vmatprep.subr.bf16.mxu0 0
      %384 = vmatpush2.bf16.msra.mxu0 0
      %385 = vmatprep.subr.bf16.mxu0 0
      %386 = vmatpush2.bf16.msra.mxu0 0
      %387 = vmatprep.subr.bf16.mxu0 0
      %388 = vmatpush2.bf16.msra.mxu0 0
      %389 = vmatprep.subr.bf16.mxu0 0
      %390 = vmatpush2.bf16.msra.mxu0 0
      %391 = vmatprep.subr.bf16.mxu0 0
      %392 = vmatpush2.bf16.msra.mxu0 0
      %393 = vmatprep.subr.bf16.mxu0 0
      %394 = vmatpush2.bf16.msra.mxu0 0
      %395 = vmatprep.subr.bf16.mxu0 0
      %396 = vmatpush2.bf16.msra.mxu0 0
      %397 = vmatprep.mubr.bf16.mxu0 0
      %398 = vmatmul.mubr.bf16.gmra.mxu0 %v311
      %v399 = vpop.f32.mrf.mxu0
      %v400 = vadd.f32 %v216, %v399
      %v401 = vpop.f32.mrf.mxu0
      %v402 = vpop.f32.mrf.mxu0
      %v403 = vadd.f32 %v216, %v402
      %v404 = vpop.f32.mrf.mxu0
      %405 = vmatprep.mubr.bf16.mxu0 0
      %406 = vmatmul.mubr.bf16.gmra.mxu0 %v314
      %v407 = vpop.f32.mrf.mxu0
      %v408 = vadd.f32 %v216, %v407
      %v409 = vpop.f32.mrf.mxu0
      %v410 = vpop.f32.mrf.mxu0
      %v411 = vadd.f32 %v216, %v410
      %v412 = vpop.f32.mrf.mxu0
      %413 = vmatprep.mubr.bf16.mxu0 0
      %414 = vmatmul.mubr.bf16.gmra.mxu0 %v317
      %v415 = vpop.f32.mrf.mxu0
      %v416 = vadd.f32 %v216, %v415
      %v417 = vpop.f32.mrf.mxu0
      %v418 = vpop.f32.mrf.mxu0
      %v419 = vadd.f32 %v216, %v418
      %v420 = vpop.f32.mrf.mxu0
      %421 = vmatprep.mubr.bf16.mxu0 0
      %422 = vmatmul.mubr.bf16.gmra.mxu0 %v320
      %v423 = vpop.f32.mrf.mxu0
      %v424 = vadd.f32 %v216, %v423
      %v425 = vpop.f32.mrf.mxu0
      %v426 = vpop.f32.mrf.mxu0
      %v427 = vadd.f32 %v216, %v426
      %v428 = vpop.f32.mrf.mxu0
      %429 = vmatprep.mubr.bf16.mxu0 0
      %430 = vmatmul.mubr.bf16.gmra.mxu0 %v323
      %v431 = vpop.f32.mrf.mxu0
      %v432 = vadd.f32 %v216, %v431
      %v433 = vpop.f32.mrf.mxu0
      %v434 = vpop.f32.mrf.mxu0
      %v435 = vadd.f32 %v216, %v434
      %v436 = vpop.f32.mrf.mxu0
      %437 = vmatprep.mubr.bf16.mxu0 0
      %438 = vmatmul.mubr.bf16.gmra.mxu0 %v326
      %v439 = vpop.f32.mrf.mxu0
      %v440 = vadd.f32 %v216, %v439
      %v441 = vpop.f32.mrf.mxu0
      %v442 = vpop.f32.mrf.mxu0
      %v443 = vadd.f32 %v216, %v442
      %v444 = vpop.f32.mrf.mxu0
      %445 = vmatprep.mubr.bf16.mxu0 0
      %446 = vmatmul.mubr.bf16.gmra.mxu0 %v329
      %v447 = vpop.f32.mrf.mxu0
      %v448 = vadd.f32 %v216, %v447
      %v449 = vpop.f32.mrf.mxu0
      %v450 = vpop.f32.mrf.mxu0
      %v451 = vadd.f32 %v216, %v450
      %v452 = vpop.f32.mrf.mxu0
      %453 = vmatprep.mubr.bf16.mxu0 0
      %454 = vmatmul.mubr.bf16.gmra.mxu0 %v332
      %v455 = vpop.f32.mrf.mxu0
      %v456 = vadd.f32 %v216, %v455
      %v457 = vpop.f32.mrf.mxu0
      %v458 = vpop.f32.mrf.mxu0
      %v459 = vadd.f32 %v216, %v458
      %v460 = vpop.f32.mrf.mxu0
      %461 = vmatprep.mubr.bf16.mxu0 0
      %462 = vmatmul.mubr.bf16.gmra.mxu0 %v335
      %v463 = vpop.f32.mrf.mxu0
      %v464 = vadd.f32 %v216, %v463
      %v465 = vpop.f32.mrf.mxu0
      %v466 = vpop.f32.mrf.mxu0
      %v467 = vadd.f32 %v216, %v466
      %v468 = vpop.f32.mrf.mxu0
      %469 = vmatprep.mubr.bf16.mxu0 0
      %470 = vmatmul.mubr.bf16.gmra.mxu0 %v338
      %v471 = vpop.f32.mrf.mxu0
      %v472 = vadd.f32 %v216, %v471
      %v473 = vpop.f32.mrf.mxu0
      %v474 = vpop.f32.mrf.mxu0
      %v475 = vadd.f32 %v216, %v474
      %v476 = vpop.f32.mrf.mxu0
      %477 = vmatprep.mubr.bf16.mxu0 0
      %478 = vmatmul.mubr.bf16.gmra.mxu0 %v341
      %v479 = vpop.f32.mrf.mxu0
      %v480 = vadd.f32 %v216, %v479
      %v481 = vpop.f32.mrf.mxu0
      %v482 = vpop.f32.mrf.mxu0
      %v483 = vadd.f32 %v216, %v482
      %v484 = vpop.f32.mrf.mxu0
      %485 = vmatprep.mubr.bf16.mxu0 0
      %486 = vmatmul.mubr.bf16.gmra.mxu0 %v344
      %v487 = vpop.f32.mrf.mxu0
      %v488 = vadd.f32 %v216, %v487
      %v489 = vpop.f32.mrf.mxu0
      %v490 = vpop.f32.mrf.mxu0
      %v491 = vadd.f32 %v216, %v490
      %v492 = vpop.f32.mrf.mxu0
      %493 = vmatprep.mubr.bf16.mxu0 0
      %494 = vmatmul.mubr.bf16.gmra.mxu0 %v347
      %v495 = vpop.f32.mrf.mxu0
      %v496 = vadd.f32 %v216, %v495
      %v497 = vpop.f32.mrf.mxu0
      %v498 = vpop.f32.mrf.mxu0
      %v499 = vadd.f32 %v216, %v498
      %v500 = vpop.f32.mrf.mxu0
      %501 = vmatprep.mubr.bf16.mxu0 0
      %502 = vmatmul.mubr.bf16.gmra.mxu0 %v350
      %v503 = vpop.f32.mrf.mxu0
      %v504 = vadd.f32 %v216, %v503
      %v505 = vpop.f32.mrf.mxu0
      %v506 = vpop.f32.mrf.mxu0
      %v507 = vadd.f32 %v216, %v506
      %v508 = vpop.f32.mrf.mxu0
      %509 = vmatprep.mubr.bf16.mxu0 0
      %510 = vmatmul.mubr.bf16.gmra.mxu0 %v353
      %v511 = vpop.f32.mrf.mxu0
      %v512 = vadd.f32 %v216, %v511
      %v513 = vpop.f32.mrf.mxu0
      %v514 = vpop.f32.mrf.mxu0
      %v515 = vadd.f32 %v216, %v514
      %v516 = vpop.f32.mrf.mxu0
      %517 = vmatprep.mubr.bf16.mxu0 0
      %518 = vmatmul.mubr.bf16.gmra.mxu0 %v356
      %v519 = vpop.f32.mrf.mxu0
      %v520 = vadd.f32 %v216, %v519
      %v521 = vpop.f32.mrf.mxu0
      %v522 = vpop.f32.mrf.mxu0
      %v523 = vadd.f32 %v216, %v522
      %v524 = vpop.f32.mrf.mxu0
      %525 = vdwg.mxu0
      %v526 = vmax.f32 %v400, 0.0
      %v527 = vmax.f32 %v403, 0.0
      %v528 = vmax.f32 %v408, 0.0
      %v529 = vmax.f32 %v411, 0.0
      %v530 = vmax.f32 %v416, 0.0
      %v531 = vmax.f32 %v419, 0.0
      %v532 = vmax.f32 %v424, 0.0
      %v533 = vmax.f32 %v427, 0.0
      %v534 = vmax.f32 %v432, 0.0
      %v535 = vmax.f32 %v435, 0.0
      %v536 = vmax.f32 %v440, 0.0
      %v537 = vmax.f32 %v443, 0.0
      %v538 = vmax.f32 %v448, 0.0
      %v539 = vmax.f32 %v451, 0.0
      %v540 = vmax.f32 %v456, 0.0
      %v541 = vmax.f32 %v459, 0.0
      %v542 = vmax.f32 %v464, 0.0
      %v543 = vmax.f32 %v467, 0.0
      %v544 = vmax.f32 %v472, 0.0
      %v545 = vmax.f32 %v475, 0.0
      %v546 = vmax.f32 %v480, 0.0
      %v547 = vmax.f32 %v483, 0.0
      %v548 = vmax.f32 %v488, 0.0
      %v549 = vmax.f32 %v491, 0.0
      %v550 = vmax.f32 %v496, 0.0
      %v551 = vmax.f32 %v499, 0.0
      %v552 = vmax.f32 %v504, 0.0
      %v553 = vmax.f32 %v507, 0.0
      %v554 = vmax.f32 %v512, 0.0
      %v555 = vmax.f32 %v515, 0.0
      %v556 = vmax.f32 %v520, 0.0
      %v557 = vmax.f32 %v523, 0.0
      %v558 = vpack.c.bf16 %v527, %v526
      %v559 = vpack.c.bf16 %v529, %v528
      %v560 = vpack.c.bf16 %v531, %v530
      %v561 = vpack.c.bf16 %v533, %v532
      %v562 = vpack.c.bf16 %v535, %v534
      %v563 = vpack.c.bf16 %v537, %v536
      %v564 = vpack.c.bf16 %v539, %v538
      %v565 = vpack.c.bf16 %v541, %v540
      %v566 = vpack.c.bf16 %v543, %v542
      %v567 = vpack.c.bf16 %v545, %v544
      %v568 = vpack.c.bf16 %v547, %v546
      %v569 = vpack.c.bf16 %v549, %v548
      %v570 = vpack.c.bf16 %v551, %v550
      %v571 = vpack.c.bf16 %v553, %v552
      %v572 = vpack.c.bf16 %v555, %v554
      %v573 = vpack.c.bf16 %v557, %v556
      %v590 = vunpack.c.l.b16 %v558
      %v591 = vunpack.c.h.b16 %v558
      %v592 = vunpack.c.l.b16 %v559
      %v593 = vunpack.c.h.b16 %v559
      %v594 = vunpack.c.l.b16 %v560
      %v595 = vunpack.c.h.b16 %v560
      %v596 = vunpack.c.l.b16 %v561
      %v597 = vunpack.c.h.b16 %v561
      %v598 = vunpack.c.l.b16 %v562
      %v599 = vunpack.c.h.b16 %v562
      %v600 = vunpack.c.l.b16 %v563
      %v601 = vunpack.c.h.b16 %v563
      %v602 = vunpack.c.l.b16 %v564
      %v603 = vunpack.c.h.b16 %v564
      %v604 = vunpack.c.l.b16 %v565
      %v605 = vunpack.c.h.b16 %v565
      %v606 = vunpack.c.l.b16 %v566
      %v607 = vunpack.c.h.b16 %v566
      %v608 = vunpack.c.l.b16 %v567
      %v609 = vunpack.c.h.b16 %v567
      %v610 = vunpack.c.l.b16 %v568
      %v611 = vunpack.c.h.b16 %v568
      %v612 = vunpack.c.l.b16 %v569
      %v613 = vunpack.c.h.b16 %v569
      %v614 = vunpack.c.l.b16 %v570
      %v615 = vunpack.c.h.b16 %v570
      %v616 = vunpack.c.l.b16 %v571
      %v617 = vunpack.c.h.b16 %v571
      %v618 = vunpack.c.l.b16 %v572
      %v619 = vunpack.c.h.b16 %v572
      %v620 = vunpack.c.l.b16 %v573
      %v621 = vunpack.c.h.b16 %v573
      %v622 = vpack.c.b16 %v590, %v590
      %v623 = vpack.c.b16 %v591, %v591
      %v624 = vpack.c.b16 %v592, %v592
      %v625 = vpack.c.b16 %v593, %v593
      %v626 = vpack.c.b16 %v594, %v594
      %v627 = vpack.c.b16 %v595, %v595
      %v628 = vpack.c.b16 %v596, %v596
      %v629 = vpack.c.b16 %v597, %v597
      %v630 = vpack.c.b16 %v598, %v598
      %v631 = vpack.c.b16 %v599, %v599
      %v632 = vpack.c.b16 %v600, %v600
      %v633 = vpack.c.b16 %v601, %v601
      %v634 = vpack.c.b16 %v602, %v602
      %v635 = vpack.c.b16 %v603, %v603
      %v636 = vpack.c.b16 %v604, %v604
      %v637 = vpack.c.b16 %v605, %v605
      %v638 = vpack.c.b16 %v606, %v606
      %v639 = vpack.c.b16 %v607, %v607
      %v640 = vpack.c.b16 %v608, %v608
      %v641 = vpack.c.b16 %v609, %v609
      %v642 = vpack.c.b16 %v610, %v610
      %v643 = vpack.c.b16 %v611, %v611
      %v644 = vpack.c.b16 %v612, %v612
      %v645 = vpack.c.b16 %v613, %v613
      %v646 = vpack.c.b16 %v614, %v614
      %v647 = vpack.c.b16 %v615, %v615
      %v648 = vpack.c.b16 %v616, %v616
      %v649 = vpack.c.b16 %v617, %v617
      %v650 = vpack.c.b16 %v618, %v618
      %v651 = vpack.c.b16 %v619, %v619
      %v652 = vpack.c.b16 %v620, %v620
      %v653 = vpack.c.b16 %v621, %v621
      %vm686 = vcmask 125952
      %687 = vst.msk [vmem:[%s172] sm:$0xf] %vm686, %v622
      %688 = vst.msk [vmem:[%s172 + $0x4] sm:$0xf] %vm686, %v623
      %689 = vst.msk [vmem:[%s172 + $0x8] sm:$0xf] %vm686, %v624
      %690 = vst.msk [vmem:[%s172 + $0xc] sm:$0xf] %vm686, %v625
      %691 = vst.msk [vmem:[%s172 + $0x10] sm:$0xf] %vm686, %v626
      %692 = vst.msk [vmem:[%s172 + $0x14] sm:$0xf] %vm686, %v627
      %693 = vst.msk [vmem:[%s172 + $0x18] sm:$0xf] %vm686, %v628
      %694 = vst.msk [vmem:[%s172 + $0x1c] sm:$0xf] %vm686, %v629
      %695 = vst.msk [vmem:[%s172 + $0x20] sm:$0xf] %vm686, %v630
      %696 = vst.msk [vmem:[%s172 + $0x24] sm:$0xf] %vm686, %v631
      %697 = vst.msk [vmem:[%s172 + $0x28] sm:$0xf] %vm686, %v632
      %698 = vst.msk [vmem:[%s172 + $0x2c] sm:$0xf] %vm686, %v633
      %699 = vst.msk [vmem:[%s172 + $0x30] sm:$0xf] %vm686, %v634
      %700 = vst.msk [vmem:[%s172 + $0x34] sm:$0xf] %vm686, %v635
      %701 = vst.msk [vmem:[%s172 + $0x38] sm:$0xf] %vm686, %v636
      %702 = vst.msk [vmem:[%s172 + $0x3c] sm:$0xf] %vm686, %v637
      %703 = vst.msk [vmem:[%s172 + $0x40] sm:$0xf] %vm686, %v638
      %704 = vst.msk [vmem:[%s172 + $0x44] sm:$0xf] %vm686, %v639
      %705 = vst.msk [vmem:[%s172 + $0x48] sm:$0xf] %vm686, %v640
      %706 = vst.msk [vmem:[%s172 + $0x4c] sm:$0xf] %vm686, %v641
      %707 = vst.msk [vmem:[%s172 + $0x50] sm:$0xf] %vm686, %v642
      %708 = vst.msk [vmem:[%s172 + $0x54] sm:$0xf] %vm686, %v643
      %709 = vst.msk [vmem:[%s172 + $0x58] sm:$0xf] %vm686, %v644
      %710 = vst.msk [vmem:[%s172 + $0x5c] sm:$0xf] %vm686, %v645
      %711 = vst.msk [vmem:[%s172 + $0x60] sm:$0xf] %vm686, %v646
      %712 = vst.msk [vmem:[%s172 + $0x64] sm:$0xf] %vm686, %v647
      %713 = vst.msk [vmem:[%s172 + $0x68] sm:$0xf] %vm686, %v648
      %714 = vst.msk [vmem:[%s172 + $0x6c] sm:$0xf] %vm686, %v649
      %715 = vst.msk [vmem:[%s172 + $0x70] sm:$0xf] %vm686, %v650
      %716 = vst.msk [vmem:[%s172 + $0x74] sm:$0xf] %vm686, %v651
      %717 = vst.msk [vmem:[%s172 + $0x78] sm:$0xf] %vm686, %v652
      %718 = vst.msk [vmem:[%s172 + $0x7c] sm:$0xf] %vm686, %v653
      %s719 = smul.u32 32, %s14
      %p720 = scmp.lt.s32.totalorder %s719, 63
      %s721 = scalar_select %p720, %s719, 63
      %s722 = smul.addr %s721, 4
      %s723 = scalar_lea.vmem %s3, %s722
      // Predicated region
      $region33: #{nanodet_plus_forward.7} parent=31 // pred_check
        %p724 = pneg %p100
      $region34: #{nanodet_plus_forward.7} parent=31 // pred_check_branch
        %726 = sbr.rel (%p724) target = $region36
      $region35: #{nanodet_plus_forward.7} parent=31 // pred_region
        %s727 = smul.u32 32, %s14
      $region36: #{nanodet_plus_forward.7} parent=31 // pred_fallthru
        _
    $region32: #{nanodet_plus_forward.7} parent=5 // pred_fallthru
      _
    %p728 = scmp.le.s32.totalorder 2, %s9
    // Predicated region
    $region37: #{nanodet_plus_forward.7} parent=5 // pred_check
      %p729 = pneg %p728
    $region38: #{nanodet_plus_forward.7} parent=5 // pred_check_branch
      %731 = sbr.rel (%p729) target = $region40
    $region39: #{nanodet_plus_forward.7} parent=5 // pred_region
      %s732 = ssub.s32 %s9, 2
      // Predicated region
      $region41: #{nanodet_plus_forward.7} parent=39 // pred_check
        %p733 = pneg %p106
      $region42: #{nanodet_plus_forward.7} parent=39 // pred_check_branch
        %735 = sbr.rel (%p733) target = $region44
      $region43: #{nanodet_plus_forward.7} parent=39 // pred_region
        %s736 = smul.u32 32, %s15
        %p737 = scmp.lt.s32.totalorder %s736, 63
        %s738 = scalar_select %p737, %s736, 63
        %s739 = smul.addr %s738, 4
        %s740 = scalar_lea.vmem %s3, %s739
      $region44: #{nanodet_plus_forward.7} parent=39 // pred_fallthru
        _
    $region40: #{nanodet_plus_forward.7} parent=5 // pred_fallthru
      _
  $region6: #{nanodet_plus_forward.7} parent=0 // loop_footer
    %s13 = sadd.s32 1, %s9
  $region7: #{nanodet_plus_forward.7} parent=0 // loop_footer_branch
    %8 = sbr.rel target = $region3
  $region8: #{nanodet_plus_forward.7} parent=0 // loop_exit
    _

// kernel: nanodet_plus_forward.8
$region0: #{nanodet_plus_forward.8}
  #allocation0 [shape = 'u32[]', space=smem, size = 0x4, offset = 0x4, fixed_abs, tag = 'smem constant byte address 0x4 - core index']
  #allocation1 [shape = 'u32[144,128]{1,0:T(1,128)}', space=vmem, size = 0x12000, scoped, tag = 'internal scratch']
  %s0 = inlined_call_operand.vmem [shape: bf16[128,144], index: 0, kind: input, shape index: {}]
  %s1 = inlined_call_operand.vmem [shape: bf16[144,32], index: 1, kind: input, shape index: {}]
  %s2 = inlined_call_operand.vmem [shape: f32[1,32], index: 2, kind: input, shape index: {}]
  %s3 = inlined_call_operand.vmem [shape: bf16[128,32], index: 3, kind: output, shape index: {}]
  %s4 = sld [smem:[#allocation0]]
  $region45: #{nanodet_plus_forward.8} parent=0
    _
  %s6 = ssub.s32 1, %s4
  %s7 = scalar_select 0, %s6, %s4
  loop: start=0, step=1, limit=4
  $region2: #{nanodet_plus_forward.8} parent=0 // loop_pre_header
    _
  $region3: #{nanodet_plus_forward.8} parent=0 // loop_header
    %s9 = sphi 0, %s13
    %p10 = scmp.ge.s32.totalorder %s9, 4
    %s19 = sphi 0, %s21
    %s22 = sphi 0, %s19
    %s23 = sphi 0, %s22
    %s39 = sphi 0, %s23
    %s43 = sphi 0, %s43
    %s45 = sphi 0, %s43
    %s46 = sphi 0, %s45
    %s60 = sphi 0, %s46
    %s64 = sphi 0, %s64
    %s66 = sphi 0, %s64
    %s67 = sphi 0, %s66
    %s81 = sphi 0, %s67
    %s87 = sphi 0, %s89
    %s90 = sphi 0, %s87
    %s91 = sphi 0, %s90
    %s107 = sphi 0, %s91
  $region4: #{nanodet_plus_forward.8} parent=0 // loop_header_branch
    %12 = sbr.rel (%p10) target = $region8
  $region5: #{nanodet_plus_forward.8} parent=0 // loop_body
    %s14 = ssub.s32 %s9, 1
    %s15 = ssub.s32 %s9, 2
    %s16 = sadd.s32 %s9, 1
    %s17 = ssub.s32 %s9, %s16
    %p18 = scmp.eq.s32.totalorder %s17, 0
    %s20 = sadd.s32 %s19, 1
    %s21 = scalar_select %p18, %s19, %s20
    %p24 = pneg %p18
    %p25 = scmp.eq.s32.totalorder %s9, 1
    %p26 = por %p24, %p25
    %p27 = scmp.ne.s32.totalorder %s19, %s22
    %p28 = scmp.eq.s32.totalorder %s9, 0
    %p29 = por %p27, %p28
    %p30 = scmp.ne.s32.totalorder %s19, %s22
    %p31 = scmp.eq.s32.totalorder %s14, 1
    %p32 = por %p30, %p31
    %p33 = scmp.ne.s32.totalorder %s22, %s23
    %p34 = scmp.eq.s32.totalorder %s14, 0
    %p35 = por %p33, %p34
    %p36 = scmp.ne.s32.totalorder %s22, %s23
    %p37 = scmp.eq.s32.totalorder %s15, 1
    %p38 = por %p36, %p37
    %p40 = scmp.ne.s32.totalorder %s23, %s39
    %p41 = scmp.eq.s32.totalorder %s15, 0
    %p42 = por %p40, %p41
    %s44 = sadd.s32 %s43, 1
    %p47 = scmp.eq.s32.totalorder %s9, 1
    %p48 = scmp.ne.s32.totalorder %s43, %s45
    %p49 = scmp.eq.s32.totalorder %s9, 0
    %p50 = por %p48, %p49
    %p51 = scmp.ne.s32.totalorder %s43, %s45
    %p52 = scmp.eq.s32.totalorder %s14, 1
    %p53 = por %p51, %p52
    %p54 = scmp.ne.s32.totalorder %s45, %s46
    %p55 = scmp.eq.s32.totalorder %s14, 0
    %p56 = por %p54, %p55
    %p57 = scmp.ne.s32.totalorder %s45, %s46
    %p58 = scmp.eq.s32.totalorder %s15, 1
    %p59 = por %p57, %p58
    %p61 = scmp.ne.s32.totalorder %s46, %s60
    %p62 = scmp.eq.s32.totalorder %s15, 0
    %p63 = por %p61, %p62
    %s65 = sadd.s32 %s64, 1
    %p68 = scmp.eq.s32.totalorder %s9, 1
    %p69 = scmp.ne.s32.totalorder %s64, %s66
    %p70 = scmp.eq.s32.totalorder %s9, 0
    %p71 = por %p69, %p70
    %p72 = scmp.ne.s32.totalorder %s64, %s66
    %p73 = scmp.eq.s32.totalorder %s14, 1
    %p74 = por %p72, %p73
    %p75 = scmp.ne.s32.totalorder %s66, %s67
    %p76 = scmp.eq.s32.totalorder %s14, 0
    %p77 = por %p75, %p76
    %p78 = scmp.ne.s32.totalorder %s66, %s67
    %p79 = scmp.eq.s32.totalorder %s15, 1
    %p80 = por %p78, %p79
    %p82 = scmp.ne.s32.totalorder %s67, %s81
    %p83 = scmp.eq.s32.totalorder %s15, 0
    %p84 = por %p82, %p83
    %s85 = ssub.s32 %s9, %s16
    %p86 = scmp.eq.s32.totalorder %s85, 0
    %s88 = sadd.s32 %s87, 1
    %s89 = scalar_select %p86, %s87, %s88
    %p92 = pneg %p86
    %p93 = scmp.eq.s32.totalorder %s9, 1
    %p94 = por %p92, %p93
    %p95 = scmp.ne.s32.totalorder %s87, %s90
    %p96 = scmp.eq.s32.totalorder %s9, 0
    %p97 = por %p95, %p96
    %p98 = scmp.ne.s32.totalorder %s87, %s90
    %p99 = scmp.eq.s32.totalorder %s14, 1
    %p100 = por %p98, %p99
    %p101 = scmp.ne.s32.totalorder %s90, %s91
    %p102 = scmp.eq.s32.totalorder %s14, 0
    %p103 = por %p101, %p102
    %p104 = scmp.ne.s32.totalorder %s90, %s91
    %p105 = scmp.eq.s32.totalorder %s15, 1
    %p106 = por %p104, %p105
    %p108 = scmp.ne.s32.totalorder %s91, %s107
    %p109 = scmp.eq.s32.totalorder %s15, 0
    %p110 = por %p108, %p109
    %p111 = scmp.le.s32.totalorder 1, %s9
    %p112 = scmp.lt.s32.totalorder %s9, 3
    %p113 = pnand %p111, %p112
    %p114 = pneg %p113
    // Predicated region
    $region9: #{nanodet_plus_forward.8} parent=5 // pred_check
      _
    $region10: #{nanodet_plus_forward.8} parent=5 // pred_check_branch
      %116 = sbr.rel (%p113) target = $region12
    $region11: #{nanodet_plus_forward.8} parent=5 // pred_region
      %s117 = ssub.s32 %s9, 1
      // Predicated region
      $region13: #{nanodet_plus_forward.8} parent=11 // pred_check
        %p118 = pneg %p56
      $region14: #{nanodet_plus_forward.8} parent=11 // pred_check_branch
        %120 = sbr.rel (%p118) target = $region16
      $region15: #{nanodet_plus_forward.8} parent=11 // pred_region
        _
      $region16: #{nanodet_plus_forward.8} parent=11 // pred_fallthru
        _
      // Predicated region
      $region17: #{nanodet_plus_forward.8} parent=11 // pred_check
        %p121 = pneg %p77
      $region18: #{nanodet_plus_forward.8} parent=11 // pred_check_branch
        %123 = sbr.rel (%p121) target = $region20
      $region19: #{nanodet_plus_forward.8} parent=11 // pred_region
        _
      $region20: #{nanodet_plus_forward.8} parent=11 // pred_fallthru
        _
    $region12: #{nanodet_plus_forward.8} parent=5 // pred_fallthru
      _
    %p124 = scmp.lt.s32.totalorder %s9, 2
    // Predicated region
    $region21: #{nanodet_plus_forward.8} parent=5 // pred_check
      %p125 = pneg %p124
    $region22: #{nanodet_plus_forward.8} parent=5 // pred_check_branch
      %127 = sbr.rel (%p125) target = $region24
    $region23: #{nanodet_plus_forward.8} parent=5 // pred_region
      // Predicated region
      $region25: #{nanodet_plus_forward.8} parent=23 // pred_check
        %p128 = pneg %p29
      $region26: #{nanodet_plus_forward.8} parent=23 // pred_check_branch
        %130 = sbr.rel (%p128) target = $region28
      $region27: #{nanodet_plus_forward.8} parent=23 // pred_region
        %s131 = smul.u32 8, %s9
        %p132 = scmp.lt.s32.totalorder %s131, 15
        %s133 = scalar_select %p132, %s131, 15
        %s134 = smul.addr %s133, 2
        %s135 = smul.addr %s134, 4
        %s136 = scalar_lea.vmem %s0, %s135
        %s137 = smul.u32 8, %s9
      $region28: #{nanodet_plus_forward.8} parent=23 // pred_fallthru
        _
    $region24: #{nanodet_plus_forward.8} parent=5 // pred_fallthru
      _
    %p138 = scmp.le.s32.totalorder 1, %s9
    %p139 = scmp.lt.s32.totalorder %s9, 3
    %p140 = pnand %p138, %p139
    %p141 = pneg %p140
    // Predicated region
    $region29: #{nanodet_plus_forward.8} parent=5 // pred_check
      _
    $region30: #{nanodet_plus_forward.8} parent=5 // pred_check_branch
      %143 = sbr.rel (%p140) target = $region32
    $region31: #{nanodet_plus_forward.8} parent=5 // pred_region
      %s144 = ssub.s32 %s9, 1
      %s145 = smul.u32 8, %s14
      %p146 = scmp.lt.s32.totalorder %s145, 15
      %s147 = scalar_select %p146, %s145, 15
      %s148 = smul.addr %s147, 2
      %s149 = smul.addr %s148, 4
      %s150 = scalar_lea.vmem %s0, %s149
      %p151 = pneg %p35
      %p152 = pneg %p32
      %p153 = pneg %p56
      %p154 = pneg %p53
      %p155 = pneg %p77
      %p156 = pneg %p74
      %p157 = pneg %p103
      %p158 = pneg %p100
      %s159 = smul.u32 8, %s14
      %p160 = scmp.lt.s32.totalorder %s159, 15
      %s161 = scalar_select %p160, %s159, 15
      %s162 = smul.addr %s161, 4
      %s163 = scalar_lea.vmem %s3, %s162
      %s164 = smul.u32 8, %s14
      %p165 = scmp.lt.s32.totalorder %s164, 15
      %s166 = scalar_select %p165, %s164, 15
      %s167 = smul.addr %s166, 2
      %s168 = smul.addr %s167, 4
      %s169 = scalar_lea.vmem %s0, %s168
      %s170 = smul.u32 8, %s14
      %s171 = smul.u32 8, %s14
      %p172 = scmp.lt.s32.totalorder %s171, 15
      %s173 = scalar_select %p172, %s171, 15
      %s174 = smul.addr %s173, 4
      %s175 = scalar_lea.vmem %s3, %s174
      %s176 = smul.u32 8, %s14
      %v178 = vld [vmem:[%s169] sm:$0xff]
      %v179 = vld [vmem:[%s169 + $0x8] sm:$0xff]
      %v180 = vld [vmem:[%s169 + $0x10] sm:$0xff]
      %v181 = vld [vmem:[%s169 + $0x18] sm:$0xff]
      %v182 = vld [vmem:[%s169 + $0x20] sm:$0xff]
      %v183 = vld [vmem:[%s169 + $0x28] sm:$0xff]
      %v184 = vld [vmem:[%s169 + $0x30] sm:$0xff]
      %v185 = vld [vmem:[%s169 + $0x38] sm:$0xff]
      %v186 = vld [vmem:[%s1] sm:$0xf]
      %v187 = vld [vmem:[%s1 + $0x4] sm:$0xf]
      %v188 = vld [vmem:[%s1 + $0x8] sm:$0xf]
      %v189 = vld [vmem:[%s1 + $0xc] sm:$0xf]
      %v190 = vld [vmem:[%s1 + $0x10] sm:$0xf]
      %v191 = vld [vmem:[%s1 + $0x14] sm:$0xf]
      %v192 = vld [vmem:[%s1 + $0x18] sm:$0xf]
      %v193 = vld [vmem:[%s1 + $0x1c] sm:$0xf]
      %v194 = vld [vmem:[%s1 + $0x20] sm:$0xf]
      %v195 = vld [vmem:[%s1 + $0x24] sm:$0xf]
      %v196 = vld [vmem:[%s1 + $0x28] sm:$0xf]
      %v197 = vld [vmem:[%s1 + $0x2c] sm:$0xf]
      %v198 = vld [vmem:[%s1 + $0x30] sm:$0xf]
      %v199 = vld [vmem:[%s1 + $0x34] sm:$0xf]
      %v200 = vld [vmem:[%s1 + $0x38] sm:$0xf]
      %v201 = vld [vmem:[%s1 + $0x3c] sm:$0xf]
      %v202 = vld [vmem:[%s1 + $0x40] sm:$0xf]
      %v203 = vld [vmem:[%s1 + $0x44] sm:$0xf]
      %v204 = vld [vmem:[%s2] sm:$0x1]
      %v206 = vlaneseq
      %v207 = vshrl.u32 %v206, 7
      %v208 = vsub.s32 0, %v207
      %v209 = vrot.slane %v204, %v208
      %v219 = vunpack.c.l.b16 %v178
      %v220 = vunpack.c.h.b16 %v178
      %v221 = vunpack.c.l.b16 %v179
      %v222 = vunpack.c.h.b16 %v179
      %v223 = vunpack.c.l.b16 %v180
      %v224 = vunpack.c.h.b16 %v180
      %v225 = vunpack.c.l.b16 %v181
      %v226 = vunpack.c.h.b16 %v181
      %v227 = vunpack.c.l.b16 %v182
      %v228 = vunpack.c.h.b16 %v182
      %v229 = vunpack.c.l.b16 %v183
      %v230 = vunpack.c.h.b16 %v183
      %v231 = vunpack.c.l.b16 %v184
      %v232 = vunpack.c.h.b16 %v184
      %v233 = vunpack.c.l.b16 %v185
      %v234 = vunpack.c.h.b16 %v185
      %v235 = vpack.c.b16 %v221, %v219
      %v236 = vpack.c.b16 %v222, %v220
      %v237 = vpack.c.b16 %v225, %v223
      %v238 = vpack.c.b16 %v226, %v224
      %v239 = vpack.c.b16 %v229, %v227
      %v240 = vpack.c.b16 %v230, %v228
      %v241 = vpack.c.b16 %v233, %v231
      %v242 = vpack.c.b16 %v234, %v232
      %v265 = vunpack.c.l.b16 %v186
      %v266 = vunpack.c.l.b16 %v187
      %v267 = vunpack.c.l.b16 %v188
      %v268 = vunpack.c.l.b16 %v189
      %v269 = vunpack.c.l.b16 %v190
      %v270 = vunpack.c.l.b16 %v191
      %v271 = vunpack.c.l.b16 %v192
      %v272 = vunpack.c.l.b16 %v193
      %v273 = vunpack.c.l.b16 %v194
      %v274 = vunpack.c.l.b16 %v195
      %v275 = vunpack.c.l.b16 %v196
      %v276 = vunpack.c.l.b16 %v197
      %v277 = vunpack.c.l.b16 %v198
      %v278 = vunpack.c.l.b16 %v199
      %v279 = vunpack.c.l.b16 %v200
      %v280 = vunpack.c.l.b16 %v201
      %v281 = vunpack.c.l.b16 %v202
      %v282 = vunpack.c.l.b16 %v203
      %v283 = vpack.c.b16 %v266, %v265
      %v284 = vpack.c.b16 %v268, %v267
      %v285 = vpack.c.b16 %v270, %v269
      %v286 = vpack.c.b16 %v272, %v271
      %v287 = vpack.c.b16 %v274, %v273
      %v288 = vpack.c.b16 %v276, %v275
      %v289 = vpack.c.b16 %v278, %v277
      %v290 = vpack.c.b16 %v280, %v279
      %v291 = vpack.c.b16 %v282, %v281
      %vm301 = vcmask 130048
      %v303 = vsel %vm301, %v236, 0
      %v306 = vsel %vm301, %v238, 0
      %v309 = vsel %vm301, %v240, 0
      %v312 = vsel %vm301, %v242, 0
      %314 = vmatprep.subr.bf16.mxu0 0
      %315 = vmatpush1.bf16.msra.mxu0 %v290
      %316 = vmatprep.subr.bf16.mxu0 0
      %317 = vmatpush1.bf16.msra.mxu0 %v289
      %318 = vmatprep.subr.bf16.mxu0 0
      %319 = vmatpush1.bf16.msra.mxu0 %v288
      %320 = vmatprep.subr.bf16.mxu0 0
      %321 = vmatpush1.bf16.msra.mxu0 %v287
      %322 = vmatprep.subr.bf16.mxu0 0
      %323 = vmatpush1.bf16.msra.mxu0 %v286
      %324 = vmatprep.subr.bf16.mxu0 0
      %325 = vmatpush1.bf16.msra.mxu0 %v285
      %326 = vmatprep.subr.bf16.mxu0 0
      %327 = vmatpush1.bf16.msra.mxu0 %v284
      %328 = vmatprep.subr.bf16.mxu0 0
      %329 = vmatpush1.bf16.msra.mxu0 %v283
      %330 = vmatprep.subr.bf16.mxu0 0
      %331 = vmatpush2.bf16.msra.mxu0 0
      %332 = vmatprep.subr.bf16.mxu0 0
      %333 = vmatpush2.bf16.msra.mxu0 0
      %334 = vmatprep.subr.bf16.mxu0 0
      %335 = vmatpush2.bf16.msra.mxu0 0
      %336 = vmatprep.subr.bf16.mxu0 0
      %337 = vmatpush2.bf16.msra.mxu0 0
      %338 = vmatprep.subr.bf16.mxu0 0
      %339 = vmatpush2.bf16.msra.mxu0 0
      %340 = vmatprep.subr.bf16.mxu0 0
      %341 = vmatpush2.bf16.msra.mxu0 0
      %342 = vmatprep.subr.bf16.mxu0 0
      %343 = vmatpush2.bf16.msra.mxu0 0
      %344 = vmatprep.subr.bf16.mxu0 0
      %345 = vmatpush2.bf16.msra.mxu0 %v291
      %346 = vmatprep.mubr.bf16.mxu0 %v303
      %347 = vmatmul.mubr.bf16.gmra.mxu0 %v235
      %v348 = vpop.f32.mrf.mxu0
      %v349 = vadd.f32 %v209, %v348
      %v350 = vpop.f32.mrf.mxu0
      %v351 = vpop.f32.mrf.mxu0
      %v352 = vadd.f32 %v209, %v351
      %v353 = vpop.f32.mrf.mxu0
      %354 = vmatprep.mubr.bf16.mxu0 %v306
      %355 = vmatmul.mubr.bf16.gmra.mxu0 %v237
      %v356 = vpop.f32.mrf.mxu0
      %v357 = vadd.f32 %v209, %v356
      %v358 = vpop.f32.mrf.mxu0
      %v359 = vpop.f32.mrf.mxu0
      %v360 = vadd.f32 %v209, %v359
      %v361 = vpop.f32.mrf.mxu0
      %362 = vmatprep.mubr.bf16.mxu0 %v309
      %363 = vmatmul.mubr.bf16.gmra.mxu0 %v239
      %v364 = vpop.f32.mrf.mxu0
      %v365 = vadd.f32 %v209, %v364
      %v366 = vpop.f32.mrf.mxu0
      %v367 = vpop.f32.mrf.mxu0
      %v368 = vadd.f32 %v209, %v367
      %v369 = vpop.f32.mrf.mxu0
      %370 = vmatprep.mubr.bf16.mxu0 %v312
      %371 = vmatmul.mubr.bf16.gmra.mxu0 %v241
      %v372 = vpop.f32.mrf.mxu0
      %v373 = vadd.f32 %v209, %v372
      %v374 = vpop.f32.mrf.mxu0
      %v375 = vpop.f32.mrf.mxu0
      %v376 = vadd.f32 %v209, %v375
      %v377 = vpop.f32.mrf.mxu0
      %378 = vdwg.mxu0
      %v379 = vmax.f32 %v349, 0.0
      %v380 = vmax.f32 %v352, 0.0
      %v381 = vmax.f32 %v357, 0.0
      %v382 = vmax.f32 %v360, 0.0
      %v383 = vmax.f32 %v365, 0.0
      %v384 = vmax.f32 %v368, 0.0
      %v385 = vmax.f32 %v373, 0.0
      %v386 = vmax.f32 %v376, 0.0
      %v387 = vpack.c.bf16 %v380, %v379
      %v388 = vpack.c.bf16 %v382, %v381
      %v389 = vpack.c.bf16 %v384, %v383
      %v390 = vpack.c.bf16 %v386, %v385
      %v395 = vunpack.c.l.b16 %v387
      %v396 = vunpack.c.h.b16 %v387
      %v397 = vunpack.c.l.b16 %v388
      %v398 = vunpack.c.h.b16 %v388
      %v399 = vunpack.c.l.b16 %v389
      %v400 = vunpack.c.h.b16 %v389
      %v401 = vunpack.c.l.b16 %v390
      %v402 = vunpack.c.h.b16 %v390
      %v403 = vpack.c.b16 %v395, %v395
      %v404 = vpack.c.b16 %v396, %v396
      %v405 = vpack.c.b16 %v397, %v397
      %v406 = vpack.c.b16 %v398, %v398
      %v407 = vpack.c.b16 %v399, %v399
      %v408 = vpack.c.b16 %v400, %v400
      %v409 = vpack.c.b16 %v401, %v401
      %v410 = vpack.c.b16 %v402, %v402
      %vm419 = vcmask 257024
      %420 = vst.msk [vmem:[%s175] sm:$0xf] %vm419, %v403
      %421 = vst.msk [vmem:[%s175 + $0x4] sm:$0xf] %vm419, %v404
      %422 = vst.msk [vmem:[%s175 + $0x8] sm:$0xf] %vm419, %v405
      %423 = vst.msk [vmem:[%s175 + $0xc] sm:$0xf] %vm419, %v406
      %424 = vst.msk [vmem:[%s175 + $0x10] sm:$0xf] %vm419, %v407
      %425 = vst.msk [vmem:[%s175 + $0x14] sm:$0xf] %vm419, %v408
      %426 = vst.msk [vmem:[%s175 + $0x18] sm:$0xf] %vm419, %v409
      %427 = vst.msk [vmem:[%s175 + $0x1c] sm:$0xf] %vm419, %v410
      %s428 = smul.u32 8, %s14
      %p429 = scmp.lt.s32.totalorder %s428, 15
      %s430 = scalar_select %p429, %s428, 15
      %s431 = smul.addr %s430, 4
      %s432 = scalar_lea.vmem %s3, %s431
      // Predicated region
      $region33: #{nanodet_plus_forward.8} parent=31 // pred_check
        %p433 = pneg %p100
      $region34: #{nanodet_plus_forward.8} parent=31 // pred_check_branch
        %435 = sbr.rel (%p433) target = $region36
      $region35: #{nanodet_plus_forward.8} parent=31 // pred_region
        %s436 = smul.u32 8, %s14
      $region36: #{nanodet_plus_forward.8} parent=31 // pred_fallthru
        _
    $region32: #{nanodet_plus_forward.8} parent=5 // pred_fallthru
      _
    %p437 = scmp.le.s32.totalorder 2, %s9
    // Predicated region
    $region37: #{nanodet_plus_forward.8} parent=5 // pred_check
      %p438 = pneg %p437
    $region38: #{nanodet_plus_forward.8} parent=5 // pred_check_branch
      %440 = sbr.rel (%p438) target = $region40
    $region39: #{nanodet_plus_forward.8} parent=5 // pred_region
      %s441 = ssub.s32 %s9, 2
      // Predicated region
      $region41: #{nanodet_plus_forward.8} parent=39 // pred_check
        %p442 = pneg %p106
      $region42: #{nanodet_plus_forward.8} parent=39 // pred_check_branch
        %444 = sbr.rel (%p442) target = $region44
      $region43: #{nanodet_plus_forward.8} parent=39 // pred_region
        %s445 = smul.u32 8, %s15
        %p446 = scmp.lt.s32.totalorder %s445, 15
        %s447 = scalar_select %p446, %s445, 15
        %s448 = smul.addr %s447, 4
        %s449 = scalar_lea.vmem %s3, %s448
      $region44: #{nanodet_plus_forward.8} parent=39 // pred_fallthru
        _
    $region40: #{nanodet_plus_forward.8} parent=5 // pred_fallthru
      _
  $region6: #{nanodet_plus_forward.8} parent=0 // loop_footer
    %s13 = sadd.s32 1, %s9
  $region7: #{nanodet_plus_forward.8} parent=0 // loop_footer_branch
    %8 = sbr.rel target = $region3
  $region8: #{nanodet_plus_forward.8} parent=0 // loop_exit
    _

// kernel: nanodet_plus_forward.9
$region0: #{nanodet_plus_forward.9}
  #allocation0 [shape = 'u32[]', space=smem, size = 0x4, offset = 0x4, fixed_abs, tag = 'smem constant byte address 0x4 - core index']
  #allocation1 [shape = 'u32[144,128]{1,0:T(1,128)}', space=vmem, size = 0x12000, scoped, tag = 'internal scratch']
  %s0 = inlined_call_operand.vmem [shape: bf16[32,288], index: 0, kind: input, shape index: {}]
  %s1 = inlined_call_operand.vmem [shape: bf16[288,64], index: 1, kind: input, shape index: {}]
  %s2 = inlined_call_operand.vmem [shape: f32[1,64], index: 2, kind: input, shape index: {}]
  %s3 = inlined_call_operand.vmem [shape: bf16[32,64], index: 3, kind: output, shape index: {}]
  %s4 = sld [smem:[#allocation0]]
  $region45: #{nanodet_plus_forward.9} parent=0
    _
  %s6 = ssub.s32 1, %s4
  %s7 = scalar_select 0, %s6, %s4
  loop: start=0, step=1, limit=4
  $region2: #{nanodet_plus_forward.9} parent=0 // loop_pre_header
    _
  $region3: #{nanodet_plus_forward.9} parent=0 // loop_header
    %s9 = sphi 0, %s13
    %p10 = scmp.ge.s32.totalorder %s9, 4
    %s19 = sphi 0, %s21
    %s22 = sphi 0, %s19
    %s23 = sphi 0, %s22
    %s39 = sphi 0, %s23
    %s43 = sphi 0, %s43
    %s45 = sphi 0, %s43
    %s46 = sphi 0, %s45
    %s60 = sphi 0, %s46
    %s64 = sphi 0, %s64
    %s66 = sphi 0, %s64
    %s67 = sphi 0, %s66
    %s81 = sphi 0, %s67
    %s87 = sphi 0, %s89
    %s90 = sphi 0, %s87
    %s91 = sphi 0, %s90
    %s107 = sphi 0, %s91
  $region4: #{nanodet_plus_forward.9} parent=0 // loop_header_branch
    %12 = sbr.rel (%p10) target = $region8
  $region5: #{nanodet_plus_forward.9} parent=0 // loop_body
    %s14 = ssub.s32 %s9, 1
    %s15 = ssub.s32 %s9, 2
    %s16 = sadd.s32 %s9, 1
    %s17 = ssub.s32 %s9, %s16
    %p18 = scmp.eq.s32.totalorder %s17, 0
    %s20 = sadd.s32 %s19, 1
    %s21 = scalar_select %p18, %s19, %s20
    %p24 = pneg %p18
    %p25 = scmp.eq.s32.totalorder %s9, 1
    %p26 = por %p24, %p25
    %p27 = scmp.ne.s32.totalorder %s19, %s22
    %p28 = scmp.eq.s32.totalorder %s9, 0
    %p29 = por %p27, %p28
    %p30 = scmp.ne.s32.totalorder %s19, %s22
    %p31 = scmp.eq.s32.totalorder %s14, 1
    %p32 = por %p30, %p31
    %p33 = scmp.ne.s32.totalorder %s22, %s23
    %p34 = scmp.eq.s32.totalorder %s14, 0
    %p35 = por %p33, %p34
    %p36 = scmp.ne.s32.totalorder %s22, %s23
    %p37 = scmp.eq.s32.totalorder %s15, 1
    %p38 = por %p36, %p37
    %p40 = scmp.ne.s32.totalorder %s23, %s39
    %p41 = scmp.eq.s32.totalorder %s15, 0
    %p42 = por %p40, %p41
    %s44 = sadd.s32 %s43, 1
    %p47 = scmp.eq.s32.totalorder %s9, 1
    %p48 = scmp.ne.s32.totalorder %s43, %s45
    %p49 = scmp.eq.s32.totalorder %s9, 0
    %p50 = por %p48, %p49
    %p51 = scmp.ne.s32.totalorder %s43, %s45
    %p52 = scmp.eq.s32.totalorder %s14, 1
    %p53 = por %p51, %p52
    %p54 = scmp.ne.s32.totalorder %s45, %s46
    %p55 = scmp.eq.s32.totalorder %s14, 0
    %p56 = por %p54, %p55
    %p57 = scmp.ne.s32.totalorder %s45, %s46
    %p58 = scmp.eq.s32.totalorder %s15, 1
    %p59 = por %p57, %p58
    %p61 = scmp.ne.s32.totalorder %s46, %s60
    %p62 = scmp.eq.s32.totalorder %s15, 0
    %p63 = por %p61, %p62
    %s65 = sadd.s32 %s64, 1
    %p68 = scmp.eq.s32.totalorder %s9, 1
    %p69 = scmp.ne.s32.totalorder %s64, %s66
    %p70 = scmp.eq.s32.totalorder %s9, 0
    %p71 = por %p69, %p70
    %p72 = scmp.ne.s32.totalorder %s64, %s66
    %p73 = scmp.eq.s32.totalorder %s14, 1
    %p74 = por %p72, %p73
    %p75 = scmp.ne.s32.totalorder %s66, %s67
    %p76 = scmp.eq.s32.totalorder %s14, 0
    %p77 = por %p75, %p76
    %p78 = scmp.ne.s32.totalorder %s66, %s67
    %p79 = scmp.eq.s32.totalorder %s15, 1
    %p80 = por %p78, %p79
    %p82 = scmp.ne.s32.totalorder %s67, %s81
    %p83 = scmp.eq.s32.totalorder %s15, 0
    %p84 = por %p82, %p83
    %s85 = ssub.s32 %s9, %s16
    %p86 = scmp.eq.s32.totalorder %s85, 0
    %s88 = sadd.s32 %s87, 1
    %s89 = scalar_select %p86, %s87, %s88
    %p92 = pneg %p86
    %p93 = scmp.eq.s32.totalorder %s9, 1
    %p94 = por %p92, %p93
    %p95 = scmp.ne.s32.totalorder %s87, %s90
    %p96 = scmp.eq.s32.totalorder %s9, 0
    %p97 = por %p95, %p96
    %p98 = scmp.ne.s32.totalorder %s87, %s90
    %p99 = scmp.eq.s32.totalorder %s14, 1
    %p100 = por %p98, %p99
    %p101 = scmp.ne.s32.totalorder %s90, %s91
    %p102 = scmp.eq.s32.totalorder %s14, 0
    %p103 = por %p101, %p102
    %p104 = scmp.ne.s32.totalorder %s90, %s91
    %p105 = scmp.eq.s32.totalorder %s15, 1
    %p106 = por %p104, %p105
    %p108 = scmp.ne.s32.totalorder %s91, %s107
    %p109 = scmp.eq.s32.totalorder %s15, 0
    %p110 = por %p108, %p109
    %p111 = scmp.le.s32.totalorder 1, %s9
    %p112 = scmp.lt.s32.totalorder %s9, 3
    %p113 = pnand %p111, %p112
    %p114 = pneg %p113
    // Predicated region
    $region9: #{nanodet_plus_forward.9} parent=5 // pred_check
      _
    $region10: #{nanodet_plus_forward.9} parent=5 // pred_check_branch
      %116 = sbr.rel (%p113) target = $region12
    $region11: #{nanodet_plus_forward.9} parent=5 // pred_region
      %s117 = ssub.s32 %s9, 1
      // Predicated region
      $region13: #{nanodet_plus_forward.9} parent=11 // pred_check
        %p118 = pneg %p56
      $region14: #{nanodet_plus_forward.9} parent=11 // pred_check_branch
        %120 = sbr.rel (%p118) target = $region16
      $region15: #{nanodet_plus_forward.9} parent=11 // pred_region
        _
      $region16: #{nanodet_plus_forward.9} parent=11 // pred_fallthru
        _
      // Predicated region
      $region17: #{nanodet_plus_forward.9} parent=11 // pred_check
        %p121 = pneg %p77
      $region18: #{nanodet_plus_forward.9} parent=11 // pred_check_branch
        %123 = sbr.rel (%p121) target = $region20
      $region19: #{nanodet_plus_forward.9} parent=11 // pred_region
        _
      $region20: #{nanodet_plus_forward.9} parent=11 // pred_fallthru
        _
    $region12: #{nanodet_plus_forward.9} parent=5 // pred_fallthru
      _
    %p124 = scmp.lt.s32.totalorder %s9, 2
    // Predicated region
    $region21: #{nanodet_plus_forward.9} parent=5 // pred_check
      %p125 = pneg %p124
    $region22: #{nanodet_plus_forward.9} parent=5 // pred_check_branch
      %127 = sbr.rel (%p125) target = $region24
    $region23: #{nanodet_plus_forward.9} parent=5 // pred_region
      // Predicated region
      $region25: #{nanodet_plus_forward.9} parent=23 // pred_check
        %p128 = pneg %p29
      $region26: #{nanodet_plus_forward.9} parent=23 // pred_check_branch
        %130 = sbr.rel (%p128) target = $region28
      $region27: #{nanodet_plus_forward.9} parent=23 // pred_region
        %s131 = smul.u32 2, %s9
        %p132 = scmp.lt.s32.totalorder %s131, 3
        %s133 = scalar_select %p132, %s131, 3
        %s134 = smul.addr %s133, 3
        %s135 = smul.addr %s134, 4
        %s136 = scalar_lea.vmem %s0, %s135
        %s137 = smul.u32 2, %s9
      $region28: #{nanodet_plus_forward.9} parent=23 // pred_fallthru
        _
    $region24: #{nanodet_plus_forward.9} parent=5 // pred_fallthru
      _
    %p138 = scmp.le.s32.totalorder 1, %s9
    %p139 = scmp.lt.s32.totalorder %s9, 3
    %p140 = pnand %p138, %p139
    %p141 = pneg %p140
    // Predicated region
    $region29: #{nanodet_plus_forward.9} parent=5 // pred_check
      _
    $region30: #{nanodet_plus_forward.9} parent=5 // pred_check_branch
      %143 = sbr.rel (%p140) target = $region32
    $region31: #{nanodet_plus_forward.9} parent=5 // pred_region
      %s144 = ssub.s32 %s9, 1
      %s145 = smul.u32 2, %s14
      %p146 = scmp.lt.s32.totalorder %s145, 3
      %s147 = scalar_select %p146, %s145, 3
      %s148 = smul.addr %s147, 3
      %s149 = smul.addr %s148, 4
      %s150 = scalar_lea.vmem %s0, %s149
      %p151 = pneg %p35
      %p152 = pneg %p32
      %p153 = pneg %p56
      %p154 = pneg %p53
      %p155 = pneg %p77
      %p156 = pneg %p74
      %p157 = pneg %p103
      %p158 = pneg %p100
      %s159 = smul.u32 2, %s14
      %p160 = scmp.lt.s32.totalorder %s159, 3
      %s161 = scalar_select %p160, %s159, 3
      %s162 = smul.addr %s161, 4
      %s163 = scalar_lea.vmem %s3, %s162
      %s164 = smul.u32 2, %s14
      %p165 = scmp.lt.s32.totalorder %s164, 3
      %s166 = scalar_select %p165, %s164, 3
      %s167 = smul.addr %s166, 3
      %s168 = smul.addr %s167, 4
      %s169 = scalar_lea.vmem %s0, %s168
      %s170 = smul.u32 2, %s14
      %s171 = smul.u32 2, %s14
      %p172 = scmp.lt.s32.totalorder %s171, 3
      %s173 = scalar_select %p172, %s171, 3
      %s174 = smul.addr %s173, 4
      %s175 = scalar_lea.vmem %s3, %s174
      %s176 = smul.u32 2, %s14
      %v178 = vld [vmem:[%s169] sm:$0xff]
      %v179 = vld [vmem:[%s169 + $0x8] sm:$0xf]
      %v180 = vld [vmem:[%s169 + $0xc] sm:$0xff]
      %v181 = vld [vmem:[%s169 + $0x14] sm:$0xf]
      %v182 = vld [vmem:[%s1] sm:$0xf]
      %v183 = vld [vmem:[%s1 + $0x4] sm:$0xf]
      %v184 = vld [vmem:[%s1 + $0x8] sm:$0xf]
      %v185 = vld [vmem:[%s1 + $0xc] sm:$0xf]
      %v186 = vld [vmem:[%s1 + $0x10] sm:$0xf]
      %v187 = vld [vmem:[%s1 + $0x14] sm:$0xf]
      %v188 = vld [vmem:[%s1 + $0x18] sm:$0xf]
      %v189 = vld [vmem:[%s1 + $0x1c] sm:$0xf]
      %v190 = vld [vmem:[%s1 + $0x20] sm:$0xf]
      %v191 = vld [vmem:[%s1 + $0x24] sm:$0xf]
      %v192 = vld [vmem:[%s1 + $0x28] sm:$0xf]
      %v193 = vld [vmem:[%s1 + $0x2c] sm:$0xf]
      %v194 = vld [vmem:[%s1 + $0x30] sm:$0xf]
      %v195 = vld [vmem:[%s1 + $0x34] sm:$0xf]
      %v196 = vld [vmem:[%s1 + $0x38] sm:$0xf]
      %v197 = vld [vmem:[%s1 + $0x3c] sm:$0xf]
      %v198 = vld [vmem:[%s1 + $0x40] sm:$0xf]
      %v199 = vld [vmem:[%s1 + $0x44] sm:$0xf]
      %v200 = vld [vmem:[%s1 + $0x48] sm:$0xf]
      %v201 = vld [vmem:[%s1 + $0x4c] sm:$0xf]
      %v202 = vld [vmem:[%s1 + $0x50] sm:$0xf]
      %v203 = vld [vmem:[%s1 + $0x54] sm:$0xf]
      %v204 = vld [vmem:[%s1 + $0x58] sm:$0xf]
      %v205 = vld [vmem:[%s1 + $0x5c] sm:$0xf]
      %v206 = vld [vmem:[%s1 + $0x60] sm:$0xf]
      %v207 = vld [vmem:[%s1 + $0x64] sm:$0xf]
      %v208 = vld [vmem:[%s1 + $0x68] sm:$0xf]
      %v209 = vld [vmem:[%s1 + $0x6c] sm:$0xf]
      %v210 = vld [vmem:[%s1 + $0x70] sm:$0xf]
      %v211 = vld [vmem:[%s1 + $0x74] sm:$0xf]
      %v212 = vld [vmem:[%s1 + $0x78] sm:$0xf]
      %v213 = vld [vmem:[%s1 + $0x7c] sm:$0xf]
      %v214 = vld [vmem:[%s1 + $0x80] sm:$0xf]
      %v215 = vld [vmem:[%s1 + $0x84] sm:$0xf]
      %v216 = vld [vmem:[%s1 + $0x88] sm:$0xf]
      %v217 = vld [vmem:[%s1 + $0x8c] sm:$0xf]
      %v218 = vld [vmem:[%s2] sm:$0x1]
      %v220 = vlaneseq
      %v221 = vshrl.u32 %v220, 7
      %v222 = vsub.s32 0, %v221
      %v223 = vrot.slane %v218, %v222
      %v229 = vunpack.c.l.b16 %v178
      %v230 = vunpack.c.h.b16 %v178
      %v231 = vunpack.c.l.b16 %v179
      %v232 = vunpack.c.l.b16 %v180
      %v233 = vunpack.c.h.b16 %v180
      %v234 = vunpack.c.l.b16 %v181
      %v235 = vpack.c.b16 %v232, %v229
      %v236 = vpack.c.b16 %v233, %v230
      %v237 = vpack.c.b16 %v234, %v231
      %v276 = vunpack.c.l.b16 %v182
      %v277 = vunpack.c.l.b16 %v183
      %v278 = vunpack.c.l.b16 %v184
      %v279 = vunpack.c.l.b16 %v185
      %v280 = vunpack.c.l.b16 %v186
      %v281 = vunpack.c.l.b16 %v187
      %v282 = vunpack.c.l.b16 %v188
      %v283 = vunpack.c.l.b16 %v189
      %v284 = vunpack.c.l.b16 %v190
      %v285 = vunpack.c.l.b16 %v191
      %v286 = vunpack.c.l.b16 %v192
      %v287 = vunpack.c.l.b16 %v193
      %v288 = vunpack.c.l.b16 %v194
      %v289 = vunpack.c.l.b16 %v195
      %v290 = vunpack.c.l.b16 %v196
      %v291 = vunpack.c.l.b16 %v197
      %v292 = vunpack.c.l.b16 %v198
      %v293 = vunpack.c.l.b16 %v199
      %v294 = vunpack.c.l.b16 %v200
      %v295 = vunpack.c.l.b16 %v201
      %v296 = vunpack.c.l.b16 %v202
      %v297 = vunpack.c.l.b16 %v203
      %v298 = vunpack.c.l.b16 %v204
      %v299 = vunpack.c.l.b16 %v205
      %v300 = vunpack.c.l.b16 %v206
      %v301 = vunpack.c.l.b16 %v207
      %v302 = vunpack.c.l.b16 %v208
      %v303 = vunpack.c.l.b16 %v209
      %v304 = vunpack.c.l.b16 %v210
      %v305 = vunpack.c.l.b16 %v211
      %v306 = vunpack.c.l.b16 %v212
      %v307 = vunpack.c.l.b16 %v213
      %v308 = vunpack.c.l.b16 %v214
      %v309 = vunpack.c.l.b16 %v215
      %v310 = vunpack.c.l.b16 %v216
      %v311 = vunpack.c.l.b16 %v217
      %v312 = vpack.c.b16 %v277, %v276
      %v313 = vpack.c.b16 %v279, %v278
      %v314 = vpack.c.b16 %v281, %v280
      %v315 = vpack.c.b16 %v283, %v282
      %v316 = vpack.c.b16 %v285, %v284
      %v317 = vpack.c.b16 %v287, %v286
      %v318 = vpack.c.b16 %v289, %v288
      %v319 = vpack.c.b16 %v291, %v290
      %v320 = vpack.c.b16 %v293, %v292
      %v321 = vpack.c.b16 %v295, %v294
      %v322 = vpack.c.b16 %v297, %v296
      %v323 = vpack.c.b16 %v299, %v298
      %v324 = vpack.c.b16 %v301, %v300
      %v325 = vpack.c.b16 %v303, %v302
      %v326 = vpack.c.b16 %v305, %v304
      %v327 = vpack.c.b16 %v307, %v306
      %v328 = vpack.c.b16 %v309, %v308
      %v329 = vpack.c.b16 %v311, %v310
      %vm348 = vcmask 261120
      %v350 = vsel %vm348, %v237, 0
      %352 = vmatprep.subr.bf16.mxu0 0
      %353 = vmatpush1.bf16.msra.mxu0 %v319
      %354 = vmatprep.subr.bf16.mxu0 0
      %355 = vmatpush1.bf16.msra.mxu0 %v318
      %356 = vmatprep.subr.bf16.mxu0 0
      %357 = vmatpush1.bf16.msra.mxu0 %v317
      %358 = vmatprep.subr.bf16.mxu0 0
      %359 = vmatpush1.bf16.msra.mxu0 %v316
      %360 = vmatprep.subr.bf16.mxu0 0
      %361 = vmatpush1.bf16.msra.mxu0 %v315
      %362 = vmatprep.subr.bf16.mxu0 0
      %363 = vmatpush1.bf16.msra.mxu0 %v314
      %364 = vmatprep.subr.bf16.mxu0 0
      %365 = vmatpush1.bf16.msra.mxu0 %v313
      %366 = vmatprep.subr.bf16.mxu0 0
      %367 = vmatpush1.bf16.msra.mxu0 %v312
      %368 = vmatprep.subr.bf16.mxu0 0
      %369 = vmatpush2.bf16.msra.mxu0 %v327
      %370 = vmatprep.subr.bf16.mxu0 0
      %371 = vmatpush2.bf16.msra.mxu0 %v326
      %372 = vmatprep.subr.bf16.mxu0 0
      %373 = vmatpush2.bf16.msra.mxu0 %v325
      %374 = vmatprep.subr.bf16.mxu0 0
      %375 = vmatpush2.bf16.msra.mxu0 %v324
      %376 = vmatprep.subr.bf16.mxu0 0
      %377 = vmatpush2.bf16.msra.mxu0 %v323
      %378 = vmatprep.subr.bf16.mxu0 0
      %379 = vmatpush2.bf16.msra.mxu0 %v322
      %380 = vmatprep.subr.bf16.mxu0 0
      %381 = vmatpush2.bf16.msra.mxu0 %v321
      %382 = vmatprep.subr.bf16.mxu0 0
      %383 = vmatpush2.bf16.msra.mxu0 %v320
      %384 = vmatprep.mubr.bf16.mxu0 %v236
      %385 = vmatmul.mubr.bf16.gmra.mxu0 %v235
      %v386 = vpop.f32.mrf.mxu0
      %v387 = vadd.f32 %v223, %v386
      %v388 = vpop.f32.mrf.mxu0
      %v389 = vpop.f32.mrf.mxu0
      %v390 = vadd.f32 %v223, %v389
      %v391 = vpop.f32.mrf.mxu0
      %392 = vdwg.mxu0
      %393 = vmatprep.subr.bf16.mxu0 0
      %394 = vmatpush1.bf16.msra.mxu0 0
      %395 = vmatprep.subr.bf16.mxu0 0
      %396 = vmatpush1.bf16.msra.mxu0 0
      %397 = vmatprep.subr.bf16.mxu0 0
      %398 = vmatpush1.bf16.msra.mxu0 0
      %399 = vmatprep.subr.bf16.mxu0 0
      %400 = vmatpush1.bf16.msra.mxu0 0
      %401 = vmatprep.subr.bf16.mxu0 0
      %402 = vmatpush1.bf16.msra.mxu0 0
      %403 = vmatprep.subr.bf16.mxu0 0
      %404 = vmatpush1.bf16.msra.mxu0 0
      %405 = vmatprep.subr.bf16.mxu0 0
      %406 = vmatpush1.bf16.msra.mxu0 %v329
      %407 = vmatprep.subr.bf16.mxu0 0
      %408 = vmatpush1.bf16.msra.mxu0 %v328
      %409 = vmatprep.subr.bf16.mxu0 0
      %410 = vmatpush2.bf16.msra.mxu0 0
      %411 = vmatprep.subr.bf16.mxu0 0
      %412 = vmatpush2.bf16.msra.mxu0 0
      %413 = vmatprep.subr.bf16.mxu0 0
      %414 = vmatpush2.bf16.msra.mxu0 0
      %415 = vmatprep.subr.bf16.mxu0 0
      %416 = vmatpush2.bf16.msra.mxu0 0
      %417 = vmatprep.subr.bf16.mxu0 0
      %418 = vmatpush2.bf16.msra.mxu0 0
      %419 = vmatprep.subr.bf16.mxu0 0
      %420 = vmatpush2.bf16.msra.mxu0 0
      %421 = vmatprep.subr.bf16.mxu0 0
      %422 = vmatpush2.bf16.msra.mxu0 0
      %423 = vmatprep.subr.bf16.mxu0 0
      %424 = vmatpush2.bf16.msra.mxu0 0
      %425 = vmatprep.mubr.bf16.mxu0 0
      %426 = vmatmul.mubr.bf16.gmra.mxu0 %v350
      %v427 = vpop.f32.mrf.mxu0
      %v428 = vadd.f32 %v387, %v427
      %v429 = vpop.f32.mrf.mxu0
      %v430 = vpop.f32.mrf.mxu0
      %v431 = vadd.f32 %v390, %v430
      %v432 = vpop.f32.mrf.mxu0
      %433 = vdwg.mxu0
      %v434 = vmax.f32 %v428, 0.0
      %v435 = vmax.f32 %v431, 0.0
      %v436 = vpack.c.bf16 %v435, %v434
      %v438 = vunpack.c.l.b16 %v436
      %v439 = vunpack.c.h.b16 %v436
      %v440 = vpack.c.b16 %v438, %v438
      %v441 = vpack.c.b16 %v439, %v439
      %vm444 = vcmask 519168
      %445 = vst.msk [vmem:[%s175] sm:$0xf] %vm444, %v440
      %446 = vst.msk [vmem:[%s175 + $0x4] sm:$0xf] %vm444, %v441
      %s447 = smul.u32 2, %s14
      %p448 = scmp.lt.s32.totalorder %s447, 3
      %s449 = scalar_select %p448, %s447, 3
      %s450 = smul.addr %s449, 4
      %s451 = scalar_lea.vmem %s3, %s450
      // Predicated region
      $region33: #{nanodet_plus_forward.9} parent=31 // pred_check
        %p452 = pneg %p100
      $region34: #{nanodet_plus_forward.9} parent=31 // pred_check_branch
        %454 = sbr.rel (%p452) target = $region36
      $region35: #{nanodet_plus_forward.9} parent=31 // pred_region
        %s455 = smul.u32 2, %s14
      $region36: #{nanodet_plus_forward.9} parent=31 // pred_fallthru
        _
    $region32: #{nanodet_plus_forward.9} parent=5 // pred_fallthru
      _
    %p456 = scmp.le.s32.totalorder 2, %s9
    // Predicated region
    $region37: #{nanodet_plus_forward.9} parent=5 // pred_check
      %p457 = pneg %p456
    $region38: #{nanodet_plus_forward.9} parent=5 // pred_check_branch
      %459 = sbr.rel (%p457) target = $region40
    $region39: #{nanodet_plus_forward.9} parent=5 // pred_region
      %s460 = ssub.s32 %s9, 2
      // Predicated region
      $region41: #{nanodet_plus_forward.9} parent=39 // pred_check
        %p461 = pneg %p106
      $region42: #{nanodet_plus_forward.9} parent=39 // pred_check_branch
        %463 = sbr.rel (%p461) target = $region44
      $region43: #{nanodet_plus_forward.9} parent=39 // pred_region
        %s464 = smul.u32 2, %s15
        %p465 = scmp.lt.s32.totalorder %s464, 3
        %s466 = scalar_select %p465, %s464, 3
        %s467 = smul.addr %s466, 4
        %s468 = scalar_lea.vmem %s3, %s467
      $region44: #{nanodet_plus_forward.9} parent=39 // pred_fallthru
        _
    $region40: #{nanodet_plus_forward.9} parent=5 // pred_fallthru
      _
  $region6: #{nanodet_plus_forward.9} parent=0 // loop_footer
    %s13 = sadd.s32 1, %s9
  $region7: #{nanodet_plus_forward.9} parent=0 // loop_footer_branch
    %8 = sbr.rel target = $region3
  $region8: #{nanodet_plus_forward.9} parent=0 // loop_exit
    _

// kernel: nanodet_plus_forward.10
$region0: #{nanodet_plus_forward.10}
  #allocation0 [shape = 'u32[]', space=smem, size = 0x4, offset = 0x4, fixed_abs, tag = 'smem constant byte address 0x4 - core index']
  #allocation1 [shape = 'u32[144,128]{1,0:T(1,128)}', space=vmem, size = 0x12000, scoped, tag = 'internal scratch']
  %s0 = inlined_call_operand.vmem [shape: bf16[32,64], index: 0, kind: input, shape index: {}]
  %s1 = inlined_call_operand.vmem [shape: bf16[64,32], index: 1, kind: input, shape index: {}]
  %s2 = inlined_call_operand.vmem [shape: f32[1,32], index: 2, kind: input, shape index: {}]
  %s3 = inlined_call_operand.vmem [shape: bf16[32,32], index: 3, kind: output, shape index: {}]
  %s4 = sld [smem:[#allocation0]]
  $region45: #{nanodet_plus_forward.10} parent=0
    _
  %s6 = ssub.s32 1, %s4
  %s7 = scalar_select 0, %s6, %s4
  loop: start=0, step=1, limit=4
  $region2: #{nanodet_plus_forward.10} parent=0 // loop_pre_header
    _
  $region3: #{nanodet_plus_forward.10} parent=0 // loop_header
    %s9 = sphi 0, %s13
    %p10 = scmp.ge.s32.totalorder %s9, 4
    %s19 = sphi 0, %s21
    %s22 = sphi 0, %s19
    %s23 = sphi 0, %s22
    %s39 = sphi 0, %s23
    %s43 = sphi 0, %s43
    %s45 = sphi 0, %s43
    %s46 = sphi 0, %s45
    %s60 = sphi 0, %s46
    %s64 = sphi 0, %s64
    %s66 = sphi 0, %s64
    %s67 = sphi 0, %s66
    %s81 = sphi 0, %s67
    %s87 = sphi 0, %s89
    %s90 = sphi 0, %s87
    %s91 = sphi 0, %s90
    %s107 = sphi 0, %s91
  $region4: #{nanodet_plus_forward.10} parent=0 // loop_header_branch
    %12 = sbr.rel (%p10) target = $region8
  $region5: #{nanodet_plus_forward.10} parent=0 // loop_body
    %s14 = ssub.s32 %s9, 1
    %s15 = ssub.s32 %s9, 2
    %s16 = sadd.s32 %s9, 1
    %s17 = ssub.s32 %s9, %s16
    %p18 = scmp.eq.s32.totalorder %s17, 0
    %s20 = sadd.s32 %s19, 1
    %s21 = scalar_select %p18, %s19, %s20
    %p24 = pneg %p18
    %p25 = scmp.eq.s32.totalorder %s9, 1
    %p26 = por %p24, %p25
    %p27 = scmp.ne.s32.totalorder %s19, %s22
    %p28 = scmp.eq.s32.totalorder %s9, 0
    %p29 = por %p27, %p28
    %p30 = scmp.ne.s32.totalorder %s19, %s22
    %p31 = scmp.eq.s32.totalorder %s14, 1
    %p32 = por %p30, %p31
    %p33 = scmp.ne.s32.totalorder %s22, %s23
    %p34 = scmp.eq.s32.totalorder %s14, 0
    %p35 = por %p33, %p34
    %p36 = scmp.ne.s32.totalorder %s22, %s23
    %p37 = scmp.eq.s32.totalorder %s15, 1
    %p38 = por %p36, %p37
    %p40 = scmp.ne.s32.totalorder %s23, %s39
    %p41 = scmp.eq.s32.totalorder %s15, 0
    %p42 = por %p40, %p41
    %s44 = sadd.s32 %s43, 1
    %p47 = scmp.eq.s32.totalorder %s9, 1
    %p48 = scmp.ne.s32.totalorder %s43, %s45
    %p49 = scmp.eq.s32.totalorder %s9, 0
    %p50 = por %p48, %p49
    %p51 = scmp.ne.s32.totalorder %s43, %s45
    %p52 = scmp.eq.s32.totalorder %s14, 1
    %p53 = por %p51, %p52
    %p54 = scmp.ne.s32.totalorder %s45, %s46
    %p55 = scmp.eq.s32.totalorder %s14, 0
    %p56 = por %p54, %p55
    %p57 = scmp.ne.s32.totalorder %s45, %s46
    %p58 = scmp.eq.s32.totalorder %s15, 1
    %p59 = por %p57, %p58
    %p61 = scmp.ne.s32.totalorder %s46, %s60
    %p62 = scmp.eq.s32.totalorder %s15, 0
    %p63 = por %p61, %p62
    %s65 = sadd.s32 %s64, 1
    %p68 = scmp.eq.s32.totalorder %s9, 1
    %p69 = scmp.ne.s32.totalorder %s64, %s66
    %p70 = scmp.eq.s32.totalorder %s9, 0
    %p71 = por %p69, %p70
    %p72 = scmp.ne.s32.totalorder %s64, %s66
    %p73 = scmp.eq.s32.totalorder %s14, 1
    %p74 = por %p72, %p73
    %p75 = scmp.ne.s32.totalorder %s66, %s67
    %p76 = scmp.eq.s32.totalorder %s14, 0
    %p77 = por %p75, %p76
    %p78 = scmp.ne.s32.totalorder %s66, %s67
    %p79 = scmp.eq.s32.totalorder %s15, 1
    %p80 = por %p78, %p79
    %p82 = scmp.ne.s32.totalorder %s67, %s81
    %p83 = scmp.eq.s32.totalorder %s15, 0
    %p84 = por %p82, %p83
    %s85 = ssub.s32 %s9, %s16
    %p86 = scmp.eq.s32.totalorder %s85, 0
    %s88 = sadd.s32 %s87, 1
    %s89 = scalar_select %p86, %s87, %s88
    %p92 = pneg %p86
    %p93 = scmp.eq.s32.totalorder %s9, 1
    %p94 = por %p92, %p93
    %p95 = scmp.ne.s32.totalorder %s87, %s90
    %p96 = scmp.eq.s32.totalorder %s9, 0
    %p97 = por %p95, %p96
    %p98 = scmp.ne.s32.totalorder %s87, %s90
    %p99 = scmp.eq.s32.totalorder %s14, 1
    %p100 = por %p98, %p99
    %p101 = scmp.ne.s32.totalorder %s90, %s91
    %p102 = scmp.eq.s32.totalorder %s14, 0
    %p103 = por %p101, %p102
    %p104 = scmp.ne.s32.totalorder %s90, %s91
    %p105 = scmp.eq.s32.totalorder %s15, 1
    %p106 = por %p104, %p105
    %p108 = scmp.ne.s32.totalorder %s91, %s107
    %p109 = scmp.eq.s32.totalorder %s15, 0
    %p110 = por %p108, %p109
    %p111 = scmp.le.s32.totalorder 1, %s9
    %p112 = scmp.lt.s32.totalorder %s9, 3
    %p113 = pnand %p111, %p112
    %p114 = pneg %p113
    // Predicated region
    $region9: #{nanodet_plus_forward.10} parent=5 // pred_check
      _
    $region10: #{nanodet_plus_forward.10} parent=5 // pred_check_branch
      %116 = sbr.rel (%p113) target = $region12
    $region11: #{nanodet_plus_forward.10} parent=5 // pred_region
      %s117 = ssub.s32 %s9, 1
      // Predicated region
      $region13: #{nanodet_plus_forward.10} parent=11 // pred_check
        %p118 = pneg %p56
      $region14: #{nanodet_plus_forward.10} parent=11 // pred_check_branch
        %120 = sbr.rel (%p118) target = $region16
      $region15: #{nanodet_plus_forward.10} parent=11 // pred_region
        _
      $region16: #{nanodet_plus_forward.10} parent=11 // pred_fallthru
        _
      // Predicated region
      $region17: #{nanodet_plus_forward.10} parent=11 // pred_check
        %p121 = pneg %p77
      $region18: #{nanodet_plus_forward.10} parent=11 // pred_check_branch
        %123 = sbr.rel (%p121) target = $region20
      $region19: #{nanodet_plus_forward.10} parent=11 // pred_region
        _
      $region20: #{nanodet_plus_forward.10} parent=11 // pred_fallthru
        _
    $region12: #{nanodet_plus_forward.10} parent=5 // pred_fallthru
      _
    %p124 = scmp.lt.s32.totalorder %s9, 2
    // Predicated region
    $region21: #{nanodet_plus_forward.10} parent=5 // pred_check
      %p125 = pneg %p124
    $region22: #{nanodet_plus_forward.10} parent=5 // pred_check_branch
      %127 = sbr.rel (%p125) target = $region24
    $region23: #{nanodet_plus_forward.10} parent=5 // pred_region
      // Predicated region
      $region25: #{nanodet_plus_forward.10} parent=23 // pred_check
        %p128 = pneg %p29
      $region26: #{nanodet_plus_forward.10} parent=23 // pred_check_branch
        %130 = sbr.rel (%p128) target = $region28
      $region27: #{nanodet_plus_forward.10} parent=23 // pred_region
        %s131 = smul.u32 2, %s9
        %p132 = scmp.lt.s32.totalorder %s131, 3
        %s133 = scalar_select %p132, %s131, 3
        %s134 = smul.addr %s133, 4
        %s135 = scalar_lea.vmem %s0, %s134
        %s136 = smul.u32 2, %s9
      $region28: #{nanodet_plus_forward.10} parent=23 // pred_fallthru
        _
    $region24: #{nanodet_plus_forward.10} parent=5 // pred_fallthru
      _
    %p137 = scmp.le.s32.totalorder 1, %s9
    %p138 = scmp.lt.s32.totalorder %s9, 3
    %p139 = pnand %p137, %p138
    %p140 = pneg %p139
    // Predicated region
    $region29: #{nanodet_plus_forward.10} parent=5 // pred_check
      _
    $region30: #{nanodet_plus_forward.10} parent=5 // pred_check_branch
      %142 = sbr.rel (%p139) target = $region32
    $region31: #{nanodet_plus_forward.10} parent=5 // pred_region
      %s143 = ssub.s32 %s9, 1
      %s144 = smul.u32 2, %s14
      %p145 = scmp.lt.s32.totalorder %s144, 3
      %s146 = scalar_select %p145, %s144, 3
      %s147 = smul.addr %s146, 4
      %s148 = scalar_lea.vmem %s0, %s147
      %p149 = pneg %p35
      %p150 = pneg %p32
      %p151 = pneg %p56
      %p152 = pneg %p53
      %p153 = pneg %p77
      %p154 = pneg %p74
      %p155 = pneg %p103
      %p156 = pneg %p100
      %s157 = smul.u32 2, %s14
      %p158 = scmp.lt.s32.totalorder %s157, 3
      %s159 = scalar_select %p158, %s157, 3
      %s160 = smul.addr %s159, 4
      %s161 = scalar_lea.vmem %s3, %s160
      %s162 = smul.u32 2, %s14
      %p163 = scmp.lt.s32.totalorder %s162, 3
      %s164 = scalar_select %p163, %s162, 3
      %s165 = smul.addr %s164, 4
      %s166 = scalar_lea.vmem %s0, %s165
      %s167 = smul.u32 2, %s14
      %s168 = smul.u32 2, %s14
      %p169 = scmp.lt.s32.totalorder %s168, 3
      %s170 = scalar_select %p169, %s168, 3
      %s171 = smul.addr %s170, 4
      %s172 = scalar_lea.vmem %s3, %s171
      %s173 = smul.u32 2, %s14
      %v175 = vld [vmem:[%s166] sm:$0xf]
      %v176 = vld [vmem:[%s166 + $0x4] sm:$0xf]
      %v177 = vld [vmem:[%s1] sm:$0xf]
      %v178 = vld [vmem:[%s1 + $0x4] sm:$0xf]
      %v179 = vld [vmem:[%s1 + $0x8] sm:$0xf]
      %v180 = vld [vmem:[%s1 + $0xc] sm:$0xf]
      %v181 = vld [vmem:[%s1 + $0x10] sm:$0xf]
      %v182 = vld [vmem:[%s1 + $0x14] sm:$0xf]
      %v183 = vld [vmem:[%s1 + $0x18] sm:$0xf]
      %v184 = vld [vmem:[%s1 + $0x1c] sm:$0xf]
      %v185 = vld [vmem:[%s2] sm:$0x1]
      %v187 = vlaneseq
      %v188 = vshrl.u32 %v187, 7
      %v189 = vsub.s32 0, %v188
      %v190 = vrot.slane %v185, %v189
      %v194 = vunpack.c.l.b16 %v175
      %v195 = vunpack.c.l.b16 %v176
      %v196 = vpack.c.b16 %v195, %v194
      %v205 = vunpack.c.l.b16 %v177
      %v206 = vunpack.c.l.b16 %v178
      %v207 = vunpack.c.l.b16 %v179
      %v208 = vunpack.c.l.b16 %v180
      %v209 = vunpack.c.l.b16 %v181
      %v210 = vunpack.c.l.b16 %v182
      %v211 = vunpack.c.l.b16 %v183
      %v212 = vunpack.c.l.b16 %v184
      %v213 = vpack.c.b16 %v206, %v205
      %v214 = vpack.c.b16 %v208, %v207
      %v215 = vpack.c.b16 %v210, %v209
      %v216 = vpack.c.b16 %v212, %v211
      %vm221 = vcmask 523264
      %v223 = vsel %vm221, %v196, 0
      %225 = vmatprep.subr.bf16.mxu0 0
      %226 = vmatpush1.bf16.msra.mxu0 0
      %227 = vmatprep.subr.bf16.mxu0 0
      %228 = vmatpush1.bf16.msra.mxu0 0
      %229 = vmatprep.subr.bf16.mxu0 0
      %230 = vmatpush1.bf16.msra.mxu0 0
      %231 = vmatprep.subr.bf16.mxu0 0
      %232 = vmatpush1.bf16.msra.mxu0 0
      %233 = vmatprep.subr.bf16.mxu0 0
      %234 = vmatpush1.bf16.msra.mxu0 %v216
      %235 = vmatprep.subr.bf16.mxu0 0
      %236 = vmatpush1.bf16.msra.mxu0 %v215
      %237 = vmatprep.subr.bf16.mxu0 0
      %238 = vmatpush1.bf16.msra.mxu0 %v214
      %239 = vmatprep.subr.bf16.mxu0 0
      %240 = vmatpush1.bf16.msra.mxu0 %v213
      %241 = vmatprep.subr.bf16.mxu0 0
      %242 = vmatpush2.bf16.msra.mxu0 0
      %243 = vmatprep.subr.bf16.mxu0 0
      %244 = vmatpush2.bf16.msra.mxu0 0
      %245 = vmatprep.subr.bf16.mxu0 0
      %246 = vmatpush2.bf16.msra.mxu0 0
      %247 = vmatprep.subr.bf16.mxu0 0
      %248 = vmatpush2.bf16.msra.mxu0 0
      %249 = vmatprep.subr.bf16.mxu0 0
      %250 = vmatpush2.bf16.msra.mxu0 0
      %251 = vmatprep.subr.bf16.mxu0 0
      %252 = vmatpush2.bf16.msra.mxu0 0
      %253 = vmatprep.subr.bf16.mxu0 0
      %254 = vmatpush2.bf16.msra.mxu0 0
      %255 = vmatprep.subr.bf16.mxu0 0
      %256 = vmatpush2.bf16.msra.mxu0 0
      %257 = vmatprep.mubr.bf16.mxu0 0
      %258 = vmatmul.mubr.bf16.gmra.mxu0 %v223
      %v259 = vpop.f32.mrf.mxu0
      %v260 = vadd.f32 %v190, %v259
      %v261 = vpop.f32.mrf.mxu0
      %v262 = vpop.f32.mrf.mxu0
      %v263 = vadd.f32 %v190, %v262
      %v264 = vpop.f32.mrf.mxu0
      %265 = vdwg.mxu0
      %v266 = vpack.c.bf16 %v263, %v260
      %v268 = vunpack.c.l.b16 %v266
      %v269 = vunpack.c.h.b16 %v266
      %v270 = vpack.c.b16 %v268, %v268
      %v271 = vpack.c.b16 %v269, %v269
      %vm274 = vcmask 257024
      %275 = vst.msk [vmem:[%s172] sm:$0xf] %vm274, %v270
      %276 = vst.msk [vmem:[%s172 + $0x4] sm:$0xf] %vm274, %v271
      %s277 = smul.u32 2, %s14
      %p278 = scmp.lt.s32.totalorder %s277, 3
      %s279 = scalar_select %p278, %s277, 3
      %s280 = smul.addr %s279, 4
      %s281 = scalar_lea.vmem %s3, %s280
      // Predicated region
      $region33: #{nanodet_plus_forward.10} parent=31 // pred_check
        %p282 = pneg %p100
      $region34: #{nanodet_plus_forward.10} parent=31 // pred_check_branch
        %284 = sbr.rel (%p282) target = $region36
      $region35: #{nanodet_plus_forward.10} parent=31 // pred_region
        %s285 = smul.u32 2, %s14
      $region36: #{nanodet_plus_forward.10} parent=31 // pred_fallthru
        _
    $region32: #{nanodet_plus_forward.10} parent=5 // pred_fallthru
      _
    %p286 = scmp.le.s32.totalorder 2, %s9
    // Predicated region
    $region37: #{nanodet_plus_forward.10} parent=5 // pred_check
      %p287 = pneg %p286
    $region38: #{nanodet_plus_forward.10} parent=5 // pred_check_branch
      %289 = sbr.rel (%p287) target = $region40
    $region39: #{nanodet_plus_forward.10} parent=5 // pred_region
      %s290 = ssub.s32 %s9, 2
      // Predicated region
      $region41: #{nanodet_plus_forward.10} parent=39 // pred_check
        %p291 = pneg %p106
      $region42: #{nanodet_plus_forward.10} parent=39 // pred_check_branch
        %293 = sbr.rel (%p291) target = $region44
      $region43: #{nanodet_plus_forward.10} parent=39 // pred_region
        %s294 = smul.u32 2, %s15
        %p295 = scmp.lt.s32.totalorder %s294, 3
        %s296 = scalar_select %p295, %s294, 3
        %s297 = smul.addr %s296, 4
        %s298 = scalar_lea.vmem %s3, %s297
      $region44: #{nanodet_plus_forward.10} parent=39 // pred_fallthru
        _
    $region40: #{nanodet_plus_forward.10} parent=5 // pred_fallthru
      _
  $region6: #{nanodet_plus_forward.10} parent=0 // loop_footer
    %s13 = sadd.s32 1, %s9
  $region7: #{nanodet_plus_forward.10} parent=0 // loop_footer_branch
    %8 = sbr.rel target = $region3
  $region8: #{nanodet_plus_forward.10} parent=0 // loop_exit
    _

// kernel: nanodet_plus_forward.11
$region0: #{nanodet_plus_forward.11}
  #allocation0 [shape = 'u32[]', space=smem, size = 0x4, offset = 0x4, fixed_abs, tag = 'smem constant byte address 0x4 - core index']
  #allocation1 [shape = 'u32[144,128]{1,0:T(1,128)}', space=vmem, size = 0x12000, scoped, tag = 'internal scratch']
  %s0 = inlined_call_operand.vmem [shape: bf16[128,32], index: 0, kind: input, shape index: {}]
  %s1 = inlined_call_operand.vmem [shape: bf16[32,32], index: 1, kind: input, shape index: {}]
  %s2 = inlined_call_operand.vmem [shape: f32[1,32], index: 2, kind: input, shape index: {}]
  %s3 = inlined_call_operand.vmem [shape: bf16[128,32], index: 3, kind: input, shape index: {}]
  %s4 = inlined_call_operand.vmem [shape: bf16[128,32], index: 4, kind: output, shape index: {}]
  %s5 = sld [smem:[#allocation0]]
  $region49: #{nanodet_plus_forward.11} parent=0
    _
  %s7 = ssub.s32 1, %s5
  %s8 = scalar_select 0, %s7, %s5
  loop: start=0, step=1, limit=4
  $region2: #{nanodet_plus_forward.11} parent=0 // loop_pre_header
    _
  $region3: #{nanodet_plus_forward.11} parent=0 // loop_header
    %s10 = sphi 0, %s14
    %p11 = scmp.ge.s32.totalorder %s10, 4
    %s20 = sphi 0, %s22
    %s23 = sphi 0, %s20
    %s24 = sphi 0, %s23
    %s40 = sphi 0, %s24
    %s44 = sphi 0, %s44
    %s46 = sphi 0, %s44
    %s47 = sphi 0, %s46
    %s61 = sphi 0, %s47
    %s65 = sphi 0, %s65
    %s67 = sphi 0, %s65
    %s68 = sphi 0, %s67
    %s82 = sphi 0, %s68
    %s88 = sphi 0, %s90
    %s91 = sphi 0, %s88
    %s92 = sphi 0, %s91
    %s108 = sphi 0, %s92
    %s114 = sphi 0, %s116
    %s117 = sphi 0, %s114
    %s118 = sphi 0, %s117
    %s134 = sphi 0, %s118
  $region4: #{nanodet_plus_forward.11} parent=0 // loop_header_branch
    %13 = sbr.rel (%p11) target = $region8
  $region5: #{nanodet_plus_forward.11} parent=0 // loop_body
    %s15 = ssub.s32 %s10, 1
    %s16 = ssub.s32 %s10, 2
    %s17 = sadd.s32 %s10, 1
    %s18 = ssub.s32 %s10, %s17
    %p19 = scmp.eq.s32.totalorder %s18, 0
    %s21 = sadd.s32 %s20, 1
    %s22 = scalar_select %p19, %s20, %s21
    %p25 = pneg %p19
    %p26 = scmp.eq.s32.totalorder %s10, 1
    %p27 = por %p25, %p26
    %p28 = scmp.ne.s32.totalorder %s20, %s23
    %p29 = scmp.eq.s32.totalorder %s10, 0
    %p30 = por %p28, %p29
    %p31 = scmp.ne.s32.totalorder %s20, %s23
    %p32 = scmp.eq.s32.totalorder %s15, 1
    %p33 = por %p31, %p32
    %p34 = scmp.ne.s32.totalorder %s23, %s24
    %p35 = scmp.eq.s32.totalorder %s15, 0
    %p36 = por %p34, %p35
    %p37 = scmp.ne.s32.totalorder %s23, %s24
    %p38 = scmp.eq.s32.totalorder %s16, 1
    %p39 = por %p37, %p38
    %p41 = scmp.ne.s32.totalorder %s24, %s40
    %p42 = scmp.eq.s32.totalorder %s16, 0
    %p43 = por %p41, %p42
    %s45 = sadd.s32 %s44, 1
    %p48 = scmp.eq.s32.totalorder %s10, 1
    %p49 = scmp.ne.s32.totalorder %s44, %s46
    %p50 = scmp.eq.s32.totalorder %s10, 0
    %p51 = por %p49, %p50
    %p52 = scmp.ne.s32.totalorder %s44, %s46
    %p53 = scmp.eq.s32.totalorder %s15, 1
    %p54 = por %p52, %p53
    %p55 = scmp.ne.s32.totalorder %s46, %s47
    %p56 = scmp.eq.s32.totalorder %s15, 0
    %p57 = por %p55, %p56
    %p58 = scmp.ne.s32.totalorder %s46, %s47
    %p59 = scmp.eq.s32.totalorder %s16, 1
    %p60 = por %p58, %p59
    %p62 = scmp.ne.s32.totalorder %s47, %s61
    %p63 = scmp.eq.s32.totalorder %s16, 0
    %p64 = por %p62, %p63
    %s66 = sadd.s32 %s65, 1
    %p69 = scmp.eq.s32.totalorder %s10, 1
    %p70 = scmp.ne.s32.totalorder %s65, %s67
    %p71 = scmp.eq.s32.totalorder %s10, 0
    %p72 = por %p70, %p71
    %p73 = scmp.ne.s32.totalorder %s65, %s67
    %p74 = scmp.eq.s32.totalorder %s15, 1
    %p75 = por %p73, %p74
    %p76 = scmp.ne.s32.totalorder %s67, %s68
    %p77 = scmp.eq.s32.totalorder %s15, 0
    %p78 = por %p76, %p77
    %p79 = scmp.ne.s32.totalorder %s67, %s68
    %p80 = scmp.eq.s32.totalorder %s16, 1
    %p81 = por %p79, %p80
    %p83 = scmp.ne.s32.totalorder %s68, %s82
    %p84 = scmp.eq.s32.totalorder %s16, 0
    %p85 = por %p83, %p84
    %s86 = ssub.s32 %s10, %s17
    %p87 = scmp.eq.s32.totalorder %s86, 0
    %s89 = sadd.s32 %s88, 1
    %s90 = scalar_select %p87, %s88, %s89
    %p93 = pneg %p87
    %p94 = scmp.eq.s32.totalorder %s10, 1
    %p95 = por %p93, %p94
    %p96 = scmp.ne.s32.totalorder %s88, %s91
    %p97 = scmp.eq.s32.totalorder %s10, 0
    %p98 = por %p96, %p97
    %p99 = scmp.ne.s32.totalorder %s88, %s91
    %p100 = scmp.eq.s32.totalorder %s15, 1
    %p101 = por %p99, %p100
    %p102 = scmp.ne.s32.totalorder %s91, %s92
    %p103 = scmp.eq.s32.totalorder %s15, 0
    %p104 = por %p102, %p103
    %p105 = scmp.ne.s32.totalorder %s91, %s92
    %p106 = scmp.eq.s32.totalorder %s16, 1
    %p107 = por %p105, %p106
    %p109 = scmp.ne.s32.totalorder %s92, %s108
    %p110 = scmp.eq.s32.totalorder %s16, 0
    %p111 = por %p109, %p110
    %s112 = ssub.s32 %s10, %s17
    %p113 = scmp.eq.s32.totalorder %s112, 0
    %s115 = sadd.s32 %s114, 1
    %s116 = scalar_select %p113, %s114, %s115
    %p119 = pneg %p113
    %p120 = scmp.eq.s32.totalorder %s10, 1
    %p121 = por %p119, %p120
    %p122 = scmp.ne.s32.totalorder %s114, %s117
    %p123 = scmp.eq.s32.totalorder %s10, 0
    %p124 = por %p122, %p123
    %p125 = scmp.ne.s32.totalorder %s114, %s117
    %p126 = scmp.eq.s32.totalorder %s15, 1
    %p127 = por %p125, %p126
    %p128 = scmp.ne.s32.totalorder %s117, %s118
    %p129 = scmp.eq.s32.totalorder %s15, 0
    %p130 = por %p128, %p129
    %p131 = scmp.ne.s32.totalorder %s117, %s118
    %p132 = scmp.eq.s32.totalorder %s16, 1
    %p133 = por %p131, %p132
    %p135 = scmp.ne.s32.totalorder %s118, %s134
    %p136 = scmp.eq.s32.totalorder %s16, 0
    %p137 = por %p135, %p136
    %p138 = scmp.le.s32.totalorder 1, %s10
    %p139 = scmp.lt.s32.totalorder %s10, 3
    %p140 = pnand %p138, %p139
    %p141 = pneg %p140
    // Predicated region
    $region9: #{nanodet_plus_forward.11} parent=5 // pred_check
      _
    $region10: #{nanodet_plus_forward.11} parent=5 // pred_check_branch
      %143 = sbr.rel (%p140) target = $region12
    $region11: #{nanodet_plus_forward.11} parent=5 // pred_region
      %s144 = ssub.s32 %s10, 1
      // Predicated region
      $region13: #{nanodet_plus_forward.11} parent=11 // pred_check
        %p145 = pneg %p57
      $region14: #{nanodet_plus_forward.11} parent=11 // pred_check_branch
        %147 = sbr.rel (%p145) target = $region16
      $region15: #{nanodet_plus_forward.11} parent=11 // pred_region
        _
      $region16: #{nanodet_plus_forward.11} parent=11 // pred_fallthru
        _
      // Predicated region
      $region17: #{nanodet_plus_forward.11} parent=11 // pred_check
        %p148 = pneg %p78
      $region18: #{nanodet_plus_forward.11} parent=11 // pred_check_branch
        %150 = sbr.rel (%p148) target = $region20
      $region19: #{nanodet_plus_forward.11} parent=11 // pred_region
        _
      $region20: #{nanodet_plus_forward.11} parent=11 // pred_fallthru
        _
    $region12: #{nanodet_plus_forward.11} parent=5 // pred_fallthru
      _
    %p151 = scmp.lt.s32.totalorder %s10, 2
    // Predicated region
    $region21: #{nanodet_plus_forward.11} parent=5 // pred_check
      %p152 = pneg %p151
    $region22: #{nanodet_plus_forward.11} parent=5 // pred_check_branch
      %154 = sbr.rel (%p152) target = $region24
    $region23: #{nanodet_plus_forward.11} parent=5 // pred_region
      // Predicated region
      $region25: #{nanodet_plus_forward.11} parent=23 // pred_check
        %p155 = pneg %p30
      $region26: #{nanodet_plus_forward.11} parent=23 // pred_check_branch
        %157 = sbr.rel (%p155) target = $region28
      $region27: #{nanodet_plus_forward.11} parent=23 // pred_region
        %s158 = smul.u32 8, %s10
        %p159 = scmp.lt.s32.totalorder %s158, 15
        %s160 = scalar_select %p159, %s158, 15
        %s161 = smul.addr %s160, 4
        %s162 = scalar_lea.vmem %s0, %s161
        %s163 = smul.u32 8, %s10
      $region28: #{nanodet_plus_forward.11} parent=23 // pred_fallthru
        _
      // Predicated region
      $region29: #{nanodet_plus_forward.11} parent=23 // pred_check
        %p164 = pneg %p98
      $region30: #{nanodet_plus_forward.11} parent=23 // pred_check_branch
        %166 = sbr.rel (%p164) target = $region32
      $region31: #{nanodet_plus_forward.11} parent=23 // pred_region
        %s167 = smul.u32 8, %s10
        %p168 = scmp.lt.s32.totalorder %s167, 15
        %s169 = scalar_select %p168, %s167, 15
        %s170 = smul.addr %s169, 4
        %s171 = scalar_lea.vmem %s3, %s170
        %s172 = smul.u32 8, %s10
      $region32: #{nanodet_plus_forward.11} parent=23 // pred_fallthru
        _
    $region24: #{nanodet_plus_forward.11} parent=5 // pred_fallthru
      _
    %p173 = scmp.le.s32.totalorder 1, %s10
    %p174 = scmp.lt.s32.totalorder %s10, 3
    %p175 = pnand %p173, %p174
    %p176 = pneg %p175
    // Predicated region
    $region33: #{nanodet_plus_forward.11} parent=5 // pred_check
      _
    $region34: #{nanodet_plus_forward.11} parent=5 // pred_check_branch
      %178 = sbr.rel (%p175) target = $region36
    $region35: #{nanodet_plus_forward.11} parent=5 // pred_region
      %s179 = ssub.s32 %s10, 1
      %s180 = smul.u32 8, %s15
      %p181 = scmp.lt.s32.totalorder %s180, 15
      %s182 = scalar_select %p181, %s180, 15
      %s183 = smul.addr %s182, 4
      %s184 = scalar_lea.vmem %s0, %s183
      %p185 = pneg %p36
      %p186 = pneg %p33
      %p187 = pneg %p57
      %p188 = pneg %p54
      %p189 = pneg %p78
      %p190 = pneg %p75
      %s191 = smul.u32 8, %s15
      %p192 = scmp.lt.s32.totalorder %s191, 15
      %s193 = scalar_select %p192, %s191, 15
      %s194 = smul.addr %s193, 4
      %s195 = scalar_lea.vmem %s3, %s194
      %p196 = pneg %p104
      %p197 = pneg %p101
      %p198 = pneg %p130
      %p199 = pneg %p127
      %s200 = smul.u32 8, %s15
      %p201 = scmp.lt.s32.totalorder %s200, 15
      %s202 = scalar_select %p201, %s200, 15
      %s203 = smul.addr %s202, 4
      %s204 = scalar_lea.vmem %s4, %s203
      %s205 = smul.u32 8, %s15
      %p206 = scmp.lt.s32.totalorder %s205, 15
      %s207 = scalar_select %p206, %s205, 15
      %s208 = smul.addr %s207, 4
      %s209 = scalar_lea.vmem %s0, %s208
      %s210 = smul.u32 8, %s15
      %s211 = smul.u32 8, %s15
      %p212 = scmp.lt.s32.totalorder %s211, 15
      %s213 = scalar_select %p212, %s211, 15
      %s214 = smul.addr %s213, 4
      %s215 = scalar_lea.vmem %s3, %s214
      %s216 = smul.u32 8, %s15
      %s217 = smul.u32 8, %s15
      %p218 = scmp.lt.s32.totalorder %s217, 15
      %s219 = scalar_select %p218, %s217, 15
      %s220 = smul.addr %s219, 4
      %s221 = scalar_lea.vmem %s4, %s220
      %s222 = smul.u32 8, %s15
      %v224 = vld [vmem:[%s209] sm:$0xf]
      %v225 = vld [vmem:[%s209 + $0x4] sm:$0xf]
      %v226 = vld [vmem:[%s209 + $0x8] sm:$0xf]
      %v227 = vld [vmem:[%s209 + $0xc] sm:$0xf]
      %v228 = vld [vmem:[%s209 + $0x10] sm:$0xf]
      %v229 = vld [vmem:[%s209 + $0x14] sm:$0xf]
      %v230 = vld [vmem:[%s209 + $0x18] sm:$0xf]
      %v231 = vld [vmem:[%s209 + $0x1c] sm:$0xf]
      %v232 = vld [vmem:[%s1] sm:$0xf]
      %v233 = vld [vmem:[%s1 + $0x4] sm:$0xf]
      %v234 = vld [vmem:[%s1 + $0x8] sm:$0xf]
      %v235 = vld [vmem:[%s1 + $0xc] sm:$0xf]
      %v236 = vld [vmem:[%s2] sm:$0x1]
      %v238 = vlaneseq
      %v239 = vshrl.u32 %v238, 7
      %v240 = vsub.s32 0, %v239
      %v241 = vrot.slane %v236, %v240
      %v251 = vunpack.c.l.b16 %v224
      %v252 = vunpack.c.l.b16 %v225
      %v253 = vunpack.c.l.b16 %v226
      %v254 = vunpack.c.l.b16 %v227
      %v255 = vunpack.c.l.b16 %v228
      %v256 = vunpack.c.l.b16 %v229
      %v257 = vunpack.c.l.b16 %v230
      %v258 = vunpack.c.l.b16 %v231
      %v259 = vpack.c.b16 %v252, %v251
      %v260 = vpack.c.b16 %v254, %v253
      %v261 = vpack.c.b16 %v256, %v255
      %v262 = vpack.c.b16 %v258, %v257
      %v267 = vunpack.c.l.b16 %v232
      %v268 = vunpack.c.l.b16 %v233
      %v269 = vunpack.c.l.b16 %v234
      %v270 = vunpack.c.l.b16 %v235
      %v271 = vpack.c.b16 %v268, %v267
      %v272 = vpack.c.b16 %v270, %v269
      %vm275 = vcmask 261120
      %v277 = vsel %vm275, %v259, 0
      %v280 = vsel %vm275, %v260, 0
      %v283 = vsel %vm275, %v261, 0
      %v286 = vsel %vm275, %v262, 0
      %288 = vmatprep.subr.bf16.mxu0 0
      %289 = vmatpush1.bf16.msra.mxu0 0
      %290 = vmatprep.subr.bf16.mxu0 0
      %291 = vmatpush1.bf16.msra.mxu0 0
      %292 = vmatprep.subr.bf16.mxu0 0
      %293 = vmatpush1.bf16.msra.mxu0 0
      %294 = vmatprep.subr.bf16.mxu0 0
      %295 = vmatpush1.bf16.msra.mxu0 0
      %296 = vmatprep.subr.bf16.mxu0 0
      %297 = vmatpush1.bf16.msra.mxu0 0
      %298 = vmatprep.subr.bf16.mxu0 0
      %299 = vmatpush1.bf16.msra.mxu0 0
      %300 = vmatprep.subr.bf16.mxu0 0
      %301 = vmatpush1.bf16.msra.mxu0 %v272
      %302 = vmatprep.subr.bf16.mxu0 0
      %303 = vmatpush1.bf16.msra.mxu0 %v271
      %304 = vmatprep.subr.bf16.mxu0 0
      %305 = vmatpush2.bf16.msra.mxu0 0
      %306 = vmatprep.subr.bf16.mxu0 0
      %307 = vmatpush2.bf16.msra.mxu0 0
      %308 = vmatprep.subr.bf16.mxu0 0
      %309 = vmatpush2.bf16.msra.mxu0 0
      %310 = vmatprep.subr.bf16.mxu0 0
      %311 = vmatpush2.bf16.msra.mxu0 0
      %312 = vmatprep.subr.bf16.mxu0 0
      %313 = vmatpush2.bf16.msra.mxu0 0
      %314 = vmatprep.subr.bf16.mxu0 0
      %315 = vmatpush2.bf16.msra.mxu0 0
      %316 = vmatprep.subr.bf16.mxu0 0
      %317 = vmatpush2.bf16.msra.mxu0 0
      %318 = vmatprep.subr.bf16.mxu0 0
      %319 = vmatpush2.bf16.msra.mxu0 0
      %320 = vmatprep.mubr.bf16.mxu0 0
      %321 = vmatmul.mubr.bf16.gmra.mxu0 %v277
      %v322 = vpop.f32.mrf.mxu0
      %v323 = vadd.f32 %v241, %v322
      %v324 = vpop.f32.mrf.mxu0
      %v325 = vpop.f32.mrf.mxu0
      %v326 = vadd.f32 %v241, %v325
      %v327 = vpop.f32.mrf.mxu0
      %328 = vmatprep.mubr.bf16.mxu0 0
      %329 = vmatmul.mubr.bf16.gmra.mxu0 %v280
      %v330 = vpop.f32.mrf.mxu0
      %v331 = vadd.f32 %v241, %v330
      %v332 = vpop.f32.mrf.mxu0
      %v333 = vpop.f32.mrf.mxu0
      %v334 = vadd.f32 %v241, %v333
      %v335 = vpop.f32.mrf.mxu0
      %336 = vmatprep.mubr.bf16.mxu0 0
      %337 = vmatmul.mubr.bf16.gmra.mxu0 %v283
      %v338 = vpop.f32.mrf.mxu0
      %v339 = vadd.f32 %v241, %v338
      %v340 = vpop.f32.mrf.mxu0
      %v341 = vpop.f32.mrf.mxu0
      %v342 = vadd.f32 %v241, %v341
      %v343 = vpop.f32.mrf.mxu0
      %344 = vmatprep.mubr.bf16.mxu0 0
      %345 = vmatmul.mubr.bf16.gmra.mxu0 %v286
      %v346 = vpop.f32.mrf.mxu0
      %v347 = vadd.f32 %v241, %v346
      %v348 = vpop.f32.mrf.mxu0
      %v349 = vpop.f32.mrf.mxu0
      %v350 = vadd.f32 %v241, %v349
      %v351 = vpop.f32.mrf.mxu0
      %352 = vdwg.mxu0
      %v353 = vld [vmem:[%s215] sm:$0xf]
      %v354 = vld [vmem:[%s215 + $0x4] sm:$0xf]
      %v355 = vld [vmem:[%s215 + $0x8] sm:$0xf]
      %v356 = vld [vmem:[%s215 + $0xc] sm:$0xf]
      %v357 = vld [vmem:[%s215 + $0x10] sm:$0xf]
      %v358 = vld [vmem:[%s215 + $0x14] sm:$0xf]
      %v359 = vld [vmem:[%s215 + $0x18] sm:$0xf]
      %v360 = vld [vmem:[%s215 + $0x1c] sm:$0xf]
      %v361 = vunpack.c.l.bf16 %v353
      %v362 = vunpack.c.l.bf16 %v354
      %v363 = vunpack.c.l.bf16 %v355
      %v364 = vunpack.c.l.bf16 %v356
      %v365 = vunpack.c.l.bf16 %v357
      %v366 = vunpack.c.l.bf16 %v358
      %v367 = vunpack.c.l.bf16 %v359
      %v368 = vunpack.c.l.bf16 %v360
      %v369 = vadd.f32 %v323, %v361
      %v370 = vadd.f32 %v326, %v362
      %v371 = vadd.f32 %v331, %v363
      %v372 = vadd.f32 %v334, %v364
      %v373 = vadd.f32 %v339, %v365
      %v374 = vadd.f32 %v342, %v366
      %v375 = vadd.f32 %v347, %v367
      %v376 = vadd.f32 %v350, %v368
      %v377 = vpack.c.bf16 %v370, %v369
      %v378 = vpack.c.bf16 %v372, %v371
      %v379 = vpack.c.bf16 %v374, %v373
      %v380 = vpack.c.bf16 %v376, %v375
      %v385 = vunpack.c.l.b16 %v377
      %v386 = vunpack.c.h.b16 %v377
      %v387 = vunpack.c.l.b16 %v378
      %v388 = vunpack.c.h.b16 %v378
      %v389 = vunpack.c.l.b16 %v379
      %v390 = vunpack.c.h.b16 %v379
      %v391 = vunpack.c.l.b16 %v380
      %v392 = vunpack.c.h.b16 %v380
      %v393 = vpack.c.b16 %v385, %v385
      %v394 = vpack.c.b16 %v386, %v386
      %v395 = vpack.c.b16 %v387, %v387
      %v396 = vpack.c.b16 %v388, %v388
      %v397 = vpack.c.b16 %v389, %v389
      %v398 = vpack.c.b16 %v390, %v390
      %v399 = vpack.c.b16 %v391, %v391
      %v400 = vpack.c.b16 %v392, %v392
      %vm409 = vcmask 257024
      %410 = vst.msk [vmem:[%s221] sm:$0xf] %vm409, %v393
      %411 = vst.msk [vmem:[%s221 + $0x4] sm:$0xf] %vm409, %v394
      %412 = vst.msk [vmem:[%s221 + $0x8] sm:$0xf] %vm409, %v395
      %413 = vst.msk [vmem:[%s221 + $0xc] sm:$0xf] %vm409, %v396
      %414 = vst.msk [vmem:[%s221 + $0x10] sm:$0xf] %vm409, %v397
      %415 = vst.msk [vmem:[%s221 + $0x14] sm:$0xf] %vm409, %v398
      %416 = vst.msk [vmem:[%s221 + $0x18] sm:$0xf] %vm409, %v399
      %417 = vst.msk [vmem:[%s221 + $0x1c] sm:$0xf] %vm409, %v400
      %s418 = smul.u32 8, %s15
      %p419 = scmp.lt.s32.totalorder %s418, 15
      %s420 = scalar_select %p419, %s418, 15
      %s421 = smul.addr %s420, 4
      %s422 = scalar_lea.vmem %s4, %s421
      // Predicated region
      $region37: #{nanodet_plus_forward.11} parent=35 // pred_check
        %p423 = pneg %p127
      $region38: #{nanodet_plus_forward.11} parent=35 // pred_check_branch
        %425 = sbr.rel (%p423) target = $region40
      $region39: #{nanodet_plus_forward.11} parent=35 // pred_region
        %s426 = smul.u32 8, %s15
      $region40: #{nanodet_plus_forward.11} parent=35 // pred_fallthru
        _
    $region36: #{nanodet_plus_forward.11} parent=5 // pred_fallthru
      _
    %p427 = scmp.le.s32.totalorder 2, %s10
    // Predicated region
    $region41: #{nanodet_plus_forward.11} parent=5 // pred_check
      %p428 = pneg %p427
    $region42: #{nanodet_plus_forward.11} parent=5 // pred_check_branch
      %430 = sbr.rel (%p428) target = $region44
    $region43: #{nanodet_plus_forward.11} parent=5 // pred_region
      %s431 = ssub.s32 %s10, 2
      // Predicated region
      $region45: #{nanodet_plus_forward.11} parent=43 // pred_check
        %p432 = pneg %p133
      $region46: #{nanodet_plus_forward.11} parent=43 // pred_check_branch
        %434 = sbr.rel (%p432) target = $region48
      $region47: #{nanodet_plus_forward.11} parent=43 // pred_region
        %s435 = smul.u32 8, %s16
        %p436 = scmp.lt.s32.totalorder %s435, 15
        %s437 = scalar_select %p436, %s435, 15
        %s438 = smul.addr %s437, 4
        %s439 = scalar_lea.vmem %s4, %s438
      $region48: #{nanodet_plus_forward.11} parent=43 // pred_fallthru
        _
    $region44: #{nanodet_plus_forward.11} parent=5 // pred_fallthru
      _
  $region6: #{nanodet_plus_forward.11} parent=0 // loop_footer
    %s14 = sadd.s32 1, %s10
  $region7: #{nanodet_plus_forward.11} parent=0 // loop_footer_branch
    %9 = sbr.rel target = $region3
  $region8: #{nanodet_plus_forward.11} parent=0 // loop_exit
    _

// kernel: nanodet_plus_forward.12
$region0: #{nanodet_plus_forward.12}
  #allocation0 [shape = 'u32[]', space=smem, size = 0x4, offset = 0x4, fixed_abs, tag = 'smem constant byte address 0x4 - core index']
  #allocation1 [shape = 'u32[144,128]{1,0:T(1,128)}', space=vmem, size = 0x12000, scoped, tag = 'internal scratch']
  %s0 = inlined_call_operand.vmem [shape: bf16[512,16], index: 0, kind: input, shape index: {}]
  %s1 = inlined_call_operand.vmem [shape: bf16[16,32], index: 1, kind: input, shape index: {}]
  %s2 = inlined_call_operand.vmem [shape: f32[1,32], index: 2, kind: input, shape index: {}]
  %s3 = inlined_call_operand.vmem [shape: bf16[512,32], index: 3, kind: input, shape index: {}]
  %s4 = inlined_call_operand.vmem [shape: bf16[512,32], index: 4, kind: output, shape index: {}]
  %s5 = sld [smem:[#allocation0]]
  $region49: #{nanodet_plus_forward.12} parent=0
    _
  %s7 = ssub.s32 1, %s5
  %s8 = scalar_select 0, %s7, %s5
  loop: start=0, step=1, limit=4
  $region2: #{nanodet_plus_forward.12} parent=0 // loop_pre_header
    _
  $region3: #{nanodet_plus_forward.12} parent=0 // loop_header
    %s10 = sphi 0, %s14
    %p11 = scmp.ge.s32.totalorder %s10, 4
    %s20 = sphi 0, %s22
    %s23 = sphi 0, %s20
    %s24 = sphi 0, %s23
    %s40 = sphi 0, %s24
    %s44 = sphi 0, %s44
    %s46 = sphi 0, %s44
    %s47 = sphi 0, %s46
    %s61 = sphi 0, %s47
    %s65 = sphi 0, %s65
    %s67 = sphi 0, %s65
    %s68 = sphi 0, %s67
    %s82 = sphi 0, %s68
    %s88 = sphi 0, %s90
    %s91 = sphi 0, %s88
    %s92 = sphi 0, %s91
    %s108 = sphi 0, %s92
    %s114 = sphi 0, %s116
    %s117 = sphi 0, %s114
    %s118 = sphi 0, %s117
    %s134 = sphi 0, %s118
  $region4: #{nanodet_plus_forward.12} parent=0 // loop_header_branch
    %13 = sbr.rel (%p11) target = $region8
  $region5: #{nanodet_plus_forward.12} parent=0 // loop_body
    %s15 = ssub.s32 %s10, 1
    %s16 = ssub.s32 %s10, 2
    %s17 = sadd.s32 %s10, 1
    %s18 = ssub.s32 %s10, %s17
    %p19 = scmp.eq.s32.totalorder %s18, 0
    %s21 = sadd.s32 %s20, 1
    %s22 = scalar_select %p19, %s20, %s21
    %p25 = pneg %p19
    %p26 = scmp.eq.s32.totalorder %s10, 1
    %p27 = por %p25, %p26
    %p28 = scmp.ne.s32.totalorder %s20, %s23
    %p29 = scmp.eq.s32.totalorder %s10, 0
    %p30 = por %p28, %p29
    %p31 = scmp.ne.s32.totalorder %s20, %s23
    %p32 = scmp.eq.s32.totalorder %s15, 1
    %p33 = por %p31, %p32
    %p34 = scmp.ne.s32.totalorder %s23, %s24
    %p35 = scmp.eq.s32.totalorder %s15, 0
    %p36 = por %p34, %p35
    %p37 = scmp.ne.s32.totalorder %s23, %s24
    %p38 = scmp.eq.s32.totalorder %s16, 1
    %p39 = por %p37, %p38
    %p41 = scmp.ne.s32.totalorder %s24, %s40
    %p42 = scmp.eq.s32.totalorder %s16, 0
    %p43 = por %p41, %p42
    %s45 = sadd.s32 %s44, 1
    %p48 = scmp.eq.s32.totalorder %s10, 1
    %p49 = scmp.ne.s32.totalorder %s44, %s46
    %p50 = scmp.eq.s32.totalorder %s10, 0
    %p51 = por %p49, %p50
    %p52 = scmp.ne.s32.totalorder %s44, %s46
    %p53 = scmp.eq.s32.totalorder %s15, 1
    %p54 = por %p52, %p53
    %p55 = scmp.ne.s32.totalorder %s46, %s47
    %p56 = scmp.eq.s32.totalorder %s15, 0
    %p57 = por %p55, %p56
    %p58 = scmp.ne.s32.totalorder %s46, %s47
    %p59 = scmp.eq.s32.totalorder %s16, 1
    %p60 = por %p58, %p59
    %p62 = scmp.ne.s32.totalorder %s47, %s61
    %p63 = scmp.eq.s32.totalorder %s16, 0
    %p64 = por %p62, %p63
    %s66 = sadd.s32 %s65, 1
    %p69 = scmp.eq.s32.totalorder %s10, 1
    %p70 = scmp.ne.s32.totalorder %s65, %s67
    %p71 = scmp.eq.s32.totalorder %s10, 0
    %p72 = por %p70, %p71
    %p73 = scmp.ne.s32.totalorder %s65, %s67
    %p74 = scmp.eq.s32.totalorder %s15, 1
    %p75 = por %p73, %p74
    %p76 = scmp.ne.s32.totalorder %s67, %s68
    %p77 = scmp.eq.s32.totalorder %s15, 0
    %p78 = por %p76, %p77
    %p79 = scmp.ne.s32.totalorder %s67, %s68
    %p80 = scmp.eq.s32.totalorder %s16, 1
    %p81 = por %p79, %p80
    %p83 = scmp.ne.s32.totalorder %s68, %s82
    %p84 = scmp.eq.s32.totalorder %s16, 0
    %p85 = por %p83, %p84
    %s86 = ssub.s32 %s10, %s17
    %p87 = scmp.eq.s32.totalorder %s86, 0
    %s89 = sadd.s32 %s88, 1
    %s90 = scalar_select %p87, %s88, %s89
    %p93 = pneg %p87
    %p94 = scmp.eq.s32.totalorder %s10, 1
    %p95 = por %p93, %p94
    %p96 = scmp.ne.s32.totalorder %s88, %s91
    %p97 = scmp.eq.s32.totalorder %s10, 0
    %p98 = por %p96, %p97
    %p99 = scmp.ne.s32.totalorder %s88, %s91
    %p100 = scmp.eq.s32.totalorder %s15, 1
    %p101 = por %p99, %p100
    %p102 = scmp.ne.s32.totalorder %s91, %s92
    %p103 = scmp.eq.s32.totalorder %s15, 0
    %p104 = por %p102, %p103
    %p105 = scmp.ne.s32.totalorder %s91, %s92
    %p106 = scmp.eq.s32.totalorder %s16, 1
    %p107 = por %p105, %p106
    %p109 = scmp.ne.s32.totalorder %s92, %s108
    %p110 = scmp.eq.s32.totalorder %s16, 0
    %p111 = por %p109, %p110
    %s112 = ssub.s32 %s10, %s17
    %p113 = scmp.eq.s32.totalorder %s112, 0
    %s115 = sadd.s32 %s114, 1
    %s116 = scalar_select %p113, %s114, %s115
    %p119 = pneg %p113
    %p120 = scmp.eq.s32.totalorder %s10, 1
    %p121 = por %p119, %p120
    %p122 = scmp.ne.s32.totalorder %s114, %s117
    %p123 = scmp.eq.s32.totalorder %s10, 0
    %p124 = por %p122, %p123
    %p125 = scmp.ne.s32.totalorder %s114, %s117
    %p126 = scmp.eq.s32.totalorder %s15, 1
    %p127 = por %p125, %p126
    %p128 = scmp.ne.s32.totalorder %s117, %s118
    %p129 = scmp.eq.s32.totalorder %s15, 0
    %p130 = por %p128, %p129
    %p131 = scmp.ne.s32.totalorder %s117, %s118
    %p132 = scmp.eq.s32.totalorder %s16, 1
    %p133 = por %p131, %p132
    %p135 = scmp.ne.s32.totalorder %s118, %s134
    %p136 = scmp.eq.s32.totalorder %s16, 0
    %p137 = por %p135, %p136
    %p138 = scmp.le.s32.totalorder 1, %s10
    %p139 = scmp.lt.s32.totalorder %s10, 3
    %p140 = pnand %p138, %p139
    %p141 = pneg %p140
    // Predicated region
    $region9: #{nanodet_plus_forward.12} parent=5 // pred_check
      _
    $region10: #{nanodet_plus_forward.12} parent=5 // pred_check_branch
      %143 = sbr.rel (%p140) target = $region12
    $region11: #{nanodet_plus_forward.12} parent=5 // pred_region
      %s144 = ssub.s32 %s10, 1
      // Predicated region
      $region13: #{nanodet_plus_forward.12} parent=11 // pred_check
        %p145 = pneg %p57
      $region14: #{nanodet_plus_forward.12} parent=11 // pred_check_branch
        %147 = sbr.rel (%p145) target = $region16
      $region15: #{nanodet_plus_forward.12} parent=11 // pred_region
        _
      $region16: #{nanodet_plus_forward.12} parent=11 // pred_fallthru
        _
      // Predicated region
      $region17: #{nanodet_plus_forward.12} parent=11 // pred_check
        %p148 = pneg %p78
      $region18: #{nanodet_plus_forward.12} parent=11 // pred_check_branch
        %150 = sbr.rel (%p148) target = $region20
      $region19: #{nanodet_plus_forward.12} parent=11 // pred_region
        _
      $region20: #{nanodet_plus_forward.12} parent=11 // pred_fallthru
        _
    $region12: #{nanodet_plus_forward.12} parent=5 // pred_fallthru
      _
    %p151 = scmp.lt.s32.totalorder %s10, 2
    // Predicated region
    $region21: #{nanodet_plus_forward.12} parent=5 // pred_check
      %p152 = pneg %p151
    $region22: #{nanodet_plus_forward.12} parent=5 // pred_check_branch
      %154 = sbr.rel (%p152) target = $region24
    $region23: #{nanodet_plus_forward.12} parent=5 // pred_region
      // Predicated region
      $region25: #{nanodet_plus_forward.12} parent=23 // pred_check
        %p155 = pneg %p30
      $region26: #{nanodet_plus_forward.12} parent=23 // pred_check_branch
        %157 = sbr.rel (%p155) target = $region28
      $region27: #{nanodet_plus_forward.12} parent=23 // pred_region
        %s158 = smul.u32 32, %s10
        %p159 = scmp.lt.s32.totalorder %s158, 63
        %s160 = scalar_select %p159, %s158, 63
        %s161 = smul.addr %s160, 4
        %s162 = scalar_lea.vmem %s0, %s161
        %s163 = smul.u32 32, %s10
      $region28: #{nanodet_plus_forward.12} parent=23 // pred_fallthru
        _
      // Predicated region
      $region29: #{nanodet_plus_forward.12} parent=23 // pred_check
        %p164 = pneg %p98
      $region30: #{nanodet_plus_forward.12} parent=23 // pred_check_branch
        %166 = sbr.rel (%p164) target = $region32
      $region31: #{nanodet_plus_forward.12} parent=23 // pred_region
        %s167 = smul.u32 32, %s10
        %p168 = scmp.lt.s32.totalorder %s167, 63
        %s169 = scalar_select %p168, %s167, 63
        %s170 = smul.addr %s169, 4
        %s171 = scalar_lea.vmem %s3, %s170
        %s172 = smul.u32 32, %s10
      $region32: #{nanodet_plus_forward.12} parent=23 // pred_fallthru
        _
    $region24: #{nanodet_plus_forward.12} parent=5 // pred_fallthru
      _
    %p173 = scmp.le.s32.totalorder 1, %s10
    %p174 = scmp.lt.s32.totalorder %s10, 3
    %p175 = pnand %p173, %p174
    %p176 = pneg %p175
    // Predicated region
    $region33: #{nanodet_plus_forward.12} parent=5 // pred_check
      _
    $region34: #{nanodet_plus_forward.12} parent=5 // pred_check_branch
      %178 = sbr.rel (%p175) target = $region36
    $region35: #{nanodet_plus_forward.12} parent=5 // pred_region
      %s179 = ssub.s32 %s10, 1
      %s180 = smul.u32 32, %s15
      %p181 = scmp.lt.s32.totalorder %s180, 63
      %s182 = scalar_select %p181, %s180, 63
      %s183 = smul.addr %s182, 4
      %s184 = scalar_lea.vmem %s0, %s183
      %p185 = pneg %p36
      %p186 = pneg %p33
      %p187 = pneg %p57
      %p188 = pneg %p54
      %p189 = pneg %p78
      %p190 = pneg %p75
      %s191 = smul.u32 32, %s15
      %p192 = scmp.lt.s32.totalorder %s191, 63
      %s193 = scalar_select %p192, %s191, 63
      %s194 = smul.addr %s193, 4
      %s195 = scalar_lea.vmem %s3, %s194
      %p196 = pneg %p104
      %p197 = pneg %p101
      %p198 = pneg %p130
      %p199 = pneg %p127
      %s200 = smul.u32 32, %s15
      %p201 = scmp.lt.s32.totalorder %s200, 63
      %s202 = scalar_select %p201, %s200, 63
      %s203 = smul.addr %s202, 4
      %s204 = scalar_lea.vmem %s4, %s203
      %s205 = smul.u32 32, %s15
      %p206 = scmp.lt.s32.totalorder %s205, 63
      %s207 = scalar_select %p206, %s205, 63
      %s208 = smul.addr %s207, 4
      %s209 = scalar_lea.vmem %s0, %s208
      %s210 = smul.u32 32, %s15
      %s211 = smul.u32 32, %s15
      %p212 = scmp.lt.s32.totalorder %s211, 63
      %s213 = scalar_select %p212, %s211, 63
      %s214 = smul.addr %s213, 4
      %s215 = scalar_lea.vmem %s3, %s214
      %s216 = smul.u32 32, %s15
      %s217 = smul.u32 32, %s15
      %p218 = scmp.lt.s32.totalorder %s217, 63
      %s219 = scalar_select %p218, %s217, 63
      %s220 = smul.addr %s219, 4
      %s221 = scalar_lea.vmem %s4, %s220
      %s222 = smul.u32 32, %s15
      %v224 = vld [vmem:[%s209] sm:$0xf]
      %v225 = vld [vmem:[%s209 + $0x4] sm:$0xf]
      %v226 = vld [vmem:[%s209 + $0x8] sm:$0xf]
      %v227 = vld [vmem:[%s209 + $0xc] sm:$0xf]
      %v228 = vld [vmem:[%s209 + $0x10] sm:$0xf]
      %v229 = vld [vmem:[%s209 + $0x14] sm:$0xf]
      %v230 = vld [vmem:[%s209 + $0x18] sm:$0xf]
      %v231 = vld [vmem:[%s209 + $0x1c] sm:$0xf]
      %v232 = vld [vmem:[%s209 + $0x20] sm:$0xf]
      %v233 = vld [vmem:[%s209 + $0x24] sm:$0xf]
      %v234 = vld [vmem:[%s209 + $0x28] sm:$0xf]
      %v235 = vld [vmem:[%s209 + $0x2c] sm:$0xf]
      %v236 = vld [vmem:[%s209 + $0x30] sm:$0xf]
      %v237 = vld [vmem:[%s209 + $0x34] sm:$0xf]
      %v238 = vld [vmem:[%s209 + $0x38] sm:$0xf]
      %v239 = vld [vmem:[%s209 + $0x3c] sm:$0xf]
      %v240 = vld [vmem:[%s209 + $0x40] sm:$0xf]
      %v241 = vld [vmem:[%s209 + $0x44] sm:$0xf]
      %v242 = vld [vmem:[%s209 + $0x48] sm:$0xf]
      %v243 = vld [vmem:[%s209 + $0x4c] sm:$0xf]
      %v244 = vld [vmem:[%s209 + $0x50] sm:$0xf]
      %v245 = vld [vmem:[%s209 + $0x54] sm:$0xf]
      %v246 = vld [vmem:[%s209 + $0x58] sm:$0xf]
      %v247 = vld [vmem:[%s209 + $0x5c] sm:$0xf]
      %v248 = vld [vmem:[%s209 + $0x60] sm:$0xf]
      %v249 = vld [vmem:[%s209 + $0x64] sm:$0xf]
      %v250 = vld [vmem:[%s209 + $0x68] sm:$0xf]
      %v251 = vld [vmem:[%s209 + $0x6c] sm:$0xf]
      %v252 = vld [vmem:[%s209 + $0x70] sm:$0xf]
      %v253 = vld [vmem:[%s209 + $0x74] sm:$0xf]
      %v254 = vld [vmem:[%s209 + $0x78] sm:$0xf]
      %v255 = vld [vmem:[%s209 + $0x7c] sm:$0xf]
      %v256 = vld [vmem:[%s1] sm:$0xf]
      %v257 = vld [vmem:[%s1 + $0x4] sm:$0xf]
      %v258 = vld [vmem:[%s2] sm:$0x1]
      %v260 = vlaneseq
      %v261 = vshrl.u32 %v260, 7
      %v262 = vsub.s32 0, %v261
      %v263 = vrot.slane %v258, %v262
      %v297 = vunpack.c.l.b16 %v224
      %v298 = vunpack.c.l.b16 %v225
      %v299 = vunpack.c.l.b16 %v226
      %v300 = vunpack.c.l.b16 %v227
      %v301 = vunpack.c.l.b16 %v228
      %v302 = vunpack.c.l.b16 %v229
      %v303 = vunpack.c.l.b16 %v230
      %v304 = vunpack.c.l.b16 %v231
      %v305 = vunpack.c.l.b16 %v232
      %v306 = vunpack.c.l.b16 %v233
      %v307 = vunpack.c.l.b16 %v234
      %v308 = vunpack.c.l.b16 %v235
      %v309 = vunpack.c.l.b16 %v236
      %v310 = vunpack.c.l.b16 %v237
      %v311 = vunpack.c.l.b16 %v238
      %v312 = vunpack.c.l.b16 %v239
      %v313 = vunpack.c.l.b16 %v240
      %v314 = vunpack.c.l.b16 %v241
      %v315 = vunpack.c.l.b16 %v242
      %v316 = vunpack.c.l.b16 %v243
      %v317 = vunpack.c.l.b16 %v244
      %v318 = vunpack.c.l.b16 %v245
      %v319 = vunpack.c.l.b16 %v246
      %v320 = vunpack.c.l.b16 %v247
      %v321 = vunpack.c.l.b16 %v248
      %v322 = vunpack.c.l.b16 %v249
      %v323 = vunpack.c.l.b16 %v250
      %v324 = vunpack.c.l.b16 %v251
      %v325 = vunpack.c.l.b16 %v252
      %v326 = vunpack.c.l.b16 %v253
      %v327 = vunpack.c.l.b16 %v254
      %v328 = vunpack.c.l.b16 %v255
      %v329 = vpack.c.b16 %v298, %v297
      %v330 = vpack.c.b16 %v300, %v299
      %v331 = vpack.c.b16 %v302, %v301
      %v332 = vpack.c.b16 %v304, %v303
      %v333 = vpack.c.b16 %v306, %v305
      %v334 = vpack.c.b16 %v308, %v307
      %v335 = vpack.c.b16 %v310, %v309
      %v336 = vpack.c.b16 %v312, %v311
      %v337 = vpack.c.b16 %v314, %v313
      %v338 = vpack.c.b16 %v316, %v315
      %v339 = vpack.c.b16 %v318, %v317
      %v340 = vpack.c.b16 %v320, %v319
      %v341 = vpack.c.b16 %v322, %v321
      %v342 = vpack.c.b16 %v324, %v323
      %v343 = vpack.c.b16 %v326, %v325
      %v344 = vpack.c.b16 %v328, %v327
      %v347 = vunpack.c.l.b16 %v256
      %v348 = vunpack.c.l.b16 %v257
      %v349 = vpack.c.b16 %v348, %v347
      %vm351 = vcmask 130048
      %v353 = vsel %vm351, %v329, 0
      %v356 = vsel %vm351, %v330, 0
      %v359 = vsel %vm351, %v331, 0
      %v362 = vsel %vm351, %v332, 0
      %v365 = vsel %vm351, %v333, 0
      %v368 = vsel %vm351, %v334, 0
      %v371 = vsel %vm351, %v335, 0
      %v374 = vsel %vm351, %v336, 0
      %v377 = vsel %vm351, %v337, 0
      %v380 = vsel %vm351, %v338, 0
      %v383 = vsel %vm351, %v339, 0
      %v386 = vsel %vm351, %v340, 0
      %v389 = vsel %vm351, %v341, 0
      %v392 = vsel %vm351, %v342, 0
      %v395 = vsel %vm351, %v343, 0
      %v398 = vsel %vm351, %v344, 0
      %400 = vmatprep.subr.bf16.mxu0 0
      %401 = vmatpush1.bf16.msra.mxu0 0
      %402 = vmatprep.subr.bf16.mxu0 0
      %403 = vmatpush1.bf16.msra.mxu0 0
      %404 = vmatprep.subr.bf16.mxu0 0
      %405 = vmatpush1.bf16.msra.mxu0 0
      %406 = vmatprep.subr.bf16.mxu0 0
      %407 = vmatpush1.bf16.msra.mxu0 0
      %408 = vmatprep.subr.bf16.mxu0 0
      %409 = vmatpush1.bf16.msra.mxu0 0
      %410 = vmatprep.subr.bf16.mxu0 0
      %411 = vmatpush1.bf16.msra.mxu0 0
      %412 = vmatprep.subr.bf16.mxu0 0
      %413 = vmatpush1.bf16.msra.mxu0 0
      %414 = vmatprep.subr.bf16.mxu0 0
      %415 = vmatpush1.bf16.msra.mxu0 %v349
      %416 = vmatprep.subr.bf16.mxu0 0
      %417 = vmatpush2.bf16.msra.mxu0 0
      %418 = vmatprep.subr.bf16.mxu0 0
      %419 = vmatpush2.bf16.msra.mxu0 0
      %420 = vmatprep.subr.bf16.mxu0 0
      %421 = vmatpush2.bf16.msra.mxu0 0
      %422 = vmatprep.subr.bf16.mxu0 0
      %423 = vmatpush2.bf16.msra.mxu0 0
      %424 = vmatprep.subr.bf16.mxu0 0
      %425 = vmatpush2.bf16.msra.mxu0 0
      %426 = vmatprep.subr.bf16.mxu0 0
      %427 = vmatpush2.bf16.msra.mxu0 0
      %428 = vmatprep.subr.bf16.mxu0 0
      %429 = vmatpush2.bf16.msra.mxu0 0
      %430 = vmatprep.subr.bf16.mxu0 0
      %431 = vmatpush2.bf16.msra.mxu0 0
      %432 = vmatprep.mubr.bf16.mxu0 0
      %433 = vmatmul.mubr.bf16.gmra.mxu0 %v353
      %v434 = vpop.f32.mrf.mxu0
      %v435 = vadd.f32 %v263, %v434
      %v436 = vpop.f32.mrf.mxu0
      %v437 = vpop.f32.mrf.mxu0
      %v438 = vadd.f32 %v263, %v437
      %v439 = vpop.f32.mrf.mxu0
      %440 = vmatprep.mubr.bf16.mxu0 0
      %441 = vmatmul.mubr.bf16.gmra.mxu0 %v356
      %v442 = vpop.f32.mrf.mxu0
      %v443 = vadd.f32 %v263, %v442
      %v444 = vpop.f32.mrf.mxu0
      %v445 = vpop.f32.mrf.mxu0
      %v446 = vadd.f32 %v263, %v445
      %v447 = vpop.f32.mrf.mxu0
      %448 = vmatprep.mubr.bf16.mxu0 0
      %449 = vmatmul.mubr.bf16.gmra.mxu0 %v359
      %v450 = vpop.f32.mrf.mxu0
      %v451 = vadd.f32 %v263, %v450
      %v452 = vpop.f32.mrf.mxu0
      %v453 = vpop.f32.mrf.mxu0
      %v454 = vadd.f32 %v263, %v453
      %v455 = vpop.f32.mrf.mxu0
      %456 = vmatprep.mubr.bf16.mxu0 0
      %457 = vmatmul.mubr.bf16.gmra.mxu0 %v362
      %v458 = vpop.f32.mrf.mxu0
      %v459 = vadd.f32 %v263, %v458
      %v460 = vpop.f32.mrf.mxu0
      %v461 = vpop.f32.mrf.mxu0
      %v462 = vadd.f32 %v263, %v461
      %v463 = vpop.f32.mrf.mxu0
      %464 = vmatprep.mubr.bf16.mxu0 0
      %465 = vmatmul.mubr.bf16.gmra.mxu0 %v365
      %v466 = vpop.f32.mrf.mxu0
      %v467 = vadd.f32 %v263, %v466
      %v468 = vpop.f32.mrf.mxu0
      %v469 = vpop.f32.mrf.mxu0
      %v470 = vadd.f32 %v263, %v469
      %v471 = vpop.f32.mrf.mxu0
      %472 = vmatprep.mubr.bf16.mxu0 0
      %473 = vmatmul.mubr.bf16.gmra.mxu0 %v368
      %v474 = vpop.f32.mrf.mxu0
      %v475 = vadd.f32 %v263, %v474
      %v476 = vpop.f32.mrf.mxu0
      %v477 = vpop.f32.mrf.mxu0
      %v478 = vadd.f32 %v263, %v477
      %v479 = vpop.f32.mrf.mxu0
      %480 = vmatprep.mubr.bf16.mxu0 0
      %481 = vmatmul.mubr.bf16.gmra.mxu0 %v371
      %v482 = vpop.f32.mrf.mxu0
      %v483 = vadd.f32 %v263, %v482
      %v484 = vpop.f32.mrf.mxu0
      %v485 = vpop.f32.mrf.mxu0
      %v486 = vadd.f32 %v263, %v485
      %v487 = vpop.f32.mrf.mxu0
      %488 = vmatprep.mubr.bf16.mxu0 0
      %489 = vmatmul.mubr.bf16.gmra.mxu0 %v374
      %v490 = vpop.f32.mrf.mxu0
      %v491 = vadd.f32 %v263, %v490
      %v492 = vpop.f32.mrf.mxu0
      %v493 = vpop.f32.mrf.mxu0
      %v494 = vadd.f32 %v263, %v493
      %v495 = vpop.f32.mrf.mxu0
      %496 = vmatprep.mubr.bf16.mxu0 0
      %497 = vmatmul.mubr.bf16.gmra.mxu0 %v377
      %v498 = vpop.f32.mrf.mxu0
      %v499 = vadd.f32 %v263, %v498
      %v500 = vpop.f32.mrf.mxu0
      %v501 = vpop.f32.mrf.mxu0
      %v502 = vadd.f32 %v263, %v501
      %v503 = vpop.f32.mrf.mxu0
      %504 = vmatprep.mubr.bf16.mxu0 0
      %505 = vmatmul.mubr.bf16.gmra.mxu0 %v380
      %v506 = vpop.f32.mrf.mxu0
      %v507 = vadd.f32 %v263, %v506
      %v508 = vpop.f32.mrf.mxu0
      %v509 = vpop.f32.mrf.mxu0
      %v510 = vadd.f32 %v263, %v509
      %v511 = vpop.f32.mrf.mxu0
      %512 = vmatprep.mubr.bf16.mxu0 0
      %513 = vmatmul.mubr.bf16.gmra.mxu0 %v383
      %v514 = vpop.f32.mrf.mxu0
      %v515 = vadd.f32 %v263, %v514
      %v516 = vpop.f32.mrf.mxu0
      %v517 = vpop.f32.mrf.mxu0
      %v518 = vadd.f32 %v263, %v517
      %v519 = vpop.f32.mrf.mxu0
      %520 = vmatprep.mubr.bf16.mxu0 0
      %521 = vmatmul.mubr.bf16.gmra.mxu0 %v386
      %v522 = vpop.f32.mrf.mxu0
      %v523 = vadd.f32 %v263, %v522
      %v524 = vpop.f32.mrf.mxu0
      %v525 = vpop.f32.mrf.mxu0
      %v526 = vadd.f32 %v263, %v525
      %v527 = vpop.f32.mrf.mxu0
      %528 = vmatprep.mubr.bf16.mxu0 0
      %529 = vmatmul.mubr.bf16.gmra.mxu0 %v389
      %v530 = vpop.f32.mrf.mxu0
      %v531 = vadd.f32 %v263, %v530
      %v532 = vpop.f32.mrf.mxu0
      %v533 = vpop.f32.mrf.mxu0
      %v534 = vadd.f32 %v263, %v533
      %v535 = vpop.f32.mrf.mxu0
      %536 = vmatprep.mubr.bf16.mxu0 0
      %537 = vmatmul.mubr.bf16.gmra.mxu0 %v392
      %v538 = vpop.f32.mrf.mxu0
      %v539 = vadd.f32 %v263, %v538
      %v540 = vpop.f32.mrf.mxu0
      %v541 = vpop.f32.mrf.mxu0
      %v542 = vadd.f32 %v263, %v541
      %v543 = vpop.f32.mrf.mxu0
      %544 = vmatprep.mubr.bf16.mxu0 0
      %545 = vmatmul.mubr.bf16.gmra.mxu0 %v395
      %v546 = vpop.f32.mrf.mxu0
      %v547 = vadd.f32 %v263, %v546
      %v548 = vpop.f32.mrf.mxu0
      %v549 = vpop.f32.mrf.mxu0
      %v550 = vadd.f32 %v263, %v549
      %v551 = vpop.f32.mrf.mxu0
      %552 = vmatprep.mubr.bf16.mxu0 0
      %553 = vmatmul.mubr.bf16.gmra.mxu0 %v398
      %v554 = vpop.f32.mrf.mxu0
      %v555 = vadd.f32 %v263, %v554
      %v556 = vpop.f32.mrf.mxu0
      %v557 = vpop.f32.mrf.mxu0
      %v558 = vadd.f32 %v263, %v557
      %v559 = vpop.f32.mrf.mxu0
      %560 = vdwg.mxu0
      %v561 = vld [vmem:[%s215] sm:$0xf]
      %v562 = vld [vmem:[%s215 + $0x4] sm:$0xf]
      %v563 = vld [vmem:[%s215 + $0x8] sm:$0xf]
      %v564 = vld [vmem:[%s215 + $0xc] sm:$0xf]
      %v565 = vld [vmem:[%s215 + $0x10] sm:$0xf]
      %v566 = vld [vmem:[%s215 + $0x14] sm:$0xf]
      %v567 = vld [vmem:[%s215 + $0x18] sm:$0xf]
      %v568 = vld [vmem:[%s215 + $0x1c] sm:$0xf]
      %v569 = vld [vmem:[%s215 + $0x20] sm:$0xf]
      %v570 = vld [vmem:[%s215 + $0x24] sm:$0xf]
      %v571 = vld [vmem:[%s215 + $0x28] sm:$0xf]
      %v572 = vld [vmem:[%s215 + $0x2c] sm:$0xf]
      %v573 = vld [vmem:[%s215 + $0x30] sm:$0xf]
      %v574 = vld [vmem:[%s215 + $0x34] sm:$0xf]
      %v575 = vld [vmem:[%s215 + $0x38] sm:$0xf]
      %v576 = vld [vmem:[%s215 + $0x3c] sm:$0xf]
      %v577 = vld [vmem:[%s215 + $0x40] sm:$0xf]
      %v578 = vld [vmem:[%s215 + $0x44] sm:$0xf]
      %v579 = vld [vmem:[%s215 + $0x48] sm:$0xf]
      %v580 = vld [vmem:[%s215 + $0x4c] sm:$0xf]
      %v581 = vld [vmem:[%s215 + $0x50] sm:$0xf]
      %v582 = vld [vmem:[%s215 + $0x54] sm:$0xf]
      %v583 = vld [vmem:[%s215 + $0x58] sm:$0xf]
      %v584 = vld [vmem:[%s215 + $0x5c] sm:$0xf]
      %v585 = vld [vmem:[%s215 + $0x60] sm:$0xf]
      %v586 = vld [vmem:[%s215 + $0x64] sm:$0xf]
      %v587 = vld [vmem:[%s215 + $0x68] sm:$0xf]
      %v588 = vld [vmem:[%s215 + $0x6c] sm:$0xf]
      %v589 = vld [vmem:[%s215 + $0x70] sm:$0xf]
      %v590 = vld [vmem:[%s215 + $0x74] sm:$0xf]
      %v591 = vld [vmem:[%s215 + $0x78] sm:$0xf]
      %v592 = vld [vmem:[%s215 + $0x7c] sm:$0xf]
      %v593 = vunpack.c.l.bf16 %v561
      %v594 = vunpack.c.l.bf16 %v562
      %v595 = vunpack.c.l.bf16 %v563
      %v596 = vunpack.c.l.bf16 %v564
      %v597 = vunpack.c.l.bf16 %v565
      %v598 = vunpack.c.l.bf16 %v566
      %v599 = vunpack.c.l.bf16 %v567
      %v600 = vunpack.c.l.bf16 %v568
      %v601 = vunpack.c.l.bf16 %v569
      %v602 = vunpack.c.l.bf16 %v570
      %v603 = vunpack.c.l.bf16 %v571
      %v604 = vunpack.c.l.bf16 %v572
      %v605 = vunpack.c.l.bf16 %v573
      %v606 = vunpack.c.l.bf16 %v574
      %v607 = vunpack.c.l.bf16 %v575
      %v608 = vunpack.c.l.bf16 %v576
      %v609 = vunpack.c.l.bf16 %v577
      %v610 = vunpack.c.l.bf16 %v578
      %v611 = vunpack.c.l.bf16 %v579
      %v612 = vunpack.c.l.bf16 %v580
      %v613 = vunpack.c.l.bf16 %v581
      %v614 = vunpack.c.l.bf16 %v582
      %v615 = vunpack.c.l.bf16 %v583
      %v616 = vunpack.c.l.bf16 %v584
      %v617 = vunpack.c.l.bf16 %v585
      %v618 = vunpack.c.l.bf16 %v586
      %v619 = vunpack.c.l.bf16 %v587
      %v620 = vunpack.c.l.bf16 %v588
      %v621 = vunpack.c.l.bf16 %v589
      %v622 = vunpack.c.l.bf16 %v590
      %v623 = vunpack.c.l.bf16 %v591
      %v624 = vunpack.c.l.bf16 %v592
      %v625 = vadd.f32 %v435, %v593
      %v626 = vadd.f32 %v438, %v594
      %v627 = vadd.f32 %v443, %v595
      %v628 = vadd.f32 %v446, %v596
      %v629 = vadd.f32 %v451, %v597
      %v630 = vadd.f32 %v454, %v598
      %v631 = vadd.f32 %v459, %v599
      %v632 = vadd.f32 %v462, %v600
      %v633 = vadd.f32 %v467, %v601
      %v634 = vadd.f32 %v470, %v602
      %v635 = vadd.f32 %v475, %v603
      %v636 = vadd.f32 %v478, %v604
      %v637 = vadd.f32 %v483, %v605
      %v638 = vadd.f32 %v486, %v606
      %v639 = vadd.f32 %v491, %v607
      %v640 = vadd.f32 %v494, %v608
      %v641 = vadd.f32 %v499, %v609
      %v642 = vadd.f32 %v502, %v610
      %v643 = vadd.f32 %v507, %v611
      %v644 = vadd.f32 %v510, %v612
      %v645 = vadd.f32 %v515, %v613
      %v646 = vadd.f32 %v518, %v614
      %v647 = vadd.f32 %v523, %v615
      %v648 = vadd.f32 %v526, %v616
      %v649 = vadd.f32 %v531, %v617
      %v650 = vadd.f32 %v534, %v618
      %v651 = vadd.f32 %v539, %v619
      %v652 = vadd.f32 %v542, %v620
      %v653 = vadd.f32 %v547, %v621
      %v654 = vadd.f32 %v550, %v622
      %v655 = vadd.f32 %v555, %v623
      %v656 = vadd.f32 %v558, %v624
      %v657 = vpack.c.bf16 %v626, %v625
      %v658 = vpack.c.bf16 %v628, %v627
      %v659 = vpack.c.bf16 %v630, %v629
      %v660 = vpack.c.bf16 %v632, %v631
      %v661 = vpack.c.bf16 %v634, %v633
      %v662 = vpack.c.bf16 %v636, %v635
      %v663 = vpack.c.bf16 %v638, %v637
      %v664 = vpack.c.bf16 %v640, %v639
      %v665 = vpack.c.bf16 %v642, %v641
      %v666 = vpack.c.bf16 %v644, %v643
      %v667 = vpack.c.bf16 %v646, %v645
      %v668 = vpack.c.bf16 %v648, %v647
      %v669 = vpack.c.bf16 %v650, %v649
      %v670 = vpack.c.bf16 %v652, %v651
      %v671 = vpack.c.bf16 %v654, %v653
      %v672 = vpack.c.bf16 %v656, %v655
      %v689 = vunpack.c.l.b16 %v657
      %v690 = vunpack.c.h.b16 %v657
      %v691 = vunpack.c.l.b16 %v658
      %v692 = vunpack.c.h.b16 %v658
      %v693 = vunpack.c.l.b16 %v659
      %v694 = vunpack.c.h.b16 %v659
      %v695 = vunpack.c.l.b16 %v660
      %v696 = vunpack.c.h.b16 %v660
      %v697 = vunpack.c.l.b16 %v661
      %v698 = vunpack.c.h.b16 %v661
      %v699 = vunpack.c.l.b16 %v662
      %v700 = vunpack.c.h.b16 %v662
      %v701 = vunpack.c.l.b16 %v663
      %v702 = vunpack.c.h.b16 %v663
      %v703 = vunpack.c.l.b16 %v664
      %v704 = vunpack.c.h.b16 %v664
      %v705 = vunpack.c.l.b16 %v665
      %v706 = vunpack.c.h.b16 %v665
      %v707 = vunpack.c.l.b16 %v666
      %v708 = vunpack.c.h.b16 %v666
      %v709 = vunpack.c.l.b16 %v667
      %v710 = vunpack.c.h.b16 %v667
      %v711 = vunpack.c.l.b16 %v668
      %v712 = vunpack.c.h.b16 %v668
      %v713 = vunpack.c.l.b16 %v669
      %v714 = vunpack.c.h.b16 %v669
      %v715 = vunpack.c.l.b16 %v670
      %v716 = vunpack.c.h.b16 %v670
      %v717 = vunpack.c.l.b16 %v671
      %v718 = vunpack.c.h.b16 %v671
      %v719 = vunpack.c.l.b16 %v672
      %v720 = vunpack.c.h.b16 %v672
      %v721 = vpack.c.b16 %v689, %v689
      %v722 = vpack.c.b16 %v690, %v690
      %v723 = vpack.c.b16 %v691, %v691
      %v724 = vpack.c.b16 %v692, %v692
      %v725 = vpack.c.b16 %v693, %v693
      %v726 = vpack.c.b16 %v694, %v694
      %v727 = vpack.c.b16 %v695, %v695
      %v728 = vpack.c.b16 %v696, %v696
      %v729 = vpack.c.b16 %v697, %v697
      %v730 = vpack.c.b16 %v698, %v698
      %v731 = vpack.c.b16 %v699, %v699
      %v732 = vpack.c.b16 %v700, %v700
      %v733 = vpack.c.b16 %v701, %v701
      %v734 = vpack.c.b16 %v702, %v702
      %v735 = vpack.c.b16 %v703, %v703
      %v736 = vpack.c.b16 %v704, %v704
      %v737 = vpack.c.b16 %v705, %v705
      %v738 = vpack.c.b16 %v706, %v706
      %v739 = vpack.c.b16 %v707, %v707
      %v740 = vpack.c.b16 %v708, %v708
      %v741 = vpack.c.b16 %v709, %v709
      %v742 = vpack.c.b16 %v710, %v710
      %v743 = vpack.c.b16 %v711, %v711
      %v744 = vpack.c.b16 %v712, %v712
      %v745 = vpack.c.b16 %v713, %v713
      %v746 = vpack.c.b16 %v714, %v714
      %v747 = vpack.c.b16 %v715, %v715
      %v748 = vpack.c.b16 %v716, %v716
      %v749 = vpack.c.b16 %v717, %v717
      %v750 = vpack.c.b16 %v718, %v718
      %v751 = vpack.c.b16 %v719, %v719
      %v752 = vpack.c.b16 %v720, %v720
      %vm785 = vcmask 257024
      %786 = vst.msk [vmem:[%s221] sm:$0xf] %vm785, %v721
      %787 = vst.msk [vmem:[%s221 + $0x4] sm:$0xf] %vm785, %v722
      %788 = vst.msk [vmem:[%s221 + $0x8] sm:$0xf] %vm785, %v723
      %789 = vst.msk [vmem:[%s221 + $0xc] sm:$0xf] %vm785, %v724
      %790 = vst.msk [vmem:[%s221 + $0x10] sm:$0xf] %vm785, %v725
      %791 = vst.msk [vmem:[%s221 + $0x14] sm:$0xf] %vm785, %v726
      %792 = vst.msk [vmem:[%s221 + $0x18] sm:$0xf] %vm785, %v727
      %793 = vst.msk [vmem:[%s221 + $0x1c] sm:$0xf] %vm785, %v728
      %794 = vst.msk [vmem:[%s221 + $0x20] sm:$0xf] %vm785, %v729
      %795 = vst.msk [vmem:[%s221 + $0x24] sm:$0xf] %vm785, %v730
      %796 = vst.msk [vmem:[%s221 + $0x28] sm:$0xf] %vm785, %v731
      %797 = vst.msk [vmem:[%s221 + $0x2c] sm:$0xf] %vm785, %v732
      %798 = vst.msk [vmem:[%s221 + $0x30] sm:$0xf] %vm785, %v733
      %799 = vst.msk [vmem:[%s221 + $0x34] sm:$0xf] %vm785, %v734
      %800 = vst.msk [vmem:[%s221 + $0x38] sm:$0xf] %vm785, %v735
      %801 = vst.msk [vmem:[%s221 + $0x3c] sm:$0xf] %vm785, %v736
      %802 = vst.msk [vmem:[%s221 + $0x40] sm:$0xf] %vm785, %v737
      %803 = vst.msk [vmem:[%s221 + $0x44] sm:$0xf] %vm785, %v738
      %804 = vst.msk [vmem:[%s221 + $0x48] sm:$0xf] %vm785, %v739
      %805 = vst.msk [vmem:[%s221 + $0x4c] sm:$0xf] %vm785, %v740
      %806 = vst.msk [vmem:[%s221 + $0x50] sm:$0xf] %vm785, %v741
      %807 = vst.msk [vmem:[%s221 + $0x54] sm:$0xf] %vm785, %v742
      %808 = vst.msk [vmem:[%s221 + $0x58] sm:$0xf] %vm785, %v743
      %809 = vst.msk [vmem:[%s221 + $0x5c] sm:$0xf] %vm785, %v744
      %810 = vst.msk [vmem:[%s221 + $0x60] sm:$0xf] %vm785, %v745
      %811 = vst.msk [vmem:[%s221 + $0x64] sm:$0xf] %vm785, %v746
      %812 = vst.msk [vmem:[%s221 + $0x68] sm:$0xf] %vm785, %v747
      %813 = vst.msk [vmem:[%s221 + $0x6c] sm:$0xf] %vm785, %v748
      %814 = vst.msk [vmem:[%s221 + $0x70] sm:$0xf] %vm785, %v749
      %815 = vst.msk [vmem:[%s221 + $0x74] sm:$0xf] %vm785, %v750
      %816 = vst.msk [vmem:[%s221 + $0x78] sm:$0xf] %vm785, %v751
      %817 = vst.msk [vmem:[%s221 + $0x7c] sm:$0xf] %vm785, %v752
      %s818 = smul.u32 32, %s15
      %p819 = scmp.lt.s32.totalorder %s818, 63
      %s820 = scalar_select %p819, %s818, 63
      %s821 = smul.addr %s820, 4
      %s822 = scalar_lea.vmem %s4, %s821
      // Predicated region
      $region37: #{nanodet_plus_forward.12} parent=35 // pred_check
        %p823 = pneg %p127
      $region38: #{nanodet_plus_forward.12} parent=35 // pred_check_branch
        %825 = sbr.rel (%p823) target = $region40
      $region39: #{nanodet_plus_forward.12} parent=35 // pred_region
        %s826 = smul.u32 32, %s15
      $region40: #{nanodet_plus_forward.12} parent=35 // pred_fallthru
        _
    $region36: #{nanodet_plus_forward.12} parent=5 // pred_fallthru
      _
    %p827 = scmp.le.s32.totalorder 2, %s10
    // Predicated region
    $region41: #{nanodet_plus_forward.12} parent=5 // pred_check
      %p828 = pneg %p827
    $region42: #{nanodet_plus_forward.12} parent=5 // pred_check_branch
      %830 = sbr.rel (%p828) target = $region44
    $region43: #{nanodet_plus_forward.12} parent=5 // pred_region
      %s831 = ssub.s32 %s10, 2
      // Predicated region
      $region45: #{nanodet_plus_forward.12} parent=43 // pred_check
        %p832 = pneg %p133
      $region46: #{nanodet_plus_forward.12} parent=43 // pred_check_branch
        %834 = sbr.rel (%p832) target = $region48
      $region47: #{nanodet_plus_forward.12} parent=43 // pred_region
        %s835 = smul.u32 32, %s16
        %p836 = scmp.lt.s32.totalorder %s835, 63
        %s837 = scalar_select %p836, %s835, 63
        %s838 = smul.addr %s837, 4
        %s839 = scalar_lea.vmem %s4, %s838
      $region48: #{nanodet_plus_forward.12} parent=43 // pred_fallthru
        _
    $region44: #{nanodet_plus_forward.12} parent=5 // pred_fallthru
      _
  $region6: #{nanodet_plus_forward.12} parent=0 // loop_footer
    %s14 = sadd.s32 1, %s10
  $region7: #{nanodet_plus_forward.12} parent=0 // loop_footer_branch
    %9 = sbr.rel target = $region3
  $region8: #{nanodet_plus_forward.12} parent=0 // loop_exit
    _

// kernel: nanodet_plus_forward.13
$region0: #{nanodet_plus_forward.13}
  #allocation0 [shape = 'u32[]', space=smem, size = 0x4, offset = 0x4, fixed_abs, tag = 'smem constant byte address 0x4 - core index']
  #allocation1 [shape = 'u32[144,128]{1,0:T(1,128)}', space=vmem, size = 0x12000, scoped, tag = 'internal scratch']
  %s0 = inlined_call_operand.vmem [shape: bf16[672,288], index: 0, kind: input, shape index: {}]
  %s1 = inlined_call_operand.vmem [shape: bf16[288,32], index: 1, kind: input, shape index: {}]
  %s2 = inlined_call_operand.vmem [shape: f32[1,32], index: 2, kind: input, shape index: {}]
  %s3 = inlined_call_operand.vmem [shape: f32[32,36], index: 3, kind: input, shape index: {}]
  %s4 = inlined_call_operand.vmem [shape: f32[1,36], index: 4, kind: input, shape index: {}]
  %s5 = inlined_call_operand.vmem [shape: f32[32,8], index: 5, kind: input, shape index: {}]
  %s6 = inlined_call_operand.vmem [shape: f32[672,8], index: 6, kind: input, shape index: {}]
  %s7 = inlined_call_operand.vmem [shape: f32[672,36], index: 7, kind: output, shape index: {0}]
  %s8 = inlined_call_operand.vmem [shape: f32[672,8], index: 8, kind: output, shape index: {1}]
  %9 = xla_tuple %s7, %s8
  %s10 = sld [smem:[#allocation0]]
  $region69: #{nanodet_plus_forward.13} parent=0
    _
  %s12 = ssub.s32 1, %s10
  %s13 = scalar_select 0, %s12, %s10
  loop: start=0, step=1, limit=4
  $region2: #{nanodet_plus_forward.13} parent=0 // loop_pre_header
    _
  $region3: #{nanodet_plus_forward.13} parent=0 // loop_header
    %s15 = sphi 0, %s19
    %p16 = scmp.ge.s32.totalorder %s15, 4
    %s25 = sphi 0, %s27
    %s28 = sphi 0, %s25
    %s29 = sphi 0, %s28
    %s45 = sphi 0, %s29
    %s49 = sphi 0, %s49
    %s51 = sphi 0, %s49
    %s52 = sphi 0, %s51
    %s66 = sphi 0, %s52
    %s70 = sphi 0, %s70
    %s72 = sphi 0, %s70
    %s73 = sphi 0, %s72
    %s87 = sphi 0, %s73
    %s91 = sphi 0, %s91
    %s93 = sphi 0, %s91
    %s94 = sphi 0, %s93
    %s108 = sphi 0, %s94
    %s112 = sphi 0, %s112
    %s114 = sphi 0, %s112
    %s115 = sphi 0, %s114
    %s129 = sphi 0, %s115
    %s133 = sphi 0, %s133
    %s135 = sphi 0, %s133
    %s136 = sphi 0, %s135
    %s150 = sphi 0, %s136
    %s156 = sphi 0, %s158
    %s159 = sphi 0, %s156
    %s160 = sphi 0, %s159
    %s176 = sphi 0, %s160
    %s182 = sphi 0, %s184
    %s185 = sphi 0, %s182
    %s186 = sphi 0, %s185
    %s202 = sphi 0, %s186
    %s208 = sphi 0, %s210
    %s211 = sphi 0, %s208
    %s212 = sphi 0, %s211
    %s228 = sphi 0, %s212
  $region4: #{nanodet_plus_forward.13} parent=0 // loop_header_branch
    %18 = sbr.rel (%p16) target = $region8
  $region5: #{nanodet_plus_forward.13} parent=0 // loop_body
    %s20 = ssub.s32 %s15, 1
    %s21 = ssub.s32 %s15, 2
    %s22 = sadd.s32 %s15, 1
    %s23 = ssub.s32 %s15, %s22
    %p24 = scmp.eq.s32.totalorder %s23, 0
    %s26 = sadd.s32 %s25, 1
    %s27 = scalar_select %p24, %s25, %s26
    %p30 = pneg %p24
    %p31 = scmp.eq.s32.totalorder %s15, 1
    %p32 = por %p30, %p31
    %p33 = scmp.ne.s32.totalorder %s25, %s28
    %p34 = scmp.eq.s32.totalorder %s15, 0
    %p35 = por %p33, %p34
    %p36 = scmp.ne.s32.totalorder %s25, %s28
    %p37 = scmp.eq.s32.totalorder %s20, 1
    %p38 = por %p36, %p37
    %p39 = scmp.ne.s32.totalorder %s28, %s29
    %p40 = scmp.eq.s32.totalorder %s20, 0
    %p41 = por %p39, %p40
    %p42 = scmp.ne.s32.totalorder %s28, %s29
    %p43 = scmp.eq.s32.totalorder %s21, 1
    %p44 = por %p42, %p43
    %p46 = scmp.ne.s32.totalorder %s29, %s45
    %p47 = scmp.eq.s32.totalorder %s21, 0
    %p48 = por %p46, %p47
    %s50 = sadd.s32 %s49, 1
    %p53 = scmp.eq.s32.totalorder %s15, 1
    %p54 = scmp.ne.s32.totalorder %s49, %s51
    %p55 = scmp.eq.s32.totalorder %s15, 0
    %p56 = por %p54, %p55
    %p57 = scmp.ne.s32.totalorder %s49, %s51
    %p58 = scmp.eq.s32.totalorder %s20, 1
    %p59 = por %p57, %p58
    %p60 = scmp.ne.s32.totalorder %s51, %s52
    %p61 = scmp.eq.s32.totalorder %s20, 0
    %p62 = por %p60, %p61
    %p63 = scmp.ne.s32.totalorder %s51, %s52
    %p64 = scmp.eq.s32.totalorder %s21, 1
    %p65 = por %p63, %p64
    %p67 = scmp.ne.s32.totalorder %s52, %s66
    %p68 = scmp.eq.s32.totalorder %s21, 0
    %p69 = por %p67, %p68
    %s71 = sadd.s32 %s70, 1
    %p74 = scmp.eq.s32.totalorder %s15, 1
    %p75 = scmp.ne.s32.totalorder %s70, %s72
    %p76 = scmp.eq.s32.totalorder %s15, 0
    %p77 = por %p75, %p76
    %p78 = scmp.ne.s32.totalorder %s70, %s72
    %p79 = scmp.eq.s32.totalorder %s20, 1
    %p80 = por %p78, %p79
    %p81 = scmp.ne.s32.totalorder %s72, %s73
    %p82 = scmp.eq.s32.totalorder %s20, 0
    %p83 = por %p81, %p82
    %p84 = scmp.ne.s32.totalorder %s72, %s73
    %p85 = scmp.eq.s32.totalorder %s21, 1
    %p86 = por %p84, %p85
    %p88 = scmp.ne.s32.totalorder %s73, %s87
    %p89 = scmp.eq.s32.totalorder %s21, 0
    %p90 = por %p88, %p89
    %s92 = sadd.s32 %s91, 1
    %p95 = scmp.eq.s32.totalorder %s15, 1
    %p96 = scmp.ne.s32.totalorder %s91, %s93
    %p97 = scmp.eq.s32.totalorder %s15, 0
    %p98 = por %p96, %p97
    %p99 = scmp.ne.s32.totalorder %s91, %s93
    %p100 = scmp.eq.s32.totalorder %s20, 1
    %p101 = por %p99, %p100
    %p102 = scmp.ne.s32.totalorder %s93, %s94
    %p103 = scmp.eq.s32.totalorder %s20, 0
    %p104 = por %p102, %p103
    %p105 = scmp.ne.s32.totalorder %s93, %s94
    %p106 = scmp.eq.s32.totalorder %s21, 1
    %p107 = por %p105, %p106
    %p109 = scmp.ne.s32.totalorder %s94, %s108
    %p110 = scmp.eq.s32.totalorder %s21, 0
    %p111 = por %p109, %p110
    %s113 = sadd.s32 %s112, 1
    %p116 = scmp.eq.s32.totalorder %s15, 1
    %p117 = scmp.ne.s32.totalorder %s112, %s114
    %p118 = scmp.eq.s32.totalorder %s15, 0
    %p119 = por %p117, %p118
    %p120 = scmp.ne.s32.totalorder %s112, %s114
    %p121 = scmp.eq.s32.totalorder %s20, 1
    %p122 = por %p120, %p121
    %p123 = scmp.ne.s32.totalorder %s114, %s115
    %p124 = scmp.eq.s32.totalorder %s20, 0
    %p125 = por %p123, %p124
    %p126 = scmp.ne.s32.totalorder %s114, %s115
    %p127 = scmp.eq.s32.totalorder %s21, 1
    %p128 = por %p126, %p127
    %p130 = scmp.ne.s32.totalorder %s115, %s129
    %p131 = scmp.eq.s32.totalorder %s21, 0
    %p132 = por %p130, %p131
    %s134 = sadd.s32 %s133, 1
    %p137 = scmp.eq.s32.totalorder %s15, 1
    %p138 = scmp.ne.s32.totalorder %s133, %s135
    %p139 = scmp.eq.s32.totalorder %s15, 0
    %p140 = por %p138, %p139
    %p141 = scmp.ne.s32.totalorder %s133, %s135
    %p142 = scmp.eq.s32.totalorder %s20, 1
    %p143 = por %p141, %p142
    %p144 = scmp.ne.s32.totalorder %s135, %s136
    %p145 = scmp.eq.s32.totalorder %s20, 0
    %p146 = por %p144, %p145
    %p147 = scmp.ne.s32.totalorder %s135, %s136
    %p148 = scmp.eq.s32.totalorder %s21, 1
    %p149 = por %p147, %p148
    %p151 = scmp.ne.s32.totalorder %s136, %s150
    %p152 = scmp.eq.s32.totalorder %s21, 0
    %p153 = por %p151, %p152
    %s154 = ssub.s32 %s15, %s22
    %p155 = scmp.eq.s32.totalorder %s154, 0
    %s157 = sadd.s32 %s156, 1
    %s158 = scalar_select %p155, %s156, %s157
    %p161 = pneg %p155
    %p162 = scmp.eq.s32.totalorder %s15, 1
    %p163 = por %p161, %p162
    %p164 = scmp.ne.s32.totalorder %s156, %s159
    %p165 = scmp.eq.s32.totalorder %s15, 0
    %p166 = por %p164, %p165
    %p167 = scmp.ne.s32.totalorder %s156, %s159
    %p168 = scmp.eq.s32.totalorder %s20, 1
    %p169 = por %p167, %p168
    %p170 = scmp.ne.s32.totalorder %s159, %s160
    %p171 = scmp.eq.s32.totalorder %s20, 0
    %p172 = por %p170, %p171
    %p173 = scmp.ne.s32.totalorder %s159, %s160
    %p174 = scmp.eq.s32.totalorder %s21, 1
    %p175 = por %p173, %p174
    %p177 = scmp.ne.s32.totalorder %s160, %s176
    %p178 = scmp.eq.s32.totalorder %s21, 0
    %p179 = por %p177, %p178
    %s180 = ssub.s32 %s15, %s22
    %p181 = scmp.eq.s32.totalorder %s180, 0
    %s183 = sadd.s32 %s182, 1
    %s184 = scalar_select %p181, %s182, %s183
    %p187 = pneg %p181
    %p188 = scmp.eq.s32.totalorder %s15, 1
    %p189 = por %p187, %p188
    %p190 = scmp.ne.s32.totalorder %s182, %s185
    %p191 = scmp.eq.s32.totalorder %s15, 0
    %p192 = por %p190, %p191
    %p193 = scmp.ne.s32.totalorder %s182, %s185
    %p194 = scmp.eq.s32.totalorder %s20, 1
    %p195 = por %p193, %p194
    %p196 = scmp.ne.s32.totalorder %s185, %s186
    %p197 = scmp.eq.s32.totalorder %s20, 0
    %p198 = por %p196, %p197
    %p199 = scmp.ne.s32.totalorder %s185, %s186
    %p200 = scmp.eq.s32.totalorder %s21, 1
    %p201 = por %p199, %p200
    %p203 = scmp.ne.s32.totalorder %s186, %s202
    %p204 = scmp.eq.s32.totalorder %s21, 0
    %p205 = por %p203, %p204
    %s206 = ssub.s32 %s15, %s22
    %p207 = scmp.eq.s32.totalorder %s206, 0
    %s209 = sadd.s32 %s208, 1
    %s210 = scalar_select %p207, %s208, %s209
    %p213 = pneg %p207
    %p214 = scmp.eq.s32.totalorder %s15, 1
    %p215 = por %p213, %p214
    %p216 = scmp.ne.s32.totalorder %s208, %s211
    %p217 = scmp.eq.s32.totalorder %s15, 0
    %p218 = por %p216, %p217
    %p219 = scmp.ne.s32.totalorder %s208, %s211
    %p220 = scmp.eq.s32.totalorder %s20, 1
    %p221 = por %p219, %p220
    %p222 = scmp.ne.s32.totalorder %s211, %s212
    %p223 = scmp.eq.s32.totalorder %s20, 0
    %p224 = por %p222, %p223
    %p225 = scmp.ne.s32.totalorder %s211, %s212
    %p226 = scmp.eq.s32.totalorder %s21, 1
    %p227 = por %p225, %p226
    %p229 = scmp.ne.s32.totalorder %s212, %s228
    %p230 = scmp.eq.s32.totalorder %s21, 0
    %p231 = por %p229, %p230
    %p232 = scmp.le.s32.totalorder 1, %s15
    %p233 = scmp.lt.s32.totalorder %s15, 3
    %p234 = pnand %p232, %p233
    %p235 = pneg %p234
    // Predicated region
    $region9: #{nanodet_plus_forward.13} parent=5 // pred_check
      _
    $region10: #{nanodet_plus_forward.13} parent=5 // pred_check_branch
      %237 = sbr.rel (%p234) target = $region12
    $region11: #{nanodet_plus_forward.13} parent=5 // pred_region
      %s238 = ssub.s32 %s15, 1
      // Predicated region
      $region13: #{nanodet_plus_forward.13} parent=11 // pred_check
        %p239 = pneg %p62
      $region14: #{nanodet_plus_forward.13} parent=11 // pred_check_branch
        %241 = sbr.rel (%p239) target = $region16
      $region15: #{nanodet_plus_forward.13} parent=11 // pred_region
        _
      $region16: #{nanodet_plus_forward.13} parent=11 // pred_fallthru
        _
      // Predicated region
      $region17: #{nanodet_plus_forward.13} parent=11 // pred_check
        %p242 = pneg %p83
      $region18: #{nanodet_plus_forward.13} parent=11 // pred_check_branch
        %244 = sbr.rel (%p242) target = $region20
      $region19: #{nanodet_plus_forward.13} parent=11 // pred_region
        _
      $region20: #{nanodet_plus_forward.13} parent=11 // pred_fallthru
        _
      // Predicated region
      $region21: #{nanodet_plus_forward.13} parent=11 // pred_check
        %p245 = pneg %p104
      $region22: #{nanodet_plus_forward.13} parent=11 // pred_check_branch
        %247 = sbr.rel (%p245) target = $region24
      $region23: #{nanodet_plus_forward.13} parent=11 // pred_region
        _
      $region24: #{nanodet_plus_forward.13} parent=11 // pred_fallthru
        _
      // Predicated region
      $region25: #{nanodet_plus_forward.13} parent=11 // pred_check
        %p248 = pneg %p125
      $region26: #{nanodet_plus_forward.13} parent=11 // pred_check_branch
        %250 = sbr.rel (%p248) target = $region28
      $region27: #{nanodet_plus_forward.13} parent=11 // pred_region
        _
      $region28: #{nanodet_plus_forward.13} parent=11 // pred_fallthru
        _
      // Predicated region
      $region29: #{nanodet_plus_forward.13} parent=11 // pred_check
        %p251 = pneg %p146
      $region30: #{nanodet_plus_forward.13} parent=11 // pred_check_branch
        %253 = sbr.rel (%p251) target = $region32
      $region31: #{nanodet_plus_forward.13} parent=11 // pred_region
        _
      $region32: #{nanodet_plus_forward.13} parent=11 // pred_fallthru
        _
    $region12: #{nanodet_plus_forward.13} parent=5 // pred_fallthru
      _
    %p254 = scmp.lt.s32.totalorder %s15, 2
    // Predicated region
    $region33: #{nanodet_plus_forward.13} parent=5 // pred_check
      %p255 = pneg %p254
    $region34: #{nanodet_plus_forward.13} parent=5 // pred_check_branch
      %257 = sbr.rel (%p255) target = $region36
    $region35: #{nanodet_plus_forward.13} parent=5 // pred_region
      // Predicated region
      $region37: #{nanodet_plus_forward.13} parent=35 // pred_check
        %p258 = pneg %p35
      $region38: #{nanodet_plus_forward.13} parent=35 // pred_check_branch
        %260 = sbr.rel (%p258) target = $region40
      $region39: #{nanodet_plus_forward.13} parent=35 // pred_region
        %s261 = smul.u32 42, %s15
        %p262 = scmp.lt.s32.totalorder %s261, 83
        %s263 = scalar_select %p262, %s261, 83
        %s264 = smul.addr %s263, 3
        %s265 = smul.addr %s264, 4
        %s266 = scalar_lea.vmem %s0, %s265
        %s267 = smul.u32 42, %s15
      $region40: #{nanodet_plus_forward.13} parent=35 // pred_fallthru
        _
      // Predicated region
      $region41: #{nanodet_plus_forward.13} parent=35 // pred_check
        %p268 = pneg %p166
      $region42: #{nanodet_plus_forward.13} parent=35 // pred_check_branch
        %270 = sbr.rel (%p268) target = $region44
      $region43: #{nanodet_plus_forward.13} parent=35 // pred_region
        %s271 = smul.u32 42, %s15
        %p272 = scmp.lt.s32.totalorder %s271, 83
        %s273 = scalar_select %p272, %s271, 83
        %s274 = smul.addr %s273, 8
        %s275 = scalar_lea.vmem %s6, %s274
        %s276 = smul.u32 42, %s15
      $region44: #{nanodet_plus_forward.13} parent=35 // pred_fallthru
        _
    $region36: #{nanodet_plus_forward.13} parent=5 // pred_fallthru
      _
    %p277 = scmp.le.s32.totalorder 1, %s15
    %p278 = scmp.lt.s32.totalorder %s15, 3
    %p279 = pnand %p277, %p278
    %p280 = pneg %p279
    // Predicated region
    $region45: #{nanodet_plus_forward.13} parent=5 // pred_check
      _
    $region46: #{nanodet_plus_forward.13} parent=5 // pred_check_branch
      %282 = sbr.rel (%p279) target = $region48
    $region47: #{nanodet_plus_forward.13} parent=5 // pred_region
      %s283 = ssub.s32 %s15, 1
      %s284 = smul.u32 42, %s20
      %p285 = scmp.lt.s32.totalorder %s284, 83
      %s286 = scalar_select %p285, %s284, 83
      %s287 = smul.addr %s286, 3
      %s288 = smul.addr %s287, 4
      %s289 = scalar_lea.vmem %s0, %s288
      %p290 = pneg %p41
      %p291 = pneg %p38
      %p292 = pneg %p62
      %p293 = pneg %p59
      %p294 = pneg %p83
      %p295 = pneg %p80
      %p296 = pneg %p104
      %p297 = pneg %p101
      %p298 = pneg %p125
      %p299 = pneg %p122
      %p300 = pneg %p146
      %p301 = pneg %p143
      %s302 = smul.u32 42, %s20
      %p303 = scmp.lt.s32.totalorder %s302, 83
      %s304 = scalar_select %p303, %s302, 83
      %s305 = smul.addr %s304, 8
      %s306 = scalar_lea.vmem %s6, %s305
      %p307 = pneg %p172
      %p308 = pneg %p169
      %p309 = pneg %p198
      %p310 = pneg %p195
      %s311 = smul.u32 42, %s20
      %p312 = scmp.lt.s32.totalorder %s311, 83
      %s313 = scalar_select %p312, %s311, 83
      %s314 = smul.addr %s313, 8
      %s315 = scalar_lea.vmem %s7, %s314
      %p316 = pneg %p224
      %p317 = pneg %p221
      %s318 = smul.u32 42, %s20
      %p319 = scmp.lt.s32.totalorder %s318, 83
      %s320 = scalar_select %p319, %s318, 83
      %s321 = smul.addr %s320, 8
      %s322 = scalar_lea.vmem %s8, %s321
      %s323 = smul.u32 42, %s20
      %p324 = scmp.lt.s32.totalorder %s323, 83
      %s325 = scalar_select %p324, %s323, 83
      %s326 = smul.addr %s325, 3
      %s327 = smul.addr %s326, 4
      %s328 = scalar_lea.vmem %s0, %s327
      %s329 = smul.u32 42, %s20
      %s330 = smul.u32 42, %s20
      %p331 = scmp.lt.s32.totalorder %s330, 83
      %s332 = scalar_select %p331, %s330, 83
      %s333 = smul.addr %s332, 8
      %s334 = scalar_lea.vmem %s6, %s333
      %s335 = smul.u32 42, %s20
      %s336 = smul.u32 42, %s20
      %p337 = scmp.lt.s32.totalorder %s336, 83
      %s338 = scalar_select %p337, %s336, 83
      %s339 = smul.addr %s338, 8
      %s340 = scalar_lea.vmem %s7, %s339
      %s341 = smul.u32 42, %s20
      %s342 = smul.u32 42, %s20
      %p343 = scmp.lt.s32.totalorder %s342, 83
      %s344 = scalar_select %p343, %s342, 83
      %s345 = smul.addr %s344, 8
      %s346 = scalar_lea.vmem %s8, %s345
      %s347 = smul.u32 42, %s20
      %v349 = vld [vmem:[%s328] sm:$0xff]
      %v350 = vld [vmem:[%s328 + $0x8] sm:$0xf]
      %v351 = vld [vmem:[%s328 + $0xc] sm:$0xff]
      %v352 = vld [vmem:[%s328 + $0x14] sm:$0xf]
      %v353 = vld [vmem:[%s328 + $0x18] sm:$0xff]
      %v354 = vld [vmem:[%s328 + $0x20] sm:$0xf]
      %v355 = vld [vmem:[%s328 + $0x24] sm:$0xff]
      %v356 = vld [vmem:[%s328 + $0x2c] sm:$0xf]
      %v357 = vld [vmem:[%s328 + $0x30] sm:$0xff]
      %v358 = vld [vmem:[%s328 + $0x38] sm:$0xf]
      %v359 = vld [vmem:[%s328 + $0x3c] sm:$0xff]
      %v360 = vld [vmem:[%s328 + $0x44] sm:$0xf]
      %v361 = vld [vmem:[%s328 + $0x48] sm:$0xff]
      %v362 = vld [vmem:[%s328 + $0x50] sm:$0xf]
      %v363 = vld [vmem:[%s328 + $0x54] sm:$0xff]
      %v364 = vld [vmem:[%s328 + $0x5c] sm:$0xf]
      %v365 = vld [vmem:[%s328 + $0x60] sm:$0xff]
      %v366 = vld [vmem:[%s328 + $0x68] sm:$0xf]
      %v367 = vld [vmem:[%s328 + $0x6c] sm:$0xff]
      %v368 = vld [vmem:[%s328 + $0x74] sm:$0xf]
      %v369 = vld [vmem:[%s328 + $0x78] sm:$0xff]
      %v370 = vld [vmem:[%s328 + $0x80] sm:$0xf]
      %v371 = vld [vmem:[%s328 + $0x84] sm:$0xff]
      %v372 = vld [vmem:[%s328 + $0x8c] sm:$0xf]
      %v373 = vld [vmem:[%s328 + $0x90] sm:$0xff]
      %v374 = vld [vmem:[%s328 + $0x98] sm:$0xf]
      %v375 = vld [vmem:[%s328 + $0x9c] sm:$0xff]
      %v376 = vld [vmem:[%s328 + $0xa4] sm:$0xf]
      %v377 = vld [vmem:[%s328 + $0xa8] sm:$0xff]
      %v378 = vld [vmem:[%s328 + $0xb0] sm:$0xf]
      %v379 = vld [vmem:[%s328 + $0xb4] sm:$0xff]
      %v380 = vld [vmem:[%s328 + $0xbc] sm:$0xf]
      %v381 = vld [vmem:[%s328 + $0xc0] sm:$0xff]
      %v382 = vld [vmem:[%s328 + $0xc8] sm:$0xf]
      %v383 = vld [vmem:[%s328 + $0xcc] sm:$0xff]
      %v384 = vld [vmem:[%s328 + $0xd4] sm:$0xf]
      %v385 = vld [vmem:[%s328 + $0xd8] sm:$0xff]
      %v386 = vld [vmem:[%s328 + $0xe0] sm:$0xf]
      %v387 = vld [vmem:[%s328 + $0xe4] sm:$0xff]
      %v388 = vld [vmem:[%s328 + $0xec] sm:$0xf]
      %v389 = vld [vmem:[%s328 + $0xf0] sm:$0xff]
      %v390 = vld [vmem:[%s328 + $0xf8] sm:$0xf]
      %v391 = vld [vmem:[%s328 + $0xfc] sm:$0xff]
      %v392 = vld [vmem:[%s328 + $0x104] sm:$0xf]
      %v393 = vld [vmem:[%s328 + $0x108] sm:$0xff]
      %v394 = vld [vmem:[%s328 + $0x110] sm:$0xf]
      %v395 = vld [vmem:[%s328 + $0x114] sm:$0xff]
      %v396 = vld [vmem:[%s328 + $0x11c] sm:$0xf]
      %v397 = vld [vmem:[%s328 + $0x120] sm:$0xff]
      %v398 = vld [vmem:[%s328 + $0x128] sm:$0xf]
      %v399 = vld [vmem:[%s328 + $0x12c] sm:$0xff]
      %v400 = vld [vmem:[%s328 + $0x134] sm:$0xf]
      %v401 = vld [vmem:[%s328 + $0x138] sm:$0xff]
      %v402 = vld [vmem:[%s328 + $0x140] sm:$0xf]
      %v403 = vld [vmem:[%s328 + $0x144] sm:$0xff]
      %v404 = vld [vmem:[%s328 + $0x14c] sm:$0xf]
      %v405 = vld [vmem:[%s328 + $0x150] sm:$0xff]
      %v406 = vld [vmem:[%s328 + $0x158] sm:$0xf]
      %v407 = vld [vmem:[%s328 + $0x15c] sm:$0xff]
      %v408 = vld [vmem:[%s328 + $0x164] sm:$0xf]
      %v409 = vld [vmem:[%s328 + $0x168] sm:$0xff]
      %v410 = vld [vmem:[%s328 + $0x170] sm:$0xf]
      %v411 = vld [vmem:[%s328 + $0x174] sm:$0xff]
      %v412 = vld [vmem:[%s328 + $0x17c] sm:$0xf]
      %v413 = vld [vmem:[%s328 + $0x180] sm:$0xff]
      %v414 = vld [vmem:[%s328 + $0x188] sm:$0xf]
      %v415 = vld [vmem:[%s328 + $0x18c] sm:$0xff]
      %v416 = vld [vmem:[%s328 + $0x194] sm:$0xf]
      %v417 = vld [vmem:[%s328 + $0x198] sm:$0xff]
      %v418 = vld [vmem:[%s328 + $0x1a0] sm:$0xf]
      %v419 = vld [vmem:[%s328 + $0x1a4] sm:$0xff]
      %v420 = vld [vmem:[%s328 + $0x1ac] sm:$0xf]
      %v421 = vld [vmem:[%s328 + $0x1b0] sm:$0xff]
      %v422 = vld [vmem:[%s328 + $0x1b8] sm:$0xf]
      %v423 = vld [vmem:[%s328 + $0x1bc] sm:$0xff]
      %v424 = vld [vmem:[%s328 + $0x1c4] sm:$0xf]
      %v425 = vld [vmem:[%s328 + $0x1c8] sm:$0xff]
      %v426 = vld [vmem:[%s328 + $0x1d0] sm:$0xf]
      %v427 = vld [vmem:[%s328 + $0x1d4] sm:$0xff]
      %v428 = vld [vmem:[%s328 + $0x1dc] sm:$0xf]
      %v429 = vld [vmem:[%s328 + $0x1e0] sm:$0xff]
      %v430 = vld [vmem:[%s328 + $0x1e8] sm:$0xf]
      %v431 = vld [vmem:[%s328 + $0x1ec] sm:$0xff]
      %v432 = vld [vmem:[%s328 + $0x1f4] sm:$0xf]
      %v433 = vld [vmem:[%s1] sm:$0xf]
      %v434 = vld [vmem:[%s1 + $0x4] sm:$0xf]
      %v435 = vld [vmem:[%s1 + $0x8] sm:$0xf]
      %v436 = vld [vmem:[%s1 + $0xc] sm:$0xf]
      %v437 = vld [vmem:[%s1 + $0x10] sm:$0xf]
      %v438 = vld [vmem:[%s1 + $0x14] sm:$0xf]
      %v439 = vld [vmem:[%s1 + $0x18] sm:$0xf]
      %v440 = vld [vmem:[%s1 + $0x1c] sm:$0xf]
      %v441 = vld [vmem:[%s1 + $0x20] sm:$0xf]
      %v442 = vld [vmem:[%s1 + $0x24] sm:$0xf]
      %v443 = vld [vmem:[%s1 + $0x28] sm:$0xf]
      %v444 = vld [vmem:[%s1 + $0x2c] sm:$0xf]
      %v445 = vld [vmem:[%s1 + $0x30] sm:$0xf]
      %v446 = vld [vmem:[%s1 + $0x34] sm:$0xf]
      %v447 = vld [vmem:[%s1 + $0x38] sm:$0xf]
      %v448 = vld [vmem:[%s1 + $0x3c] sm:$0xf]
      %v449 = vld [vmem:[%s1 + $0x40] sm:$0xf]
      %v450 = vld [vmem:[%s1 + $0x44] sm:$0xf]
      %v451 = vld [vmem:[%s1 + $0x48] sm:$0xf]
      %v452 = vld [vmem:[%s1 + $0x4c] sm:$0xf]
      %v453 = vld [vmem:[%s1 + $0x50] sm:$0xf]
      %v454 = vld [vmem:[%s1 + $0x54] sm:$0xf]
      %v455 = vld [vmem:[%s1 + $0x58] sm:$0xf]
      %v456 = vld [vmem:[%s1 + $0x5c] sm:$0xf]
      %v457 = vld [vmem:[%s1 + $0x60] sm:$0xf]
      %v458 = vld [vmem:[%s1 + $0x64] sm:$0xf]
      %v459 = vld [vmem:[%s1 + $0x68] sm:$0xf]
      %v460 = vld [vmem:[%s1 + $0x6c] sm:$0xf]
      %v461 = vld [vmem:[%s1 + $0x70] sm:$0xf]
      %v462 = vld [vmem:[%s1 + $0x74] sm:$0xf]
      %v463 = vld [vmem:[%s1 + $0x78] sm:$0xf]
      %v464 = vld [vmem:[%s1 + $0x7c] sm:$0xf]
      %v465 = vld [vmem:[%s1 + $0x80] sm:$0xf]
      %v466 = vld [vmem:[%s1 + $0x84] sm:$0xf]
      %v467 = vld [vmem:[%s1 + $0x88] sm:$0xf]
      %v468 = vld [vmem:[%s1 + $0x8c] sm:$0xf]
      %v469 = vld [vmem:[%s2] sm:$0x1]
      %v471 = vlaneseq
      %v472 = vshrl.u32 %v471, 7
      %v473 = vsub.s32 0, %v472
      %v474 = vrot.slane %v469, %v473
      %v560 = vunpack.c.l.b16 %v349
      %v561 = vunpack.c.h.b16 %v349
      %v562 = vunpack.c.l.b16 %v350
      %v563 = vunpack.c.l.b16 %v351
      %v564 = vunpack.c.h.b16 %v351
      %v565 = vunpack.c.l.b16 %v352
      %v566 = vunpack.c.l.b16 %v353
      %v567 = vunpack.c.h.b16 %v353
      %v568 = vunpack.c.l.b16 %v354
      %v569 = vunpack.c.l.b16 %v355
      %v570 = vunpack.c.h.b16 %v355
      %v571 = vunpack.c.l.b16 %v356
      %v572 = vunpack.c.l.b16 %v357
      %v573 = vunpack.c.h.b16 %v357
      %v574 = vunpack.c.l.b16 %v358
      %v575 = vunpack.c.l.b16 %v359
      %v576 = vunpack.c.h.b16 %v359
      %v577 = vunpack.c.l.b16 %v360
      %v578 = vunpack.c.l.b16 %v361
      %v579 = vunpack.c.h.b16 %v361
      %v580 = vunpack.c.l.b16 %v362
      %v581 = vunpack.c.l.b16 %v363
      %v582 = vunpack.c.h.b16 %v363
      %v583 = vunpack.c.l.b16 %v364
      %v584 = vunpack.c.l.b16 %v365
      %v585 = vunpack.c.h.b16 %v365
      %v586 = vunpack.c.l.b16 %v366
      %v587 = vunpack.c.l.b16 %v367
      %v588 = vunpack.c.h.b16 %v367
      %v589 = vunpack.c.l.b16 %v368
      %v590 = vunpack.c.l.b16 %v369
      %v591 = vunpack.c.h.b16 %v369
      %v592 = vunpack.c.l.b16 %v370
      %v593 = vunpack.c.l.b16 %v371
      %v594 = vunpack.c.h.b16 %v371
      %v595 = vunpack.c.l.b16 %v372
      %v596 = vunpack.c.l.b16 %v373
      %v597 = vunpack.c.h.b16 %v373
      %v598 = vunpack.c.l.b16 %v374
      %v599 = vunpack.c.l.b16 %v375
      %v600 = vunpack.c.h.b16 %v375
      %v601 = vunpack.c.l.b16 %v376
      %v602 = vunpack.c.l.b16 %v377
      %v603 = vunpack.c.h.b16 %v377
      %v604 = vunpack.c.l.b16 %v378
      %v605 = vunpack.c.l.b16 %v379
      %v606 = vunpack.c.h.b16 %v379
      %v607 = vunpack.c.l.b16 %v380
      %v608 = vunpack.c.l.b16 %v381
      %v609 = vunpack.c.h.b16 %v381
      %v610 = vunpack.c.l.b16 %v382
      %v611 = vunpack.c.l.b16 %v383
      %v612 = vunpack.c.h.b16 %v383
      %v613 = vunpack.c.l.b16 %v384
      %v614 = vunpack.c.l.b16 %v385
      %v615 = vunpack.c.h.b16 %v385
      %v616 = vunpack.c.l.b16 %v386
      %v617 = vunpack.c.l.b16 %v387
      %v618 = vunpack.c.h.b16 %v387
      %v619 = vunpack.c.l.b16 %v388
      %v620 = vunpack.c.l.b16 %v389
      %v621 = vunpack.c.h.b16 %v389
      %v622 = vunpack.c.l.b16 %v390
      %v623 = vunpack.c.l.b16 %v391
      %v624 = vunpack.c.h.b16 %v391
      %v625 = vunpack.c.l.b16 %v392
      %v626 = vunpack.c.l.b16 %v393
      %v627 = vunpack.c.h.b16 %v393
      %v628 = vunpack.c.l.b16 %v394
      %v629 = vunpack.c.l.b16 %v395
      %v630 = vunpack.c.h.b16 %v395
      %v631 = vunpack.c.l.b16 %v396
      %v632 = vunpack.c.l.b16 %v397
      %v633 = vunpack.c.h.b16 %v397
      %v634 = vunpack.c.l.b16 %v398
      %v635 = vunpack.c.l.b16 %v399
      %v636 = vunpack.c.h.b16 %v399
      %v637 = vunpack.c.l.b16 %v400
      %v638 = vunpack.c.l.b16 %v401
      %v639 = vunpack.c.h.b16 %v401
      %v640 = vunpack.c.l.b16 %v402
      %v641 = vunpack.c.l.b16 %v403
      %v642 = vunpack.c.h.b16 %v403
      %v643 = vunpack.c.l.b16 %v404
      %v644 = vunpack.c.l.b16 %v405
      %v645 = vunpack.c.h.b16 %v405
      %v646 = vunpack.c.l.b16 %v406
      %v647 = vunpack.c.l.b16 %v407
      %v648 = vunpack.c.h.b16 %v407
      %v649 = vunpack.c.l.b16 %v408
      %v650 = vunpack.c.l.b16 %v409
      %v651 = vunpack.c.h.b16 %v409
      %v652 = vunpack.c.l.b16 %v410
      %v653 = vunpack.c.l.b16 %v411
      %v654 = vunpack.c.h.b16 %v411
      %v655 = vunpack.c.l.b16 %v412
      %v656 = vunpack.c.l.b16 %v413
      %v657 = vunpack.c.h.b16 %v413
      %v658 = vunpack.c.l.b16 %v414
      %v659 = vunpack.c.l.b16 %v415
      %v660 = vunpack.c.h.b16 %v415
      %v661 = vunpack.c.l.b16 %v416
      %v662 = vunpack.c.l.b16 %v417
      %v663 = vunpack.c.h.b16 %v417
      %v664 = vunpack.c.l.b16 %v418
      %v665 = vunpack.c.l.b16 %v419
      %v666 = vunpack.c.h.b16 %v419
      %v667 = vunpack.c.l.b16 %v420
      %v668 = vunpack.c.l.b16 %v421
      %v669 = vunpack.c.h.b16 %v421
      %v670 = vunpack.c.l.b16 %v422
      %v671 = vunpack.c.l.b16 %v423
      %v672 = vunpack.c.h.b16 %v423
      %v673 = vunpack.c.l.b16 %v424
      %v674 = vunpack.c.l.b16 %v425
      %v675 = vunpack.c.h.b16 %v425
      %v676 = vunpack.c.l.b16 %v426
      %v677 = vunpack.c.l.b16 %v427
      %v678 = vunpack.c.h.b16 %v427
      %v679 = vunpack.c.l.b16 %v428
      %v680 = vunpack.c.l.b16 %v429
      %v681 = vunpack.c.h.b16 %v429
      %v682 = vunpack.c.l.b16 %v430
      %v683 = vunpack.c.l.b16 %v431
      %v684 = vunpack.c.h.b16 %v431
      %v685 = vunpack.c.l.b16 %v432
      %v686 = vpack.c.b16 %v563, %v560
      %v687 = vpack.c.b16 %v564, %v561
      %v688 = vpack.c.b16 %v565, %v562
      %v689 = vpack.c.b16 %v569, %v566
      %v690 = vpack.c.b16 %v570, %v567
      %v691 = vpack.c.b16 %v571, %v568
      %v692 = vpack.c.b16 %v575, %v572
      %v693 = vpack.c.b16 %v576, %v573
      %v694 = vpack.c.b16 %v577, %v574
      %v695 = vpack.c.b16 %v581, %v578
      %v696 = vpack.c.b16 %v582, %v579
      %v697 = vpack.c.b16 %v583, %v580
      %v698 = vpack.c.b16 %v587, %v584
      %v699 = vpack.c.b16 %v588, %v585
      %v700 = vpack.c.b16 %v589, %v586
      %v701 = vpack.c.b16 %v593, %v590
      %v702 = vpack.c.b16 %v594, %v591
      %v703 = vpack.c.b16 %v595, %v592
      %v704 = vpack.c.b16 %v599, %v596
      %v705 = vpack.c.b16 %v600, %v597
      %v706 = vpack.c.b16 %v601, %v598
      %v707 = vpack.c.b16 %v605, %v602
      %v708 = vpack.c.b16 %v606, %v603
      %v709 = vpack.c.b16 %v607, %v604
      %v710 = vpack.c.b16 %v611, %v608
      %v711 = vpack.c.b16 %v612, %v609
      %v712 = vpack.c.b16 %v613, %v610
      %v713 = vpack.c.b16 %v617, %v614
      %v714 = vpack.c.b16 %v618, %v615
      %v715 = vpack.c.b16 %v619, %v616
      %v716 = vpack.c.b16 %v623, %v620
      %v717 = vpack.c.b16 %v624, %v621
      %v718 = vpack.c.b16 %v625, %v622
      %v719 = vpack.c.b16 %v629, %v626
      %v720 = vpack.c.b16 %v630, %v627
      %v721 = vpack.c.b16 %v631, %v628
      %v722 = vpack.c.b16 %v635, %v632
      %v723 = vpack.c.b16 %v636, %v633
      %v724 = vpack.c.b16 %v637, %v634
      %v725 = vpack.c.b16 %v641, %v638
      %v726 = vpack.c.b16 %v642, %v639
      %v727 = vpack.c.b16 %v643, %v640
      %v728 = vpack.c.b16 %v647, %v644
      %v729 = vpack.c.b16 %v648, %v645
      %v730 = vpack.c.b16 %v649, %v646
      %v731 = vpack.c.b16 %v653, %v650
      %v732 = vpack.c.b16 %v654, %v651
      %v733 = vpack.c.b16 %v655, %v652
      %v734 = vpack.c.b16 %v659, %v656
      %v735 = vpack.c.b16 %v660, %v657
      %v736 = vpack.c.b16 %v661, %v658
      %v737 = vpack.c.b16 %v665, %v662
      %v738 = vpack.c.b16 %v666, %v663
      %v739 = vpack.c.b16 %v667, %v664
      %v740 = vpack.c.b16 %v671, %v668
      %v741 = vpack.c.b16 %v672, %v669
      %v742 = vpack.c.b16 %v673, %v670
      %v743 = vpack.c.b16 %v677, %v674
      %v744 = vpack.c.b16 %v678, %v675
      %v745 = vpack.c.b16 %v679, %v676
      %v746 = vpack.c.b16 %v683, %v680
      %v747 = vpack.c.b16 %v684, %v681
      %v748 = vpack.c.b16 %v685, %v682
      %v827 = vunpack.c.l.b16 %v433
      %v828 = vunpack.c.l.b16 %v434
      %v829 = vunpack.c.l.b16 %v435
      %v830 = vunpack.c.l.b16 %v436
      %v831 = vunpack.c.l.b16 %v437
      %v832 = vunpack.c.l.b16 %v438
      %v833 = vunpack.c.l.b16 %v439
      %v834 = vunpack.c.l.b16 %v440
      %v835 = vunpack.c.l.b16 %v441
      %v836 = vunpack.c.l.b16 %v442
      %v837 = vunpack.c.l.b16 %v443
      %v838 = vunpack.c.l.b16 %v444
      %v839 = vunpack.c.l.b16 %v445
      %v840 = vunpack.c.l.b16 %v446
      %v841 = vunpack.c.l.b16 %v447
      %v842 = vunpack.c.l.b16 %v448
      %v843 = vunpack.c.l.b16 %v449
      %v844 = vunpack.c.l.b16 %v450
      %v845 = vunpack.c.l.b16 %v451
      %v846 = vunpack.c.l.b16 %v452
      %v847 = vunpack.c.l.b16 %v453
      %v848 = vunpack.c.l.b16 %v454
      %v849 = vunpack.c.l.b16 %v455
      %v850 = vunpack.c.l.b16 %v456
      %v851 = vunpack.c.l.b16 %v457
      %v852 = vunpack.c.l.b16 %v458
      %v853 = vunpack.c.l.b16 %v459
      %v854 = vunpack.c.l.b16 %v460
      %v855 = vunpack.c.l.b16 %v461
      %v856 = vunpack.c.l.b16 %v462
      %v857 = vunpack.c.l.b16 %v463
      %v858 = vunpack.c.l.b16 %v464
      %v859 = vunpack.c.l.b16 %v465
      %v860 = vunpack.c.l.b16 %v466
      %v861 = vunpack.c.l.b16 %v467
      %v862 = vunpack.c.l.b16 %v468
      %v863 = vpack.c.b16 %v828, %v827
      %v864 = vpack.c.b16 %v830, %v829
      %v865 = vpack.c.b16 %v832, %v831
      %v866 = vpack.c.b16 %v834, %v833
      %v867 = vpack.c.b16 %v836, %v835
      %v868 = vpack.c.b16 %v838, %v837
      %v869 = vpack.c.b16 %v840, %v839
      %v870 = vpack.c.b16 %v842, %v841
      %v871 = vpack.c.b16 %v844, %v843
      %v872 = vpack.c.b16 %v846, %v845
      %v873 = vpack.c.b16 %v848, %v847
      %v874 = vpack.c.b16 %v850, %v849
      %v875 = vpack.c.b16 %v852, %v851
      %v876 = vpack.c.b16 %v854, %v853
      %v877 = vpack.c.b16 %v856, %v855
      %v878 = vpack.c.b16 %v858, %v857
      %v879 = vpack.c.b16 %v860, %v859
      %v880 = vpack.c.b16 %v862, %v861
      %vm899 = vcmask 261120
      %v901 = vsel %vm899, %v688, 0
      %v904 = vsel %vm899, %v691, 0
      %v907 = vsel %vm899, %v694, 0
      %v910 = vsel %vm899, %v697, 0
      %v913 = vsel %vm899, %v700, 0
      %v916 = vsel %vm899, %v703, 0
      %v919 = vsel %vm899, %v706, 0
      %v922 = vsel %vm899, %v709, 0
      %v925 = vsel %vm899, %v712, 0
      %v928 = vsel %vm899, %v715, 0
      %v931 = vsel %vm899, %v718, 0
      %v934 = vsel %vm899, %v721, 0
      %v937 = vsel %vm899, %v724, 0
      %v940 = vsel %vm899, %v727, 0
      %v943 = vsel %vm899, %v730, 0
      %v946 = vsel %vm899, %v733, 0
      %v949 = vsel %vm899, %v736, 0
      %v952 = vsel %vm899, %v739, 0
      %v955 = vsel %vm899, %v742, 0
      %v958 = vsel %vm899, %v745, 0
      %v961 = vsel %vm899, %v748, 0
      %963 = vmatprep.subr.bf16.mxu0 0
      %964 = vmatpush1.bf16.msra.mxu0 %v870
      %965 = vmatprep.subr.bf16.mxu0 0
      %966 = vmatpush1.bf16.msra.mxu0 %v869
      %967 = vmatprep.subr.bf16.mxu0 0
      %968 = vmatpush1.bf16.msra.mxu0 %v868
      %969 = vmatprep.subr.bf16.mxu0 0
      %970 = vmatpush1.bf16.msra.mxu0 %v867
      %971 = vmatprep.subr.bf16.mxu0 0
      %972 = vmatpush1.bf16.msra.mxu0 %v866
      %973 = vmatprep.subr.bf16.mxu0 0
      %974 = vmatpush1.bf16.msra.mxu0 %v865
      %975 = vmatprep.subr.bf16.mxu0 0
      %976 = vmatpush1.bf16.msra.mxu0 %v864
      %977 = vmatprep.subr.bf16.mxu0 0
      %978 = vmatpush1.bf16.msra.mxu0 %v863
      %979 = vmatprep.subr.bf16.mxu0 0
      %980 = vmatpush2.bf16.msra.mxu0 %v878
      %981 = vmatprep.subr.bf16.mxu0 0
      %982 = vmatpush2.bf16.msra.mxu0 %v877
      %983 = vmatprep.subr.bf16.mxu0 0
      %984 = vmatpush2.bf16.msra.mxu0 %v876
      %985 = vmatprep.subr.bf16.mxu0 0
      %986 = vmatpush2.bf16.msra.mxu0 %v875
      %987 = vmatprep.subr.bf16.mxu0 0
      %988 = vmatpush2.bf16.msra.mxu0 %v874
      %989 = vmatprep.subr.bf16.mxu0 0
      %990 = vmatpush2.bf16.msra.mxu0 %v873
      %991 = vmatprep.subr.bf16.mxu0 0
      %992 = vmatpush2.bf16.msra.mxu0 %v872
      %993 = vmatprep.subr.bf16.mxu0 0
      %994 = vmatpush2.bf16.msra.mxu0 %v871
      %995 = vmatprep.mubr.bf16.mxu0 %v687
      %996 = vmatmul.mubr.bf16.gmra.mxu0 %v686
      %v997 = vpop.f32.mrf.mxu0
      %v998 = vadd.f32 %v474, %v997
      %v999 = vpop.f32.mrf.mxu0
      %v1000 = vpop.f32.mrf.mxu0
      %v1001 = vadd.f32 %v474, %v1000
      %v1002 = vpop.f32.mrf.mxu0
      %1003 = vmatprep.mubr.bf16.mxu0 %v690
      %1004 = vmatmul.mubr.bf16.gmra.mxu0 %v689
      %v1005 = vpop.f32.mrf.mxu0
      %v1006 = vadd.f32 %v474, %v1005
      %v1007 = vpop.f32.mrf.mxu0
      %v1008 = vpop.f32.mrf.mxu0
      %v1009 = vadd.f32 %v474, %v1008
      %v1010 = vpop.f32.mrf.mxu0
      %1011 = vmatprep.mubr.bf16.mxu0 %v693
      %1012 = vmatmul.mubr.bf16.gmra.mxu0 %v692
      %v1013 = vpop.f32.mrf.mxu0
      %v1014 = vadd.f32 %v474, %v1013
      %v1015 = vpop.f32.mrf.mxu0
      %v1016 = vpop.f32.mrf.mxu0
      %v1017 = vadd.f32 %v474, %v1016
      %v1018 = vpop.f32.mrf.mxu0
      %1019 = vmatprep.mubr.bf16.mxu0 %v696
      %1020 = vmatmul.mubr.bf16.gmra.mxu0 %v695
      %v1021 = vpop.f32.mrf.mxu0
      %v1022 = vadd.f32 %v474, %v1021
      %v1023 = vpop.f32.mrf.mxu0
      %v1024 = vpop.f32.mrf.mxu0
      %v1025 = vadd.f32 %v474, %v1024
      %v1026 = vpop.f32.mrf.mxu0
      %1027 = vmatprep.mubr.bf16.mxu0 %v699
      %1028 = vmatmul.mubr.bf16.gmra.mxu0 %v698
      %v1029 = vpop.f32.mrf.mxu0
      %v1030 = vadd.f32 %v474, %v1029
      %v1031 = vpop.f32.mrf.mxu0
      %v1032 = vpop.f32.mrf.mxu0
      %v1033 = vadd.f32 %v474, %v1032
      %v1034 = vpop.f32.mrf.mxu0
      %1035 = vmatprep.mubr.bf16.mxu0 %v702
      %1036 = vmatmul.mubr.bf16.gmra.mxu0 %v701
      %v1037 = vpop.f32.mrf.mxu0
      %v1038 = vadd.f32 %v474, %v1037
      %v1039 = vpop.f32.mrf.mxu0
      %v1040 = vpop.f32.mrf.mxu0
      %v1041 = vadd.f32 %v474, %v1040
      %v1042 = vpop.f32.mrf.mxu0
      %1043 = vmatprep.mubr.bf16.mxu0 %v705
      %1044 = vmatmul.mubr.bf16.gmra.mxu0 %v704
      %v1045 = vpop.f32.mrf.mxu0
      %v1046 = vadd.f32 %v474, %v1045
      %v1047 = vpop.f32.mrf.mxu0
      %v1048 = vpop.f32.mrf.mxu0
      %v1049 = vadd.f32 %v474, %v1048
      %v1050 = vpop.f32.mrf.mxu0
      %1051 = vmatprep.mubr.bf16.mxu0 %v708
      %1052 = vmatmul.mubr.bf16.gmra.mxu0 %v707
      %v1053 = vpop.f32.mrf.mxu0
      %v1054 = vadd.f32 %v474, %v1053
      %v1055 = vpop.f32.mrf.mxu0
      %v1056 = vpop.f32.mrf.mxu0
      %v1057 = vadd.f32 %v474, %v1056
      %v1058 = vpop.f32.mrf.mxu0
      %1059 = vmatprep.mubr.bf16.mxu0 %v711
      %1060 = vmatmul.mubr.bf16.gmra.mxu0 %v710
      %v1061 = vpop.f32.mrf.mxu0
      %v1062 = vadd.f32 %v474, %v1061
      %v1063 = vpop.f32.mrf.mxu0
      %v1064 = vpop.f32.mrf.mxu0
      %v1065 = vadd.f32 %v474, %v1064
      %v1066 = vpop.f32.mrf.mxu0
      %1067 = vmatprep.mubr.bf16.mxu0 %v714
      %1068 = vmatmul.mubr.bf16.gmra.mxu0 %v713
      %v1069 = vpop.f32.mrf.mxu0
      %v1070 = vadd.f32 %v474, %v1069
      %v1071 = vpop.f32.mrf.mxu0
      %v1072 = vpop.f32.mrf.mxu0
      %v1073 = vadd.f32 %v474, %v1072
      %v1074 = vpop.f32.mrf.mxu0
      %1075 = vmatprep.mubr.bf16.mxu0 %v717
      %1076 = vmatmul.mubr.bf16.gmra.mxu0 %v716
      %v1077 = vpop.f32.mrf.mxu0
      %v1078 = vadd.f32 %v474, %v1077
      %v1079 = vpop.f32.mrf.mxu0
      %v1080 = vpop.f32.mrf.mxu0
      %v1081 = vadd.f32 %v474, %v1080
      %v1082 = vpop.f32.mrf.mxu0
      %1083 = vmatprep.mubr.bf16.mxu0 %v720
      %1084 = vmatmul.mubr.bf16.gmra.mxu0 %v719
      %v1085 = vpop.f32.mrf.mxu0
      %v1086 = vadd.f32 %v474, %v1085
      %v1087 = vpop.f32.mrf.mxu0
      %v1088 = vpop.f32.mrf.mxu0
      %v1089 = vadd.f32 %v474, %v1088
      %v1090 = vpop.f32.mrf.mxu0
      %1091 = vmatprep.mubr.bf16.mxu0 %v723
      %1092 = vmatmul.mubr.bf16.gmra.mxu0 %v722
      %v1093 = vpop.f32.mrf.mxu0
      %v1094 = vadd.f32 %v474, %v1093
      %v1095 = vpop.f32.mrf.mxu0
      %v1096 = vpop.f32.mrf.mxu0
      %v1097 = vadd.f32 %v474, %v1096
      %v1098 = vpop.f32.mrf.mxu0
      %1099 = vmatprep.mubr.bf16.mxu0 %v726
      %1100 = vmatmul.mubr.bf16.gmra.mxu0 %v725
      %v1101 = vpop.f32.mrf.mxu0
      %v1102 = vadd.f32 %v474, %v1101
      %v1103 = vpop.f32.mrf.mxu0
      %v1104 = vpop.f32.mrf.mxu0
      %v1105 = vadd.f32 %v474, %v1104
      %v1106 = vpop.f32.mrf.mxu0
      %1107 = vmatprep.mubr.bf16.mxu0 %v729
      %1108 = vmatmul.mubr.bf16.gmra.mxu0 %v728
      %v1109 = vpop.f32.mrf.mxu0
      %v1110 = vadd.f32 %v474, %v1109
      %v1111 = vpop.f32.mrf.mxu0
      %v1112 = vpop.f32.mrf.mxu0
      %v1113 = vadd.f32 %v474, %v1112
      %v1114 = vpop.f32.mrf.mxu0
      %1115 = vmatprep.mubr.bf16.mxu0 %v732
      %1116 = vmatmul.mubr.bf16.gmra.mxu0 %v731
      %v1117 = vpop.f32.mrf.mxu0
      %v1118 = vadd.f32 %v474, %v1117
      %v1119 = vpop.f32.mrf.mxu0
      %v1120 = vpop.f32.mrf.mxu0
      %v1121 = vadd.f32 %v474, %v1120
      %v1122 = vpop.f32.mrf.mxu0
      %1123 = vmatprep.mubr.bf16.mxu0 %v735
      %1124 = vmatmul.mubr.bf16.gmra.mxu0 %v734
      %v1125 = vpop.f32.mrf.mxu0
      %v1126 = vadd.f32 %v474, %v1125
      %v1127 = vpop.f32.mrf.mxu0
      %v1128 = vpop.f32.mrf.mxu0
      %v1129 = vadd.f32 %v474, %v1128
      %v1130 = vpop.f32.mrf.mxu0
      %1131 = vmatprep.mubr.bf16.mxu0 %v738
      %1132 = vmatmul.mubr.bf16.gmra.mxu0 %v737
      %v1133 = vpop.f32.mrf.mxu0
      %v1134 = vadd.f32 %v474, %v1133
      %v1135 = vpop.f32.mrf.mxu0
      %v1136 = vpop.f32.mrf.mxu0
      %v1137 = vadd.f32 %v474, %v1136
      %v1138 = vpop.f32.mrf.mxu0
      %1139 = vmatprep.mubr.bf16.mxu0 %v741
      %1140 = vmatmul.mubr.bf16.gmra.mxu0 %v740
      %v1141 = vpop.f32.mrf.mxu0
      %v1142 = vadd.f32 %v474, %v1141
      %v1143 = vpop.f32.mrf.mxu0
      %v1144 = vpop.f32.mrf.mxu0
      %v1145 = vadd.f32 %v474, %v1144
      %v1146 = vpop.f32.mrf.mxu0
      %1147 = vmatprep.mubr.bf16.mxu0 %v744
      %1148 = vmatmul.mubr.bf16.gmra.mxu0 %v743
      %v1149 = vpop.f32.mrf.mxu0
      %v1150 = vadd.f32 %v474, %v1149
      %v1151 = vpop.f32.mrf.mxu0
      %v1152 = vpop.f32.mrf.mxu0
      %v1153 = vadd.f32 %v474, %v1152
      %v1154 = vpop.f32.mrf.mxu0
      %1155 = vmatprep.mubr.bf16.mxu0 %v747
      %1156 = vmatmul.mubr.bf16.gmra.mxu0 %v746
      %v1157 = vpop.f32.mrf.mxu0
      %v1158 = vadd.f32 %v474, %v1157
      %v1159 = vpop.f32.mrf.mxu0
      %v1160 = vpop.f32.mrf.mxu0
      %v1161 = vadd.f32 %v474, %v1160
      %v1162 = vpop.f32.mrf.mxu0
      %1163 = vdwg.mxu0
      %1164 = vmatprep.subr.bf16.mxu0 0
      %1165 = vmatpush1.bf16.msra.mxu0 0
      %1166 = vmatprep.subr.bf16.mxu0 0
      %1167 = vmatpush1.bf16.msra.mxu0 0
      %1168 = vmatprep.subr.bf16.mxu0 0
      %1169 = vmatpush1.bf16.msra.mxu0 0
      %1170 = vmatprep.subr.bf16.mxu0 0
      %1171 = vmatpush1.bf16.msra.mxu0 0
      %1172 = vmatprep.subr.bf16.mxu0 0
      %1173 = vmatpush1.bf16.msra.mxu0 0
      %1174 = vmatprep.subr.bf16.mxu0 0
      %1175 = vmatpush1.bf16.msra.mxu0 0
      %1176 = vmatprep.subr.bf16.mxu0 0
      %1177 = vmatpush1.bf16.msra.mxu0 %v880
      %1178 = vmatprep.subr.bf16.mxu0 0
      %1179 = vmatpush1.bf16.msra.mxu0 %v879
      %1180 = vmatprep.subr.bf16.mxu0 0
      %1181 = vmatpush2.bf16.msra.mxu0 0
      %1182 = vmatprep.subr.bf16.mxu0 0
      %1183 = vmatpush2.bf16.msra.mxu0 0
      %1184 = vmatprep.subr.bf16.mxu0 0
      %1185 = vmatpush2.bf16.msra.mxu0 0
      %1186 = vmatprep.subr.bf16.mxu0 0
      %1187 = vmatpush2.bf16.msra.mxu0 0
      %1188 = vmatprep.subr.bf16.mxu0 0
      %1189 = vmatpush2.bf16.msra.mxu0 0
      %1190 = vmatprep.subr.bf16.mxu0 0
      %1191 = vmatpush2.bf16.msra.mxu0 0
      %1192 = vmatprep.subr.bf16.mxu0 0
      %1193 = vmatpush2.bf16.msra.mxu0 0
      %1194 = vmatprep.subr.bf16.mxu0 0
      %1195 = vmatpush2.bf16.msra.mxu0 0
      %1196 = vmatprep.mubr.bf16.mxu0 0
      %1197 = vmatmul.mubr.bf16.gmra.mxu0 %v901
      %v1198 = vpop.f32.mrf.mxu0
      %v1199 = vadd.f32 %v998, %v1198
      %v1200 = vpop.f32.mrf.mxu0
      %v1201 = vpop.f32.mrf.mxu0
      %v1202 = vadd.f32 %v1001, %v1201
      %v1203 = vpop.f32.mrf.mxu0
      %1204 = vmatprep.mubr.bf16.mxu0 0
      %1205 = vmatmul.mubr.bf16.gmra.mxu0 %v904
      %v1206 = vpop.f32.mrf.mxu0
      %v1207 = vadd.f32 %v1006, %v1206
      %v1208 = vpop.f32.mrf.mxu0
      %v1209 = vpop.f32.mrf.mxu0
      %v1210 = vadd.f32 %v1009, %v1209
      %v1211 = vpop.f32.mrf.mxu0
      %1212 = vmatprep.mubr.bf16.mxu0 0
      %1213 = vmatmul.mubr.bf16.gmra.mxu0 %v907
      %v1214 = vpop.f32.mrf.mxu0
      %v1215 = vadd.f32 %v1014, %v1214
      %v1216 = vpop.f32.mrf.mxu0
      %v1217 = vpop.f32.mrf.mxu0
      %v1218 = vadd.f32 %v1017, %v1217
      %v1219 = vpop.f32.mrf.mxu0
      %1220 = vmatprep.mubr.bf16.mxu0 0
      %1221 = vmatmul.mubr.bf16.gmra.mxu0 %v910
      %v1222 = vpop.f32.mrf.mxu0
      %v1223 = vadd.f32 %v1022, %v1222
      %v1224 = vpop.f32.mrf.mxu0
      %v1225 = vpop.f32.mrf.mxu0
      %v1226 = vadd.f32 %v1025, %v1225
      %v1227 = vpop.f32.mrf.mxu0
      %1228 = vmatprep.mubr.bf16.mxu0 0
      %1229 = vmatmul.mubr.bf16.gmra.mxu0 %v913
      %v1230 = vpop.f32.mrf.mxu0
      %v1231 = vadd.f32 %v1030, %v1230
      %v1232 = vpop.f32.mrf.mxu0
      %v1233 = vpop.f32.mrf.mxu0
      %v1234 = vadd.f32 %v1033, %v1233
      %v1235 = vpop.f32.mrf.mxu0
      %1236 = vmatprep.mubr.bf16.mxu0 0
      %1237 = vmatmul.mubr.bf16.gmra.mxu0 %v916
      %v1238 = vpop.f32.mrf.mxu0
      %v1239 = vadd.f32 %v1038, %v1238
      %v1240 = vpop.f32.mrf.mxu0
      %v1241 = vpop.f32.mrf.mxu0
      %v1242 = vadd.f32 %v1041, %v1241
      %v1243 = vpop.f32.mrf.mxu0
      %1244 = vmatprep.mubr.bf16.mxu0 0
      %1245 = vmatmul.mubr.bf16.gmra.mxu0 %v919
      %v1246 = vpop.f32.mrf.mxu0
      %v1247 = vadd.f32 %v1046, %v1246
      %v1248 = vpop.f32.mrf.mxu0
      %v1249 = vpop.f32.mrf.mxu0
      %v1250 = vadd.f32 %v1049, %v1249
      %v1251 = vpop.f32.mrf.mxu0
      %1252 = vmatprep.mubr.bf16.mxu0 0
      %1253 = vmatmul.mubr.bf16.gmra.mxu0 %v922
      %v1254 = vpop.f32.mrf.mxu0
      %v1255 = vadd.f32 %v1054, %v1254
      %v1256 = vpop.f32.mrf.mxu0
      %v1257 = vpop.f32.mrf.mxu0
      %v1258 = vadd.f32 %v1057, %v1257
      %v1259 = vpop.f32.mrf.mxu0
      %1260 = vmatprep.mubr.bf16.mxu0 0
      %1261 = vmatmul.mubr.bf16.gmra.mxu0 %v925
      %v1262 = vpop.f32.mrf.mxu0
      %v1263 = vadd.f32 %v1062, %v1262
      %v1264 = vpop.f32.mrf.mxu0
      %v1265 = vpop.f32.mrf.mxu0
      %v1266 = vadd.f32 %v1065, %v1265
      %v1267 = vpop.f32.mrf.mxu0
      %1268 = vmatprep.mubr.bf16.mxu0 0
      %1269 = vmatmul.mubr.bf16.gmra.mxu0 %v928
      %v1270 = vpop.f32.mrf.mxu0
      %v1271 = vadd.f32 %v1070, %v1270
      %v1272 = vpop.f32.mrf.mxu0
      %v1273 = vpop.f32.mrf.mxu0
      %v1274 = vadd.f32 %v1073, %v1273
      %v1275 = vpop.f32.mrf.mxu0
      %1276 = vmatprep.mubr.bf16.mxu0 0
      %1277 = vmatmul.mubr.bf16.gmra.mxu0 %v931
      %v1278 = vpop.f32.mrf.mxu0
      %v1279 = vadd.f32 %v1078, %v1278
      %v1280 = vpop.f32.mrf.mxu0
      %v1281 = vpop.f32.mrf.mxu0
      %v1282 = vadd.f32 %v1081, %v1281
      %v1283 = vpop.f32.mrf.mxu0
      %1284 = vmatprep.mubr.bf16.mxu0 0
      %1285 = vmatmul.mubr.bf16.gmra.mxu0 %v934
      %v1286 = vpop.f32.mrf.mxu0
      %v1287 = vadd.f32 %v1086, %v1286
      %v1288 = vpop.f32.mrf.mxu0
      %v1289 = vpop.f32.mrf.mxu0
      %v1290 = vadd.f32 %v1089, %v1289
      %v1291 = vpop.f32.mrf.mxu0
      %1292 = vmatprep.mubr.bf16.mxu0 0
      %1293 = vmatmul.mubr.bf16.gmra.mxu0 %v937
      %v1294 = vpop.f32.mrf.mxu0
      %v1295 = vadd.f32 %v1094, %v1294
      %v1296 = vpop.f32.mrf.mxu0
      %v1297 = vpop.f32.mrf.mxu0
      %v1298 = vadd.f32 %v1097, %v1297
      %v1299 = vpop.f32.mrf.mxu0
      %1300 = vmatprep.mubr.bf16.mxu0 0
      %1301 = vmatmul.mubr.bf16.gmra.mxu0 %v940
      %v1302 = vpop.f32.mrf.mxu0
      %v1303 = vadd.f32 %v1102, %v1302
      %v1304 = vpop.f32.mrf.mxu0
      %v1305 = vpop.f32.mrf.mxu0
      %v1306 = vadd.f32 %v1105, %v1305
      %v1307 = vpop.f32.mrf.mxu0
      %1308 = vmatprep.mubr.bf16.mxu0 0
      %1309 = vmatmul.mubr.bf16.gmra.mxu0 %v943
      %v1310 = vpop.f32.mrf.mxu0
      %v1311 = vadd.f32 %v1110, %v1310
      %v1312 = vpop.f32.mrf.mxu0
      %v1313 = vpop.f32.mrf.mxu0
      %v1314 = vadd.f32 %v1113, %v1313
      %v1315 = vpop.f32.mrf.mxu0
      %1316 = vmatprep.mubr.bf16.mxu0 0
      %1317 = vmatmul.mubr.bf16.gmra.mxu0 %v946
      %v1318 = vpop.f32.mrf.mxu0
      %v1319 = vadd.f32 %v1118, %v1318
      %v1320 = vpop.f32.mrf.mxu0
      %v1321 = vpop.f32.mrf.mxu0
      %v1322 = vadd.f32 %v1121, %v1321
      %v1323 = vpop.f32.mrf.mxu0
      %1324 = vmatprep.mubr.bf16.mxu0 0
      %1325 = vmatmul.mubr.bf16.gmra.mxu0 %v949
      %v1326 = vpop.f32.mrf.mxu0
      %v1327 = vadd.f32 %v1126, %v1326
      %v1328 = vpop.f32.mrf.mxu0
      %v1329 = vpop.f32.mrf.mxu0
      %v1330 = vadd.f32 %v1129, %v1329
      %v1331 = vpop.f32.mrf.mxu0
      %1332 = vmatprep.mubr.bf16.mxu0 0
      %1333 = vmatmul.mubr.bf16.gmra.mxu0 %v952
      %v1334 = vpop.f32.mrf.mxu0
      %v1335 = vadd.f32 %v1134, %v1334
      %v1336 = vpop.f32.mrf.mxu0
      %v1337 = vpop.f32.mrf.mxu0
      %v1338 = vadd.f32 %v1137, %v1337
      %v1339 = vpop.f32.mrf.mxu0
      %1340 = vmatprep.mubr.bf16.mxu0 0
      %1341 = vmatmul.mubr.bf16.gmra.mxu0 %v955
      %v1342 = vpop.f32.mrf.mxu0
      %v1343 = vadd.f32 %v1142, %v1342
      %v1344 = vpop.f32.mrf.mxu0
      %v1345 = vpop.f32.mrf.mxu0
      %v1346 = vadd.f32 %v1145, %v1345
      %v1347 = vpop.f32.mrf.mxu0
      %1348 = vmatprep.mubr.bf16.mxu0 0
      %1349 = vmatmul.mubr.bf16.gmra.mxu0 %v958
      %v1350 = vpop.f32.mrf.mxu0
      %v1351 = vadd.f32 %v1150, %v1350
      %v1352 = vpop.f32.mrf.mxu0
      %v1353 = vpop.f32.mrf.mxu0
      %v1354 = vadd.f32 %v1153, %v1353
      %v1355 = vpop.f32.mrf.mxu0
      %1356 = vmatprep.mubr.bf16.mxu0 0
      %1357 = vmatmul.mubr.bf16.gmra.mxu0 %v961
      %v1358 = vpop.f32.mrf.mxu0
      %v1359 = vadd.f32 %v1158, %v1358
      %v1360 = vpop.f32.mrf.mxu0
      %v1361 = vpop.f32.mrf.mxu0
      %v1362 = vadd.f32 %v1161, %v1361
      %v1363 = vpop.f32.mrf.mxu0
      %1364 = vdwg.mxu0
      %v1365 = vmax.f32 %v1199, 0.0
      %v1366 = vmax.f32 %v1202, 0.0
      %v1367 = vmax.f32 %v1207, 0.0
      %v1368 = vmax.f32 %v1210, 0.0
      %v1369 = vmax.f32 %v1215, 0.0
      %v1370 = vmax.f32 %v1218, 0.0
      %v1371 = vmax.f32 %v1223, 0.0
      %v1372 = vmax.f32 %v1226, 0.0
      %v1373 = vmax.f32 %v1231, 0.0
      %v1374 = vmax.f32 %v1234, 0.0
      %v1375 = vmax.f32 %v1239, 0.0
      %v1376 = vmax.f32 %v1242, 0.0
      %v1377 = vmax.f32 %v1247, 0.0
      %v1378 = vmax.f32 %v1250, 0.0
      %v1379 = vmax.f32 %v1255, 0.0
      %v1380 = vmax.f32 %v1258, 0.0
      %v1381 = vmax.f32 %v1263, 0.0
      %v1382 = vmax.f32 %v1266, 0.0
      %v1383 = vmax.f32 %v1271, 0.0
      %v1384 = vmax.f32 %v1274, 0.0
      %v1385 = vmax.f32 %v1279, 0.0
      %v1386 = vmax.f32 %v1282, 0.0
      %v1387 = vmax.f32 %v1287, 0.0
      %v1388 = vmax.f32 %v1290, 0.0
      %v1389 = vmax.f32 %v1295, 0.0
      %v1390 = vmax.f32 %v1298, 0.0
      %v1391 = vmax.f32 %v1303, 0.0
      %v1392 = vmax.f32 %v1306, 0.0
      %v1393 = vmax.f32 %v1311, 0.0
      %v1394 = vmax.f32 %v1314, 0.0
      %v1395 = vmax.f32 %v1319, 0.0
      %v1396 = vmax.f32 %v1322, 0.0
      %v1397 = vmax.f32 %v1327, 0.0
      %v1398 = vmax.f32 %v1330, 0.0
      %v1399 = vmax.f32 %v1335, 0.0
      %v1400 = vmax.f32 %v1338, 0.0
      %v1401 = vmax.f32 %v1343, 0.0
      %v1402 = vmax.f32 %v1346, 0.0
      %v1403 = vmax.f32 %v1351, 0.0
      %v1404 = vmax.f32 %v1354, 0.0
      %v1405 = vmax.f32 %v1359, 0.0
      %v1406 = vmax.f32 %v1362, 0.0
      %v1407 = vld [vmem:[%s3] sm:$0xff]
      %v1408 = vld [vmem:[%s3 + $0x8] sm:$0xff]
      %v1409 = vld [vmem:[%s3 + $0x10] sm:$0xff]
      %v1410 = vld [vmem:[%s3 + $0x18] sm:$0xff]
      %v1411 = vld [vmem:[%s4] sm:$0x1]
      %v1413 = vlaneseq
      %v1414 = vshrl.u32 %v1413, 7
      %v1415 = vsub.s32 0, %v1414
      %v1416 = vrot.slane %v1411, %v1415
      %v1419 = vsel %vm899, %v1365, 0
      %v1422 = vsel %vm899, %v1366, 0
      %v1425 = vsel %vm899, %v1367, 0
      %v1428 = vsel %vm899, %v1368, 0
      %v1431 = vsel %vm899, %v1369, 0
      %v1434 = vsel %vm899, %v1370, 0
      %v1437 = vsel %vm899, %v1371, 0
      %v1440 = vsel %vm899, %v1372, 0
      %v1443 = vsel %vm899, %v1373, 0
      %v1446 = vsel %vm899, %v1374, 0
      %v1449 = vsel %vm899, %v1375, 0
      %v1452 = vsel %vm899, %v1376, 0
      %v1455 = vsel %vm899, %v1377, 0
      %v1458 = vsel %vm899, %v1378, 0
      %v1461 = vsel %vm899, %v1379, 0
      %v1464 = vsel %vm899, %v1380, 0
      %v1467 = vsel %vm899, %v1381, 0
      %v1470 = vsel %vm899, %v1382, 0
      %v1473 = vsel %vm899, %v1383, 0
      %v1476 = vsel %vm899, %v1384, 0
      %v1479 = vsel %vm899, %v1385, 0
      %v1482 = vsel %vm899, %v1386, 0
      %v1485 = vsel %vm899, %v1387, 0
      %v1488 = vsel %vm899, %v1388, 0
      %v1491 = vsel %vm899, %v1389, 0
      %v1494 = vsel %vm899, %v1390, 0
      %v1497 = vsel %vm899, %v1391, 0
      %v1500 = vsel %vm899, %v1392, 0
      %v1503 = vsel %vm899, %v1393, 0
      %v1506 = vsel %vm899, %v1394, 0
      %v1509 = vsel %vm899, %v1395, 0
      %v1512 = vsel %vm899, %v1396, 0
      %v1515 = vsel %vm899, %v1397, 0
      %v1518 = vsel %vm899, %v1398, 0
      %v1521 = vsel %vm899, %v1399, 0
      %v1524 = vsel %vm899, %v1400, 0
      %v1527 = vsel %vm899, %v1401, 0
      %v1530 = vsel %vm899, %v1402, 0
      %v1533 = vsel %vm899, %v1403, 0
      %v1536 = vsel %vm899, %v1404, 0
      %v1539 = vsel %vm899, %v1405, 0
      %v1542 = vsel %vm899, %v1406, 0
      %1544 = vmatprep.subr.mxu0 0.0
      %1545 = vmatpush1.msra.mxu0 0.0
      %1546 = vmatprep.subr.mxu0 0.0
      %1547 = vmatpush1.msra.mxu0 0.0
      %1548 = vmatprep.subr.mxu0 0.0
      %1549 = vmatpush1.msra.mxu0 0.0
      %1550 = vmatprep.subr.mxu0 0.0
      %1551 = vmatpush1.msra.mxu0 0.0
      %1552 = vmatprep.subr.mxu0 0.0
      %1553 = vmatpush1.msra.mxu0 0.0
      %1554 = vmatprep.subr.mxu0 0.0
      %1555 = vmatpush1.msra.mxu0 0.0
      %1556 = vmatprep.subr.mxu0 0.0
      %1557 = vmatpush1.msra.mxu0 0.0
      %1558 = vmatprep.subr.mxu0 0.0
      %1559 = vmatpush1.msra.mxu0 0.0
      %1560 = vmatprep.subr.mxu0 0.0
      %1561 = vmatpush1.msra.mxu0 0.0
      %1562 = vmatprep.subr.mxu0 0.0
      %1563 = vmatpush1.msra.mxu0 0.0
      %1564 = vmatprep.subr.mxu0 0.0
      %1565 = vmatpush1.msra.mxu0 0.0
      %1566 = vmatprep.subr.mxu0 0.0
      %1567 = vmatpush1.msra.mxu0 0.0
      %1568 = vmatprep.subr.mxu0 0.0
      %1569 = vmatpush1.msra.mxu0 %v1410
      %1570 = vmatprep.subr.mxu0 0.0
      %1571 = vmatpush1.msra.mxu0 %v1409
      %1572 = vmatprep.subr.mxu0 0.0
      %1573 = vmatpush1.msra.mxu0 %v1408
      %1574 = vmatprep.subr.mxu0 0.0
      %1575 = vmatpush1.msra.mxu0 %v1407
      %1576 = vmatprep.subr.mxu0 0.0
      %1577 = vmatpush2.msra.mxu0 0.0
      %1578 = vmatprep.subr.mxu0 0.0
      %1579 = vmatpush2.msra.mxu0 0.0
      %1580 = vmatprep.subr.mxu0 0.0
      %1581 = vmatpush2.msra.mxu0 0.0
      %1582 = vmatprep.subr.mxu0 0.0
      %1583 = vmatpush2.msra.mxu0 0.0
      %1584 = vmatprep.subr.mxu0 0.0
      %1585 = vmatpush2.msra.mxu0 0.0
      %1586 = vmatprep.subr.mxu0 0.0
      %1587 = vmatpush2.msra.mxu0 0.0
      %1588 = vmatprep.subr.mxu0 0.0
      %1589 = vmatpush2.msra.mxu0 0.0
      %1590 = vmatprep.subr.mxu0 0.0
      %1591 = vmatpush2.msra.mxu0 0.0
      %1592 = vmatprep.subr.mxu0 0.0
      %1593 = vmatpush2.msra.mxu0 0.0
      %1594 = vmatprep.subr.mxu0 0.0
      %1595 = vmatpush2.msra.mxu0 0.0
      %1596 = vmatprep.subr.mxu0 0.0
      %1597 = vmatpush2.msra.mxu0 0.0
      %1598 = vmatprep.subr.mxu0 0.0
      %1599 = vmatpush2.msra.mxu0 0.0
      %1600 = vmatprep.subr.mxu0 0.0
      %1601 = vmatpush2.msra.mxu0 0.0
      %1602 = vmatprep.subr.mxu0 0.0
      %1603 = vmatpush2.msra.mxu0 0.0
      %1604 = vmatprep.subr.mxu0 0.0
      %1605 = vmatpush2.msra.mxu0 0.0
      %1606 = vmatprep.subr.mxu0 0.0
      %1607 = vmatpush2.msra.mxu0 0.0
      %1608 = vmatprep.mubr.f32.mxu0 0.0
      %1609 = vmatmul.mubr.f32.gmra.mxu0 %v1419
      %v1610 = vpop.f32.mrf.mxu0
      %v1611 = vadd.f32 %v1416, %v1610
      %v1612 = vpop.f32.mrf.mxu0
      %1613 = vmatprep.mubr.f32.mxu0 0.0
      %1614 = vmatmul.mubr.f32.gmra.mxu0 %v1422
      %v1615 = vpop.f32.mrf.mxu0
      %v1616 = vadd.f32 %v1416, %v1615
      %v1617 = vpop.f32.mrf.mxu0
      %1618 = vmatprep.mubr.f32.mxu0 0.0
      %1619 = vmatmul.mubr.f32.gmra.mxu0 %v1425
      %v1620 = vpop.f32.mrf.mxu0
      %v1621 = vadd.f32 %v1416, %v1620
      %v1622 = vpop.f32.mrf.mxu0
      %1623 = vmatprep.mubr.f32.mxu0 0.0
      %1624 = vmatmul.mubr.f32.gmra.mxu0 %v1428
      %v1625 = vpop.f32.mrf.mxu0
      %v1626 = vadd.f32 %v1416, %v1625
      %v1627 = vpop.f32.mrf.mxu0
      %1628 = vmatprep.mubr.f32.mxu0 0.0
      %1629 = vmatmul.mubr.f32.gmra.mxu0 %v1431
      %v1630 = vpop.f32.mrf.mxu0
      %v1631 = vadd.f32 %v1416, %v1630
      %v1632 = vpop.f32.mrf.mxu0
      %1633 = vmatprep.mubr.f32.mxu0 0.0
      %1634 = vmatmul.mubr.f32.gmra.mxu0 %v1434
      %v1635 = vpop.f32.mrf.mxu0
      %v1636 = vadd.f32 %v1416, %v1635
      %v1637 = vpop.f32.mrf.mxu0
      %1638 = vmatprep.mubr.f32.mxu0 0.0
      %1639 = vmatmul.mubr.f32.gmra.mxu0 %v1437
      %v1640 = vpop.f32.mrf.mxu0
      %v1641 = vadd.f32 %v1416, %v1640
      %v1642 = vpop.f32.mrf.mxu0
      %1643 = vmatprep.mubr.f32.mxu0 0.0
      %1644 = vmatmul.mubr.f32.gmra.mxu0 %v1440
      %v1645 = vpop.f32.mrf.mxu0
      %v1646 = vadd.f32 %v1416, %v1645
      %v1647 = vpop.f32.mrf.mxu0
      %1648 = vmatprep.mubr.f32.mxu0 0.0
      %1649 = vmatmul.mubr.f32.gmra.mxu0 %v1443
      %v1650 = vpop.f32.mrf.mxu0
      %v1651 = vadd.f32 %v1416, %v1650
      %v1652 = vpop.f32.mrf.mxu0
      %1653 = vmatprep.mubr.f32.mxu0 0.0
      %1654 = vmatmul.mubr.f32.gmra.mxu0 %v1446
      %v1655 = vpop.f32.mrf.mxu0
      %v1656 = vadd.f32 %v1416, %v1655
      %v1657 = vpop.f32.mrf.mxu0
      %1658 = vmatprep.mubr.f32.mxu0 0.0
      %1659 = vmatmul.mubr.f32.gmra.mxu0 %v1449
      %v1660 = vpop.f32.mrf.mxu0
      %v1661 = vadd.f32 %v1416, %v1660
      %v1662 = vpop.f32.mrf.mxu0
      %1663 = vmatprep.mubr.f32.mxu0 0.0
      %1664 = vmatmul.mubr.f32.gmra.mxu0 %v1452
      %v1665 = vpop.f32.mrf.mxu0
      %v1666 = vadd.f32 %v1416, %v1665
      %v1667 = vpop.f32.mrf.mxu0
      %1668 = vmatprep.mubr.f32.mxu0 0.0
      %1669 = vmatmul.mubr.f32.gmra.mxu0 %v1455
      %v1670 = vpop.f32.mrf.mxu0
      %v1671 = vadd.f32 %v1416, %v1670
      %v1672 = vpop.f32.mrf.mxu0
      %1673 = vmatprep.mubr.f32.mxu0 0.0
      %1674 = vmatmul.mubr.f32.gmra.mxu0 %v1458
      %v1675 = vpop.f32.mrf.mxu0
      %v1676 = vadd.f32 %v1416, %v1675
      %v1677 = vpop.f32.mrf.mxu0
      %1678 = vmatprep.mubr.f32.mxu0 0.0
      %1679 = vmatmul.mubr.f32.gmra.mxu0 %v1461
      %v1680 = vpop.f32.mrf.mxu0
      %v1681 = vadd.f32 %v1416, %v1680
      %v1682 = vpop.f32.mrf.mxu0
      %1683 = vmatprep.mubr.f32.mxu0 0.0
      %1684 = vmatmul.mubr.f32.gmra.mxu0 %v1464
      %v1685 = vpop.f32.mrf.mxu0
      %v1686 = vadd.f32 %v1416, %v1685
      %v1687 = vpop.f32.mrf.mxu0
      %1688 = vmatprep.mubr.f32.mxu0 0.0
      %1689 = vmatmul.mubr.f32.gmra.mxu0 %v1467
      %v1690 = vpop.f32.mrf.mxu0
      %v1691 = vadd.f32 %v1416, %v1690
      %v1692 = vpop.f32.mrf.mxu0
      %1693 = vmatprep.mubr.f32.mxu0 0.0
      %1694 = vmatmul.mubr.f32.gmra.mxu0 %v1470
      %v1695 = vpop.f32.mrf.mxu0
      %v1696 = vadd.f32 %v1416, %v1695
      %v1697 = vpop.f32.mrf.mxu0
      %1698 = vmatprep.mubr.f32.mxu0 0.0
      %1699 = vmatmul.mubr.f32.gmra.mxu0 %v1473
      %v1700 = vpop.f32.mrf.mxu0
      %v1701 = vadd.f32 %v1416, %v1700
      %v1702 = vpop.f32.mrf.mxu0
      %1703 = vmatprep.mubr.f32.mxu0 0.0
      %1704 = vmatmul.mubr.f32.gmra.mxu0 %v1476
      %v1705 = vpop.f32.mrf.mxu0
      %v1706 = vadd.f32 %v1416, %v1705
      %v1707 = vpop.f32.mrf.mxu0
      %1708 = vmatprep.mubr.f32.mxu0 0.0
      %1709 = vmatmul.mubr.f32.gmra.mxu0 %v1479
      %v1710 = vpop.f32.mrf.mxu0
      %v1711 = vadd.f32 %v1416, %v1710
      %v1712 = vpop.f32.mrf.mxu0
      %1713 = vmatprep.mubr.f32.mxu0 0.0
      %1714 = vmatmul.mubr.f32.gmra.mxu0 %v1482
      %v1715 = vpop.f32.mrf.mxu0
      %v1716 = vadd.f32 %v1416, %v1715
      %v1717 = vpop.f32.mrf.mxu0
      %1718 = vmatprep.mubr.f32.mxu0 0.0
      %1719 = vmatmul.mubr.f32.gmra.mxu0 %v1485
      %v1720 = vpop.f32.mrf.mxu0
      %v1721 = vadd.f32 %v1416, %v1720
      %v1722 = vpop.f32.mrf.mxu0
      %1723 = vmatprep.mubr.f32.mxu0 0.0
      %1724 = vmatmul.mubr.f32.gmra.mxu0 %v1488
      %v1725 = vpop.f32.mrf.mxu0
      %v1726 = vadd.f32 %v1416, %v1725
      %v1727 = vpop.f32.mrf.mxu0
      %1728 = vmatprep.mubr.f32.mxu0 0.0
      %1729 = vmatmul.mubr.f32.gmra.mxu0 %v1491
      %v1730 = vpop.f32.mrf.mxu0
      %v1731 = vadd.f32 %v1416, %v1730
      %v1732 = vpop.f32.mrf.mxu0
      %1733 = vmatprep.mubr.f32.mxu0 0.0
      %1734 = vmatmul.mubr.f32.gmra.mxu0 %v1494
      %v1735 = vpop.f32.mrf.mxu0
      %v1736 = vadd.f32 %v1416, %v1735
      %v1737 = vpop.f32.mrf.mxu0
      %1738 = vmatprep.mubr.f32.mxu0 0.0
      %1739 = vmatmul.mubr.f32.gmra.mxu0 %v1497
      %v1740 = vpop.f32.mrf.mxu0
      %v1741 = vadd.f32 %v1416, %v1740
      %v1742 = vpop.f32.mrf.mxu0
      %1743 = vmatprep.mubr.f32.mxu0 0.0
      %1744 = vmatmul.mubr.f32.gmra.mxu0 %v1500
      %v1745 = vpop.f32.mrf.mxu0
      %v1746 = vadd.f32 %v1416, %v1745
      %v1747 = vpop.f32.mrf.mxu0
      %1748 = vmatprep.mubr.f32.mxu0 0.0
      %1749 = vmatmul.mubr.f32.gmra.mxu0 %v1503
      %v1750 = vpop.f32.mrf.mxu0
      %v1751 = vadd.f32 %v1416, %v1750
      %v1752 = vpop.f32.mrf.mxu0
      %1753 = vmatprep.mubr.f32.mxu0 0.0
      %1754 = vmatmul.mubr.f32.gmra.mxu0 %v1506
      %v1755 = vpop.f32.mrf.mxu0
      %v1756 = vadd.f32 %v1416, %v1755
      %v1757 = vpop.f32.mrf.mxu0
      %1758 = vmatprep.mubr.f32.mxu0 0.0
      %1759 = vmatmul.mubr.f32.gmra.mxu0 %v1509
      %v1760 = vpop.f32.mrf.mxu0
      %v1761 = vadd.f32 %v1416, %v1760
      %v1762 = vpop.f32.mrf.mxu0
      %1763 = vmatprep.mubr.f32.mxu0 0.0
      %1764 = vmatmul.mubr.f32.gmra.mxu0 %v1512
      %v1765 = vpop.f32.mrf.mxu0
      %v1766 = vadd.f32 %v1416, %v1765
      %v1767 = vpop.f32.mrf.mxu0
      %1768 = vmatprep.mubr.f32.mxu0 0.0
      %1769 = vmatmul.mubr.f32.gmra.mxu0 %v1515
      %v1770 = vpop.f32.mrf.mxu0
      %v1771 = vadd.f32 %v1416, %v1770
      %v1772 = vpop.f32.mrf.mxu0
      %1773 = vmatprep.mubr.f32.mxu0 0.0
      %1774 = vmatmul.mubr.f32.gmra.mxu0 %v1518
      %v1775 = vpop.f32.mrf.mxu0
      %v1776 = vadd.f32 %v1416, %v1775
      %v1777 = vpop.f32.mrf.mxu0
      %1778 = vmatprep.mubr.f32.mxu0 0.0
      %1779 = vmatmul.mubr.f32.gmra.mxu0 %v1521
      %v1780 = vpop.f32.mrf.mxu0
      %v1781 = vadd.f32 %v1416, %v1780
      %v1782 = vpop.f32.mrf.mxu0
      %1783 = vmatprep.mubr.f32.mxu0 0.0
      %1784 = vmatmul.mubr.f32.gmra.mxu0 %v1524
      %v1785 = vpop.f32.mrf.mxu0
      %v1786 = vadd.f32 %v1416, %v1785
      %v1787 = vpop.f32.mrf.mxu0
      %1788 = vmatprep.mubr.f32.mxu0 0.0
      %1789 = vmatmul.mubr.f32.gmra.mxu0 %v1527
      %v1790 = vpop.f32.mrf.mxu0
      %v1791 = vadd.f32 %v1416, %v1790
      %v1792 = vpop.f32.mrf.mxu0
      %1793 = vmatprep.mubr.f32.mxu0 0.0
      %1794 = vmatmul.mubr.f32.gmra.mxu0 %v1530
      %v1795 = vpop.f32.mrf.mxu0
      %v1796 = vadd.f32 %v1416, %v1795
      %v1797 = vpop.f32.mrf.mxu0
      %1798 = vmatprep.mubr.f32.mxu0 0.0
      %1799 = vmatmul.mubr.f32.gmra.mxu0 %v1533
      %v1800 = vpop.f32.mrf.mxu0
      %v1801 = vadd.f32 %v1416, %v1800
      %v1802 = vpop.f32.mrf.mxu0
      %1803 = vmatprep.mubr.f32.mxu0 0.0
      %1804 = vmatmul.mubr.f32.gmra.mxu0 %v1536
      %v1805 = vpop.f32.mrf.mxu0
      %v1806 = vadd.f32 %v1416, %v1805
      %v1807 = vpop.f32.mrf.mxu0
      %1808 = vmatprep.mubr.f32.mxu0 0.0
      %1809 = vmatmul.mubr.f32.gmra.mxu0 %v1539
      %v1810 = vpop.f32.mrf.mxu0
      %v1811 = vadd.f32 %v1416, %v1810
      %v1812 = vpop.f32.mrf.mxu0
      %1813 = vmatprep.mubr.f32.mxu0 0.0
      %1814 = vmatmul.mubr.f32.gmra.mxu0 %v1542
      %v1815 = vpop.f32.mrf.mxu0
      %v1816 = vadd.f32 %v1416, %v1815
      %v1817 = vpop.f32.mrf.mxu0
      %1818 = vdwg.mxu0
      %vm1819 = vcmask 293888
      %1820 = vst.msk [vmem:[%s340] sm:$0xff] %vm1819, %v1611
      %1821 = vst.msk [vmem:[%s340 + $0x8] sm:$0xff] %vm1819, %v1616
      %1822 = vst.msk [vmem:[%s340 + $0x10] sm:$0xff] %vm1819, %v1621
      %1823 = vst.msk [vmem:[%s340 + $0x18] sm:$0xff] %vm1819, %v1626
      %1824 = vst.msk [vmem:[%s340 + $0x20] sm:$0xff] %vm1819, %v1631
      %1825 = vst.msk [vmem:[%s340 + $0x28] sm:$0xff] %vm1819, %v1636
      %1826 = vst.msk [vmem:[%s340 + $0x30] sm:$0xff] %vm1819, %v1641
      %1827 = vst.msk [vmem:[%s340 + $0x38] sm:$0xff] %vm1819, %v1646
      %1828 = vst.msk [vmem:[%s340 + $0x40] sm:$0xff] %vm1819, %v1651
      %1829 = vst.msk [vmem:[%s340 + $0x48] sm:$0xff] %vm1819, %v1656
      %1830 = vst.msk [vmem:[%s340 + $0x50] sm:$0xff] %vm1819, %v1661
      %1831 = vst.msk [vmem:[%s340 + $0x58] sm:$0xff] %vm1819, %v1666
      %1832 = vst.msk [vmem:[%s340 + $0x60] sm:$0xff] %vm1819, %v1671
      %1833 = vst.msk [vmem:[%s340 + $0x68] sm:$0xff] %vm1819, %v1676
      %1834 = vst.msk [vmem:[%s340 + $0x70] sm:$0xff] %vm1819, %v1681
      %1835 = vst.msk [vmem:[%s340 + $0x78] sm:$0xff] %vm1819, %v1686
      %1836 = vst.msk [vmem:[%s340 + $0x80] sm:$0xff] %vm1819, %v1691
      %1837 = vst.msk [vmem:[%s340 + $0x88] sm:$0xff] %vm1819, %v1696
      %1838 = vst.msk [vmem:[%s340 + $0x90] sm:$0xff] %vm1819, %v1701
      %1839 = vst.msk [vmem:[%s340 + $0x98] sm:$0xff] %vm1819, %v1706
      %1840 = vst.msk [vmem:[%s340 + $0xa0] sm:$0xff] %vm1819, %v1711
      %1841 = vst.msk [vmem:[%s340 + $0xa8] sm:$0xff] %vm1819, %v1716
      %1842 = vst.msk [vmem:[%s340 + $0xb0] sm:$0xff] %vm1819, %v1721
      %1843 = vst.msk [vmem:[%s340 + $0xb8] sm:$0xff] %vm1819, %v1726
      %1844 = vst.msk [vmem:[%s340 + $0xc0] sm:$0xff] %vm1819, %v1731
      %1845 = vst.msk [vmem:[%s340 + $0xc8] sm:$0xff] %vm1819, %v1736
      %1846 = vst.msk [vmem:[%s340 + $0xd0] sm:$0xff] %vm1819, %v1741
      %1847 = vst.msk [vmem:[%s340 + $0xd8] sm:$0xff] %vm1819, %v1746
      %1848 = vst.msk [vmem:[%s340 + $0xe0] sm:$0xff] %vm1819, %v1751
      %1849 = vst.msk [vmem:[%s340 + $0xe8] sm:$0xff] %vm1819, %v1756
      %1850 = vst.msk [vmem:[%s340 + $0xf0] sm:$0xff] %vm1819, %v1761
      %1851 = vst.msk [vmem:[%s340 + $0xf8] sm:$0xff] %vm1819, %v1766
      %1852 = vst.msk [vmem:[%s340 + $0x100] sm:$0xff] %vm1819, %v1771
      %1853 = vst.msk [vmem:[%s340 + $0x108] sm:$0xff] %vm1819, %v1776
      %1854 = vst.msk [vmem:[%s340 + $0x110] sm:$0xff] %vm1819, %v1781
      %1855 = vst.msk [vmem:[%s340 + $0x118] sm:$0xff] %vm1819, %v1786
      %1856 = vst.msk [vmem:[%s340 + $0x120] sm:$0xff] %vm1819, %v1791
      %1857 = vst.msk [vmem:[%s340 + $0x128] sm:$0xff] %vm1819, %v1796
      %1858 = vst.msk [vmem:[%s340 + $0x130] sm:$0xff] %vm1819, %v1801
      %1859 = vst.msk [vmem:[%s340 + $0x138] sm:$0xff] %vm1819, %v1806
      %1860 = vst.msk [vmem:[%s340 + $0x140] sm:$0xff] %vm1819, %v1811
      %1861 = vst.msk [vmem:[%s340 + $0x148] sm:$0xff] %vm1819, %v1816
      %v1862 = vxor.u32 %v1611, 2147483648
      %v1863 = vxor.u32 %v1616, 2147483648
      %v1864 = vxor.u32 %v1621, 2147483648
      %v1865 = vxor.u32 %v1626, 2147483648
      %v1866 = vxor.u32 %v1631, 2147483648
      %v1867 = vxor.u32 %v1636, 2147483648
      %v1868 = vxor.u32 %v1641, 2147483648
      %v1869 = vxor.u32 %v1646, 2147483648
      %v1870 = vxor.u32 %v1651, 2147483648
      %v1871 = vxor.u32 %v1656, 2147483648
      %v1872 = vxor.u32 %v1661, 2147483648
      %v1873 = vxor.u32 %v1666, 2147483648
      %v1874 = vxor.u32 %v1671, 2147483648
      %v1875 = vxor.u32 %v1676, 2147483648
      %v1876 = vxor.u32 %v1681, 2147483648
      %v1877 = vxor.u32 %v1686, 2147483648
      %v1878 = vxor.u32 %v1691, 2147483648
      %v1879 = vxor.u32 %v1696, 2147483648
      %v1880 = vxor.u32 %v1701, 2147483648
      %v1881 = vxor.u32 %v1706, 2147483648
      %v1882 = vxor.u32 %v1711, 2147483648
      %v1883 = vxor.u32 %v1716, 2147483648
      %v1884 = vxor.u32 %v1721, 2147483648
      %v1885 = vxor.u32 %v1726, 2147483648
      %v1886 = vxor.u32 %v1731, 2147483648
      %v1887 = vxor.u32 %v1736, 2147483648
      %v1888 = vxor.u32 %v1741, 2147483648
      %v1889 = vxor.u32 %v1746, 2147483648
      %v1890 = vxor.u32 %v1751, 2147483648
      %v1891 = vxor.u32 %v1756, 2147483648
      %v1892 = vxor.u32 %v1761, 2147483648
      %v1893 = vxor.u32 %v1766, 2147483648
      %v1894 = vxor.u32 %v1771, 2147483648
      %v1895 = vxor.u32 %v1776, 2147483648
      %v1896 = vxor.u32 %v1781, 2147483648
      %v1897 = vxor.u32 %v1786, 2147483648
      %v1898 = vxor.u32 %v1791, 2147483648
      %v1899 = vxor.u32 %v1796, 2147483648
      %v1900 = vxor.u32 %v1801, 2147483648
      %v1901 = vxor.u32 %v1806, 2147483648
      %v1902 = vxor.u32 %v1811, 2147483648
      %v1903 = vxor.u32 %v1816, 2147483648
      %v1904 = vmul.f32 %v1862, 1.442695
      %v1905 = vpow.pop %v1904
      %v1906 = vmul.f32 %v1863, 1.442695
      %v1907 = vpow.pop %v1906
      %v1908 = vmul.f32 %v1864, 1.442695
      %v1909 = vpow.pop %v1908
      %v1910 = vmul.f32 %v1865, 1.442695
      %v1911 = vpow.pop %v1910
      %v1912 = vmul.f32 %v1866, 1.442695
      %v1913 = vpow.pop %v1912
      %v1914 = vmul.f32 %v1867, 1.442695
      %v1915 = vpow.pop %v1914
      %v1916 = vmul.f32 %v1868, 1.442695
      %v1917 = vpow.pop %v1916
      %v1918 = vmul.f32 %v1869, 1.442695
      %v1919 = vpow.pop %v1918
      %v1920 = vmul.f32 %v1870, 1.442695
      %v1921 = vpow.pop %v1920
      %v1922 = vmul.f32 %v1871, 1.442695
      %v1923 = vpow.pop %v1922
      %v1924 = vmul.f32 %v1872, 1.442695
      %v1925 = vpow.pop %v1924
      %v1926 = vmul.f32 %v1873, 1.442695
      %v1927 = vpow.pop %v1926
      %v1928 = vmul.f32 %v1874, 1.442695
      %v1929 = vpow.pop %v1928
      %v1930 = vmul.f32 %v1875, 1.442695
      %v1931 = vpow.pop %v1930
      %v1932 = vmul.f32 %v1876, 1.442695
      %v1933 = vpow.pop %v1932
      %v1934 = vmul.f32 %v1877, 1.442695
      %v1935 = vpow.pop %v1934
      %v1936 = vmul.f32 %v1878, 1.442695
      %v1937 = vpow.pop %v1936
      %v1938 = vmul.f32 %v1879, 1.442695
      %v1939 = vpow.pop %v1938
      %v1940 = vmul.f32 %v1880, 1.442695
      %v1941 = vpow.pop %v1940
      %v1942 = vmul.f32 %v1881, 1.442695
      %v1943 = vpow.pop %v1942
      %v1944 = vmul.f32 %v1882, 1.442695
      %v1945 = vpow.pop %v1944
      %v1946 = vmul.f32 %v1883, 1.442695
      %v1947 = vpow.pop %v1946
      %v1948 = vmul.f32 %v1884, 1.442695
      %v1949 = vpow.pop %v1948
      %v1950 = vmul.f32 %v1885, 1.442695
      %v1951 = vpow.pop %v1950
      %v1952 = vmul.f32 %v1886, 1.442695
      %v1953 = vpow.pop %v1952
      %v1954 = vmul.f32 %v1887, 1.442695
      %v1955 = vpow.pop %v1954
      %v1956 = vmul.f32 %v1888, 1.442695
      %v1957 = vpow.pop %v1956
      %v1958 = vmul.f32 %v1889, 1.442695
      %v1959 = vpow.pop %v1958
      %v1960 = vmul.f32 %v1890, 1.442695
      %v1961 = vpow.pop %v1960
      %v1962 = vmul.f32 %v1891, 1.442695
      %v1963 = vpow.pop %v1962
      %v1964 = vmul.f32 %v1892, 1.442695
      %v1965 = vpow.pop %v1964
      %v1966 = vmul.f32 %v1893, 1.442695
      %v1967 = vpow.pop %v1966
      %v1968 = vmul.f32 %v1894, 1.442695
      %v1969 = vpow.pop %v1968
      %v1970 = vmul.f32 %v1895, 1.442695
      %v1971 = vpow.pop %v1970
      %v1972 = vmul.f32 %v1896, 1.442695
      %v1973 = vpow.pop %v1972
      %v1974 = vmul.f32 %v1897, 1.442695
      %v1975 = vpow.pop %v1974
      %v1976 = vmul.f32 %v1898, 1.442695
      %v1977 = vpow.pop %v1976
      %v1978 = vmul.f32 %v1899, 1.442695
      %v1979 = vpow.pop %v1978
      %v1980 = vmul.f32 %v1900, 1.442695
      %v1981 = vpow.pop %v1980
      %v1982 = vmul.f32 %v1901, 1.442695
      %v1983 = vpow.pop %v1982
      %v1984 = vmul.f32 %v1902, 1.442695
      %v1985 = vpow.pop %v1984
      %v1986 = vmul.f32 %v1903, 1.442695
      %v1987 = vpow.pop %v1986
      %v1988 = vadd.f32 %v1905, 1.0
      %v1989 = vadd.f32 %v1907, 1.0
      %v1990 = vadd.f32 %v1909, 1.0
      %v1991 = vadd.f32 %v1911, 1.0
      %v1992 = vadd.f32 %v1913, 1.0
      %v1993 = vadd.f32 %v1915, 1.0
      %v1994 = vadd.f32 %v1917, 1.0
      %v1995 = vadd.f32 %v1919, 1.0
      %v1996 = vadd.f32 %v1921, 1.0
      %v1997 = vadd.f32 %v1923, 1.0
      %v1998 = vadd.f32 %v1925, 1.0
      %v1999 = vadd.f32 %v1927, 1.0
      %v2000 = vadd.f32 %v1929, 1.0
      %v2001 = vadd.f32 %v1931, 1.0
      %v2002 = vadd.f32 %v1933, 1.0
      %v2003 = vadd.f32 %v1935, 1.0
      %v2004 = vadd.f32 %v1937, 1.0
      %v2005 = vadd.f32 %v1939, 1.0
      %v2006 = vadd.f32 %v1941, 1.0
      %v2007 = vadd.f32 %v1943, 1.0
      %v2008 = vadd.f32 %v1945, 1.0
      %v2009 = vadd.f32 %v1947, 1.0
      %v2010 = vadd.f32 %v1949, 1.0
      %v2011 = vadd.f32 %v1951, 1.0
      %v2012 = vadd.f32 %v1953, 1.0
      %v2013 = vadd.f32 %v1955, 1.0
      %v2014 = vadd.f32 %v1957, 1.0
      %v2015 = vadd.f32 %v1959, 1.0
      %v2016 = vadd.f32 %v1961, 1.0
      %v2017 = vadd.f32 %v1963, 1.0
      %v2018 = vadd.f32 %v1965, 1.0
      %v2019 = vadd.f32 %v1967, 1.0
      %v2020 = vadd.f32 %v1969, 1.0
      %v2021 = vadd.f32 %v1971, 1.0
      %v2022 = vadd.f32 %v1973, 1.0
      %v2023 = vadd.f32 %v1975, 1.0
      %v2024 = vadd.f32 %v1977, 1.0
      %v2025 = vadd.f32 %v1979, 1.0
      %v2026 = vadd.f32 %v1981, 1.0
      %v2027 = vadd.f32 %v1983, 1.0
      %v2028 = vadd.f32 %v1985, 1.0
      %v2029 = vadd.f32 %v1987, 1.0
      %v2030 = vrcp.pop %v1988
      %v2031 = vmul.f32 1.0, %v2030
      %v2032 = vrcp.pop %v1989
      %v2033 = vmul.f32 1.0, %v2032
      %v2034 = vrcp.pop %v1990
      %v2035 = vmul.f32 1.0, %v2034
      %v2036 = vrcp.pop %v1991
      %v2037 = vmul.f32 1.0, %v2036
      %v2038 = vrcp.pop %v1992
      %v2039 = vmul.f32 1.0, %v2038
      %v2040 = vrcp.pop %v1993
      %v2041 = vmul.f32 1.0, %v2040
      %v2042 = vrcp.pop %v1994
      %v2043 = vmul.f32 1.0, %v2042
      %v2044 = vrcp.pop %v1995
      %v2045 = vmul.f32 1.0, %v2044
      %v2046 = vrcp.pop %v1996
      %v2047 = vmul.f32 1.0, %v2046
      %v2048 = vrcp.pop %v1997
      %v2049 = vmul.f32 1.0, %v2048
      %v2050 = vrcp.pop %v1998
      %v2051 = vmul.f32 1.0, %v2050
      %v2052 = vrcp.pop %v1999
      %v2053 = vmul.f32 1.0, %v2052
      %v2054 = vrcp.pop %v2000
      %v2055 = vmul.f32 1.0, %v2054
      %v2056 = vrcp.pop %v2001
      %v2057 = vmul.f32 1.0, %v2056
      %v2058 = vrcp.pop %v2002
      %v2059 = vmul.f32 1.0, %v2058
      %v2060 = vrcp.pop %v2003
      %v2061 = vmul.f32 1.0, %v2060
      %v2062 = vrcp.pop %v2004
      %v2063 = vmul.f32 1.0, %v2062
      %v2064 = vrcp.pop %v2005
      %v2065 = vmul.f32 1.0, %v2064
      %v2066 = vrcp.pop %v2006
      %v2067 = vmul.f32 1.0, %v2066
      %v2068 = vrcp.pop %v2007
      %v2069 = vmul.f32 1.0, %v2068
      %v2070 = vrcp.pop %v2008
      %v2071 = vmul.f32 1.0, %v2070
      %v2072 = vrcp.pop %v2009
      %v2073 = vmul.f32 1.0, %v2072
      %v2074 = vrcp.pop %v2010
      %v2075 = vmul.f32 1.0, %v2074
      %v2076 = vrcp.pop %v2011
      %v2077 = vmul.f32 1.0, %v2076
      %v2078 = vrcp.pop %v2012
      %v2079 = vmul.f32 1.0, %v2078
      %v2080 = vrcp.pop %v2013
      %v2081 = vmul.f32 1.0, %v2080
      %v2082 = vrcp.pop %v2014
      %v2083 = vmul.f32 1.0, %v2082
      %v2084 = vrcp.pop %v2015
      %v2085 = vmul.f32 1.0, %v2084
      %v2086 = vrcp.pop %v2016
      %v2087 = vmul.f32 1.0, %v2086
      %v2088 = vrcp.pop %v2017
      %v2089 = vmul.f32 1.0, %v2088
      %v2090 = vrcp.pop %v2018
      %v2091 = vmul.f32 1.0, %v2090
      %v2092 = vrcp.pop %v2019
      %v2093 = vmul.f32 1.0, %v2092
      %v2094 = vrcp.pop %v2020
      %v2095 = vmul.f32 1.0, %v2094
      %v2096 = vrcp.pop %v2021
      %v2097 = vmul.f32 1.0, %v2096
      %v2098 = vrcp.pop %v2022
      %v2099 = vmul.f32 1.0, %v2098
      %v2100 = vrcp.pop %v2023
      %v2101 = vmul.f32 1.0, %v2100
      %v2102 = vrcp.pop %v2024
      %v2103 = vmul.f32 1.0, %v2102
      %v2104 = vrcp.pop %v2025
      %v2105 = vmul.f32 1.0, %v2104
      %v2106 = vrcp.pop %v2026
      %v2107 = vmul.f32 1.0, %v2106
      %v2108 = vrcp.pop %v2027
      %v2109 = vmul.f32 1.0, %v2108
      %v2110 = vrcp.pop %v2028
      %v2111 = vmul.f32 1.0, %v2110
      %v2112 = vrcp.pop %v2029
      %v2113 = vmul.f32 1.0, %v2112
      %vm2114 = vcmask 293920
      %v2115 = vsel %vm2114, %v1611, -inf
      %2116 = vmax.xlane.f32.xlu0 %v2115
      %v2117 = vpop.xlane.xlu0 %2116
      %v2118 = vsel %vm2114, %v1616, -inf
      %2119 = vmax.xlane.f32.xlu0 %v2118
      %v2120 = vpop.xlane.xlu0 %2119
      %v2121 = vsel %vm2114, %v1621, -inf
      %2122 = vmax.xlane.f32.xlu0 %v2121
      %v2123 = vpop.xlane.xlu0 %2122
      %v2124 = vsel %vm2114, %v1626, -inf
      %2125 = vmax.xlane.f32.xlu0 %v2124
      %v2126 = vpop.xlane.xlu0 %2125
      %v2127 = vsel %vm2114, %v1631, -inf
      %2128 = vmax.xlane.f32.xlu0 %v2127
      %v2129 = vpop.xlane.xlu0 %2128
      %v2130 = vsel %vm2114, %v1636, -inf
      %2131 = vmax.xlane.f32.xlu0 %v2130
      %v2132 = vpop.xlane.xlu0 %2131
      %v2133 = vsel %vm2114, %v1641, -inf
      %2134 = vmax.xlane.f32.xlu0 %v2133
      %v2135 = vpop.xlane.xlu0 %2134
      %v2136 = vsel %vm2114, %v1646, -inf
      %2137 = vmax.xlane.f32.xlu0 %v2136
      %v2138 = vpop.xlane.xlu0 %2137
      %v2139 = vsel %vm2114, %v1651, -inf
      %2140 = vmax.xlane.f32.xlu0 %v2139
      %v2141 = vpop.xlane.xlu0 %2140
      %v2142 = vsel %vm2114, %v1656, -inf
      %2143 = vmax.xlane.f32.xlu0 %v2142
      %v2144 = vpop.xlane.xlu0 %2143
      %v2145 = vsel %vm2114, %v1661, -inf
      %2146 = vmax.xlane.f32.xlu0 %v2145
      %v2147 = vpop.xlane.xlu0 %2146
      %v2148 = vsel %vm2114, %v1666, -inf
      %2149 = vmax.xlane.f32.xlu0 %v2148
      %v2150 = vpop.xlane.xlu0 %2149
      %v2151 = vsel %vm2114, %v1671, -inf
      %2152 = vmax.xlane.f32.xlu0 %v2151
      %v2153 = vpop.xlane.xlu0 %2152
      %v2154 = vsel %vm2114, %v1676, -inf
      %2155 = vmax.xlane.f32.xlu0 %v2154
      %v2156 = vpop.xlane.xlu0 %2155
      %v2157 = vsel %vm2114, %v1681, -inf
      %2158 = vmax.xlane.f32.xlu0 %v2157
      %v2159 = vpop.xlane.xlu0 %2158
      %v2160 = vsel %vm2114, %v1686, -inf
      %2161 = vmax.xlane.f32.xlu0 %v2160
      %v2162 = vpop.xlane.xlu0 %2161
      %v2163 = vsel %vm2114, %v1691, -inf
      %2164 = vmax.xlane.f32.xlu0 %v2163
      %v2165 = vpop.xlane.xlu0 %2164
      %v2166 = vsel %vm2114, %v1696, -inf
      %2167 = vmax.xlane.f32.xlu0 %v2166
      %v2168 = vpop.xlane.xlu0 %2167
      %v2169 = vsel %vm2114, %v1701, -inf
      %2170 = vmax.xlane.f32.xlu0 %v2169
      %v2171 = vpop.xlane.xlu0 %2170
      %v2172 = vsel %vm2114, %v1706, -inf
      %2173 = vmax.xlane.f32.xlu0 %v2172
      %v2174 = vpop.xlane.xlu0 %2173
      %v2175 = vsel %vm2114, %v1711, -inf
      %2176 = vmax.xlane.f32.xlu0 %v2175
      %v2177 = vpop.xlane.xlu0 %2176
      %v2178 = vsel %vm2114, %v1716, -inf
      %2179 = vmax.xlane.f32.xlu0 %v2178
      %v2180 = vpop.xlane.xlu0 %2179
      %v2181 = vsel %vm2114, %v1721, -inf
      %2182 = vmax.xlane.f32.xlu0 %v2181
      %v2183 = vpop.xlane.xlu0 %2182
      %v2184 = vsel %vm2114, %v1726, -inf
      %2185 = vmax.xlane.f32.xlu0 %v2184
      %v2186 = vpop.xlane.xlu0 %2185
      %v2187 = vsel %vm2114, %v1731, -inf
      %2188 = vmax.xlane.f32.xlu0 %v2187
      %v2189 = vpop.xlane.xlu0 %2188
      %v2190 = vsel %vm2114, %v1736, -inf
      %2191 = vmax.xlane.f32.xlu0 %v2190
      %v2192 = vpop.xlane.xlu0 %2191
      %v2193 = vsel %vm2114, %v1741, -inf
      %2194 = vmax.xlane.f32.xlu0 %v2193
      %v2195 = vpop.xlane.xlu0 %2194
      %v2196 = vsel %vm2114, %v1746, -inf
      %2197 = vmax.xlane.f32.xlu0 %v2196
      %v2198 = vpop.xlane.xlu0 %2197
      %v2199 = vsel %vm2114, %v1751, -inf
      %2200 = vmax.xlane.f32.xlu0 %v2199
      %v2201 = vpop.xlane.xlu0 %2200
      %v2202 = vsel %vm2114, %v1756, -inf
      %2203 = vmax.xlane.f32.xlu0 %v2202
      %v2204 = vpop.xlane.xlu0 %2203
      %v2205 = vsel %vm2114, %v1761, -inf
      %2206 = vmax.xlane.f32.xlu0 %v2205
      %v2207 = vpop.xlane.xlu0 %2206
      %v2208 = vsel %vm2114, %v1766, -inf
      %2209 = vmax.xlane.f32.xlu0 %v2208
      %v2210 = vpop.xlane.xlu0 %2209
      %v2211 = vsel %vm2114, %v1771, -inf
      %2212 = vmax.xlane.f32.xlu0 %v2211
      %v2213 = vpop.xlane.xlu0 %2212
      %v2214 = vsel %vm2114, %v1776, -inf
      %2215 = vmax.xlane.f32.xlu0 %v2214
      %v2216 = vpop.xlane.xlu0 %2215
      %v2217 = vsel %vm2114, %v1781, -inf
      %2218 = vmax.xlane.f32.xlu0 %v2217
      %v2219 = vpop.xlane.xlu0 %2218
      %v2220 = vsel %vm2114, %v1786, -inf
      %2221 = vmax.xlane.f32.xlu0 %v2220
      %v2222 = vpop.xlane.xlu0 %2221
      %v2223 = vsel %vm2114, %v1791, -inf
      %2224 = vmax.xlane.f32.xlu0 %v2223
      %v2225 = vpop.xlane.xlu0 %2224
      %v2226 = vsel %vm2114, %v1796, -inf
      %2227 = vmax.xlane.f32.xlu0 %v2226
      %v2228 = vpop.xlane.xlu0 %2227
      %v2229 = vsel %vm2114, %v1801, -inf
      %2230 = vmax.xlane.f32.xlu0 %v2229
      %v2231 = vpop.xlane.xlu0 %2230
      %v2232 = vsel %vm2114, %v1806, -inf
      %2233 = vmax.xlane.f32.xlu0 %v2232
      %v2234 = vpop.xlane.xlu0 %2233
      %v2235 = vsel %vm2114, %v1811, -inf
      %2236 = vmax.xlane.f32.xlu0 %v2235
      %v2237 = vpop.xlane.xlu0 %2236
      %v2238 = vsel %vm2114, %v1816, -inf
      %2239 = vmax.xlane.f32.xlu0 %v2238
      %v2240 = vpop.xlane.xlu0 %2239
      %v2241 = vsub.f32 %v1611, %v2117
      %v2242 = vsub.f32 %v1616, %v2120
      %v2243 = vsub.f32 %v1621, %v2123
      %v2244 = vsub.f32 %v1626, %v2126
      %v2245 = vsub.f32 %v1631, %v2129
      %v2246 = vsub.f32 %v1636, %v2132
      %v2247 = vsub.f32 %v1641, %v2135
      %v2248 = vsub.f32 %v1646, %v2138
      %v2249 = vsub.f32 %v1651, %v2141
      %v2250 = vsub.f32 %v1656, %v2144
      %v2251 = vsub.f32 %v1661, %v2147
      %v2252 = vsub.f32 %v1666, %v2150
      %v2253 = vsub.f32 %v1671, %v2153
      %v2254 = vsub.f32 %v1676, %v2156
      %v2255 = vsub.f32 %v1681, %v2159
      %v2256 = vsub.f32 %v1686, %v2162
      %v2257 = vsub.f32 %v1691, %v2165
      %v2258 = vsub.f32 %v1696, %v2168
      %v2259 = vsub.f32 %v1701, %v2171
      %v2260 = vsub.f32 %v1706, %v2174
      %v2261 = vsub.f32 %v1711, %v2177
      %v2262 = vsub.f32 %v1716, %v2180
      %v2263 = vsub.f32 %v1721, %v2183
      %v2264 = vsub.f32 %v1726, %v2186
      %v2265 = vsub.f32 %v1731, %v2189
      %v2266 = vsub.f32 %v1736, %v2192
      %v2267 = vsub.f32 %v1741, %v2195
      %v2268 = vsub.f32 %v1746, %v2198
      %v2269 = vsub.f32 %v1751, %v2201
      %v2270 = vsub.f32 %v1756, %v2204
      %v2271 = vsub.f32 %v1761, %v2207
      %v2272 = vsub.f32 %v1766, %v2210
      %v2273 = vsub.f32 %v1771, %v2213
      %v2274 = vsub.f32 %v1776, %v2216
      %v2275 = vsub.f32 %v1781, %v2219
      %v2276 = vsub.f32 %v1786, %v2222
      %v2277 = vsub.f32 %v1791, %v2225
      %v2278 = vsub.f32 %v1796, %v2228
      %v2279 = vsub.f32 %v1801, %v2231
      %v2280 = vsub.f32 %v1806, %v2234
      %v2281 = vsub.f32 %v1811, %v2237
      %v2282 = vsub.f32 %v1816, %v2240
      %v2283 = vmul.f32 %v2241, 1.442695
      %v2284 = vpow.pop %v2283
      %v2285 = vmul.f32 %v2242, 1.442695
      %v2286 = vpow.pop %v2285
      %v2287 = vmul.f32 %v2243, 1.442695
      %v2288 = vpow.pop %v2287
      %v2289 = vmul.f32 %v2244, 1.442695
      %v2290 = vpow.pop %v2289
      %v2291 = vmul.f32 %v2245, 1.442695
      %v2292 = vpow.pop %v2291
      %v2293 = vmul.f32 %v2246, 1.442695
      %v2294 = vpow.pop %v2293
      %v2295 = vmul.f32 %v2247, 1.442695
      %v2296 = vpow.pop %v2295
      %v2297 = vmul.f32 %v2248, 1.442695
      %v2298 = vpow.pop %v2297
      %v2299 = vmul.f32 %v2249, 1.442695
      %v2300 = vpow.pop %v2299
      %v2301 = vmul.f32 %v2250, 1.442695
      %v2302 = vpow.pop %v2301
      %v2303 = vmul.f32 %v2251, 1.442695
      %v2304 = vpow.pop %v2303
      %v2305 = vmul.f32 %v2252, 1.442695
      %v2306 = vpow.pop %v2305
      %v2307 = vmul.f32 %v2253, 1.442695
      %v2308 = vpow.pop %v2307
      %v2309 = vmul.f32 %v2254, 1.442695
      %v2310 = vpow.pop %v2309
      %v2311 = vmul.f32 %v2255, 1.442695
      %v2312 = vpow.pop %v2311
      %v2313 = vmul.f32 %v2256, 1.442695
      %v2314 = vpow.pop %v2313
      %v2315 = vmul.f32 %v2257, 1.442695
      %v2316 = vpow.pop %v2315
      %v2317 = vmul.f32 %v2258, 1.442695
      %v2318 = vpow.pop %v2317
      %v2319 = vmul.f32 %v2259, 1.442695
      %v2320 = vpow.pop %v2319
      %v2321 = vmul.f32 %v2260, 1.442695
      %v2322 = vpow.pop %v2321
      %v2323 = vmul.f32 %v2261, 1.442695
      %v2324 = vpow.pop %v2323
      %v2325 = vmul.f32 %v2262, 1.442695
      %v2326 = vpow.pop %v2325
      %v2327 = vmul.f32 %v2263, 1.442695
      %v2328 = vpow.pop %v2327
      %v2329 = vmul.f32 %v2264, 1.442695
      %v2330 = vpow.pop %v2329
      %v2331 = vmul.f32 %v2265, 1.442695
      %v2332 = vpow.pop %v2331
      %v2333 = vmul.f32 %v2266, 1.442695
      %v2334 = vpow.pop %v2333
      %v2335 = vmul.f32 %v2267, 1.442695
      %v2336 = vpow.pop %v2335
      %v2337 = vmul.f32 %v2268, 1.442695
      %v2338 = vpow.pop %v2337
      %v2339 = vmul.f32 %v2269, 1.442695
      %v2340 = vpow.pop %v2339
      %v2341 = vmul.f32 %v2270, 1.442695
      %v2342 = vpow.pop %v2341
      %v2343 = vmul.f32 %v2271, 1.442695
      %v2344 = vpow.pop %v2343
      %v2345 = vmul.f32 %v2272, 1.442695
      %v2346 = vpow.pop %v2345
      %v2347 = vmul.f32 %v2273, 1.442695
      %v2348 = vpow.pop %v2347
      %v2349 = vmul.f32 %v2274, 1.442695
      %v2350 = vpow.pop %v2349
      %v2351 = vmul.f32 %v2275, 1.442695
      %v2352 = vpow.pop %v2351
      %v2353 = vmul.f32 %v2276, 1.442695
      %v2354 = vpow.pop %v2353
      %v2355 = vmul.f32 %v2277, 1.442695
      %v2356 = vpow.pop %v2355
      %v2357 = vmul.f32 %v2278, 1.442695
      %v2358 = vpow.pop %v2357
      %v2359 = vmul.f32 %v2279, 1.442695
      %v2360 = vpow.pop %v2359
      %v2361 = vmul.f32 %v2280, 1.442695
      %v2362 = vpow.pop %v2361
      %v2363 = vmul.f32 %v2281, 1.442695
      %v2364 = vpow.pop %v2363
      %v2365 = vmul.f32 %v2282, 1.442695
      %v2366 = vpow.pop %v2365
      %v2367 = vld [vmem:[%s5] sm:$0xff]
      %v2368 = vld [vmem:[%s5 + $0x8] sm:$0xff]
      %v2369 = vld [vmem:[%s5 + $0x10] sm:$0xff]
      %v2370 = vld [vmem:[%s5 + $0x18] sm:$0xff]
      %2413 = vrot.lane.b32.xlu0 %v2284, 124
      %v2414 = vpop.permute.xlu0 %2413
      %2415 = vrot.lane.b32.xlu0 %v2286, 124
      %v2416 = vpop.permute.xlu0 %2415
      %2417 = vrot.lane.b32.xlu0 %v2288, 124
      %v2418 = vpop.permute.xlu0 %2417
      %2419 = vrot.lane.b32.xlu0 %v2290, 124
      %v2420 = vpop.permute.xlu0 %2419
      %2421 = vrot.lane.b32.xlu0 %v2292, 124
      %v2422 = vpop.permute.xlu0 %2421
      %2423 = vrot.lane.b32.xlu0 %v2294, 124
      %v2424 = vpop.permute.xlu0 %2423
      %2425 = vrot.lane.b32.xlu0 %v2296, 124
      %v2426 = vpop.permute.xlu0 %2425
      %2427 = vrot.lane.b32.xlu0 %v2298, 124
      %v2428 = vpop.permute.xlu0 %2427
      %2429 = vrot.lane.b32.xlu0 %v2300, 124
      %v2430 = vpop.permute.xlu0 %2429
      %2431 = vrot.lane.b32.xlu0 %v2302, 124
      %v2432 = vpop.permute.xlu0 %2431
      %2433 = vrot.lane.b32.xlu0 %v2304, 124
      %v2434 = vpop.permute.xlu0 %2433
      %2435 = vrot.lane.b32.xlu0 %v2306, 124
      %v2436 = vpop.permute.xlu0 %2435
      %2437 = vrot.lane.b32.xlu0 %v2308, 124
      %v2438 = vpop.permute.xlu0 %2437
      %2439 = vrot.lane.b32.xlu0 %v2310, 124
      %v2440 = vpop.permute.xlu0 %2439
      %2441 = vrot.lane.b32.xlu0 %v2312, 124
      %v2442 = vpop.permute.xlu0 %2441
      %2443 = vrot.lane.b32.xlu0 %v2314, 124
      %v2444 = vpop.permute.xlu0 %2443
      %2445 = vrot.lane.b32.xlu0 %v2316, 124
      %v2446 = vpop.permute.xlu0 %2445
      %2447 = vrot.lane.b32.xlu0 %v2318, 124
      %v2448 = vpop.permute.xlu0 %2447
      %2449 = vrot.lane.b32.xlu0 %v2320, 124
      %v2450 = vpop.permute.xlu0 %2449
      %2451 = vrot.lane.b32.xlu0 %v2322, 124
      %v2452 = vpop.permute.xlu0 %2451
      %2453 = vrot.lane.b32.xlu0 %v2324, 124
      %v2454 = vpop.permute.xlu0 %2453
      %2455 = vrot.lane.b32.xlu0 %v2326, 124
      %v2456 = vpop.permute.xlu0 %2455
      %2457 = vrot.lane.b32.xlu0 %v2328, 124
      %v2458 = vpop.permute.xlu0 %2457
      %2459 = vrot.lane.b32.xlu0 %v2330, 124
      %v2460 = vpop.permute.xlu0 %2459
      %2461 = vrot.lane.b32.xlu0 %v2332, 124
      %v2462 = vpop.permute.xlu0 %2461
      %2463 = vrot.lane.b32.xlu0 %v2334, 124
      %v2464 = vpop.permute.xlu0 %2463
      %2465 = vrot.lane.b32.xlu0 %v2336, 124
      %v2466 = vpop.permute.xlu0 %2465
      %2467 = vrot.lane.b32.xlu0 %v2338, 124
      %v2468 = vpop.permute.xlu0 %2467
      %2469 = vrot.lane.b32.xlu0 %v2340, 124
      %v2470 = vpop.permute.xlu0 %2469
      %2471 = vrot.lane.b32.xlu0 %v2342, 124
      %v2472 = vpop.permute.xlu0 %2471
      %2473 = vrot.lane.b32.xlu0 %v2344, 124
      %v2474 = vpop.permute.xlu0 %2473
      %2475 = vrot.lane.b32.xlu0 %v2346, 124
      %v2476 = vpop.permute.xlu0 %2475
      %2477 = vrot.lane.b32.xlu0 %v2348, 124
      %v2478 = vpop.permute.xlu0 %2477
      %2479 = vrot.lane.b32.xlu0 %v2350, 124
      %v2480 = vpop.permute.xlu0 %2479
      %2481 = vrot.lane.b32.xlu0 %v2352, 124
      %v2482 = vpop.permute.xlu0 %2481
      %2483 = vrot.lane.b32.xlu0 %v2354, 124
      %v2484 = vpop.permute.xlu0 %2483
      %2485 = vrot.lane.b32.xlu0 %v2356, 124
      %v2486 = vpop.permute.xlu0 %2485
      %2487 = vrot.lane.b32.xlu0 %v2358, 124
      %v2488 = vpop.permute.xlu0 %2487
      %2489 = vrot.lane.b32.xlu0 %v2360, 124
      %v2490 = vpop.permute.xlu0 %2489
      %2491 = vrot.lane.b32.xlu0 %v2362, 124
      %v2492 = vpop.permute.xlu0 %2491
      %2493 = vrot.lane.b32.xlu0 %v2364, 124
      %v2494 = vpop.permute.xlu0 %2493
      %2495 = vrot.lane.b32.xlu0 %v2366, 124
      %v2496 = vpop.permute.xlu0 %2495
      %v2497 = vsel %vm899, %v2414, 0
      %v2499 = vsel %vm899, %v2416, 0
      %v2501 = vsel %vm899, %v2418, 0
      %v2503 = vsel %vm899, %v2420, 0
      %v2505 = vsel %vm899, %v2422, 0
      %v2507 = vsel %vm899, %v2424, 0
      %v2509 = vsel %vm899, %v2426, 0
      %v2511 = vsel %vm899, %v2428, 0
      %v2513 = vsel %vm899, %v2430, 0
      %v2515 = vsel %vm899, %v2432, 0
      %v2517 = vsel %vm899, %v2434, 0
      %v2519 = vsel %vm899, %v2436, 0
      %v2521 = vsel %vm899, %v2438, 0
      %v2523 = vsel %vm899, %v2440, 0
      %v2525 = vsel %vm899, %v2442, 0
      %v2527 = vsel %vm899, %v2444, 0
      %v2529 = vsel %vm899, %v2446, 0
      %v2531 = vsel %vm899, %v2448, 0
      %v2533 = vsel %vm899, %v2450, 0
      %v2535 = vsel %vm899, %v2452, 0
      %v2537 = vsel %vm899, %v2454, 0
      %v2539 = vsel %vm899, %v2456, 0
      %v2541 = vsel %vm899, %v2458, 0
      %v2543 = vsel %vm899, %v2460, 0
      %v2545 = vsel %vm899, %v2462, 0
      %v2547 = vsel %vm899, %v2464, 0
      %v2549 = vsel %vm899, %v2466, 0
      %v2551 = vsel %vm899, %v2468, 0
      %v2553 = vsel %vm899, %v2470, 0
      %v2555 = vsel %vm899, %v2472, 0
      %v2557 = vsel %vm899, %v2474, 0
      %v2559 = vsel %vm899, %v2476, 0
      %v2561 = vsel %vm899, %v2478, 0
      %v2563 = vsel %vm899, %v2480, 0
      %v2565 = vsel %vm899, %v2482, 0
      %v2567 = vsel %vm899, %v2484, 0
      %v2569 = vsel %vm899, %v2486, 0
      %v2571 = vsel %vm899, %v2488, 0
      %v2573 = vsel %vm899, %v2490, 0
      %v2575 = vsel %vm899, %v2492, 0
      %v2577 = vsel %vm899, %v2494, 0
      %v2579 = vsel %vm899, %v2496, 0
      %2581 = vmatprep.subr.mxu0 0.0
      %2582 = vmatpush1.msra.mxu0 0.0
      %2583 = vmatprep.subr.mxu0 0.0
      %2584 = vmatpush1.msra.mxu0 0.0
      %2585 = vmatprep.subr.mxu0 0.0
      %2586 = vmatpush1.msra.mxu0 0.0
      %2587 = vmatprep.subr.mxu0 0.0
      %2588 = vmatpush1.msra.mxu0 0.0
      %2589 = vmatprep.subr.mxu0 0.0
      %2590 = vmatpush1.msra.mxu0 0.0
      %2591 = vmatprep.subr.mxu0 0.0
      %2592 = vmatpush1.msra.mxu0 0.0
      %2593 = vmatprep.subr.mxu0 0.0
      %2594 = vmatpush1.msra.mxu0 0.0
      %2595 = vmatprep.subr.mxu0 0.0
      %2596 = vmatpush1.msra.mxu0 0.0
      %2597 = vmatprep.subr.mxu0 0.0
      %2598 = vmatpush1.msra.mxu0 0.0
      %2599 = vmatprep.subr.mxu0 0.0
      %2600 = vmatpush1.msra.mxu0 0.0
      %2601 = vmatprep.subr.mxu0 0.0
      %2602 = vmatpush1.msra.mxu0 0.0
      %2603 = vmatprep.subr.mxu0 0.0
      %2604 = vmatpush1.msra.mxu0 0.0
      %2605 = vmatprep.subr.mxu0 0.0
      %2606 = vmatpush1.msra.mxu0 %v2370
      %2607 = vmatprep.subr.mxu0 0.0
      %2608 = vmatpush1.msra.mxu0 %v2369
      %2609 = vmatprep.subr.mxu0 0.0
      %2610 = vmatpush1.msra.mxu0 %v2368
      %2611 = vmatprep.subr.mxu0 0.0
      %2612 = vmatpush1.msra.mxu0 %v2367
      %2613 = vmatprep.subr.mxu0 0.0
      %2614 = vmatpush2.msra.mxu0 0.0
      %2615 = vmatprep.subr.mxu0 0.0
      %2616 = vmatpush2.msra.mxu0 0.0
      %2617 = vmatprep.subr.mxu0 0.0
      %2618 = vmatpush2.msra.mxu0 0.0
      %2619 = vmatprep.subr.mxu0 0.0
      %2620 = vmatpush2.msra.mxu0 0.0
      %2621 = vmatprep.subr.mxu0 0.0
      %2622 = vmatpush2.msra.mxu0 0.0
      %2623 = vmatprep.subr.mxu0 0.0
      %2624 = vmatpush2.msra.mxu0 0.0
      %2625 = vmatprep.subr.mxu0 0.0
      %2626 = vmatpush2.msra.mxu0 0.0
      %2627 = vmatprep.subr.mxu0 0.0
      %2628 = vmatpush2.msra.mxu0 0.0
      %2629 = vmatprep.subr.mxu0 0.0
      %2630 = vmatpush2.msra.mxu0 0.0
      %2631 = vmatprep.subr.mxu0 0.0
      %2632 = vmatpush2.msra.mxu0 0.0
      %2633 = vmatprep.subr.mxu0 0.0
      %2634 = vmatpush2.msra.mxu0 0.0
      %2635 = vmatprep.subr.mxu0 0.0
      %2636 = vmatpush2.msra.mxu0 0.0
      %2637 = vmatprep.subr.mxu0 0.0
      %2638 = vmatpush2.msra.mxu0 0.0
      %2639 = vmatprep.subr.mxu0 0.0
      %2640 = vmatpush2.msra.mxu0 0.0
      %2641 = vmatprep.subr.mxu0 0.0
      %2642 = vmatpush2.msra.mxu0 0.0
      %2643 = vmatprep.subr.mxu0 0.0
      %2644 = vmatpush2.msra.mxu0 0.0
      %2645 = vmatprep.mubr.f32.mxu0 0.0
      %2646 = vmatmul.mubr.f32.gmra.mxu0 %v2497
      %v2647 = vpop.f32.mrf.mxu0
      %v2648 = vadd.f32 0.0, %v2647
      %v2649 = vpop.f32.mrf.mxu0
      %2650 = vmatprep.mubr.f32.mxu0 0.0
      %2651 = vmatmul.mubr.f32.gmra.mxu0 %v2499
      %v2652 = vpop.f32.mrf.mxu0
      %v2653 = vadd.f32 0.0, %v2652
      %v2654 = vpop.f32.mrf.mxu0
      %2655 = vmatprep.mubr.f32.mxu0 0.0
      %2656 = vmatmul.mubr.f32.gmra.mxu0 %v2501
      %v2657 = vpop.f32.mrf.mxu0
      %v2658 = vadd.f32 0.0, %v2657
      %v2659 = vpop.f32.mrf.mxu0
      %2660 = vmatprep.mubr.f32.mxu0 0.0
      %2661 = vmatmul.mubr.f32.gmra.mxu0 %v2503
      %v2662 = vpop.f32.mrf.mxu0
      %v2663 = vadd.f32 0.0, %v2662
      %v2664 = vpop.f32.mrf.mxu0
      %2665 = vmatprep.mubr.f32.mxu0 0.0
      %2666 = vmatmul.mubr.f32.gmra.mxu0 %v2505
      %v2667 = vpop.f32.mrf.mxu0
      %v2668 = vadd.f32 0.0, %v2667
      %v2669 = vpop.f32.mrf.mxu0
      %2670 = vmatprep.mubr.f32.mxu0 0.0
      %2671 = vmatmul.mubr.f32.gmra.mxu0 %v2507
      %v2672 = vpop.f32.mrf.mxu0
      %v2673 = vadd.f32 0.0, %v2672
      %v2674 = vpop.f32.mrf.mxu0
      %2675 = vmatprep.mubr.f32.mxu0 0.0
      %2676 = vmatmul.mubr.f32.gmra.mxu0 %v2509
      %v2677 = vpop.f32.mrf.mxu0
      %v2678 = vadd.f32 0.0, %v2677
      %v2679 = vpop.f32.mrf.mxu0
      %2680 = vmatprep.mubr.f32.mxu0 0.0
      %2681 = vmatmul.mubr.f32.gmra.mxu0 %v2511
      %v2682 = vpop.f32.mrf.mxu0
      %v2683 = vadd.f32 0.0, %v2682
      %v2684 = vpop.f32.mrf.mxu0
      %2685 = vmatprep.mubr.f32.mxu0 0.0
      %2686 = vmatmul.mubr.f32.gmra.mxu0 %v2513
      %v2687 = vpop.f32.mrf.mxu0
      %v2688 = vadd.f32 0.0, %v2687
      %v2689 = vpop.f32.mrf.mxu0
      %2690 = vmatprep.mubr.f32.mxu0 0.0
      %2691 = vmatmul.mubr.f32.gmra.mxu0 %v2515
      %v2692 = vpop.f32.mrf.mxu0
      %v2693 = vadd.f32 0.0, %v2692
      %v2694 = vpop.f32.mrf.mxu0
      %2695 = vmatprep.mubr.f32.mxu0 0.0
      %2696 = vmatmul.mubr.f32.gmra.mxu0 %v2517
      %v2697 = vpop.f32.mrf.mxu0
      %v2698 = vadd.f32 0.0, %v2697
      %v2699 = vpop.f32.mrf.mxu0
      %2700 = vmatprep.mubr.f32.mxu0 0.0
      %2701 = vmatmul.mubr.f32.gmra.mxu0 %v2519
      %v2702 = vpop.f32.mrf.mxu0
      %v2703 = vadd.f32 0.0, %v2702
      %v2704 = vpop.f32.mrf.mxu0
      %2705 = vmatprep.mubr.f32.mxu0 0.0
      %2706 = vmatmul.mubr.f32.gmra.mxu0 %v2521
      %v2707 = vpop.f32.mrf.mxu0
      %v2708 = vadd.f32 0.0, %v2707
      %v2709 = vpop.f32.mrf.mxu0
      %2710 = vmatprep.mubr.f32.mxu0 0.0
      %2711 = vmatmul.mubr.f32.gmra.mxu0 %v2523
      %v2712 = vpop.f32.mrf.mxu0
      %v2713 = vadd.f32 0.0, %v2712
      %v2714 = vpop.f32.mrf.mxu0
      %2715 = vmatprep.mubr.f32.mxu0 0.0
      %2716 = vmatmul.mubr.f32.gmra.mxu0 %v2525
      %v2717 = vpop.f32.mrf.mxu0
      %v2718 = vadd.f32 0.0, %v2717
      %v2719 = vpop.f32.mrf.mxu0
      %2720 = vmatprep.mubr.f32.mxu0 0.0
      %2721 = vmatmul.mubr.f32.gmra.mxu0 %v2527
      %v2722 = vpop.f32.mrf.mxu0
      %v2723 = vadd.f32 0.0, %v2722
      %v2724 = vpop.f32.mrf.mxu0
      %2725 = vmatprep.mubr.f32.mxu0 0.0
      %2726 = vmatmul.mubr.f32.gmra.mxu0 %v2529
      %v2727 = vpop.f32.mrf.mxu0
      %v2728 = vadd.f32 0.0, %v2727
      %v2729 = vpop.f32.mrf.mxu0
      %2730 = vmatprep.mubr.f32.mxu0 0.0
      %2731 = vmatmul.mubr.f32.gmra.mxu0 %v2531
      %v2732 = vpop.f32.mrf.mxu0
      %v2733 = vadd.f32 0.0, %v2732
      %v2734 = vpop.f32.mrf.mxu0
      %2735 = vmatprep.mubr.f32.mxu0 0.0
      %2736 = vmatmul.mubr.f32.gmra.mxu0 %v2533
      %v2737 = vpop.f32.mrf.mxu0
      %v2738 = vadd.f32 0.0, %v2737
      %v2739 = vpop.f32.mrf.mxu0
      %2740 = vmatprep.mubr.f32.mxu0 0.0
      %2741 = vmatmul.mubr.f32.gmra.mxu0 %v2535
      %v2742 = vpop.f32.mrf.mxu0
      %v2743 = vadd.f32 0.0, %v2742
      %v2744 = vpop.f32.mrf.mxu0
      %2745 = vmatprep.mubr.f32.mxu0 0.0
      %2746 = vmatmul.mubr.f32.gmra.mxu0 %v2537
      %v2747 = vpop.f32.mrf.mxu0
      %v2748 = vadd.f32 0.0, %v2747
      %v2749 = vpop.f32.mrf.mxu0
      %2750 = vmatprep.mubr.f32.mxu0 0.0
      %2751 = vmatmul.mubr.f32.gmra.mxu0 %v2539
      %v2752 = vpop.f32.mrf.mxu0
      %v2753 = vadd.f32 0.0, %v2752
      %v2754 = vpop.f32.mrf.mxu0
      %2755 = vmatprep.mubr.f32.mxu0 0.0
      %2756 = vmatmul.mubr.f32.gmra.mxu0 %v2541
      %v2757 = vpop.f32.mrf.mxu0
      %v2758 = vadd.f32 0.0, %v2757
      %v2759 = vpop.f32.mrf.mxu0
      %2760 = vmatprep.mubr.f32.mxu0 0.0
      %2761 = vmatmul.mubr.f32.gmra.mxu0 %v2543
      %v2762 = vpop.f32.mrf.mxu0
      %v2763 = vadd.f32 0.0, %v2762
      %v2764 = vpop.f32.mrf.mxu0
      %2765 = vmatprep.mubr.f32.mxu0 0.0
      %2766 = vmatmul.mubr.f32.gmra.mxu0 %v2545
      %v2767 = vpop.f32.mrf.mxu0
      %v2768 = vadd.f32 0.0, %v2767
      %v2769 = vpop.f32.mrf.mxu0
      %2770 = vmatprep.mubr.f32.mxu0 0.0
      %2771 = vmatmul.mubr.f32.gmra.mxu0 %v2547
      %v2772 = vpop.f32.mrf.mxu0
      %v2773 = vadd.f32 0.0, %v2772
      %v2774 = vpop.f32.mrf.mxu0
      %2775 = vmatprep.mubr.f32.mxu0 0.0
      %2776 = vmatmul.mubr.f32.gmra.mxu0 %v2549
      %v2777 = vpop.f32.mrf.mxu0
      %v2778 = vadd.f32 0.0, %v2777
      %v2779 = vpop.f32.mrf.mxu0
      %2780 = vmatprep.mubr.f32.mxu0 0.0
      %2781 = vmatmul.mubr.f32.gmra.mxu0 %v2551
      %v2782 = vpop.f32.mrf.mxu0
      %v2783 = vadd.f32 0.0, %v2782
      %v2784 = vpop.f32.mrf.mxu0
      %2785 = vmatprep.mubr.f32.mxu0 0.0
      %2786 = vmatmul.mubr.f32.gmra.mxu0 %v2553
      %v2787 = vpop.f32.mrf.mxu0
      %v2788 = vadd.f32 0.0, %v2787
      %v2789 = vpop.f32.mrf.mxu0
      %2790 = vmatprep.mubr.f32.mxu0 0.0
      %2791 = vmatmul.mubr.f32.gmra.mxu0 %v2555
      %v2792 = vpop.f32.mrf.mxu0
      %v2793 = vadd.f32 0.0, %v2792
      %v2794 = vpop.f32.mrf.mxu0
      %2795 = vmatprep.mubr.f32.mxu0 0.0
      %2796 = vmatmul.mubr.f32.gmra.mxu0 %v2557
      %v2797 = vpop.f32.mrf.mxu0
      %v2798 = vadd.f32 0.0, %v2797
      %v2799 = vpop.f32.mrf.mxu0
      %2800 = vmatprep.mubr.f32.mxu0 0.0
      %2801 = vmatmul.mubr.f32.gmra.mxu0 %v2559
      %v2802 = vpop.f32.mrf.mxu0
      %v2803 = vadd.f32 0.0, %v2802
      %v2804 = vpop.f32.mrf.mxu0
      %2805 = vmatprep.mubr.f32.mxu0 0.0
      %2806 = vmatmul.mubr.f32.gmra.mxu0 %v2561
      %v2807 = vpop.f32.mrf.mxu0
      %v2808 = vadd.f32 0.0, %v2807
      %v2809 = vpop.f32.mrf.mxu0
      %2810 = vmatprep.mubr.f32.mxu0 0.0
      %2811 = vmatmul.mubr.f32.gmra.mxu0 %v2563
      %v2812 = vpop.f32.mrf.mxu0
      %v2813 = vadd.f32 0.0, %v2812
      %v2814 = vpop.f32.mrf.mxu0
      %2815 = vmatprep.mubr.f32.mxu0 0.0
      %2816 = vmatmul.mubr.f32.gmra.mxu0 %v2565
      %v2817 = vpop.f32.mrf.mxu0
      %v2818 = vadd.f32 0.0, %v2817
      %v2819 = vpop.f32.mrf.mxu0
      %2820 = vmatprep.mubr.f32.mxu0 0.0
      %2821 = vmatmul.mubr.f32.gmra.mxu0 %v2567
      %v2822 = vpop.f32.mrf.mxu0
      %v2823 = vadd.f32 0.0, %v2822
      %v2824 = vpop.f32.mrf.mxu0
      %2825 = vmatprep.mubr.f32.mxu0 0.0
      %2826 = vmatmul.mubr.f32.gmra.mxu0 %v2569
      %v2827 = vpop.f32.mrf.mxu0
      %v2828 = vadd.f32 0.0, %v2827
      %v2829 = vpop.f32.mrf.mxu0
      %2830 = vmatprep.mubr.f32.mxu0 0.0
      %2831 = vmatmul.mubr.f32.gmra.mxu0 %v2571
      %v2832 = vpop.f32.mrf.mxu0
      %v2833 = vadd.f32 0.0, %v2832
      %v2834 = vpop.f32.mrf.mxu0
      %2835 = vmatprep.mubr.f32.mxu0 0.0
      %2836 = vmatmul.mubr.f32.gmra.mxu0 %v2573
      %v2837 = vpop.f32.mrf.mxu0
      %v2838 = vadd.f32 0.0, %v2837
      %v2839 = vpop.f32.mrf.mxu0
      %2840 = vmatprep.mubr.f32.mxu0 0.0
      %2841 = vmatmul.mubr.f32.gmra.mxu0 %v2575
      %v2842 = vpop.f32.mrf.mxu0
      %v2843 = vadd.f32 0.0, %v2842
      %v2844 = vpop.f32.mrf.mxu0
      %2845 = vmatprep.mubr.f32.mxu0 0.0
      %2846 = vmatmul.mubr.f32.gmra.mxu0 %v2577
      %v2847 = vpop.f32.mrf.mxu0
      %v2848 = vadd.f32 0.0, %v2847
      %v2849 = vpop.f32.mrf.mxu0
      %2850 = vmatprep.mubr.f32.mxu0 0.0
      %2851 = vmatmul.mubr.f32.gmra.mxu0 %v2579
      %v2852 = vpop.f32.mrf.mxu0
      %v2853 = vadd.f32 0.0, %v2852
      %v2854 = vpop.f32.mrf.mxu0
      %2855 = vdwg.mxu0
      %2898 = vrot.lane.b32.xlu0 %v2648, 4
      %v2899 = vpop.permute.xlu0 %2898
      %2900 = vrot.lane.b32.xlu0 %v2653, 4
      %v2901 = vpop.permute.xlu0 %2900
      %2902 = vrot.lane.b32.xlu0 %v2658, 4
      %v2903 = vpop.permute.xlu0 %2902
      %2904 = vrot.lane.b32.xlu0 %v2663, 4
      %v2905 = vpop.permute.xlu0 %2904
      %2906 = vrot.lane.b32.xlu0 %v2668, 4
      %v2907 = vpop.permute.xlu0 %2906
      %2908 = vrot.lane.b32.xlu0 %v2673, 4
      %v2909 = vpop.permute.xlu0 %2908
      %2910 = vrot.lane.b32.xlu0 %v2678, 4
      %v2911 = vpop.permute.xlu0 %2910
      %2912 = vrot.lane.b32.xlu0 %v2683, 4
      %v2913 = vpop.permute.xlu0 %2912
      %2914 = vrot.lane.b32.xlu0 %v2688, 4
      %v2915 = vpop.permute.xlu0 %2914
      %2916 = vrot.lane.b32.xlu0 %v2693, 4
      %v2917 = vpop.permute.xlu0 %2916
      %2918 = vrot.lane.b32.xlu0 %v2698, 4
      %v2919 = vpop.permute.xlu0 %2918
      %2920 = vrot.lane.b32.xlu0 %v2703, 4
      %v2921 = vpop.permute.xlu0 %2920
      %2922 = vrot.lane.b32.xlu0 %v2708, 4
      %v2923 = vpop.permute.xlu0 %2922
      %2924 = vrot.lane.b32.xlu0 %v2713, 4
      %v2925 = vpop.permute.xlu0 %2924
      %2926 = vrot.lane.b32.xlu0 %v2718, 4
      %v2927 = vpop.permute.xlu0 %2926
      %2928 = vrot.lane.b32.xlu0 %v2723, 4
      %v2929 = vpop.permute.xlu0 %2928
      %2930 = vrot.lane.b32.xlu0 %v2728, 4
      %v2931 = vpop.permute.xlu0 %2930
      %2932 = vrot.lane.b32.xlu0 %v2733, 4
      %v2933 = vpop.permute.xlu0 %2932
      %2934 = vrot.lane.b32.xlu0 %v2738, 4
      %v2935 = vpop.permute.xlu0 %2934
      %2936 = vrot.lane.b32.xlu0 %v2743, 4
      %v2937 = vpop.permute.xlu0 %2936
      %2938 = vrot.lane.b32.xlu0 %v2748, 4
      %v2939 = vpop.permute.xlu0 %2938
      %2940 = vrot.lane.b32.xlu0 %v2753, 4
      %v2941 = vpop.permute.xlu0 %2940
      %2942 = vrot.lane.b32.xlu0 %v2758, 4
      %v2943 = vpop.permute.xlu0 %2942
      %2944 = vrot.lane.b32.xlu0 %v2763, 4
      %v2945 = vpop.permute.xlu0 %2944
      %2946 = vrot.lane.b32.xlu0 %v2768, 4
      %v2947 = vpop.permute.xlu0 %2946
      %2948 = vrot.lane.b32.xlu0 %v2773, 4
      %v2949 = vpop.permute.xlu0 %2948
      %2950 = vrot.lane.b32.xlu0 %v2778, 4
      %v2951 = vpop.permute.xlu0 %2950
      %2952 = vrot.lane.b32.xlu0 %v2783, 4
      %v2953 = vpop.permute.xlu0 %2952
      %2954 = vrot.lane.b32.xlu0 %v2788, 4
      %v2955 = vpop.permute.xlu0 %2954
      %2956 = vrot.lane.b32.xlu0 %v2793, 4
      %v2957 = vpop.permute.xlu0 %2956
      %2958 = vrot.lane.b32.xlu0 %v2798, 4
      %v2959 = vpop.permute.xlu0 %2958
      %2960 = vrot.lane.b32.xlu0 %v2803, 4
      %v2961 = vpop.permute.xlu0 %2960
      %2962 = vrot.lane.b32.xlu0 %v2808, 4
      %v2963 = vpop.permute.xlu0 %2962
      %2964 = vrot.lane.b32.xlu0 %v2813, 4
      %v2965 = vpop.permute.xlu0 %2964
      %2966 = vrot.lane.b32.xlu0 %v2818, 4
      %v2967 = vpop.permute.xlu0 %2966
      %2968 = vrot.lane.b32.xlu0 %v2823, 4
      %v2969 = vpop.permute.xlu0 %2968
      %2970 = vrot.lane.b32.xlu0 %v2828, 4
      %v2971 = vpop.permute.xlu0 %2970
      %2972 = vrot.lane.b32.xlu0 %v2833, 4
      %v2973 = vpop.permute.xlu0 %2972
      %2974 = vrot.lane.b32.xlu0 %v2838, 4
      %v2975 = vpop.permute.xlu0 %2974
      %2976 = vrot.lane.b32.xlu0 %v2843, 4
      %v2977 = vpop.permute.xlu0 %2976
      %2978 = vrot.lane.b32.xlu0 %v2848, 4
      %v2979 = vpop.permute.xlu0 %2978
      %2980 = vrot.lane.b32.xlu0 %v2853, 4
      %v2981 = vpop.permute.xlu0 %2980
      %v3024 = vrcp.pop %v2899
      %v3025 = vmul.f32 %v2648, %v3024
      %v3026 = vrcp.pop %v2901
      %v3027 = vmul.f32 %v2653, %v3026
      %v3028 = vrcp.pop %v2903
      %v3029 = vmul.f32 %v2658, %v3028
      %v3030 = vrcp.pop %v2905
      %v3031 = vmul.f32 %v2663, %v3030
      %v3032 = vrcp.pop %v2907
      %v3033 = vmul.f32 %v2668, %v3032
      %v3034 = vrcp.pop %v2909
      %v3035 = vmul.f32 %v2673, %v3034
      %v3036 = vrcp.pop %v2911
      %v3037 = vmul.f32 %v2678, %v3036
      %v3038 = vrcp.pop %v2913
      %v3039 = vmul.f32 %v2683, %v3038
      %v3040 = vrcp.pop %v2915
      %v3041 = vmul.f32 %v2688, %v3040
      %v3042 = vrcp.pop %v2917
      %v3043 = vmul.f32 %v2693, %v3042
      %v3044 = vrcp.pop %v2919
      %v3045 = vmul.f32 %v2698, %v3044
      %v3046 = vrcp.pop %v2921
      %v3047 = vmul.f32 %v2703, %v3046
      %v3048 = vrcp.pop %v2923
      %v3049 = vmul.f32 %v2708, %v3048
      %v3050 = vrcp.pop %v2925
      %v3051 = vmul.f32 %v2713, %v3050
      %v3052 = vrcp.pop %v2927
      %v3053 = vmul.f32 %v2718, %v3052
      %v3054 = vrcp.pop %v2929
      %v3055 = vmul.f32 %v2723, %v3054
      %v3056 = vrcp.pop %v2931
      %v3057 = vmul.f32 %v2728, %v3056
      %v3058 = vrcp.pop %v2933
      %v3059 = vmul.f32 %v2733, %v3058
      %v3060 = vrcp.pop %v2935
      %v3061 = vmul.f32 %v2738, %v3060
      %v3062 = vrcp.pop %v2937
      %v3063 = vmul.f32 %v2743, %v3062
      %v3064 = vrcp.pop %v2939
      %v3065 = vmul.f32 %v2748, %v3064
      %v3066 = vrcp.pop %v2941
      %v3067 = vmul.f32 %v2753, %v3066
      %v3068 = vrcp.pop %v2943
      %v3069 = vmul.f32 %v2758, %v3068
      %v3070 = vrcp.pop %v2945
      %v3071 = vmul.f32 %v2763, %v3070
      %v3072 = vrcp.pop %v2947
      %v3073 = vmul.f32 %v2768, %v3072
      %v3074 = vrcp.pop %v2949
      %v3075 = vmul.f32 %v2773, %v3074
      %v3076 = vrcp.pop %v2951
      %v3077 = vmul.f32 %v2778, %v3076
      %v3078 = vrcp.pop %v2953
      %v3079 = vmul.f32 %v2783, %v3078
      %v3080 = vrcp.pop %v2955
      %v3081 = vmul.f32 %v2788, %v3080
      %v3082 = vrcp.pop %v2957
      %v3083 = vmul.f32 %v2793, %v3082
      %v3084 = vrcp.pop %v2959
      %v3085 = vmul.f32 %v2798, %v3084
      %v3086 = vrcp.pop %v2961
      %v3087 = vmul.f32 %v2803, %v3086
      %v3088 = vrcp.pop %v2963
      %v3089 = vmul.f32 %v2808, %v3088
      %v3090 = vrcp.pop %v2965
      %v3091 = vmul.f32 %v2813, %v3090
      %v3092 = vrcp.pop %v2967
      %v3093 = vmul.f32 %v2818, %v3092
      %v3094 = vrcp.pop %v2969
      %v3095 = vmul.f32 %v2823, %v3094
      %v3096 = vrcp.pop %v2971
      %v3097 = vmul.f32 %v2828, %v3096
      %v3098 = vrcp.pop %v2973
      %v3099 = vmul.f32 %v2833, %v3098
      %v3100 = vrcp.pop %v2975
      %v3101 = vmul.f32 %v2838, %v3100
      %v3102 = vrcp.pop %v2977
      %v3103 = vmul.f32 %v2843, %v3102
      %v3104 = vrcp.pop %v2979
      %v3105 = vmul.f32 %v2848, %v3104
      %v3106 = vrcp.pop %v2981
      %v3107 = vmul.f32 %v2853, %v3106
      %v3108 = vld [vmem:[%s334] sm:$0xff]
      %v3109 = vld [vmem:[%s334 + $0x8] sm:$0xff]
      %v3110 = vld [vmem:[%s334 + $0x10] sm:$0xff]
      %v3111 = vld [vmem:[%s334 + $0x18] sm:$0xff]
      %v3112 = vld [vmem:[%s334 + $0x20] sm:$0xff]
      %v3113 = vld [vmem:[%s334 + $0x28] sm:$0xff]
      %v3114 = vld [vmem:[%s334 + $0x30] sm:$0xff]
      %v3115 = vld [vmem:[%s334 + $0x38] sm:$0xff]
      %v3116 = vld [vmem:[%s334 + $0x40] sm:$0xff]
      %v3117 = vld [vmem:[%s334 + $0x48] sm:$0xff]
      %v3118 = vld [vmem:[%s334 + $0x50] sm:$0xff]
      %v3119 = vld [vmem:[%s334 + $0x58] sm:$0xff]
      %v3120 = vld [vmem:[%s334 + $0x60] sm:$0xff]
      %v3121 = vld [vmem:[%s334 + $0x68] sm:$0xff]
      %v3122 = vld [vmem:[%s334 + $0x70] sm:$0xff]
      %v3123 = vld [vmem:[%s334 + $0x78] sm:$0xff]
      %v3124 = vld [vmem:[%s334 + $0x80] sm:$0xff]
      %v3125 = vld [vmem:[%s334 + $0x88] sm:$0xff]
      %v3126 = vld [vmem:[%s334 + $0x90] sm:$0xff]
      %v3127 = vld [vmem:[%s334 + $0x98] sm:$0xff]
      %v3128 = vld [vmem:[%s334 + $0xa0] sm:$0xff]
      %v3129 = vld [vmem:[%s334 + $0xa8] sm:$0xff]
      %v3130 = vld [vmem:[%s334 + $0xb0] sm:$0xff]
      %v3131 = vld [vmem:[%s334 + $0xb8] sm:$0xff]
      %v3132 = vld [vmem:[%s334 + $0xc0] sm:$0xff]
      %v3133 = vld [vmem:[%s334 + $0xc8] sm:$0xff]
      %v3134 = vld [vmem:[%s334 + $0xd0] sm:$0xff]
      %v3135 = vld [vmem:[%s334 + $0xd8] sm:$0xff]
      %v3136 = vld [vmem:[%s334 + $0xe0] sm:$0xff]
      %v3137 = vld [vmem:[%s334 + $0xe8] sm:$0xff]
      %v3138 = vld [vmem:[%s334 + $0xf0] sm:$0xff]
      %v3139 = vld [vmem:[%s334 + $0xf8] sm:$0xff]
      %v3140 = vld [vmem:[%s334 + $0x100] sm:$0xff]
      %v3141 = vld [vmem:[%s334 + $0x108] sm:$0xff]
      %v3142 = vld [vmem:[%s334 + $0x110] sm:$0xff]
      %v3143 = vld [vmem:[%s334 + $0x118] sm:$0xff]
      %v3144 = vld [vmem:[%s334 + $0x120] sm:$0xff]
      %v3145 = vld [vmem:[%s334 + $0x128] sm:$0xff]
      %v3146 = vld [vmem:[%s334 + $0x130] sm:$0xff]
      %v3147 = vld [vmem:[%s334 + $0x138] sm:$0xff]
      %v3148 = vld [vmem:[%s334 + $0x140] sm:$0xff]
      %v3149 = vld [vmem:[%s334 + $0x148] sm:$0xff]
      %v3150 = vmul.f32 %v3025, %v3108
      %v3151 = vmul.f32 %v3027, %v3109
      %v3152 = vmul.f32 %v3029, %v3110
      %v3153 = vmul.f32 %v3031, %v3111
      %v3154 = vmul.f32 %v3033, %v3112
      %v3155 = vmul.f32 %v3035, %v3113
      %v3156 = vmul.f32 %v3037, %v3114
      %v3157 = vmul.f32 %v3039, %v3115
      %v3158 = vmul.f32 %v3041, %v3116
      %v3159 = vmul.f32 %v3043, %v3117
      %v3160 = vmul.f32 %v3045, %v3118
      %v3161 = vmul.f32 %v3047, %v3119
      %v3162 = vmul.f32 %v3049, %v3120
      %v3163 = vmul.f32 %v3051, %v3121
      %v3164 = vmul.f32 %v3053, %v3122
      %v3165 = vmul.f32 %v3055, %v3123
      %v3166 = vmul.f32 %v3057, %v3124
      %v3167 = vmul.f32 %v3059, %v3125
      %v3168 = vmul.f32 %v3061, %v3126
      %v3169 = vmul.f32 %v3063, %v3127
      %v3170 = vmul.f32 %v3065, %v3128
      %v3171 = vmul.f32 %v3067, %v3129
      %v3172 = vmul.f32 %v3069, %v3130
      %v3173 = vmul.f32 %v3071, %v3131
      %v3174 = vmul.f32 %v3073, %v3132
      %v3175 = vmul.f32 %v3075, %v3133
      %v3176 = vmul.f32 %v3077, %v3134
      %v3177 = vmul.f32 %v3079, %v3135
      %v3178 = vmul.f32 %v3081, %v3136
      %v3179 = vmul.f32 %v3083, %v3137
      %v3180 = vmul.f32 %v3085, %v3138
      %v3181 = vmul.f32 %v3087, %v3139
      %v3182 = vmul.f32 %v3089, %v3140
      %v3183 = vmul.f32 %v3091, %v3141
      %v3184 = vmul.f32 %v3093, %v3142
      %v3185 = vmul.f32 %v3095, %v3143
      %v3186 = vmul.f32 %v3097, %v3144
      %v3187 = vmul.f32 %v3099, %v3145
      %v3188 = vmul.f32 %v3101, %v3146
      %v3189 = vmul.f32 %v3103, %v3147
      %v3190 = vmul.f32 %v3105, %v3148
      %v3191 = vmul.f32 %v3107, %v3149
      %3234 = vrot.lane.b32.xlu0 %v3150, 124
      %v3235 = vpop.permute.xlu0 %3234
      %3236 = vrot.lane.b32.xlu0 %v3151, 124
      %v3237 = vpop.permute.xlu0 %3236
      %3238 = vrot.lane.b32.xlu0 %v3152, 124
      %v3239 = vpop.permute.xlu0 %3238
      %3240 = vrot.lane.b32.xlu0 %v3153, 124
      %v3241 = vpop.permute.xlu0 %3240
      %3242 = vrot.lane.b32.xlu0 %v3154, 124
      %v3243 = vpop.permute.xlu0 %3242
      %3244 = vrot.lane.b32.xlu0 %v3155, 124
      %v3245 = vpop.permute.xlu0 %3244
      %3246 = vrot.lane.b32.xlu0 %v3156, 124
      %v3247 = vpop.permute.xlu0 %3246
      %3248 = vrot.lane.b32.xlu0 %v3157, 124
      %v3249 = vpop.permute.xlu0 %3248
      %3250 = vrot.lane.b32.xlu0 %v3158, 124
      %v3251 = vpop.permute.xlu0 %3250
      %3252 = vrot.lane.b32.xlu0 %v3159, 124
      %v3253 = vpop.permute.xlu0 %3252
      %3254 = vrot.lane.b32.xlu0 %v3160, 124
      %v3255 = vpop.permute.xlu0 %3254
      %3256 = vrot.lane.b32.xlu0 %v3161, 124
      %v3257 = vpop.permute.xlu0 %3256
      %3258 = vrot.lane.b32.xlu0 %v3162, 124
      %v3259 = vpop.permute.xlu0 %3258
      %3260 = vrot.lane.b32.xlu0 %v3163, 124
      %v3261 = vpop.permute.xlu0 %3260
      %3262 = vrot.lane.b32.xlu0 %v3164, 124
      %v3263 = vpop.permute.xlu0 %3262
      %3264 = vrot.lane.b32.xlu0 %v3165, 124
      %v3265 = vpop.permute.xlu0 %3264
      %3266 = vrot.lane.b32.xlu0 %v3166, 124
      %v3267 = vpop.permute.xlu0 %3266
      %3268 = vrot.lane.b32.xlu0 %v3167, 124
      %v3269 = vpop.permute.xlu0 %3268
      %3270 = vrot.lane.b32.xlu0 %v3168, 124
      %v3271 = vpop.permute.xlu0 %3270
      %3272 = vrot.lane.b32.xlu0 %v3169, 124
      %v3273 = vpop.permute.xlu0 %3272
      %3274 = vrot.lane.b32.xlu0 %v3170, 124
      %v3275 = vpop.permute.xlu0 %3274
      %3276 = vrot.lane.b32.xlu0 %v3171, 124
      %v3277 = vpop.permute.xlu0 %3276
      %3278 = vrot.lane.b32.xlu0 %v3172, 124
      %v3279 = vpop.permute.xlu0 %3278
      %3280 = vrot.lane.b32.xlu0 %v3173, 124
      %v3281 = vpop.permute.xlu0 %3280
      %3282 = vrot.lane.b32.xlu0 %v3174, 124
      %v3283 = vpop.permute.xlu0 %3282
      %3284 = vrot.lane.b32.xlu0 %v3175, 124
      %v3285 = vpop.permute.xlu0 %3284
      %3286 = vrot.lane.b32.xlu0 %v3176, 124
      %v3287 = vpop.permute.xlu0 %3286
      %3288 = vrot.lane.b32.xlu0 %v3177, 124
      %v3289 = vpop.permute.xlu0 %3288
      %3290 = vrot.lane.b32.xlu0 %v3178, 124
      %v3291 = vpop.permute.xlu0 %3290
      %3292 = vrot.lane.b32.xlu0 %v3179, 124
      %v3293 = vpop.permute.xlu0 %3292
      %3294 = vrot.lane.b32.xlu0 %v3180, 124
      %v3295 = vpop.permute.xlu0 %3294
      %3296 = vrot.lane.b32.xlu0 %v3181, 124
      %v3297 = vpop.permute.xlu0 %3296
      %3298 = vrot.lane.b32.xlu0 %v3182, 124
      %v3299 = vpop.permute.xlu0 %3298
      %3300 = vrot.lane.b32.xlu0 %v3183, 124
      %v3301 = vpop.permute.xlu0 %3300
      %3302 = vrot.lane.b32.xlu0 %v3184, 124
      %v3303 = vpop.permute.xlu0 %3302
      %3304 = vrot.lane.b32.xlu0 %v3185, 124
      %v3305 = vpop.permute.xlu0 %3304
      %3306 = vrot.lane.b32.xlu0 %v3186, 124
      %v3307 = vpop.permute.xlu0 %3306
      %3308 = vrot.lane.b32.xlu0 %v3187, 124
      %v3309 = vpop.permute.xlu0 %3308
      %3310 = vrot.lane.b32.xlu0 %v3188, 124
      %v3311 = vpop.permute.xlu0 %3310
      %3312 = vrot.lane.b32.xlu0 %v3189, 124
      %v3313 = vpop.permute.xlu0 %3312
      %3314 = vrot.lane.b32.xlu0 %v3190, 124
      %v3315 = vpop.permute.xlu0 %3314
      %3316 = vrot.lane.b32.xlu0 %v3191, 124
      %v3317 = vpop.permute.xlu0 %3316
      %v3360 = vsub.f32 %v3108, %v3235
      %v3361 = vsub.f32 %v3109, %v3237
      %v3362 = vsub.f32 %v3110, %v3239
      %v3363 = vsub.f32 %v3111, %v3241
      %v3364 = vsub.f32 %v3112, %v3243
      %v3365 = vsub.f32 %v3113, %v3245
      %v3366 = vsub.f32 %v3114, %v3247
      %v3367 = vsub.f32 %v3115, %v3249
      %v3368 = vsub.f32 %v3116, %v3251
      %v3369 = vsub.f32 %v3117, %v3253
      %v3370 = vsub.f32 %v3118, %v3255
      %v3371 = vsub.f32 %v3119, %v3257
      %v3372 = vsub.f32 %v3120, %v3259
      %v3373 = vsub.f32 %v3121, %v3261
      %v3374 = vsub.f32 %v3122, %v3263
      %v3375 = vsub.f32 %v3123, %v3265
      %v3376 = vsub.f32 %v3124, %v3267
      %v3377 = vsub.f32 %v3125, %v3269
      %v3378 = vsub.f32 %v3126, %v3271
      %v3379 = vsub.f32 %v3127, %v3273
      %v3380 = vsub.f32 %v3128, %v3275
      %v3381 = vsub.f32 %v3129, %v3277
      %v3382 = vsub.f32 %v3130, %v3279
      %v3383 = vsub.f32 %v3131, %v3281
      %v3384 = vsub.f32 %v3132, %v3283
      %v3385 = vsub.f32 %v3133, %v3285
      %v3386 = vsub.f32 %v3134, %v3287
      %v3387 = vsub.f32 %v3135, %v3289
      %v3388 = vsub.f32 %v3136, %v3291
      %v3389 = vsub.f32 %v3137, %v3293
      %v3390 = vsub.f32 %v3138, %v3295
      %v3391 = vsub.f32 %v3139, %v3297
      %v3392 = vsub.f32 %v3140, %v3299
      %v3393 = vsub.f32 %v3141, %v3301
      %v3394 = vsub.f32 %v3142, %v3303
      %v3395 = vsub.f32 %v3143, %v3305
      %v3396 = vsub.f32 %v3144, %v3307
      %v3397 = vsub.f32 %v3145, %v3309
      %v3398 = vsub.f32 %v3146, %v3311
      %v3399 = vsub.f32 %v3147, %v3313
      %v3400 = vsub.f32 %v3148, %v3315
      %v3401 = vsub.f32 %v3149, %v3317
      %v3402 = vadd.f32 %v3108, %v3235
      %v3403 = vadd.f32 %v3109, %v3237
      %v3404 = vadd.f32 %v3110, %v3239
      %v3405 = vadd.f32 %v3111, %v3241
      %v3406 = vadd.f32 %v3112, %v3243
      %v3407 = vadd.f32 %v3113, %v3245
      %v3408 = vadd.f32 %v3114, %v3247
      %v3409 = vadd.f32 %v3115, %v3249
      %v3410 = vadd.f32 %v3116, %v3251
      %v3411 = vadd.f32 %v3117, %v3253
      %v3412 = vadd.f32 %v3118, %v3255
      %v3413 = vadd.f32 %v3119, %v3257
      %v3414 = vadd.f32 %v3120, %v3259
      %v3415 = vadd.f32 %v3121, %v3261
      %v3416 = vadd.f32 %v3122, %v3263
      %v3417 = vadd.f32 %v3123, %v3265
      %v3418 = vadd.f32 %v3124, %v3267
      %v3419 = vadd.f32 %v3125, %v3269
      %v3420 = vadd.f32 %v3126, %v3271
      %v3421 = vadd.f32 %v3127, %v3273
      %v3422 = vadd.f32 %v3128, %v3275
      %v3423 = vadd.f32 %v3129, %v3277
      %v3424 = vadd.f32 %v3130, %v3279
      %v3425 = vadd.f32 %v3131, %v3281
      %v3426 = vadd.f32 %v3132, %v3283
      %v3427 = vadd.f32 %v3133, %v3285
      %v3428 = vadd.f32 %v3134, %v3287
      %v3429 = vadd.f32 %v3135, %v3289
      %v3430 = vadd.f32 %v3136, %v3291
      %v3431 = vadd.f32 %v3137, %v3293
      %v3432 = vadd.f32 %v3138, %v3295
      %v3433 = vadd.f32 %v3139, %v3297
      %v3434 = vadd.f32 %v3140, %v3299
      %v3435 = vadd.f32 %v3141, %v3301
      %v3436 = vadd.f32 %v3142, %v3303
      %v3437 = vadd.f32 %v3143, %v3305
      %v3438 = vadd.f32 %v3144, %v3307
      %v3439 = vadd.f32 %v3145, %v3309
      %v3440 = vadd.f32 %v3146, %v3311
      %v3441 = vadd.f32 %v3147, %v3313
      %v3442 = vadd.f32 %v3148, %v3315
      %v3443 = vadd.f32 %v3149, %v3317
      %vm3444 = vcmask 15360
      %v3445 = vsel %vm3444, %v3360, %v3402
      %v3446 = vsel %vm3444, %v3361, %v3403
      %v3447 = vsel %vm3444, %v3362, %v3404
      %v3448 = vsel %vm3444, %v3363, %v3405
      %v3449 = vsel %vm3444, %v3364, %v3406
      %v3450 = vsel %vm3444, %v3365, %v3407
      %v3451 = vsel %vm3444, %v3366, %v3408
      %v3452 = vsel %vm3444, %v3367, %v3409
      %v3453 = vsel %vm3444, %v3368, %v3410
      %v3454 = vsel %vm3444, %v3369, %v3411
      %v3455 = vsel %vm3444, %v3370, %v3412
      %v3456 = vsel %vm3444, %v3371, %v3413
      %v3457 = vsel %vm3444, %v3372, %v3414
      %v3458 = vsel %vm3444, %v3373, %v3415
      %v3459 = vsel %vm3444, %v3374, %v3416
      %v3460 = vsel %vm3444, %v3375, %v3417
      %v3461 = vsel %vm3444, %v3376, %v3418
      %v3462 = vsel %vm3444, %v3377, %v3419
      %v3463 = vsel %vm3444, %v3378, %v3420
      %v3464 = vsel %vm3444, %v3379, %v3421
      %v3465 = vsel %vm3444, %v3380, %v3422
      %v3466 = vsel %vm3444, %v3381, %v3423
      %v3467 = vsel %vm3444, %v3382, %v3424
      %v3468 = vsel %vm3444, %v3383, %v3425
      %v3469 = vsel %vm3444, %v3384, %v3426
      %v3470 = vsel %vm3444, %v3385, %v3427
      %v3471 = vsel %vm3444, %v3386, %v3428
      %v3472 = vsel %vm3444, %v3387, %v3429
      %v3473 = vsel %vm3444, %v3388, %v3430
      %v3474 = vsel %vm3444, %v3389, %v3431
      %v3475 = vsel %vm3444, %v3390, %v3432
      %v3476 = vsel %vm3444, %v3391, %v3433
      %v3477 = vsel %vm3444, %v3392, %v3434
      %v3478 = vsel %vm3444, %v3393, %v3435
      %v3479 = vsel %vm3444, %v3394, %v3436
      %v3480 = vsel %vm3444, %v3395, %v3437
      %v3481 = vsel %vm3444, %v3396, %v3438
      %v3482 = vsel %vm3444, %v3397, %v3439
      %v3483 = vsel %vm3444, %v3398, %v3440
      %v3484 = vsel %vm3444, %v3399, %v3441
      %v3485 = vsel %vm3444, %v3400, %v3442
      %v3486 = vsel %vm3444, %v3401, %v3443
      %3529 = vrot.lane.b32.xlu0 %v3445, 4
      %v3530 = vpop.permute.xlu0 %3529
      %3531 = vrot.lane.b32.xlu0 %v3446, 4
      %v3532 = vpop.permute.xlu0 %3531
      %3533 = vrot.lane.b32.xlu0 %v3447, 4
      %v3534 = vpop.permute.xlu0 %3533
      %3535 = vrot.lane.b32.xlu0 %v3448, 4
      %v3536 = vpop.permute.xlu0 %3535
      %3537 = vrot.lane.b32.xlu0 %v3449, 4
      %v3538 = vpop.permute.xlu0 %3537
      %3539 = vrot.lane.b32.xlu0 %v3450, 4
      %v3540 = vpop.permute.xlu0 %3539
      %3541 = vrot.lane.b32.xlu0 %v3451, 4
      %v3542 = vpop.permute.xlu0 %3541
      %3543 = vrot.lane.b32.xlu0 %v3452, 4
      %v3544 = vpop.permute.xlu0 %3543
      %3545 = vrot.lane.b32.xlu0 %v3453, 4
      %v3546 = vpop.permute.xlu0 %3545
      %3547 = vrot.lane.b32.xlu0 %v3454, 4
      %v3548 = vpop.permute.xlu0 %3547
      %3549 = vrot.lane.b32.xlu0 %v3455, 4
      %v3550 = vpop.permute.xlu0 %3549
      %3551 = vrot.lane.b32.xlu0 %v3456, 4
      %v3552 = vpop.permute.xlu0 %3551
      %3553 = vrot.lane.b32.xlu0 %v3457, 4
      %v3554 = vpop.permute.xlu0 %3553
      %3555 = vrot.lane.b32.xlu0 %v3458, 4
      %v3556 = vpop.permute.xlu0 %3555
      %3557 = vrot.lane.b32.xlu0 %v3459, 4
      %v3558 = vpop.permute.xlu0 %3557
      %3559 = vrot.lane.b32.xlu0 %v3460, 4
      %v3560 = vpop.permute.xlu0 %3559
      %3561 = vrot.lane.b32.xlu0 %v3461, 4
      %v3562 = vpop.permute.xlu0 %3561
      %3563 = vrot.lane.b32.xlu0 %v3462, 4
      %v3564 = vpop.permute.xlu0 %3563
      %3565 = vrot.lane.b32.xlu0 %v3463, 4
      %v3566 = vpop.permute.xlu0 %3565
      %3567 = vrot.lane.b32.xlu0 %v3464, 4
      %v3568 = vpop.permute.xlu0 %3567
      %3569 = vrot.lane.b32.xlu0 %v3465, 4
      %v3570 = vpop.permute.xlu0 %3569
      %3571 = vrot.lane.b32.xlu0 %v3466, 4
      %v3572 = vpop.permute.xlu0 %3571
      %3573 = vrot.lane.b32.xlu0 %v3467, 4
      %v3574 = vpop.permute.xlu0 %3573
      %3575 = vrot.lane.b32.xlu0 %v3468, 4
      %v3576 = vpop.permute.xlu0 %3575
      %3577 = vrot.lane.b32.xlu0 %v3469, 4
      %v3578 = vpop.permute.xlu0 %3577
      %3579 = vrot.lane.b32.xlu0 %v3470, 4
      %v3580 = vpop.permute.xlu0 %3579
      %3581 = vrot.lane.b32.xlu0 %v3471, 4
      %v3582 = vpop.permute.xlu0 %3581
      %3583 = vrot.lane.b32.xlu0 %v3472, 4
      %v3584 = vpop.permute.xlu0 %3583
      %3585 = vrot.lane.b32.xlu0 %v3473, 4
      %v3586 = vpop.permute.xlu0 %3585
      %3587 = vrot.lane.b32.xlu0 %v3474, 4
      %v3588 = vpop.permute.xlu0 %3587
      %3589 = vrot.lane.b32.xlu0 %v3475, 4
      %v3590 = vpop.permute.xlu0 %3589
      %3591 = vrot.lane.b32.xlu0 %v3476, 4
      %v3592 = vpop.permute.xlu0 %3591
      %3593 = vrot.lane.b32.xlu0 %v3477, 4
      %v3594 = vpop.permute.xlu0 %3593
      %3595 = vrot.lane.b32.xlu0 %v3478, 4
      %v3596 = vpop.permute.xlu0 %3595
      %3597 = vrot.lane.b32.xlu0 %v3479, 4
      %v3598 = vpop.permute.xlu0 %3597
      %3599 = vrot.lane.b32.xlu0 %v3480, 4
      %v3600 = vpop.permute.xlu0 %3599
      %3601 = vrot.lane.b32.xlu0 %v3481, 4
      %v3602 = vpop.permute.xlu0 %3601
      %3603 = vrot.lane.b32.xlu0 %v3482, 4
      %v3604 = vpop.permute.xlu0 %3603
      %3605 = vrot.lane.b32.xlu0 %v3483, 4
      %v3606 = vpop.permute.xlu0 %3605
      %3607 = vrot.lane.b32.xlu0 %v3484, 4
      %v3608 = vpop.permute.xlu0 %3607
      %3609 = vrot.lane.b32.xlu0 %v3485, 4
      %v3610 = vpop.permute.xlu0 %3609
      %3611 = vrot.lane.b32.xlu0 %v3486, 4
      %v3612 = vpop.permute.xlu0 %3611
      %vm3655 = vcmask 31744
      %v3656 = vsel %vm3655, %v2031, %v3530
      %v3657 = vsel %vm3655, %v2033, %v3532
      %v3658 = vsel %vm3655, %v2035, %v3534
      %v3659 = vsel %vm3655, %v2037, %v3536
      %v3660 = vsel %vm3655, %v2039, %v3538
      %v3661 = vsel %vm3655, %v2041, %v3540
      %v3662 = vsel %vm3655, %v2043, %v3542
      %v3663 = vsel %vm3655, %v2045, %v3544
      %v3664 = vsel %vm3655, %v2047, %v3546
      %v3665 = vsel %vm3655, %v2049, %v3548
      %v3666 = vsel %vm3655, %v2051, %v3550
      %v3667 = vsel %vm3655, %v2053, %v3552
      %v3668 = vsel %vm3655, %v2055, %v3554
      %v3669 = vsel %vm3655, %v2057, %v3556
      %v3670 = vsel %vm3655, %v2059, %v3558
      %v3671 = vsel %vm3655, %v2061, %v3560
      %v3672 = vsel %vm3655, %v2063, %v3562
      %v3673 = vsel %vm3655, %v2065, %v3564
      %v3674 = vsel %vm3655, %v2067, %v3566
      %v3675 = vsel %vm3655, %v2069, %v3568
      %v3676 = vsel %vm3655, %v2071, %v3570
      %v3677 = vsel %vm3655, %v2073, %v3572
      %v3678 = vsel %vm3655, %v2075, %v3574
      %v3679 = vsel %vm3655, %v2077, %v3576
      %v3680 = vsel %vm3655, %v2079, %v3578
      %v3681 = vsel %vm3655, %v2081, %v3580
      %v3682 = vsel %vm3655, %v2083, %v3582
      %v3683 = vsel %vm3655, %v2085, %v3584
      %v3684 = vsel %vm3655, %v2087, %v3586
      %v3685 = vsel %vm3655, %v2089, %v3588
      %v3686 = vsel %vm3655, %v2091, %v3590
      %v3687 = vsel %vm3655, %v2093, %v3592
      %v3688 = vsel %vm3655, %v2095, %v3594
      %v3689 = vsel %vm3655, %v2097, %v3596
      %v3690 = vsel %vm3655, %v2099, %v3598
      %v3691 = vsel %vm3655, %v2101, %v3600
      %v3692 = vsel %vm3655, %v2103, %v3602
      %v3693 = vsel %vm3655, %v2105, %v3604
      %v3694 = vsel %vm3655, %v2107, %v3606
      %v3695 = vsel %vm3655, %v2109, %v3608
      %v3696 = vsel %vm3655, %v2111, %v3610
      %v3697 = vsel %vm3655, %v2113, %v3612
      %vm3698 = vcmask 64512
      %3699 = vst.msk [vmem:[%s346] sm:$0xff] %vm3698, %v3656
      %3700 = vst.msk [vmem:[%s346 + $0x8] sm:$0xff] %vm3698, %v3657
      %3701 = vst.msk [vmem:[%s346 + $0x10] sm:$0xff] %vm3698, %v3658
      %3702 = vst.msk [vmem:[%s346 + $0x18] sm:$0xff] %vm3698, %v3659
      %3703 = vst.msk [vmem:[%s346 + $0x20] sm:$0xff] %vm3698, %v3660
      %3704 = vst.msk [vmem:[%s346 + $0x28] sm:$0xff] %vm3698, %v3661
      %3705 = vst.msk [vmem:[%s346 + $0x30] sm:$0xff] %vm3698, %v3662
      %3706 = vst.msk [vmem:[%s346 + $0x38] sm:$0xff] %vm3698, %v3663
      %3707 = vst.msk [vmem:[%s346 + $0x40] sm:$0xff] %vm3698, %v3664
      %3708 = vst.msk [vmem:[%s346 + $0x48] sm:$0xff] %vm3698, %v3665
      %3709 = vst.msk [vmem:[%s346 + $0x50] sm:$0xff] %vm3698, %v3666
      %3710 = vst.msk [vmem:[%s346 + $0x58] sm:$0xff] %vm3698, %v3667
      %3711 = vst.msk [vmem:[%s346 + $0x60] sm:$0xff] %vm3698, %v3668
      %3712 = vst.msk [vmem:[%s346 + $0x68] sm:$0xff] %vm3698, %v3669
      %3713 = vst.msk [vmem:[%s346 + $0x70] sm:$0xff] %vm3698, %v3670
      %3714 = vst.msk [vmem:[%s346 + $0x78] sm:$0xff] %vm3698, %v3671
      %3715 = vst.msk [vmem:[%s346 + $0x80] sm:$0xff] %vm3698, %v3672
      %3716 = vst.msk [vmem:[%s346 + $0x88] sm:$0xff] %vm3698, %v3673
      %3717 = vst.msk [vmem:[%s346 + $0x90] sm:$0xff] %vm3698, %v3674
      %3718 = vst.msk [vmem:[%s346 + $0x98] sm:$0xff] %vm3698, %v3675
      %3719 = vst.msk [vmem:[%s346 + $0xa0] sm:$0xff] %vm3698, %v3676
      %3720 = vst.msk [vmem:[%s346 + $0xa8] sm:$0xff] %vm3698, %v3677
      %3721 = vst.msk [vmem:[%s346 + $0xb0] sm:$0xff] %vm3698, %v3678
      %3722 = vst.msk [vmem:[%s346 + $0xb8] sm:$0xff] %vm3698, %v3679
      %3723 = vst.msk [vmem:[%s346 + $0xc0] sm:$0xff] %vm3698, %v3680
      %3724 = vst.msk [vmem:[%s346 + $0xc8] sm:$0xff] %vm3698, %v3681
      %3725 = vst.msk [vmem:[%s346 + $0xd0] sm:$0xff] %vm3698, %v3682
      %3726 = vst.msk [vmem:[%s346 + $0xd8] sm:$0xff] %vm3698, %v3683
      %3727 = vst.msk [vmem:[%s346 + $0xe0] sm:$0xff] %vm3698, %v3684
      %3728 = vst.msk [vmem:[%s346 + $0xe8] sm:$0xff] %vm3698, %v3685
      %3729 = vst.msk [vmem:[%s346 + $0xf0] sm:$0xff] %vm3698, %v3686
      %3730 = vst.msk [vmem:[%s346 + $0xf8] sm:$0xff] %vm3698, %v3687
      %3731 = vst.msk [vmem:[%s346 + $0x100] sm:$0xff] %vm3698, %v3688
      %3732 = vst.msk [vmem:[%s346 + $0x108] sm:$0xff] %vm3698, %v3689
      %3733 = vst.msk [vmem:[%s346 + $0x110] sm:$0xff] %vm3698, %v3690
      %3734 = vst.msk [vmem:[%s346 + $0x118] sm:$0xff] %vm3698, %v3691
      %3735 = vst.msk [vmem:[%s346 + $0x120] sm:$0xff] %vm3698, %v3692
      %3736 = vst.msk [vmem:[%s346 + $0x128] sm:$0xff] %vm3698, %v3693
      %3737 = vst.msk [vmem:[%s346 + $0x130] sm:$0xff] %vm3698, %v3694
      %3738 = vst.msk [vmem:[%s346 + $0x138] sm:$0xff] %vm3698, %v3695
      %3739 = vst.msk [vmem:[%s346 + $0x140] sm:$0xff] %vm3698, %v3696
      %3740 = vst.msk [vmem:[%s346 + $0x148] sm:$0xff] %vm3698, %v3697
      %s3741 = smul.u32 42, %s20
      %p3742 = scmp.lt.s32.totalorder %s3741, 83
      %s3743 = scalar_select %p3742, %s3741, 83
      %s3744 = smul.addr %s3743, 8
      %s3745 = scalar_lea.vmem %s7, %s3744
      %s3746 = smul.u32 42, %s20
      %p3747 = scmp.lt.s32.totalorder %s3746, 83
      %s3748 = scalar_select %p3747, %s3746, 83
      %s3749 = smul.addr %s3748, 8
      %s3750 = scalar_lea.vmem %s8, %s3749
      // Predicated region
      $region49: #{nanodet_plus_forward.13} parent=47 // pred_check
        %p3751 = pneg %p195
      $region50: #{nanodet_plus_forward.13} parent=47 // pred_check_branch
        %3753 = sbr.rel (%p3751) target = $region52
      $region51: #{nanodet_plus_forward.13} parent=47 // pred_region
        %s3754 = smul.u32 42, %s20
      $region52: #{nanodet_plus_forward.13} parent=47 // pred_fallthru
        _
      // Predicated region
      $region53: #{nanodet_plus_forward.13} parent=47 // pred_check
        %p3755 = pneg %p221
      $region54: #{nanodet_plus_forward.13} parent=47 // pred_check_branch
        %3757 = sbr.rel (%p3755) target = $region56
      $region55: #{nanodet_plus_forward.13} parent=47 // pred_region
        %s3758 = smul.u32 42, %s20
      $region56: #{nanodet_plus_forward.13} parent=47 // pred_fallthru
        _
    $region48: #{nanodet_plus_forward.13} parent=5 // pred_fallthru
      _
    %p3759 = scmp.le.s32.totalorder 2, %s15
    // Predicated region
    $region57: #{nanodet_plus_forward.13} parent=5 // pred_check
      %p3760 = pneg %p3759
    $region58: #{nanodet_plus_forward.13} parent=5 // pred_check_branch
      %3762 = sbr.rel (%p3760) target = $region60
    $region59: #{nanodet_plus_forward.13} parent=5 // pred_region
      %s3763 = ssub.s32 %s15, 2
      // Predicated region
      $region61: #{nanodet_plus_forward.13} parent=59 // pred_check
        %p3764 = pneg %p201
      $region62: #{nanodet_plus_forward.13} parent=59 // pred_check_branch
        %3766 = sbr.rel (%p3764) target = $region64
      $region63: #{nanodet_plus_forward.13} parent=59 // pred_region
        %s3767 = smul.u32 42, %s21
        %p3768 = scmp.lt.s32.totalorder %s3767, 83
        %s3769 = scalar_select %p3768, %s3767, 83
        %s3770 = smul.addr %s3769, 8
        %s3771 = scalar_lea.vmem %s7, %s3770
      $region64: #{nanodet_plus_forward.13} parent=59 // pred_fallthru
        _
      // Predicated region
      $region65: #{nanodet_plus_forward.13} parent=59 // pred_check
        %p3772 = pneg %p227
      $region66: #{nanodet_plus_forward.13} parent=59 // pred_check_branch
        %3774 = sbr.rel (%p3772) target = $region68
      $region67: #{nanodet_plus_forward.13} parent=59 // pred_region
        %s3775 = smul.u32 42, %s21
        %p3776 = scmp.lt.s32.totalorder %s3775, 83
        %s3777 = scalar_select %p3776, %s3775, 83
        %s3778 = smul.addr %s3777, 8
        %s3779 = scalar_lea.vmem %s8, %s3778
      $region68: #{nanodet_plus_forward.13} parent=59 // pred_fallthru
        _
    $region60: #{nanodet_plus_forward.13} parent=5 // pred_fallthru
      _
  $region6: #{nanodet_plus_forward.13} parent=0 // loop_footer
    %s19 = sadd.s32 1, %s15
  $region7: #{nanodet_plus_forward.13} parent=0 // loop_footer_branch
    %14 = sbr.rel target = $region3
  $region8: #{nanodet_plus_forward.13} parent=0 // loop_exit
    _

</llo_original>
